<compile_context>
chip_gen: v6e
topology: v6e:2x2x1
jax: 0.10.0
libtpu: 0.0.40
codegen_flags: <defaults>
</compile_context>

<pallas_src>
import jax
import jax.numpy as jnp
from jax.experimental import pallas as pl
from jax.experimental.pallas import tpu as pltpu

LANE = 128            # lane width: matmul output columns padded to this
CDT = jnp.bfloat16    # matmul-operand / HBM-activation dtype
ADT = jnp.float32     # accumulator / bias dtype

K1P = 32              # conv1 im2col K (25) padded to a sublane-friendly size
K2P = 160             # conv2 im2col K (150) padded


def _round_up(n, m):
    return ((n + m - 1) // m) * m


# ---------------------------------------------------------------------------
# Kernel 1: conv1 + bias + ReLU + 2x2/stride-2 max pool (fused)
# ---------------------------------------------------------------------------
def _conv_relu_pool_kernel(p_ref, w_ref, b_ref, o_ref):
    # p_ref: (4, TM, K)  pool-grouped im2col patches (axis 0 = 2x2 pool taps)
    # w_ref: (K, 128)    packed conv weight (bf16); b_ref: (1, 128) f32 bias
    # o_ref: (TM, Cc)    channel-compact pooled output
    w = w_ref[...]
    acc = jnp.dot(p_ref[0], w, preferred_element_type=jnp.float32)
    for t in range(1, 4):                       # max over the 2x2 pool window
        acc = jnp.maximum(
            acc, jnp.dot(p_ref[t], w, preferred_element_type=jnp.float32))
    # bias is identical across pool taps and ReLU is monotone, so
    # max -> +bias -> relu  ==  pool(relu(conv + bias)).
    acc = jnp.maximum(acc + b_ref[...], 0.0)
    o_ref[...] = acc[:, : o_ref.shape[-1]].astype(o_ref.dtype)


def conv_relu_pool(patches, w, b, c_out, *, tm=1024):
    """patches: (4, M, K) pool-grouped; returns pooled (M, c_out) activations."""
    _, M, K = patches.shape
    tm = min(tm, _round_up(M, 16))
    Mp = _round_up(M, tm)
    if Mp != M:
        patches = jnp.pad(patches, ((0, 0), (0, Mp - M), (0, 0)))
    out = pl.pallas_call(
        _conv_relu_pool_kernel,
        grid=(Mp // tm,),
        in_specs=[
            pl.BlockSpec((4, tm, K), lambda i: (0, i, 0)),
            pl.BlockSpec((K, LANE), lambda i: (0, 0)),
            pl.BlockSpec((1, LANE), lambda i: (0, 0)),
        ],
        out_specs=pl.BlockSpec((tm, c_out), lambda i: (i, 0)),
        out_shape=jax.ShapeDtypeStruct((Mp, c_out), CDT),
        compiler_params=pltpu.CompilerParams(dimension_semantics=("parallel",)),
    )(patches, w, b)
    return out[:M]


# ---------------------------------------------------------------------------
# Kernel 2: conv2 + ReLU + pool2 + conv3 + ReLU + fc1 + fc2 + fc3 (one kernel)
# ---------------------------------------------------------------------------
def _tail_kernel(p_ref, w2_ref, b2_ref, w3_ref, b3_ref, wf1_ref, bf1_ref,
                 wf2_ref, bf2_ref, wf3_ref, bf3_ref, o_ref):
    # p_ref: (4, 25, TB, K2) pool-grouped conv2 patches; axis0 = pool tap,
    #        axis1 = pooled 5x5 spatial position s (row-major), axis2 = batch.
    f32 = jnp.float32
    tb = p_ref.shape[2]
    w2 = w2_ref[...]
    h3 = jnp.zeros((tb, LANE), f32)              # conv3 accumulator (120 real)
    for s in range(25):
        z = jnp.dot(p_ref[0, s], w2, preferred_element_type=f32)
        for t in range(1, 4):                    # 2x2 max pool over conv2 out
            z = jnp.maximum(z, jnp.dot(p_ref[t, s], w2,
                                       preferred_element_type=f32))
        a = jnp.maximum(z + b2_ref[...], 0.0)    # relu(conv2), pooled, (TB,128)
        # conv3 has a 1x1 output map: accumulate its 25 spatial taps in place
        # (avoids any in-kernel (5,5,16)->400 flatten / relayout).
        h3 = h3 + jnp.dot(a[:, :16].astype(CDT), w3_ref[s],
                          preferred_element_type=f32)
    h = jnp.maximum(h3 + b3_ref[...], 0.0)                                # relu(conv3)
    h = jnp.dot(h.astype(CDT), wf1_ref[...], preferred_element_type=f32) + bf1_ref[...]
    h = jnp.maximum(h, 0.0)                                               # relu(fc1)
    h = jnp.dot(h.astype(CDT), wf2_ref[...], preferred_element_type=f32) + bf2_ref[...]
    h = jnp.maximum(h, 0.0)                                               # relu(fc2)
    o = jnp.dot(h.astype(CDT), wf3_ref[...], preferred_element_type=f32) + bf3_ref[...]
    o_ref[...] = o[:, : o_ref.shape[-1]].astype(o_ref.dtype)              # fc3


def conv2_pool_head(p2, packed, *, tb=16):
    """p2: (4, 25, B, K2) pool-grouped conv2 patches -> (B, 1) predictions."""
    _, _, B, K2 = p2.shape
    tb = min(tb, _round_up(B, 16))
    Bp = _round_up(B, tb)
    if Bp != B:
        p2 = jnp.pad(p2, ((0, 0), (0, 0), (0, Bp - B), (0, 0)))
    rep = lambda shape: pl.BlockSpec(shape, lambda i, _s=shape: (0,) * len(_s))
    out = pl.pallas_call(
        _tail_kernel,
        grid=(Bp // tb,),
        in_specs=[
            pl.BlockSpec((4, 25, tb, K2), lambda i: (0, 0, i, 0)),
            rep((K2, LANE)), rep((1, LANE)),       # conv2
            rep((25, 16, LANE)), rep((1, LANE)),   # conv3 (per-position slabs)
            rep((LANE, LANE)), rep((1, LANE)),     # fc1
            rep((LANE, LANE)), rep((1, LANE)),     # fc2
            rep((LANE, LANE)), rep((1, LANE)),     # fc3
        ],
        out_specs=pl.BlockSpec((tb, 8), lambda i: (i, 0)),
        out_shape=jax.ShapeDtypeStruct((Bp, 8), jnp.float32),
        compiler_params=pltpu.CompilerParams(dimension_semantics=("parallel",)),
    )(p2, packed["conv2_w"], packed["conv2_b"], packed["conv3_w"],
      packed["conv3_b"], packed["fc1_w"], packed["fc1_b"],
      packed["fc2_w"], packed["fc2_b"], packed["fc3_w"], packed["fc3_b"])
    return out[:B, :1]


# ---------------------------------------------------------------------------
# Thin XLA glue: im2col patches grouped by 2x2 pool tap (compact activations)
# ---------------------------------------------------------------------------
def _pool_grouped_patches(x_nhwc, kh, kw, k_pad):
    """x: (B,H,W,C) -> (4, B*Hp*Wp, k_pad); rows (b, pool_i, pool_j),
    columns (di, dj, c) to match the packed conv weights."""
    B, H, W, C = x_nhwc.shape
    Ho, Wo = H - kh + 1, W - kw + 1
    Hp, Wp = Ho // 2, Wo // 2
    taps = [x_nhwc[:, di:di + Ho, dj:dj + Wo, :]
            for di in range(kh) for dj in range(kw)]
    patches = jnp.concatenate(taps, axis=-1)                    # (B,Ho,Wo,K)
    grouped = jnp.stack([patches[:, p:2 * Hp:2, q:2 * Wp:2, :]
                         for p in (0, 1) for q in (0, 1)], axis=0)
    grouped = grouped.reshape(4, B * Hp * Wp, kh * kw * C)
    return jnp.pad(grouped, ((0, 0), (0, 0), (0, k_pad - kh * kw * C)))


def _pool_grouped_patches_batch_minor(y_nhwc, k_pad):
    """conv2 patches laid out (4 pool taps, 25 pooled positions, B, k_pad) so
    the fused tail kernel can slice per-position row blocks contiguously."""
    B = y_nhwc.shape[0]
    taps = [y_nhwc[:, di:di + 10, dj:dj + 10, :]
            for di in range(5) for dj in range(5)]
    patches = jnp.concatenate(taps, axis=-1)                    # (B,10,10,150)
    grouped = jnp.stack([patches[:, p:10:2, q:10:2, :]
                         for p in (0, 1) for q in (0, 1)], axis=0)  # (4,B,5,5,150)
    grouped = jnp.transpose(grouped, (0, 2, 3, 1, 4)).reshape(4, 25, B, 150)
    return jnp.pad(grouped, ((0, 0), (0, 0), (0, 0), (0, k_pad - 150)))


# ---------------------------------------------------------------------------
# Parameters: PyTorch-layout init + one-time packing (transpose / pad / cast)
# ---------------------------------------------------------------------------
def init_lenet5_params(key):
    def uinit(k, shape, fan_in):
        bound = 1.0 / float(fan_in) ** 0.5
        return jax.random.uniform(k, shape, jnp.float32, -bound, bound)

    ks = jax.random.split(key, 12)
    return {
        "conv1_w": uinit(ks[0], (6, 1, 5, 5), 25),
        "conv1_b": uinit(ks[1], (6,), 25),
        "conv2_w": uinit(ks[2], (16, 6, 5, 5), 150),
        "conv2_b": uinit(ks[3], (16,), 150),
        "conv3_w": uinit(ks[4], (120, 16, 5, 5), 400),
        "conv3_b": uinit(ks[5], (120,), 400),
        "fc1_w": uinit(ks[6], (84, 120), 120),   # torch (out, in)
        "fc1_b": uinit(ks[7], (84,), 120),
        "fc2_w": uinit(ks[8], (10, 84), 84),
        "fc2_b": uinit(ks[9], (10,), 84),
        "fc3_w": uinit(ks[10], (1, 10), 10),
        "fc3_b": uinit(ks[11], (1,), 10),
    }


def pack_params(p):
    """One-time repack into MXU-friendly, zero-padded bf16 matrices."""
    def pad2(m, rows, cols=LANE):
        return jnp.pad(m, ((0, rows - m.shape[0]), (0, cols - m.shape[1])))

    def pad_bias(b):
        return jnp.pad(b.reshape(1, -1), ((0, 0), (0, LANE - b.shape[0]))).astype(ADT)

    def conv_mat(w):  # (Cout,Cin,kh,kw) -> (kh*kw*Cin, Cout), rows (di, dj, ci)
        Cout, Cin, kh, kw = w.shape
        return jnp.transpose(w, (2, 3, 1, 0)).reshape(kh * kw * Cin, Cout)

    def fc_mat(w):    # torch (out, in) -> (128, 128), zero-padded
        return pad2(w.T, LANE)

    conv3 = jnp.transpose(p["conv3_w"], (2, 3, 1, 0)).reshape(25, 16, 120)
    conv3 = jnp.pad(conv3, ((0, 0), (0, 0), (0, LANE - 120)))   # (25, 16, 128)

    return {
        "conv1_w": pad2(conv_mat(p["conv1_w"]), K1P).astype(CDT),  # (32, 128)
        "conv1_b": pad_bias(p["conv1_b"]),
        "conv2_w": pad2(conv_mat(p["conv2_w"]), K2P).astype(CDT),  # (160, 128)
        "conv2_b": pad_bias(p["conv2_b"]),
        "conv3_w": conv3.astype(CDT),                              # (25, 16, 128)
        "conv3_b": pad_bias(p["conv3_b"]),
        "fc1_w": fc_mat(p["fc1_w"]).astype(CDT),                   # (128, 128)
        "fc1_b": pad_bias(p["fc1_b"]),
        "fc2_w": fc_mat(p["fc2_w"]).astype(CDT),
        "fc2_b": pad_bias(p["fc2_b"]),
        "fc3_w": fc_mat(p["fc3_w"]).astype(CDT),
        "fc3_b": pad_bias(p["fc3_b"]),
    }


# ---------------------------------------------------------------------------
# Forward pass (2 Pallas kernels total)
# ---------------------------------------------------------------------------
def lenet5_forward(packed, x_nchw):
    x = jnp.transpose(x_nchw, (0, 2, 3, 1)).astype(CDT)          # NHWC bf16
    B = x.shape[0]
    # Stage 1: conv1 + ReLU + pool1 fused; compact 8-channel output (6 real).
    p1 = _pool_grouped_patches(x, 5, 5, K1P)                     # (4, B*196, 32)
    y1 = conv_relu_pool(p1, packed["conv1_w"], packed["conv1_b"], c_out=8)
    y1 = y1.reshape(B, 14, 14, 8)[..., :6]                       # (B, 14, 14, 6)
    # Stage 2: conv2 + ReLU + pool2 + conv3 + fc1 + fc2 + fc3, one fused kernel.
    p2 = _pool_grouped_patches_batch_minor(y1, K2P)              # (4, 25, B, 160)
    return conv2_pool_head(p2, packed)                           # (B, 1) f32


# ---------------------------------------------------------------------------
# Pure-JAX f32 reference (correctness check only)
# ---------------------------------------------------------------------------
def _reference_forward(params, x):
    hi = jax.lax.Precision.HIGHEST

    def conv(x, w, b):
        y = jax.lax.conv_general_dilated(
            x, w, (1, 1), "VALID",
            dimension_numbers=("NCHW", "OIHW", "NCHW"), precision=hi)
        return jax.nn.relu(y + b.reshape(1, -1, 1, 1))

    def pool(y):
        return jax.lax.reduce_window(
            y, -jnp.inf, jax.lax.max, (1, 1, 2, 2), (1, 1, 2, 2), "VALID")

    y = pool(conv(x, params["conv1_w"], params["conv1_b"]))
    y = pool(conv(y, params["conv2_w"], params["conv2_b"]))
    y = conv(y, params["conv3_w"], params["conv3_b"]).reshape(x.shape[0], -1)
    y = jax.nn.relu(jnp.dot(y, params["fc1_w"].T, precision=hi) + params["fc1_b"])
    y = jax.nn.relu(jnp.dot(y, params["fc2_w"].T, precision=hi) + params["fc2_b"])
    return jnp.dot(y, params["fc3_w"].T, precision=hi) + params["fc3_b"]


if __name__ == "__main__":
    key = jax.random.PRNGKey(0)
    pkey, xkey = jax.random.split(key)
    params = init_lenet5_params(pkey)
    packed = pack_params(params)
    # LeNet5's forward implies 32x32 single-channel input; small batch=2.
    x = jax.random.normal(xkey, (2, 1, 32, 32), dtype=jnp.float32)

    out = jax.jit(lenet5_forward)(packed, x)
    jax.block_until_ready(out)
    assert out.shape == (2, 1) and out.dtype == jnp.float32

    ref = jax.jit(_reference_forward)(params, x)
    jax.block_until_ready(ref)
    max_err = float(jnp.max(jnp.abs(out - ref)))
    scale = max(1.0, float(jnp.max(jnp.abs(ref))))
    # bf16 matmul operands (f32 accumulation) vs f32 HIGHEST-precision reference.
    assert max_err < 5e-2 * scale, f"mismatch vs reference: {max_err}"

    print("KERNEL_OK")
</pallas_src>

<mosaic_0001>
module attributes {stable_mosaic.version = 11 : i64} {
  func.func @_conv_relu_pool_kernel(%arg0: i32, %arg1: memref<4x400x32xbf16, #tpu.memory_space<vmem>>, %arg2: memref<32x128xbf16, #tpu.memory_space<vmem>>, %arg3: memref<1x128xf32, #tpu.memory_space<vmem>>, %arg4: memref<400x8xbf16, #tpu.memory_space<vmem>>) attributes {dimension_semantics = [#tpu.dimension_semantics<parallel>], iteration_bounds = array<i64: 1>, scalar_prefetch = 0 : i64, scratch_operands = 0 : i64, tpu.core_type = #tpu.core_type<tc>, window_params = [{transform_indices = @transform_0, window_bounds = array<i64: 4, 400, 32>}, {pipeline_mode = #tpu.pipeline_mode<synchronous>, transform_indices = @transform_1, window_bounds = array<i64: 32, 128>}, {pipeline_mode = #tpu.pipeline_mode<synchronous>, transform_indices = @transform_2, window_bounds = array<i64: 1, 128>}, {transform_indices = @transform_3, window_bounds = array<i64: 400, 8>}]} {
    %c0 = arith.constant 0 : index
    %c0_0 = arith.constant 0 : index
    %0 = vector.load %arg2[%c0, %c0_0] : memref<32x128xbf16, #tpu.memory_space<vmem>>, vector<32x128xbf16>
    %c0_1 = arith.constant 0 : index
    %c0_2 = arith.constant 0 : index
    %c0_3 = arith.constant 0 : index
    %1 = vector.load %arg1[%c0_1, %c0_2, %c0_3] : memref<4x400x32xbf16, #tpu.memory_space<vmem>>, vector<1x400x32xbf16>
    %2 = vector.shape_cast %1 : vector<1x400x32xbf16> to vector<400x32xbf16>
    %cst = arith.constant dense<0.000000e+00> : vector<400x128xf32>
    %3 = tpu.matmul %2, %0, %cst {dimension_numbers = #tpu.dot_dimension_numbers<[1], [0], [0], [1], [0, 0, 1, 1], [], []>} : vector<400x32xbf16>, vector<32x128xbf16>, vector<400x128xf32> -> vector<400x128xf32>
    %c1 = arith.constant 1 : index
    %c0_4 = arith.constant 0 : index
    %c0_5 = arith.constant 0 : index
    %4 = vector.load %arg1[%c1, %c0_4, %c0_5] : memref<4x400x32xbf16, #tpu.memory_space<vmem>>, vector<1x400x32xbf16>
    %5 = vector.shape_cast %4 : vector<1x400x32xbf16> to vector<400x32xbf16>
    %cst_6 = arith.constant dense<0.000000e+00> : vector<400x128xf32>
    %6 = tpu.matmul %5, %0, %cst_6 {dimension_numbers = #tpu.dot_dimension_numbers<[1], [0], [0], [1], [0, 0, 1, 1], [], []>} : vector<400x32xbf16>, vector<32x128xbf16>, vector<400x128xf32> -> vector<400x128xf32>
    %7 = arith.maximumf %3, %6 : vector<400x128xf32>
    %c2 = arith.constant 2 : index
    %c0_7 = arith.constant 0 : index
    %c0_8 = arith.constant 0 : index
    %8 = vector.load %arg1[%c2, %c0_7, %c0_8] : memref<4x400x32xbf16, #tpu.memory_space<vmem>>, vector<1x400x32xbf16>
    %9 = vector.shape_cast %8 : vector<1x400x32xbf16> to vector<400x32xbf16>
    %cst_9 = arith.constant dense<0.000000e+00> : vector<400x128xf32>
    %10 = tpu.matmul %9, %0, %cst_9 {dimension_numbers = #tpu.dot_dimension_numbers<[1], [0], [0], [1], [0, 0, 1, 1], [], []>} : vector<400x32xbf16>, vector<32x128xbf16>, vector<400x128xf32> -> vector<400x128xf32>
    %11 = arith.maximumf %7, %10 : vector<400x128xf32>
    %c3 = arith.constant 3 : index
    %c0_10 = arith.constant 0 : index
    %c0_11 = arith.constant 0 : index
    %12 = vector.load %arg1[%c3, %c0_10, %c0_11] : memref<4x400x32xbf16, #tpu.memory_space<vmem>>, vector<1x400x32xbf16>
    %13 = vector.shape_cast %12 : vector<1x400x32xbf16> to vector<400x32xbf16>
    %cst_12 = arith.constant dense<0.000000e+00> : vector<400x128xf32>
    %14 = tpu.matmul %13, %0, %cst_12 {dimension_numbers = #tpu.dot_dimension_numbers<[1], [0], [0], [1], [0, 0, 1, 1], [], []>} : vector<400x32xbf16>, vector<32x128xbf16>, vector<400x128xf32> -> vector<400x128xf32>
    %15 = arith.maximumf %11, %14 : vector<400x128xf32>
    %c0_13 = arith.constant 0 : index
    %c0_14 = arith.constant 0 : index
    %16 = vector.load %arg3[%c0_13, %c0_14] : memref<1x128xf32, #tpu.memory_space<vmem>>, vector<1x128xf32>
    %17 = vector.broadcast %16 : vector<1x128xf32> to vector<400x128xf32>
    %18 = arith.addf %15, %17 : vector<400x128xf32>
    %cst_15 = arith.constant 0.000000e+00 : f32
    %19 = vector.broadcast %cst_15 : f32 to vector<400x128xf32>
    %20 = arith.maximumf %18, %19 : vector<400x128xf32>
    %21 = vector.extract_strided_slice %20 {offsets = [0, 0], sizes = [400, 8], strides = [1, 1]} : vector<400x128xf32> to vector<400x8xf32>
    %22 = arith.truncf %21 : vector<400x8xf32> to vector<400x8xbf16>
    %c0_16 = arith.constant 0 : index
    %c0_17 = arith.constant 0 : index
    %23 = vector.load %arg4[%c0_16, %c0_17] : memref<400x8xbf16, #tpu.memory_space<vmem>>, vector<400x8xbf16>
    tpu.vector_store %arg4[%c0_16, %c0_17], %22 {strides = array<i32>} : memref<400x8xbf16, #tpu.memory_space<vmem>>, vector<400x8xbf16>,
    return
  }
  func.func @transform_0(%arg0: i32) -> (i32, i32, i32) {
    %c0_i32 = arith.constant 0 : i32
    %c0_i32_0 = arith.constant 0 : i32
    %c0_i32_1 = arith.constant 0 : i32
    return %c0_i32, %arg0, %c0_i32_0 : i32, i32, i32
  }
  func.func @transform_1(%arg0: i32) -> (i32, i32) {
    %c0_i32 = arith.constant 0 : i32
    %c0_i32_0 = arith.constant 0 : i32
    %c0_i32_1 = arith.constant 0 : i32
    return %c0_i32, %c0_i32_0 : i32, i32
  }
  func.func @transform_2(%arg0: i32) -> (i32, i32) {
    %c0_i32 = arith.constant 0 : i32
    %c0_i32_0 = arith.constant 0 : i32
    %c0_i32_1 = arith.constant 0 : i32
    return %c0_i32, %c0_i32_0 : i32, i32
  }
  func.func @transform_3(%arg0: i32) -> (i32, i32) {
    %c0_i32 = arith.constant 0 : i32
    %c0_i32_0 = arith.constant 0 : i32
    return %arg0, %c0_i32 : i32, i32
  }
}

module attributes {stable_mosaic.version = 11 : i64} {
  func.func @_tail_kernel(%arg0: i32, %arg1: memref<4x25x16x160xbf16, #tpu.memory_space<vmem>>, %arg2: memref<160x128xbf16, #tpu.memory_space<vmem>>, %arg3: memref<1x128xf32, #tpu.memory_space<vmem>>, %arg4: memref<25x16x128xbf16, #tpu.memory_space<vmem>>, %arg5: memref<1x128xf32, #tpu.memory_space<vmem>>, %arg6: memref<128x128xbf16, #tpu.memory_space<vmem>>, %arg7: memref<1x128xf32, #tpu.memory_space<vmem>>, %arg8: memref<128x128xbf16, #tpu.memory_space<vmem>>, %arg9: memref<1x128xf32, #tpu.memory_space<vmem>>, %arg10: memref<128x128xbf16, #tpu.memory_space<vmem>>, %arg11: memref<1x128xf32, #tpu.memory_space<vmem>>, %arg12: memref<16x8xf32, #tpu.memory_space<vmem>>) attributes {dimension_semantics = [#tpu.dimension_semantics<parallel>], iteration_bounds = array<i64: 1>, scalar_prefetch = 0 : i64, scratch_operands = 0 : i64, tpu.core_type = #tpu.core_type<tc>, window_params = [{transform_indices = @transform_0, window_bounds = array<i64: 4, 25, 16, 160>}, {pipeline_mode = #tpu.pipeline_mode<synchronous>, transform_indices = @transform_1, window_bounds = array<i64: 160, 128>}, {pipeline_mode = #tpu.pipeline_mode<synchronous>, transform_indices = @transform_2, window_bounds = array<i64: 1, 128>}, {pipeline_mode = #tpu.pipeline_mode<synchronous>, transform_indices = @transform_3, window_bounds = array<i64: 25, 16, 128>}, {pipeline_mode = #tpu.pipeline_mode<synchronous>, transform_indices = @transform_4, window_bounds = array<i64: 1, 128>}, {pipeline_mode = #tpu.pipeline_mode<synchronous>, transform_indices = @transform_5, window_bounds = array<i64: 128, 128>}, {pipeline_mode = #tpu.pipeline_mode<synchronous>, transform_indices = @transform_6, window_bounds = array<i64: 1, 128>}, {pipeline_mode = #tpu.pipeline_mode<synchronous>, transform_indices = @transform_7, window_bounds = array<i64: 128, 128>}, {pipeline_mode = #tpu.pipeline_mode<synchronous>, transform_indices = @transform_8, window_bounds = array<i64: 1, 128>}, {pipeline_mode = #tpu.pipeline_mode<synchronous>, transform_indices = @transform_9, window_bounds = array<i64: 128, 128>}, {pipeline_mode = #tpu.pipeline_mode<synchronous>, transform_indices = @transform_10, window_bounds = array<i64: 1, 128>}, {transform_indices = @transform_11, window_bounds = array<i64: 16, 8>}]} {
    %c0 = arith.constant 0 : index
    %c0_0 = arith.constant 0 : index
    %0 = vector.load %arg2[%c0, %c0_0] : memref<160x128xbf16, #tpu.memory_space<vmem>>, vector<160x128xbf16>
    %cst = arith.constant 0.000000e+00 : f32
    %1 = vector.broadcast %cst : f32 to vector<16x128xf32>
    %c0_1 = arith.constant 0 : index
    %c0_2 = arith.constant 0 : index
    %c0_3 = arith.constant 0 : index
    %c0_4 = arith.constant 0 : index
    %2 = vector.load %arg1[%c0_1, %c0_2, %c0_3, %c0_4] : memref<4x25x16x160xbf16, #tpu.memory_space<vmem>>, vector<1x1x16x160xbf16>
    %3 = vector.shape_cast %2 : vector<1x1x16x160xbf16> to vector<16x160xbf16>
    %cst_5 = arith.constant dense<0.000000e+00> : vector<16x128xf32>
    %4 = tpu.matmul %3, %0, %cst_5 {dimension_numbers = #tpu.dot_dimension_numbers<[1], [0], [0], [1], [0, 0, 1, 1], [], []>} : vector<16x160xbf16>, vector<160x128xbf16>, vector<16x128xf32> -> vector<16x128xf32>
    %c1 = arith.constant 1 : index
    %c0_6 = arith.constant 0 : index
    %c0_7 = arith.constant 0 : index
    %c0_8 = arith.constant 0 : index
    %5 = vector.load %arg1[%c1, %c0_6, %c0_7, %c0_8] : memref<4x25x16x160xbf16, #tpu.memory_space<vmem>>, vector<1x1x16x160xbf16>
    %6 = vector.shape_cast %5 : vector<1x1x16x160xbf16> to vector<16x160xbf16>
    %cst_9 = arith.constant dense<0.000000e+00> : vector<16x128xf32>
    %7 = tpu.matmul %6, %0, %cst_9 {dimension_numbers = #tpu.dot_dimension_numbers<[1], [0], [0], [1], [0, 0, 1, 1], [], []>} : vector<16x160xbf16>, vector<160x128xbf16>, vector<16x128xf32> -> vector<16x128xf32>
    %8 = arith.maximumf %4, %7 : vector<16x128xf32>
    %c2 = arith.constant 2 : index
    %c0_10 = arith.constant 0 : index
    %c0_11 = arith.constant 0 : index
    %c0_12 = arith.constant 0 : index
    %9 = vector.load %arg1[%c2, %c0_10, %c0_11, %c0_12] : memref<4x25x16x160xbf16, #tpu.memory_space<vmem>>, vector<1x1x16x160xbf16>
    %10 = vector.shape_cast %9 : vector<1x1x16x160xbf16> to vector<16x160xbf16>
    %cst_13 = arith.constant dense<0.000000e+00> : vector<16x128xf32>
    %11 = tpu.matmul %10, %0, %cst_13 {dimension_numbers = #tpu.dot_dimension_numbers<[1], [0], [0], [1], [0, 0, 1, 1], [], []>} : vector<16x160xbf16>, vector<160x128xbf16>, vector<16x128xf32> -> vector<16x128xf32>
    %12 = arith.maximumf %8, %11 : vector<16x128xf32>
    %c3 = arith.constant 3 : index
    %c0_14 = arith.constant 0 : index
    %c0_15 = arith.constant 0 : index
    %c0_16 = arith.constant 0 : index
    %13 = vector.load %arg1[%c3, %c0_14, %c0_15, %c0_16] : memref<4x25x16x160xbf16, #tpu.memory_space<vmem>>, vector<1x1x16x160xbf16>
    %14 = vector.shape_cast %13 : vector<1x1x16x160xbf16> to vector<16x160xbf16>
    %cst_17 = arith.constant dense<0.000000e+00> : vector<16x128xf32>
    %15 = tpu.matmul %14, %0, %cst_17 {dimension_numbers = #tpu.dot_dimension_numbers<[1], [0], [0], [1], [0, 0, 1, 1], [], []>} : vector<16x160xbf16>, vector<160x128xbf16>, vector<16x128xf32> -> vector<16x128xf32>
    %16 = arith.maximumf %12, %15 : vector<16x128xf32>
    %c0_18 = arith.constant 0 : index
    %c0_19 = arith.constant 0 : index
    %17 = vector.load %arg3[%c0_18, %c0_19] : memref<1x128xf32, #tpu.memory_space<vmem>>, vector<1x128xf32>
    %18 = vector.broadcast %17 : vector<1x128xf32> to vector<16x128xf32>
    %19 = arith.addf %16, %18 : vector<16x128xf32>
    %cst_20 = arith.constant 0.000000e+00 : f32
    %20 = vector.broadcast %cst_20 : f32 to vector<16x128xf32>
    %21 = arith.maximumf %19, %20 : vector<16x128xf32>
    %22 = vector.extract_strided_slice %21 {offsets = [0, 0], sizes = [16, 16], strides = [1, 1]} : vector<16x128xf32> to vector<16x16xf32>
    %23 = arith.truncf %22 : vector<16x16xf32> to vector<16x16xbf16>
    %c0_21 = arith.constant 0 : index
    %c0_22 = arith.constant 0 : index
    %c0_23 = arith.constant 0 : index
    %24 = vector.load %arg4[%c0_21, %c0_22, %c0_23] : memref<25x16x128xbf16, #tpu.memory_space<vmem>>, vector<1x16x128xbf16>
    %25 = vector.shape_cast %24 : vector<1x16x128xbf16> to vector<16x128xbf16>
    %cst_24 = arith.constant dense<0.000000e+00> : vector<16x128xf32>
    %26 = tpu.matmul %23, %25, %cst_24 {dimension_numbers = #tpu.dot_dimension_numbers<[1], [0], [0], [1], [0, 0, 1, 1], [], []>} : vector<16x16xbf16>, vector<16x128xbf16>, vector<16x128xf32> -> vector<16x128xf32>
    %27 = arith.addf %1, %26 : vector<16x128xf32>
    %c0_25 = arith.constant 0 : index
    %c1_26 = arith.constant 1 : index
    %c0_27 = arith.constant 0 : index
    %c0_28 = arith.constant 0 : index
    %28 = vector.load %arg1[%c0_25, %c1_26, %c0_27, %c0_28] : memref<4x25x16x160xbf16, #tpu.memory_space<vmem>>, vector<1x1x16x160xbf16>
    %29 = vector.shape_cast %28 : vector<1x1x16x160xbf16> to vector<16x160xbf16>
    %cst_29 = arith.constant dense<0.000000e+00> : vector<16x128xf32>
    %30 = tpu.matmul %29, %0, %cst_29 {dimension_numbers = #tpu.dot_dimension_numbers<[1], [0], [0], [1], [0, 0, 1, 1], [], []>} : vector<16x160xbf16>, vector<160x128xbf16>, vector<16x128xf32> -> vector<16x128xf32>
    %c1_30 = arith.constant 1 : index
    %c1_31 = arith.constant 1 : index
    %c0_32 = arith.constant 0 : index
    %c0_33 = arith.constant 0 : index
    %31 = vector.load %arg1[%c1_30, %c1_31, %c0_32, %c0_33] : memref<4x25x16x160xbf16, #tpu.memory_space<vmem>>, vector<1x1x16x160xbf16>
    %32 = vector.shape_cast %31 : vector<1x1x16x160xbf16> to vector<16x160xbf16>
    %cst_34 = arith.constant dense<0.000000e+00> : vector<16x128xf32>
    %33 = tpu.matmul %32, %0, %cst_34 {dimension_numbers = #tpu.dot_dimension_numbers<[1], [0], [0], [1], [0, 0, 1, 1], [], []>} : vector<16x160xbf16>, vector<160x128xbf16>, vector<16x128xf32> -> vector<16x128xf32>
    %34 = arith.maximumf %30, %33 : vector<16x128xf32>
    %c2_35 = arith.constant 2 : index
    %c1_36 = arith.constant 1 : index
    %c0_37 = arith.constant 0 : index
    %c0_38 = arith.constant 0 : index
    %35 = vector.load %arg1[%c2_35, %c1_36, %c0_37, %c0_38] : memref<4x25x16x160xbf16, #tpu.memory_space<vmem>>, vector<1x1x16x160xbf16>
    %36 = vector.shape_cast %35 : vector<1x1x16x160xbf16> to vector<16x160xbf16>
    %cst_39 = arith.constant dense<0.000000e+00> : vector<16x128xf32>
    %37 = tpu.matmul %36, %0, %cst_39 {dimension_numbers = #tpu.dot_dimension_numbers<[1], [0], [0], [1], [0, 0, 1, 1], [], []>} : vector<16x160xbf16>, vector<160x128xbf16>, vector<16x128xf32> -> vector<16x128xf32>
    %38 = arith.maximumf %34, %37 : vector<16x128xf32>
    %c3_40 = arith.constant 3 : index
    %c1_41 = arith.constant 1 : index
    %c0_42 = arith.constant 0 : index
    %c0_43 = arith.constant 0 : index
    %39 = vector.load %arg1[%c3_40, %c1_41, %c0_42, %c0_43] : memref<4x25x16x160xbf16, #tpu.memory_space<vmem>>, vector<1x1x16x160xbf16>
    %40 = vector.shape_cast %39 : vector<1x1x16x160xbf16> to vector<16x160xbf16>
    %cst_44 = arith.constant dense<0.000000e+00> : vector<16x128xf32>
    %41 = tpu.matmul %40, %0, %cst_44 {dimension_numbers = #tpu.dot_dimension_numbers<[1], [0], [0], [1], [0, 0, 1, 1], [], []>} : vector<16x160xbf16>, vector<160x128xbf16>, vector<16x128xf32> -> vector<16x128xf32>
    %42 = arith.maximumf %38, %41 : vector<16x128xf32>
    %c0_45 = arith.constant 0 : index
    %c0_46 = arith.constant 0 : index
    %43 = vector.load %arg3[%c0_45, %c0_46] : memref<1x128xf32, #tpu.memory_space<vmem>>, vector<1x128xf32>
    %44 = vector.broadcast %43 : vector<1x128xf32> to vector<16x128xf32>
    %45 = arith.addf %42, %44 : vector<16x128xf32>
    %cst_47 = arith.constant 0.000000e+00 : f32
    %46 = vector.broadcast %cst_47 : f32 to vector<16x128xf32>
    %47 = arith.maximumf %45, %46 : vector<16x128xf32>
    %48 = vector.extract_strided_slice %47 {offsets = [0, 0], sizes = [16, 16], strides = [1, 1]} : vector<16x128xf32> to vector<16x16xf32>
    %49 = arith.truncf %48 : vector<16x16xf32> to vector<16x16xbf16>
    %c1_48 = arith.constant 1 : index
    %c0_49 = arith.constant 0 : index
    %c0_50 = arith.constant 0 : index
    %50 = vector.load %arg4[%c1_48, %c0_49, %c0_50] : memref<25x16x128xbf16, #tpu.memory_space<vmem>>, vector<1x16x128xbf16>
    %51 = vector.shape_cast %50 : vector<1x16x128xbf16> to vector<16x128xbf16>
    %cst_51 = arith.constant dense<0.000000e+00> : vector<16x128xf32>
    %52 = tpu.matmul %49, %51, %cst_51 {dimension_numbers = #tpu.dot_dimension_numbers<[1], [0], [0], [1], [0, 0, 1, 1], [], []>} : vector<16x16xbf16>, vector<16x128xbf16>, vector<16x128xf32> -> vector<16x128xf32>
    %53 = arith.addf %27, %52 : vector<16x128xf32>
    %c0_52 = arith.constant 0 : index
    %c2_53 = arith.constant 2 : index
    %c0_54 = arith.constant 0 : index
    %c0_55 = arith.constant 0 : index
    %54 = vector.load %arg1[%c0_52, %c2_53, %c0_54, %c0_55] : memref<4x25x16x160xbf16, #tpu.memory_space<vmem>>, vector<1x1x16x160xbf16>
    %55 = vector.shape_cast %54 : vector<1x1x16x160xbf16> to vector<16x160xbf16>
    %cst_56 = arith.constant dense<0.000000e+00> : vector<16x128xf32>
    %56 = tpu.matmul %55, %0, %cst_56 {dimension_numbers = #tpu.dot_dimension_numbers<[1], [0], [0], [1], [0, 0, 1, 1], [], []>} : vector<16x160xbf16>, vector<160x128xbf16>, vector<16x128xf32> -> vector<16x128xf32>
    %c1_57 = arith.constant 1 : index
    %c2_58 = arith.constant 2 : index
    %c0_59 = arith.constant 0 : index
    %c0_60 = arith.constant 0 : index
    %57 = vector.load %arg1[%c1_57, %c2_58, %c0_59, %c0_60] : memref<4x25x16x160xbf16, #tpu.memory_space<vmem>>, vector<1x1x16x160xbf16>
    %58 = vector.shape_cast %57 : vector<1x1x16x160xbf16> to vector<16x160xbf16>
    %cst_61 = arith.constant dense<0.000000e+00> : vector<16x128xf32>
    %59 = tpu.matmul %58, %0, %cst_61 {dimension_numbers = #tpu.dot_dimension_numbers<[1], [0], [0], [1], [0, 0, 1, 1], [], []>} : vector<16x160xbf16>, vector<160x128xbf16>, vector<16x128xf32> -> vector<16x128xf32>
    %60 = arith.maximumf %56, %59 : vector<16x128xf32>
    %c2_62 = arith.constant 2 : index
    %c2_63 = arith.constant 2 : index
    %c0_64 = arith.constant 0 : index
    %c0_65 = arith.constant 0 : index
    %61 = vector.load %arg1[%c2_62, %c2_63, %c0_64, %c0_65] : memref<4x25x16x160xbf16, #tpu.memory_space<vmem>>, vector<1x1x16x160xbf16>
    %62 = vector.shape_cast %61 : vector<1x1x16x160xbf16> to vector<16x160xbf16>
    %cst_66 = arith.constant dense<0.000000e+00> : vector<16x128xf32>
    %63 = tpu.matmul %62, %0, %cst_66 {dimension_numbers = #tpu.dot_dimension_numbers<[1], [0], [0], [1], [0, 0, 1, 1], [], []>} : vector<16x160xbf16>, vector<160x128xbf16>, vector<16x128xf32> -> vector<16x128xf32>
    %64 = arith.maximumf %60, %63 : vector<16x128xf32>
    %c3_67 = arith.constant 3 : index
    %c2_68 = arith.constant 2 : index
    %c0_69 = arith.constant 0 : index
    %c0_70 = arith.constant 0 : index
    %65 = vector.load %arg1[%c3_67, %c2_68, %c0_69, %c0_70] : memref<4x25x16x160xbf16, #tpu.memory_space<vmem>>, vector<1x1x16x160xbf16>
    %66 = vector.shape_cast %65 : vector<1x1x16x160xbf16> to vector<16x160xbf16>
    %cst_71 = arith.constant dense<0.000000e+00> : vector<16x128xf32>
    %67 = tpu.matmul %66, %0, %cst_71 {dimension_numbers = #tpu.dot_dimension_numbers<[1], [0], [0], [1], [0, 0, 1, 1], [], []>} : vector<16x160xbf16>, vector<160x128xbf16>, vector<16x128xf32> -> vector<16x128xf32>
    %68 = arith.maximumf %64, %67 : vector<16x128xf32>
    %c0_72 = arith.constant 0 : index
    %c0_73 = arith.constant 0 : index
    %69 = vector.load %arg3[%c0_72, %c0_73] : memref<1x128xf32, #tpu.memory_space<vmem>>, vector<1x128xf32>
    %70 = vector.broadcast %69 : vector<1x128xf32> to vector<16x128xf32>
    %71 = arith.addf %68, %70 : vector<16x128xf32>
    %cst_74 = arith.constant 0.000000e+00 : f32
    %72 = vector.broadcast %cst_74 : f32 to vector<16x128xf32>
    %73 = arith.maximumf %71, %72 : vector<16x128xf32>
    %74 = vector.extract_strided_slice %73 {offsets = [0, 0], sizes = [16, 16], strides = [1, 1]} : vector<16x128xf32> to vector<16x16xf32>
    %75 = arith.truncf %74 : vector<16x16xf32> to vector<16x16xbf16>
    %c2_75 = arith.constant 2 : index
    %c0_76 = arith.constant 0 : index
    %c0_77 = arith.constant 0 : index
    %76 = vector.load %arg4[%c2_75, %c0_76, %c0_77] : memref<25x16x128xbf16, #tpu.memory_space<vmem>>, vector<1x16x128xbf16>
    %77 = vector.shape_cast %76 : vector<1x16x128xbf16> to vector<16x128xbf16>
    %cst_78 = arith.constant dense<0.000000e+00> : vector<16x128xf32>
    %78 = tpu.matmul %75, %77, %cst_78 {dimension_numbers = #tpu.dot_dimension_numbers<[1], [0], [0], [1], [0, 0, 1, 1], [], []>} : vector<16x16xbf16>, vector<16x128xbf16>, vector<16x128xf32> -> vector<16x128xf32>
    %79 = arith.addf %53, %78 : vector<16x128xf32>
    %c0_79 = arith.constant 0 : index
    %c3_80 = arith.constant 3 : index
    %c0_81 = arith.constant 0 : index
    %c0_82 = arith.constant 0 : index
    %80 = vector.load %arg1[%c0_79, %c3_80, %c0_81, %c0_82] : memref<4x25x16x160xbf16, #tpu.memory_space<vmem>>, vector<1x1x16x160xbf16>
    %81 = vector.shape_cast %80 : vector<1x1x16x160xbf16> to vector<16x160xbf16>
    %cst_83 = arith.constant dense<0.000000e+00> : vector<16x128xf32>
    %82 = tpu.matmul %81, %0, %cst_83 {dimension_numbers = #tpu.dot_dimension_numbers<[1], [0], [0], [1], [0, 0, 1, 1], [], []>} : vector<16x160xbf16>, vector<160x128xbf16>, vector<16x128xf32> -> vector<16x128xf32>
    %c1_84 = arith.constant 1 : index
    %c3_85 = arith.constant 3 : index
    %c0_86 = arith.constant 0 : index
    %c0_87 = arith.constant 0 : index
    %83 = vector.load %arg1[%c1_84, %c3_85, %c0_86, %c0_87] : memref<4x25x16x160xbf16, #tpu.memory_space<vmem>>, vector<1x1x16x160xbf16>
    %84 = vector.shape_cast %83 : vector<1x1x16x160xbf16> to vector<16x160xbf16>
    %cst_88 = arith.constant dense<0.000000e+00> : vector<16x128xf32>
    %85 = tpu.matmul %84, %0, %cst_88 {dimension_numbers = #tpu.dot_dimension_numbers<[1], [0], [0], [1], [0, 0, 1, 1], [], []>} : vector<16x160xbf16>, vector<160x128xbf16>, vector<16x128xf32> -> vector<16x128xf32>
    %86 = arith.maximumf %82, %85 : vector<16x128xf32>
    %c2_89 = arith.constant 2 : index
    %c3_90 = arith.constant 3 : index
    %c0_91 = arith.constant 0 : index
    %c0_92 = arith.constant 0 : index
    %87 = vector.load %arg1[%c2_89, %c3_90, %c0_91, %c0_92] : memref<4x25x16x160xbf16, #tpu.memory_space<vmem>>, vector<1x1x16x160xbf16>
    %88 = vector.shape_cast %87 : vector<1x1x16x160xbf16> to vector<16x160xbf16>
    %cst_93 = arith.constant dense<0.000000e+00> : vector<16x128xf32>
    %89 = tpu.matmul %88, %0, %cst_93 {dimension_numbers = #tpu.dot_dimension_numbers<[1], [0], [0], [1], [0, 0, 1, 1], [], []>} : vector<16x160xbf16>, vector<160x128xbf16>, vector<16x128xf32> -> vector<16x128xf32>
    %90 = arith.maximumf %86, %89 : vector<16x128xf32>
    %c3_94 = arith.constant 3 : index
    %c3_95 = arith.constant 3 : index
    %c0_96 = arith.constant 0 : index
    %c0_97 = arith.constant 0 : index
    %91 = vector.load %arg1[%c3_94, %c3_95, %c0_96, %c0_97] : memref<4x25x16x160xbf16, #tpu.memory_space<vmem>>, vector<1x1x16x160xbf16>
    %92 = vector.shape_cast %91 : vector<1x1x16x160xbf16> to vector<16x160xbf16>
    %cst_98 = arith.constant dense<0.000000e+00> : vector<16x128xf32>
    %93 = tpu.matmul %92, %0, %cst_98 {dimension_numbers = #tpu.dot_dimension_numbers<[1], [0], [0], [1], [0, 0, 1, 1], [], []>} : vector<16x160xbf16>, vector<160x128xbf16>, vector<16x128xf32> -> vector<16x128xf32>
    %94 = arith.maximumf %90, %93 : vector<16x128xf32>
    %c0_99 = arith.constant 0 : index
    %c0_100 = arith.constant 0 : index
    %95 = vector.load %arg3[%c0_99, %c0_100] : memref<1x128xf32, #tpu.memory_space<vmem>>, vector<1x128xf32>
    %96 = vector.broadcast %95 : vector<1x128xf32> to vector<16x128xf32>
    %97 = arith.addf %94, %96 : vector<16x128xf32>
    %cst_101 = arith.constant 0.000000e+00 : f32
    %98 = vector.broadcast %cst_101 : f32 to vector<16x128xf32>
    %99 = arith.maximumf %97, %98 : vector<16x128xf32>
    %100 = vector.extract_strided_slice %99 {offsets = [0, 0], sizes = [16, 16], strides = [1, 1]} : vector<16x128xf32> to vector<16x16xf32>
    %101 = arith.truncf %100 : vector<16x16xf32> to vector<16x16xbf16>
    %c3_102 = arith.constant 3 : index
    %c0_103 = arith.constant 0 : index
    %c0_104 = arith.constant 0 : index
    %102 = vector.load %arg4[%c3_102, %c0_103, %c0_104] : memref<25x16x128xbf16, #tpu.memory_space<vmem>>, vector<1x16x128xbf16>
    %103 = vector.shape_cast %102 : vector<1x16x128xbf16> to vector<16x128xbf16>
    %cst_105 = arith.constant dense<0.000000e+00> : vector<16x128xf32>
    %104 = tpu.matmul %101, %103, %cst_105 {dimension_numbers = #tpu.dot_dimension_numbers<[1], [0], [0], [1], [0, 0, 1, 1], [], []>} : vector<16x16xbf16>, vector<16x128xbf16>, vector<16x128xf32> -> vector<16x128xf32>
    %105 = arith.addf %79, %104 : vector<16x128xf32>
    %c0_106 = arith.constant 0 : index
    %c4 = arith.constant 4 : index
    %c0_107 = arith.constant 0 : index
    %c0_108 = arith.constant 0 : index
    %106 = vector.load %arg1[%c0_106, %c4, %c0_107, %c0_108] : memref<4x25x16x160xbf16, #tpu.memory_space<vmem>>, vector<1x1x16x160xbf16>
    %107 = vector.shape_cast %106 : vector<1x1x16x160xbf16> to vector<16x160xbf16>
    %cst_109 = arith.constant dense<0.000000e+00> : vector<16x128xf32>
    %108 = tpu.matmul %107, %0, %cst_109 {dimension_numbers = #tpu.dot_dimension_numbers<[1], [0], [0], [1], [0, 0, 1, 1], [], []>} : vector<16x160xbf16>, vector<160x128xbf16>, vector<16x128xf32> -> vector<16x128xf32>
    %c1_110 = arith.constant 1 : index
    %c4_111 = arith.constant 4 : index
    %c0_112 = arith.constant 0 : index
    %c0_113 = arith.constant 0 : index
    %109 = vector.load %arg1[%c1_110, %c4_111, %c0_112, %c0_113] : memref<4x25x16x160xbf16, #tpu.memory_space<vmem>>, vector<1x1x16x160xbf16>
    %110 = vector.shape_cast %109 : vector<1x1x16x160xbf16> to vector<16x160xbf16>
    %cst_114 = arith.constant dense<0.000000e+00> : vector<16x128xf32>
    %111 = tpu.matmul %110, %0, %cst_114 {dimension_numbers = #tpu.dot_dimension_numbers<[1], [0], [0], [1], [0, 0, 1, 1], [], []>} : vector<16x160xbf16>, vector<160x128xbf16>, vector<16x128xf32> -> vector<16x128xf32>
    %112 = arith.maximumf %108, %111 : vector<16x128xf32>
    %c2_115 = arith.constant 2 : index
    %c4_116 = arith.constant 4 : index
    %c0_117 = arith.constant 0 : index
    %c0_118 = arith.constant 0 : index
    %113 = vector.load %arg1[%c2_115, %c4_116, %c0_117, %c0_118] : memref<4x25x16x160xbf16, #tpu.memory_space<vmem>>, vector<1x1x16x160xbf16>
    %114 = vector.shape_cast %113 : vector<1x1x16x160xbf16> to vector<16x160xbf16>
    %cst_119 = arith.constant dense<0.000000e+00> : vector<16x128xf32>
    %115 = tpu.matmul %114, %0, %cst_119 {dimension_numbers = #tpu.dot_dimension_numbers<[1], [0], [0], [1], [0, 0, 1, 1], [], []>} : vector<16x160xbf16>, vector<160x128xbf16>, vector<16x128xf32> -> vector<16x128xf32>
    %116 = arith.maximumf %112, %115 : vector<16x128xf32>
    %c3_120 = arith.constant 3 : index
    %c4_121 = arith.constant 4 : index
    %c0_122 = arith.constant 0 : index
    %c0_123 = arith.constant 0 : index
    %117 = vector.load %arg1[%c3_120, %c4_121, %c0_122, %c0_123] : memref<4x25x16x160xbf16, #tpu.memory_space<vmem>>, vector<1x1x16x160xbf16>
    %118 = vector.shape_cast %117 : vector<1x1x16x160xbf16> to vector<16x160xbf16>
    %cst_124 = arith.constant dense<0.000000e+00> : vector<16x128xf32>
    %119 = tpu.matmul %118, %0, %cst_124 {dimension_numbers = #tpu.dot_dimension_numbers<[1], [0], [0], [1], [0, 0, 1, 1], [], []>} : vector<16x160xbf16>, vector<160x128xbf16>, vector<16x128xf32> -> vector<16x128xf32>
    %120 = arith.maximumf %116, %119 : vector<16x128xf32>
    %c0_125 = arith.constant 0 : index
    %c0_126 = arith.constant 0 : index
    %121 = vector.load %arg3[%c0_125, %c0_126] : memref<1x128xf32, #tpu.memory_space<vmem>>, vector<1x128xf32>
    %122 = vector.broadcast %121 : vector<1x128xf32> to vector<16x128xf32>
    %123 = arith.addf %120, %122 : vector<16x128xf32>
    %cst_127 = arith.constant 0.000000e+00 : f32
    %124 = vector.broadcast %cst_127 : f32 to vector<16x128xf32>
    %125 = arith.maximumf %123, %124 : vector<16x128xf32>
    %126 = vector.extract_strided_slice %125 {offsets = [0, 0], sizes = [16, 16], strides = [1, 1]} : vector<16x128xf32> to vector<16x16xf32>
    %127 = arith.truncf %126 : vector<16x16xf32> to vector<16x16xbf16>
    %c4_128 = arith.constant 4 : index
    %c0_129 = arith.constant 0 : index
    %c0_130 = arith.constant 0 : index
    %128 = vector.load %arg4[%c4_128, %c0_129, %c0_130] : memref<25x16x128xbf16, #tpu.memory_space<vmem>>, vector<1x16x128xbf16>
    %129 = vector.shape_cast %128 : vector<1x16x128xbf16> to vector<16x128xbf16>
    %cst_131 = arith.constant dense<0.000000e+00> : vector<16x128xf32>
    %130 = tpu.matmul %127, %129, %cst_131 {dimension_numbers = #tpu.dot_dimension_numbers<[1], [0], [0], [1], [0, 0, 1, 1], [], []>} : vector<16x16xbf16>, vector<16x128xbf16>, vector<16x128xf32> -> vector<16x128xf32>
    %131 = arith.addf %105, %130 : vector<16x128xf32>
    %c0_132 = arith.constant 0 : index
    %c5 = arith.constant 5 : index
    %c0_133 = arith.constant 0 : index
    %c0_134 = arith.constant 0 : index
    %132 = vector.load %arg1[%c0_132, %c5, %c0_133, %c0_134] : memref<4x25x16x160xbf16, #tpu.memory_space<vmem>>, vector<1x1x16x160xbf16>
    %133 = vector.shape_cast %132 : vector<1x1x16x160xbf16> to vector<16x160xbf16>
    %cst_135 = arith.constant dense<0.000000e+00> : vector<16x128xf32>
    %134 = tpu.matmul %133, %0, %cst_135 {dimension_numbers = #tpu.dot_dimension_numbers<[1], [0], [0], [1], [0, 0, 1, 1], [], []>} : vector<16x160xbf16>, vector<160x128xbf16>, vector<16x128xf32> -> vector<16x128xf32>
    %c1_136 = arith.constant 1 : index
    %c5_137 = arith.constant 5 : index
    %c0_138 = arith.constant 0 : index
    %c0_139 = arith.constant 0 : index
    %135 = vector.load %arg1[%c1_136, %c5_137, %c0_138, %c0_139] : memref<4x25x16x160xbf16, #tpu.memory_space<vmem>>, vector<1x1x16x160xbf16>
    %136 = vector.shape_cast %135 : vector<1x1x16x160xbf16> to vector<16x160xbf16>
    %cst_140 = arith.constant dense<0.000000e+00> : vector<16x128xf32>
    %137 = tpu.matmul %136, %0, %cst_140 {dimension_numbers = #tpu.dot_dimension_numbers<[1], [0], [0], [1], [0, 0, 1, 1], [], []>} : vector<16x160xbf16>, vector<160x128xbf16>, vector<16x128xf32> -> vector<16x128xf32>
    %138 = arith.maximumf %134, %137 : vector<16x128xf32>
    %c2_141 = arith.constant 2 : index
    %c5_142 = arith.constant 5 : index
    %c0_143 = arith.constant 0 : index
    %c0_144 = arith.constant 0 : index
    %139 = vector.load %arg1[%c2_141, %c5_142, %c0_143, %c0_144] : memref<4x25x16x160xbf16, #tpu.memory_space<vmem>>, vector<1x1x16x160xbf16>
    %140 = vector.shape_cast %139 : vector<1x1x16x160xbf16> to vector<16x160xbf16>
    %cst_145 = arith.constant dense<0.000000e+00> : vector<16x128xf32>
    %141 = tpu.matmul %140, %0, %cst_145 {dimension_numbers = #tpu.dot_dimension_numbers<[1], [0], [0], [1], [0, 0, 1, 1], [], []>} : vector<16x160xbf16>, vector<160x128xbf16>, vector<16x128xf32> -> vector<16x128xf32>
    %142 = arith.maximumf %138, %141 : vector<16x128xf32>
    %c3_146 = arith.constant 3 : index
    %c5_147 = arith.constant 5 : index
    %c0_148 = arith.constant 0 : index
    %c0_149 = arith.constant 0 : index
    %143 = vector.load %arg1[%c3_146, %c5_147, %c0_148, %c0_149] : memref<4x25x16x160xbf16, #tpu.memory_space<vmem>>, vector<1x1x16x160xbf16>
    %144 = vector.shape_cast %143 : vector<1x1x16x160xbf16> to vector<16x160xbf16>
    %cst_150 = arith.constant dense<0.000000e+00> : vector<16x128xf32>
    %145 = tpu.matmul %144, %0, %cst_150 {dimension_numbers = #tpu.dot_dimension_numbers<[1], [0], [0], [1], [0, 0, 1, 1], [], []>} : vector<16x160xbf16>, vector<160x128xbf16>, vector<16x128xf32> -> vector<16x128xf32>
    %146 = arith.maximumf %142, %145 : vector<16x128xf32>
    %c0_151 = arith.constant 0 : index
    %c0_152 = arith.constant 0 : index
    %147 = vector.load %arg3[%c0_151, %c0_152] : memref<1x128xf32, #tpu.memory_space<vmem>>, vector<1x128xf32>
    %148 = vector.broadcast %147 : vector<1x128xf32> to vector<16x128xf32>
    %149 = arith.addf %146, %148 : vector<16x128xf32>
    %cst_153 = arith.constant 0.000000e+00 : f32
    %150 = vector.broadcast %cst_153 : f32 to vector<16x128xf32>
    %151 = arith.maximumf %149, %150 : vector<16x128xf32>
    %152 = vector.extract_strided_slice %151 {offsets = [0, 0], sizes = [16, 16], strides = [1, 1]} : vector<16x128xf32> to vector<16x16xf32>
    %153 = arith.truncf %152 : vector<16x16xf32> to vector<16x16xbf16>
    %c5_154 = arith.constant 5 : index
    %c0_155 = arith.constant 0 : index
    %c0_156 = arith.constant 0 : index
    %154 = vector.load %arg4[%c5_154, %c0_155, %c0_156] : memref<25x16x128xbf16, #tpu.memory_space<vmem>>, vector<1x16x128xbf16>
    %155 = vector.shape_cast %154 : vector<1x16x128xbf16> to vector<16x128xbf16>
    %cst_157 = arith.constant dense<0.000000e+00> : vector<16x128xf32>
    %156 = tpu.matmul %153, %155, %cst_157 {dimension_numbers = #tpu.dot_dimension_numbers<[1], [0], [0], [1], [0, 0, 1, 1], [], []>} : vector<16x16xbf16>, vector<16x128xbf16>, vector<16x128xf32> -> vector<16x128xf32>
    %157 = arith.addf %131, %156 : vector<16x128xf32>
    %c0_158 = arith.constant 0 : index
    %c6 = arith.constant 6 : index
    %c0_159 = arith.constant 0 : index
    %c0_160 = arith.constant 0 : index
    %158 = vector.load %arg1[%c0_158, %c6, %c0_159, %c0_160] : memref<4x25x16x160xbf16, #tpu.memory_space<vmem>>, vector<1x1x16x160xbf16>
    %159 = vector.shape_cast %158 : vector<1x1x16x160xbf16> to vector<16x160xbf16>
    %cst_161 = arith.constant dense<0.000000e+00> : vector<16x128xf32>
    %160 = tpu.matmul %159, %0, %cst_161 {dimension_numbers = #tpu.dot_dimension_numbers<[1], [0], [0], [1], [0, 0, 1, 1], [], []>} : vector<16x160xbf16>, vector<160x128xbf16>, vector<16x128xf32> -> vector<16x128xf32>
    %c1_162 = arith.constant 1 : index
    %c6_163 = arith.constant 6 : index
    %c0_164 = arith.constant 0 : index
    %c0_165 = arith.constant 0 : index
    %161 = vector.load %arg1[%c1_162, %c6_163, %c0_164, %c0_165] : memref<4x25x16x160xbf16, #tpu.memory_space<vmem>>, vector<1x1x16x160xbf16>
    %162 = vector.shape_cast %161 : vector<1x1x16x160xbf16> to vector<16x160xbf16>
    %cst_166 = arith.constant dense<0.000000e+00> : vector<16x128xf32>
    %163 = tpu.matmul %162, %0, %cst_166 {dimension_numbers = #tpu.dot_dimension_numbers<[1], [0], [0], [1], [0, 0, 1, 1], [], []>} : vector<16x160xbf16>, vector<160x128xbf16>, vector<16x128xf32> -> vector<16x128xf32>
    %164 = arith.maximumf %160, %163 : vector<16x128xf32>
    %c2_167 = arith.constant 2 : index
    %c6_168 = arith.constant 6 : index
    %c0_169 = arith.constant 0 : index
    %c0_170 = arith.constant 0 : index
    %165 = vector.load %arg1[%c2_167, %c6_168, %c0_169, %c0_170] : memref<4x25x16x160xbf16, #tpu.memory_space<vmem>>, vector<1x1x16x160xbf16>
    %166 = vector.shape_cast %165 : vector<1x1x16x160xbf16> to vector<16x160xbf16>
    %cst_171 = arith.constant dense<0.000000e+00> : vector<16x128xf32>
    %167 = tpu.matmul %166, %0, %cst_171 {dimension_numbers = #tpu.dot_dimension_numbers<[1], [0], [0], [1], [0, 0, 1, 1], [], []>} : vector<16x160xbf16>, vector<160x128xbf16>, vector<16x128xf32> -> vector<16x128xf32>
    %168 = arith.maximumf %164, %167 : vector<16x128xf32>
    %c3_172 = arith.constant 3 : index
    %c6_173 = arith.constant 6 : index
    %c0_174 = arith.constant 0 : index
    %c0_175 = arith.constant 0 : index
    %169 = vector.load %arg1[%c3_172, %c6_173, %c0_174, %c0_175] : memref<4x25x16x160xbf16, #tpu.memory_space<vmem>>, vector<1x1x16x160xbf16>
    %170 = vector.shape_cast %169 : vector<1x1x16x160xbf16> to vector<16x160xbf16>
    %cst_176 = arith.constant dense<0.000000e+00> : vector<16x128xf32>
    %171 = tpu.matmul %170, %0, %cst_176 {dimension_numbers = #tpu.dot_dimension_numbers<[1], [0], [0], [1], [0, 0, 1, 1], [], []>} : vector<16x160xbf16>, vector<160x128xbf16>, vector<16x128xf32> -> vector<16x128xf32>
    %172 = arith.maximumf %168, %171 : vector<16x128xf32>
    %c0_177 = arith.constant 0 : index
    %c0_178 = arith.constant 0 : index
    %173 = vector.load %arg3[%c0_177, %c0_178] : memref<1x128xf32, #tpu.memory_space<vmem>>, vector<1x128xf32>
    %174 = vector.broadcast %173 : vector<1x128xf32> to vector<16x128xf32>
    %175 = arith.addf %172, %174 : vector<16x128xf32>
    %cst_179 = arith.constant 0.000000e+00 : f32
    %176 = vector.broadcast %cst_179 : f32 to vector<16x128xf32>
    %177 = arith.maximumf %175, %176 : vector<16x128xf32>
    %178 = vector.extract_strided_slice %177 {offsets = [0, 0], sizes = [16, 16], strides = [1, 1]} : vector<16x128xf32> to vector<16x16xf32>
    %179 = arith.truncf %178 : vector<16x16xf32> to vector<16x16xbf16>
    %c6_180 = arith.constant 6 : index
    %c0_181 = arith.constant 0 : index
    %c0_182 = arith.constant 0 : index
    %180 = vector.load %arg4[%c6_180, %c0_181, %c0_182] : memref<25x16x128xbf16, #tpu.memory_space<vmem>>, vector<1x16x128xbf16>
    %181 = vector.shape_cast %180 : vector<1x16x128xbf16> to vector<16x128xbf16>
    %cst_183 = arith.constant dense<0.000000e+00> : vector<16x128xf32>
    %182 = tpu.matmul %179, %181, %cst_183 {dimension_numbers = #tpu.dot_dimension_numbers<[1], [0], [0], [1], [0, 0, 1, 1], [], []>} : vector<16x16xbf16>, vector<16x128xbf16>, vector<16x128xf32> -> vector<16x128xf32>
    %183 = arith.addf %157, %182 : vector<16x128xf32>
    %c0_184 = arith.constant 0 : index
    %c7 = arith.constant 7 : index
    %c0_185 = arith.constant 0 : index
    %c0_186 = arith.constant 0 : index
    %184 = vector.load %arg1[%c0_184, %c7, %c0_185, %c0_186] : memref<4x25x16x160xbf16, #tpu.memory_space<vmem>>, vector<1x1x16x160xbf16>
    %185 = vector.shape_cast %184 : vector<1x1x16x160xbf16> to vector<16x160xbf16>
    %cst_187 = arith.constant dense<0.000000e+00> : vector<16x128xf32>
    %186 = tpu.matmul %185, %0, %cst_187 {dimension_numbers = #tpu.dot_dimension_numbers<[1], [0], [0], [1], [0, 0, 1, 1], [], []>} : vector<16x160xbf16>, vector<160x128xbf16>, vector<16x128xf32> -> vector<16x128xf32>
    %c1_188 = arith.constant 1 : index
    %c7_189 = arith.constant 7 : index
    %c0_190 = arith.constant 0 : index
    %c0_191 = arith.constant 0 : index
    %187 = vector.load %arg1[%c1_188, %c7_189, %c0_190, %c0_191] : memref<4x25x16x160xbf16, #tpu.memory_space<vmem>>, vector<1x1x16x160xbf16>
    %188 = vector.shape_cast %187 : vector<1x1x16x160xbf16> to vector<16x160xbf16>
    %cst_192 = arith.constant dense<0.000000e+00> : vector<16x128xf32>
    %189 = tpu.matmul %188, %0, %cst_192 {dimension_numbers = #tpu.dot_dimension_numbers<[1], [0], [0], [1], [0, 0, 1, 1], [], []>} : vector<16x160xbf16>, vector<160x128xbf16>, vector<16x128xf32> -> vector<16x128xf32>
    %190 = arith.maximumf %186, %189 : vector<16x128xf32>
    %c2_193 = arith.constant 2 : index
    %c7_194 = arith.constant 7 : index
    %c0_195 = arith.constant 0 : index
    %c0_196 = arith.constant 0 : index
    %191 = vector.load %arg1[%c2_193, %c7_194, %c0_195, %c0_196] : memref<4x25x16x160xbf16, #tpu.memory_space<vmem>>, vector<1x1x16x160xbf16>
    %192 = vector.shape_cast %191 : vector<1x1x16x160xbf16> to vector<16x160xbf16>
    %cst_197 = arith.constant dense<0.000000e+00> : vector<16x128xf32>
    %193 = tpu.matmul %192, %0, %cst_197 {dimension_numbers = #tpu.dot_dimension_numbers<[1], [0], [0], [1], [0, 0, 1, 1], [], []>} : vector<16x160xbf16>, vector<160x128xbf16>, vector<16x128xf32> -> vector<16x128xf32>
    %194 = arith.maximumf %190, %193 : vector<16x128xf32>
    %c3_198 = arith.constant 3 : index
    %c7_199 = arith.constant 7 : index
    %c0_200 = arith.constant 0 : index
    %c0_201 = arith.constant 0 : index
    %195 = vector.load %arg1[%c3_198, %c7_199, %c0_200, %c0_201] : memref<4x25x16x160xbf16, #tpu.memory_space<vmem>>, vector<1x1x16x160xbf16>
    %196 = vector.shape_cast %195 : vector<1x1x16x160xbf16> to vector<16x160xbf16>
    %cst_202 = arith.constant dense<0.000000e+00> : vector<16x128xf32>
    %197 = tpu.matmul %196, %0, %cst_202 {dimension_numbers = #tpu.dot_dimension_numbers<[1], [0], [0], [1], [0, 0, 1, 1], [], []>} : vector<16x160xbf16>, vector<160x128xbf16>, vector<16x128xf32> -> vector<16x128xf32>
    %198 = arith.maximumf %194, %197 : vector<16x128xf32>
    %c0_203 = arith.constant 0 : index
    %c0_204 = arith.constant 0 : index
    %199 = vector.load %arg3[%c0_203, %c0_204] : memref<1x128xf32, #tpu.memory_space<vmem>>, vector<1x128xf32>
    %200 = vector.broadcast %199 : vector<1x128xf32> to vector<16x128xf32>
    %201 = arith.addf %198, %200 : vector<16x128xf32>
    %cst_205 = arith.constant 0.000000e+00 : f32
    %202 = vector.broadcast %cst_205 : f32 to vector<16x128xf32>
    %203 = arith.maximumf %201, %202 : vector<16x128xf32>
    %204 = vector.extract_strided_slice %203 {offsets = [0, 0], sizes = [16, 16], strides = [1, 1]} : vector<16x128xf32> to vector<16x16xf32>
    %205 = arith.truncf %204 : vector<16x16xf32> to vector<16x16xbf16>
    %c7_206 = arith.constant 7 : index
    %c0_207 = arith.constant 0 : index
    %c0_208 = arith.constant 0 : index
    %206 = vector.load %arg4[%c7_206, %c0_207, %c0_208] : memref<25x16x128xbf16, #tpu.memory_space<vmem>>, vector<1x16x128xbf16>
    %207 = vector.shape_cast %206 : vector<1x16x128xbf16> to vector<16x128xbf16>
    %cst_209 = arith.constant dense<0.000000e+00> : vector<16x128xf32>
    %208 = tpu.matmul %205, %207, %cst_209 {dimension_numbers = #tpu.dot_dimension_numbers<[1], [0], [0], [1], [0, 0, 1, 1], [], []>} : vector<16x16xbf16>, vector<16x128xbf16>, vector<16x128xf32> -> vector<16x128xf32>
    %209 = arith.addf %183, %208 : vector<16x128xf32>
    %c0_210 = arith.constant 0 : index
    %c8 = arith.constant 8 : index
    %c0_211 = arith.constant 0 : index
    %c0_212 = arith.constant 0 : index
    %210 = vector.load %arg1[%c0_210, %c8, %c0_211, %c0_212] : memref<4x25x16x160xbf16, #tpu.memory_space<vmem>>, vector<1x1x16x160xbf16>
    %211 = vector.shape_cast %210 : vector<1x1x16x160xbf16> to vector<16x160xbf16>
    %cst_213 = arith.constant dense<0.000000e+00> : vector<16x128xf32>
    %212 = tpu.matmul %211, %0, %cst_213 {dimension_numbers = #tpu.dot_dimension_numbers<[1], [0], [0], [1], [0, 0, 1, 1], [], []>} : vector<16x160xbf16>, vector<160x128xbf16>, vector<16x128xf32> -> vector<16x128xf32>
    %c1_214 = arith.constant 1 : index
    %c8_215 = arith.constant 8 : index
    %c0_216 = arith.constant 0 : index
    %c0_217 = arith.constant 0 : index
    %213 = vector.load %arg1[%c1_214, %c8_215, %c0_216, %c0_217] : memref<4x25x16x160xbf16, #tpu.memory_space<vmem>>, vector<1x1x16x160xbf16>
    %214 = vector.shape_cast %213 : vector<1x1x16x160xbf16> to vector<16x160xbf16>
    %cst_218 = arith.constant dense<0.000000e+00> : vector<16x128xf32>
    %215 = tpu.matmul %214, %0, %cst_218 {dimension_numbers = #tpu.dot_dimension_numbers<[1], [0], [0], [1], [0, 0, 1, 1], [], []>} : vector<16x160xbf16>, vector<160x128xbf16>, vector<16x128xf32> -> vector<16x128xf32>
    %216 = arith.maximumf %212, %215 : vector<16x128xf32>
    %c2_219 = arith.constant 2 : index
    %c8_220 = arith.constant 8 : index
    %c0_221 = arith.constant 0 : index
    %c0_222 = arith.constant 0 : index
    %217 = vector.load %arg1[%c2_219, %c8_220, %c0_221, %c0_222] : memref<4x25x16x160xbf16, #tpu.memory_space<vmem>>, vector<1x1x16x160xbf16>
    %218 = vector.shape_cast %217 : vector<1x1x16x160xbf16> to vector<16x160xbf16>
    %cst_223 = arith.constant dense<0.000000e+00> : vector<16x128xf32>
    %219 = tpu.matmul %218, %0, %cst_223 {dimension_numbers = #tpu.dot_dimension_numbers<[1], [0], [0], [1], [0, 0, 1, 1], [], []>} : vector<16x160xbf16>, vector<160x128xbf16>, vector<16x128xf32> -> vector<16x128xf32>
    %220 = arith.maximumf %216, %219 : vector<16x128xf32>
    %c3_224 = arith.constant 3 : index
    %c8_225 = arith.constant 8 : index
    %c0_226 = arith.constant 0 : index
    %c0_227 = arith.constant 0 : index
    %221 = vector.load %arg1[%c3_224, %c8_225, %c0_226, %c0_227] : memref<4x25x16x160xbf16, #tpu.memory_space<vmem>>, vector<1x1x16x160xbf16>
    %222 = vector.shape_cast %221 : vector<1x1x16x160xbf16> to vector<16x160xbf16>
    %cst_228 = arith.constant dense<0.000000e+00> : vector<16x128xf32>
    %223 = tpu.matmul %222, %0, %cst_228 {dimension_numbers = #tpu.dot_dimension_numbers<[1], [0], [0], [1], [0, 0, 1, 1], [], []>} : vector<16x160xbf16>, vector<160x128xbf16>, vector<16x128xf32> -> vector<16x128xf32>
    %224 = arith.maximumf %220, %223 : vector<16x128xf32>
    %c0_229 = arith.constant 0 : index
    %c0_230 = arith.constant 0 : index
    %225 = vector.load %arg3[%c0_229, %c0_230] : memref<1x128xf32, #tpu.memory_space<vmem>>, vector<1x128xf32>
    %226 = vector.broadcast %225 : vector<1x128xf32> to vector<16x128xf32>
    %227 = arith.addf %224, %226 : vector<16x128xf32>
    %cst_231 = arith.constant 0.000000e+00 : f32
    %228 = vector.broadcast %cst_231 : f32 to vector<16x128xf32>
    %229 = arith.maximumf %227, %228 : vector<16x128xf32>
    %230 = vector.extract_strided_slice %229 {offsets = [0, 0], sizes = [16, 16], strides = [1, 1]} : vector<16x128xf32> to vector<16x16xf32>
    %231 = arith.truncf %230 : vector<16x16xf32> to vector<16x16xbf16>
    %c8_232 = arith.constant 8 : index
    %c0_233 = arith.constant 0 : index
    %c0_234 = arith.constant 0 : index
    %232 = vector.load %arg4[%c8_232, %c0_233, %c0_234] : memref<25x16x128xbf16, #tpu.memory_space<vmem>>, vector<1x16x128xbf16>
    %233 = vector.shape_cast %232 : vector<1x16x128xbf16> to vector<16x128xbf16>
    %cst_235 = arith.constant dense<0.000000e+00> : vector<16x128xf32>
    %234 = tpu.matmul %231, %233, %cst_235 {dimension_numbers = #tpu.dot_dimension_numbers<[1], [0], [0], [1], [0, 0, 1, 1], [], []>} : vector<16x16xbf16>, vector<16x128xbf16>, vector<16x128xf32> -> vector<16x128xf32>
    %235 = arith.addf %209, %234 : vector<16x128xf32>
    %c0_236 = arith.constant 0 : index
    %c9 = arith.constant 9 : index
    %c0_237 = arith.constant 0 : index
    %c0_238 = arith.constant 0 : index
    %236 = vector.load %arg1[%c0_236, %c9, %c0_237, %c0_238] : memref<4x25x16x160xbf16, #tpu.memory_space<vmem>>, vector<1x1x16x160xbf16>
    %237 = vector.shape_cast %236 : vector<1x1x16x160xbf16> to vector<16x160xbf16>
    %cst_239 = arith.constant dense<0.000000e+00> : vector<16x128xf32>
    %238 = tpu.matmul %237, %0, %cst_239 {dimension_numbers = #tpu.dot_dimension_numbers<[1], [0], [0], [1], [0, 0, 1, 1], [], []>} : vector<16x160xbf16>, vector<160x128xbf16>, vector<16x128xf32> -> vector<16x128xf32>
    %c1_240 = arith.constant 1 : index
    %c9_241 = arith.constant 9 : index
    %c0_242 = arith.constant 0 : index
    %c0_243 = arith.constant 0 : index
    %239 = vector.load %arg1[%c1_240, %c9_241, %c0_242, %c0_243] : memref<4x25x16x160xbf16, #tpu.memory_space<vmem>>, vector<1x1x16x160xbf16>
    %240 = vector.shape_cast %239 : vector<1x1x16x160xbf16> to vector<16x160xbf16>
    %cst_244 = arith.constant dense<0.000000e+00> : vector<16x128xf32>
    %241 = tpu.matmul %240, %0, %cst_244 {dimension_numbers = #tpu.dot_dimension_numbers<[1], [0], [0], [1], [0, 0, 1, 1], [], []>} : vector<16x160xbf16>, vector<160x128xbf16>, vector<16x128xf32> -> vector<16x128xf32>
    %242 = arith.maximumf %238, %241 : vector<16x128xf32>
    %c2_245 = arith.constant 2 : index
    %c9_246 = arith.constant 9 : index
    %c0_247 = arith.constant 0 : index
    %c0_248 = arith.constant 0 : index
    %243 = vector.load %arg1[%c2_245, %c9_246, %c0_247, %c0_248] : memref<4x25x16x160xbf16, #tpu.memory_space<vmem>>, vector<1x1x16x160xbf16>
    %244 = vector.shape_cast %243 : vector<1x1x16x160xbf16> to vector<16x160xbf16>
    %cst_249 = arith.constant dense<0.000000e+00> : vector<16x128xf32>
    %245 = tpu.matmul %244, %0, %cst_249 {dimension_numbers = #tpu.dot_dimension_numbers<[1], [0], [0], [1], [0, 0, 1, 1], [], []>} : vector<16x160xbf16>, vector<160x128xbf16>, vector<16x128xf32> -> vector<16x128xf32>
    %246 = arith.maximumf %242, %245 : vector<16x128xf32>
    %c3_250 = arith.constant 3 : index
    %c9_251 = arith.constant 9 : index
    %c0_252 = arith.constant 0 : index
    %c0_253 = arith.constant 0 : index
    %247 = vector.load %arg1[%c3_250, %c9_251, %c0_252, %c0_253] : memref<4x25x16x160xbf16, #tpu.memory_space<vmem>>, vector<1x1x16x160xbf16>
    %248 = vector.shape_cast %247 : vector<1x1x16x160xbf16> to vector<16x160xbf16>
    %cst_254 = arith.constant dense<0.000000e+00> : vector<16x128xf32>
    %249 = tpu.matmul %248, %0, %cst_254 {dimension_numbers = #tpu.dot_dimension_numbers<[1], [0], [0], [1], [0, 0, 1, 1], [], []>} : vector<16x160xbf16>, vector<160x128xbf16>, vector<16x128xf32> -> vector<16x128xf32>
    %250 = arith.maximumf %246, %249 : vector<16x128xf32>
    %c0_255 = arith.constant 0 : index
    %c0_256 = arith.constant 0 : index
    %251 = vector.load %arg3[%c0_255, %c0_256] : memref<1x128xf32, #tpu.memory_space<vmem>>, vector<1x128xf32>
    %252 = vector.broadcast %251 : vector<1x128xf32> to vector<16x128xf32>
    %253 = arith.addf %250, %252 : vector<16x128xf32>
    %cst_257 = arith.constant 0.000000e+00 : f32
    %254 = vector.broadcast %cst_257 : f32 to vector<16x128xf32>
    %255 = arith.maximumf %253, %254 : vector<16x128xf32>
    %256 = vector.extract_strided_slice %255 {offsets = [0, 0], sizes = [16, 16], strides = [1, 1]} : vector<16x128xf32> to vector<16x16xf32>
    %257 = arith.truncf %256 : vector<16x16xf32> to vector<16x16xbf16>
    %c9_258 = arith.constant 9 : index
    %c0_259 = arith.constant 0 : index
    %c0_260 = arith.constant 0 : index
    %258 = vector.load %arg4[%c9_258, %c0_259, %c0_260] : memref<25x16x128xbf16, #tpu.memory_space<vmem>>, vector<1x16x128xbf16>
    %259 = vector.shape_cast %258 : vector<1x16x128xbf16> to vector<16x128xbf16>
    %cst_261 = arith.constant dense<0.000000e+00> : vector<16x128xf32>
    %260 = tpu.matmul %257, %259, %cst_261 {dimension_numbers = #tpu.dot_dimension_numbers<[1], [0], [0], [1], [0, 0, 1, 1], [], []>} : vector<16x16xbf16>, vector<16x128xbf16>, vector<16x128xf32> -> vector<16x128xf32>
    %261 = arith.addf %235, %260 : vector<16x128xf32>
    %c0_262 = arith.constant 0 : index
    %c10 = arith.constant 10 : index
    %c0_263 = arith.constant 0 : index
    %c0_264 = arith.constant 0 : index
    %262 = vector.load %arg1[%c0_262, %c10, %c0_263, %c0_264] : memref<4x25x16x160xbf16, #tpu.memory_space<vmem>>, vector<1x1x16x160xbf16>
    %263 = vector.shape_cast %262 : vector<1x1x16x160xbf16> to vector<16x160xbf16>
    %cst_265 = arith.constant dense<0.000000e+00> : vector<16x128xf32>
    %264 = tpu.matmul %263, %0, %cst_265 {dimension_numbers = #tpu.dot_dimension_numbers<[1], [0], [0], [1], [0, 0, 1, 1], [], []>} : vector<16x160xbf16>, vector<160x128xbf16>, vector<16x128xf32> -> vector<16x128xf32>
    %c1_266 = arith.constant 1 : index
    %c10_267 = arith.constant 10 : index
    %c0_268 = arith.constant 0 : index
    %c0_269 = arith.constant 0 : index
    %265 = vector.load %arg1[%c1_266, %c10_267, %c0_268, %c0_269] : memref<4x25x16x160xbf16, #tpu.memory_space<vmem>>, vector<1x1x16x160xbf16>
    %266 = vector.shape_cast %265 : vector<1x1x16x160xbf16> to vector<16x160xbf16>
    %cst_270 = arith.constant dense<0.000000e+00> : vector<16x128xf32>
    %267 = tpu.matmul %266, %0, %cst_270 {dimension_numbers = #tpu.dot_dimension_numbers<[1], [0], [0], [1], [0, 0, 1, 1], [], []>} : vector<16x160xbf16>, vector<160x128xbf16>, vector<16x128xf32> -> vector<16x128xf32>
    %268 = arith.maximumf %264, %267 : vector<16x128xf32>
    %c2_271 = arith.constant 2 : index
    %c10_272 = arith.constant 10 : index
    %c0_273 = arith.constant 0 : index
    %c0_274 = arith.constant 0 : index
    %269 = vector.load %arg1[%c2_271, %c10_272, %c0_273, %c0_274] : memref<4x25x16x160xbf16, #tpu.memory_space<vmem>>, vector<1x1x16x160xbf16>
    %270 = vector.shape_cast %269 : vector<1x1x16x160xbf16> to vector<16x160xbf16>
    %cst_275 = arith.constant dense<0.000000e+00> : vector<16x128xf32>
    %271 = tpu.matmul %270, %0, %cst_275 {dimension_numbers = #tpu.dot_dimension_numbers<[1], [0], [0], [1], [0, 0, 1, 1], [], []>} : vector<16x160xbf16>, vector<160x128xbf16>, vector<16x128xf32> -> vector<16x128xf32>
    %272 = arith.maximumf %268, %271 : vector<16x128xf32>
    %c3_276 = arith.constant 3 : index
    %c10_277 = arith.constant 10 : index
    %c0_278 = arith.constant 0 : index
    %c0_279 = arith.constant 0 : index
    %273 = vector.load %arg1[%c3_276, %c10_277, %c0_278, %c0_279] : memref<4x25x16x160xbf16, #tpu.memory_space<vmem>>, vector<1x1x16x160xbf16>
    %274 = vector.shape_cast %273 : vector<1x1x16x160xbf16> to vector<16x160xbf16>
    %cst_280 = arith.constant dense<0.000000e+00> : vector<16x128xf32>
    %275 = tpu.matmul %274, %0, %cst_280 {dimension_numbers = #tpu.dot_dimension_numbers<[1], [0], [0], [1], [0, 0, 1, 1], [], []>} : vector<16x160xbf16>, vector<160x128xbf16>, vector<16x128xf32> -> vector<16x128xf32>
    %276 = arith.maximumf %272, %275 : vector<16x128xf32>
    %c0_281 = arith.constant 0 : index
    %c0_282 = arith.constant 0 : index
    %277 = vector.load %arg3[%c0_281, %c0_282] : memref<1x128xf32, #tpu.memory_space<vmem>>, vector<1x128xf32>
    %278 = vector.broadcast %277 : vector<1x128xf32> to vector<16x128xf32>
    %279 = arith.addf %276, %278 : vector<16x128xf32>
    %cst_283 = arith.constant 0.000000e+00 : f32
    %280 = vector.broadcast %cst_283 : f32 to vector<16x128xf32>
    %281 = arith.maximumf %279, %280 : vector<16x128xf32>
    %282 = vector.extract_strided_slice %281 {offsets = [0, 0], sizes = [16, 16], strides = [1, 1]} : vector<16x128xf32> to vector<16x16xf32>
    %283 = arith.truncf %282 : vector<16x16xf32> to vector<16x16xbf16>
    %c10_284 = arith.constant 10 : index
    %c0_285 = arith.constant 0 : index
    %c0_286 = arith.constant 0 : index
    %284 = vector.load %arg4[%c10_284, %c0_285, %c0_286] : memref<25x16x128xbf16, #tpu.memory_space<vmem>>, vector<1x16x128xbf16>
    %285 = vector.shape_cast %284 : vector<1x16x128xbf16> to vector<16x128xbf16>
    %cst_287 = arith.constant dense<0.000000e+00> : vector<16x128xf32>
    %286 = tpu.matmul %283, %285, %cst_287 {dimension_numbers = #tpu.dot_dimension_numbers<[1], [0], [0], [1], [0, 0, 1, 1], [], []>} : vector<16x16xbf16>, vector<16x128xbf16>, vector<16x128xf32> -> vector<16x128xf32>
    %287 = arith.addf %261, %286 : vector<16x128xf32>
    %c0_288 = arith.constant 0 : index
    %c11 = arith.constant 11 : index
    %c0_289 = arith.constant 0 : index
    %c0_290 = arith.constant 0 : index
    %288 = vector.load %arg1[%c0_288, %c11, %c0_289, %c0_290] : memref<4x25x16x160xbf16, #tpu.memory_space<vmem>>, vector<1x1x16x160xbf16>
    %289 = vector.shape_cast %288 : vector<1x1x16x160xbf16> to vector<16x160xbf16>
    %cst_291 = arith.constant dense<0.000000e+00> : vector<16x128xf32>
    %290 = tpu.matmul %289, %0, %cst_291 {dimension_numbers = #tpu.dot_dimension_numbers<[1], [0], [0], [1], [0, 0, 1, 1], [], []>} : vector<16x160xbf16>, vector<160x128xbf16>, vector<16x128xf32> -> vector<16x128xf32>
    %c1_292 = arith.constant 1 : index
    %c11_293 = arith.constant 11 : index
    %c0_294 = arith.constant 0 : index
    %c0_295 = arith.constant 0 : index
    %291 = vector.load %arg1[%c1_292, %c11_293, %c0_294, %c0_295] : memref<4x25x16x160xbf16, #tpu.memory_space<vmem>>, vector<1x1x16x160xbf16>
    %292 = vector.shape_cast %291 : vector<1x1x16x160xbf16> to vector<16x160xbf16>
    %cst_296 = arith.constant dense<0.000000e+00> : vector<16x128xf32>
    %293 = tpu.matmul %292, %0, %cst_296 {dimension_numbers = #tpu.dot_dimension_numbers<[1], [0], [0], [1], [0, 0, 1, 1], [], []>} : vector<16x160xbf16>, vector<160x128xbf16>, vector<16x128xf32> -> vector<16x128xf32>
    %294 = arith.maximumf %290, %293 : vector<16x128xf32>
    %c2_297 = arith.constant 2 : index
    %c11_298 = arith.constant 11 : index
    %c0_299 = arith.constant 0 : index
    %c0_300 = arith.constant 0 : index
    %295 = vector.load %arg1[%c2_297, %c11_298, %c0_299, %c0_300] : memref<4x25x16x160xbf16, #tpu.memory_space<vmem>>, vector<1x1x16x160xbf16>
    %296 = vector.shape_cast %295 : vector<1x1x16x160xbf16> to vector<16x160xbf16>
    %cst_301 = arith.constant dense<0.000000e+00> : vector<16x128xf32>
    %297 = tpu.matmul %296, %0, %cst_301 {dimension_numbers = #tpu.dot_dimension_numbers<[1], [0], [0], [1], [0, 0, 1, 1], [], []>} : vector<16x160xbf16>, vector<160x128xbf16>, vector<16x128xf32> -> vector<16x128xf32>
    %298 = arith.maximumf %294, %297 : vector<16x128xf32>
    %c3_302 = arith.constant 3 : index
    %c11_303 = arith.constant 11 : index
    %c0_304 = arith.constant 0 : index
    %c0_305 = arith.constant 0 : index
    %299 = vector.load %arg1[%c3_302, %c11_303, %c0_304, %c0_305] : memref<4x25x16x160xbf16, #tpu.memory_space<vmem>>, vector<1x1x16x160xbf16>
    %300 = vector.shape_cast %299 : vector<1x1x16x160xbf16> to vector<16x160xbf16>
    %cst_306 = arith.constant dense<0.000000e+00> : vector<16x128xf32>
    %301 = tpu.matmul %300, %0, %cst_306 {dimension_numbers = #tpu.dot_dimension_numbers<[1], [0], [0], [1], [0, 0, 1, 1], [], []>} : vector<16x160xbf16>, vector<160x128xbf16>, vector<16x128xf32> -> vector<16x128xf32>
    %302 = arith.maximumf %298, %301 : vector<16x128xf32>
    %c0_307 = arith.constant 0 : index
    %c0_308 = arith.constant 0 : index
    %303 = vector.load %arg3[%c0_307, %c0_308] : memref<1x128xf32, #tpu.memory_space<vmem>>, vector<1x128xf32>
    %304 = vector.broadcast %303 : vector<1x128xf32> to vector<16x128xf32>
    %305 = arith.addf %302, %304 : vector<16x128xf32>
    %cst_309 = arith.constant 0.000000e+00 : f32
    %306 = vector.broadcast %cst_309 : f32 to vector<16x128xf32>
    %307 = arith.maximumf %305, %306 : vector<16x128xf32>
    %308 = vector.extract_strided_slice %307 {offsets = [0, 0], sizes = [16, 16], strides = [1, 1]} : vector<16x128xf32> to vector<16x16xf32>
    %309 = arith.truncf %308 : vector<16x16xf32> to vector<16x16xbf16>
    %c11_310 = arith.constant 11 : index
    %c0_311 = arith.constant 0 : index
    %c0_312 = arith.constant 0 : index
    %310 = vector.load %arg4[%c11_310, %c0_311, %c0_312] : memref<25x16x128xbf16, #tpu.memory_space<vmem>>, vector<1x16x128xbf16>
    %311 = vector.shape_cast %310 : vector<1x16x128xbf16> to vector<16x128xbf16>
    %cst_313 = arith.constant dense<0.000000e+00> : vector<16x128xf32>
    %312 = tpu.matmul %309, %311, %cst_313 {dimension_numbers = #tpu.dot_dimension_numbers<[1], [0], [0], [1], [0, 0, 1, 1], [], []>} : vector<16x16xbf16>, vector<16x128xbf16>, vector<16x128xf32> -> vector<16x128xf32>
    %313 = arith.addf %287, %312 : vector<16x128xf32>
    %c0_314 = arith.constant 0 : index
    %c12 = arith.constant 12 : index
    %c0_315 = arith.constant 0 : index
    %c0_316 = arith.constant 0 : index
    %314 = vector.load %arg1[%c0_314, %c12, %c0_315, %c0_316] : memref<4x25x16x160xbf16, #tpu.memory_space<vmem>>, vector<1x1x16x160xbf16>
    %315 = vector.shape_cast %314 : vector<1x1x16x160xbf16> to vector<16x160xbf16>
    %cst_317 = arith.constant dense<0.000000e+00> : vector<16x128xf32>
    %316 = tpu.matmul %315, %0, %cst_317 {dimension_numbers = #tpu.dot_dimension_numbers<[1], [0], [0], [1], [0, 0, 1, 1], [], []>} : vector<16x160xbf16>, vector<160x128xbf16>, vector<16x128xf32> -> vector<16x128xf32>
    %c1_318 = arith.constant 1 : index
    %c12_319 = arith.constant 12 : index
    %c0_320 = arith.constant 0 : index
    %c0_321 = arith.constant 0 : index
    %317 = vector.load %arg1[%c1_318, %c12_319, %c0_320, %c0_321] : memref<4x25x16x160xbf16, #tpu.memory_space<vmem>>, vector<1x1x16x160xbf16>
    %318 = vector.shape_cast %317 : vector<1x1x16x160xbf16> to vector<16x160xbf16>
    %cst_322 = arith.constant dense<0.000000e+00> : vector<16x128xf32>
    %319 = tpu.matmul %318, %0, %cst_322 {dimension_numbers = #tpu.dot_dimension_numbers<[1], [0], [0], [1], [0, 0, 1, 1], [], []>} : vector<16x160xbf16>, vector<160x128xbf16>, vector<16x128xf32> -> vector<16x128xf32>
    %320 = arith.maximumf %316, %319 : vector<16x128xf32>
    %c2_323 = arith.constant 2 : index
    %c12_324 = arith.constant 12 : index
    %c0_325 = arith.constant 0 : index
    %c0_326 = arith.constant 0 : index
    %321 = vector.load %arg1[%c2_323, %c12_324, %c0_325, %c0_326] : memref<4x25x16x160xbf16, #tpu.memory_space<vmem>>, vector<1x1x16x160xbf16>
    %322 = vector.shape_cast %321 : vector<1x1x16x160xbf16> to vector<16x160xbf16>
    %cst_327 = arith.constant dense<0.000000e+00> : vector<16x128xf32>
    %323 = tpu.matmul %322, %0, %cst_327 {dimension_numbers = #tpu.dot_dimension_numbers<[1], [0], [0], [1], [0, 0, 1, 1], [], []>} : vector<16x160xbf16>, vector<160x128xbf16>, vector<16x128xf32> -> vector<16x128xf32>
    %324 = arith.maximumf %320, %323 : vector<16x128xf32>
    %c3_328 = arith.constant 3 : index
    %c12_329 = arith.constant 12 : index
    %c0_330 = arith.constant 0 : index
    %c0_331 = arith.constant 0 : index
    %325 = vector.load %arg1[%c3_328, %c12_329, %c0_330, %c0_331] : memref<4x25x16x160xbf16, #tpu.memory_space<vmem>>, vector<1x1x16x160xbf16>
    %326 = vector.shape_cast %325 : vector<1x1x16x160xbf16> to vector<16x160xbf16>
    %cst_332 = arith.constant dense<0.000000e+00> : vector<16x128xf32>
    %327 = tpu.matmul %326, %0, %cst_332 {dimension_numbers = #tpu.dot_dimension_numbers<[1], [0], [0], [1], [0, 0, 1, 1], [], []>} : vector<16x160xbf16>, vector<160x128xbf16>, vector<16x128xf32> -> vector<16x128xf32>
    %328 = arith.maximumf %324, %327 : vector<16x128xf32>
    %c0_333 = arith.constant 0 : index
    %c0_334 = arith.constant 0 : index
    %329 = vector.load %arg3[%c0_333, %c0_334] : memref<1x128xf32, #tpu.memory_space<vmem>>, vector<1x128xf32>
    %330 = vector.broadcast %329 : vector<1x128xf32> to vector<16x128xf32>
    %331 = arith.addf %328, %330 : vector<16x128xf32>
    %cst_335 = arith.constant 0.000000e+00 : f32
    %332 = vector.broadcast %cst_335 : f32 to vector<16x128xf32>
    %333 = arith.maximumf %331, %332 : vector<16x128xf32>
    %334 = vector.extract_strided_slice %333 {offsets = [0, 0], sizes = [16, 16], strides = [1, 1]} : vector<16x128xf32> to vector<16x16xf32>
    %335 = arith.truncf %334 : vector<16x16xf32> to vector<16x16xbf16>
    %c12_336 = arith.constant 12 : index
    %c0_337 = arith.constant 0 : index
    %c0_338 = arith.constant 0 : index
    %336 = vector.load %arg4[%c12_336, %c0_337, %c0_338] : memref<25x16x128xbf16, #tpu.memory_space<vmem>>, vector<1x16x128xbf16>
    %337 = vector.shape_cast %336 : vector<1x16x128xbf16> to vector<16x128xbf16>
    %cst_339 = arith.constant dense<0.000000e+00> : vector<16x128xf32>
    %338 = tpu.matmul %335, %337, %cst_339 {dimension_numbers = #tpu.dot_dimension_numbers<[1], [0], [0], [1], [0, 0, 1, 1], [], []>} : vector<16x16xbf16>, vector<16x128xbf16>, vector<16x128xf32> -> vector<16x128xf32>
    %339 = arith.addf %313, %338 : vector<16x128xf32>
    %c0_340 = arith.constant 0 : index
    %c13 = arith.constant 13 : index
    %c0_341 = arith.constant 0 : index
    %c0_342 = arith.constant 0 : index
    %340 = vector.load %arg1[%c0_340, %c13, %c0_341, %c0_342] : memref<4x25x16x160xbf16, #tpu.memory_space<vmem>>, vector<1x1x16x160xbf16>
    %341 = vector.shape_cast %340 : vector<1x1x16x160xbf16> to vector<16x160xbf16>
    %cst_343 = arith.constant dense<0.000000e+00> : vector<16x128xf32>
    %342 = tpu.matmul %341, %0, %cst_343 {dimension_numbers = #tpu.dot_dimension_numbers<[1], [0], [0], [1], [0, 0, 1, 1], [], []>} : vector<16x160xbf16>, vector<160x128xbf16>, vector<16x128xf32> -> vector<16x128xf32>
    %c1_344 = arith.constant 1 : index
    %c13_345 = arith.constant 13 : index
    %c0_346 = arith.constant 0 : index
    %c0_347 = arith.constant 0 : index
    %343 = vector.load %arg1[%c1_344, %c13_345, %c0_346, %c0_347] : memref<4x25x16x160xbf16, #tpu.memory_space<vmem>>, vector<1x1x16x160xbf16>
    %344 = vector.shape_cast %343 : vector<1x1x16x160xbf16> to vector<16x160xbf16>
    %cst_348 = arith.constant dense<0.000000e+00> : vector<16x128xf32>
    %345 = tpu.matmul %344, %0, %cst_348 {dimension_numbers = #tpu.dot_dimension_numbers<[1], [0], [0], [1], [0, 0, 1, 1], [], []>} : vector<16x160xbf16>, vector<160x128xbf16>, vector<16x128xf32> -> vector<16x128xf32>
    %346 = arith.maximumf %342, %345 : vector<16x128xf32>
    %c2_349 = arith.constant 2 : index
    %c13_350 = arith.constant 13 : index
    %c0_351 = arith.constant 0 : index
    %c0_352 = arith.constant 0 : index
    %347 = vector.load %arg1[%c2_349, %c13_350, %c0_351, %c0_352] : memref<4x25x16x160xbf16, #tpu.memory_space<vmem>>, vector<1x1x16x160xbf16>
    %348 = vector.shape_cast %347 : vector<1x1x16x160xbf16> to vector<16x160xbf16>
    %cst_353 = arith.constant dense<0.000000e+00> : vector<16x128xf32>
    %349 = tpu.matmul %348, %0, %cst_353 {dimension_numbers = #tpu.dot_dimension_numbers<[1], [0], [0], [1], [0, 0, 1, 1], [], []>} : vector<16x160xbf16>, vector<160x128xbf16>, vector<16x128xf32> -> vector<16x128xf32>
    %350 = arith.maximumf %346, %349 : vector<16x128xf32>
    %c3_354 = arith.constant 3 : index
    %c13_355 = arith.constant 13 : index
    %c0_356 = arith.constant 0 : index
    %c0_357 = arith.constant 0 : index
    %351 = vector.load %arg1[%c3_354, %c13_355, %c0_356, %c0_357] : memref<4x25x16x160xbf16, #tpu.memory_space<vmem>>, vector<1x1x16x160xbf16>
    %352 = vector.shape_cast %351 : vector<1x1x16x160xbf16> to vector<16x160xbf16>
    %cst_358 = arith.constant dense<0.000000e+00> : vector<16x128xf32>
    %353 = tpu.matmul %352, %0, %cst_358 {dimension_numbers = #tpu.dot_dimension_numbers<[1], [0], [0], [1], [0, 0, 1, 1], [], []>} : vector<16x160xbf16>, vector<160x128xbf16>, vector<16x128xf32> -> vector<16x128xf32>
    %354 = arith.maximumf %350, %353 : vector<16x128xf32>
    %c0_359 = arith.constant 0 : index
    %c0_360 = arith.constant 0 : index
    %355 = vector.load %arg3[%c0_359, %c0_360] : memref<1x128xf32, #tpu.memory_space<vmem>>, vector<1x128xf32>
    %356 = vector.broadcast %355 : vector<1x128xf32> to vector<16x128xf32>
    %357 = arith.addf %354, %356 : vector<16x128xf32>
    %cst_361 = arith.constant 0.000000e+00 : f32
    %358 = vector.broadcast %cst_361 : f32 to vector<16x128xf32>
    %359 = arith.maximumf %357, %358 : vector<16x128xf32>
    %360 = vector.extract_strided_slice %359 {offsets = [0, 0], sizes = [16, 16], strides = [1, 1]} : vector<16x128xf32> to vector<16x16xf32>
    %361 = arith.truncf %360 : vector<16x16xf32> to vector<16x16xbf16>
    %c13_362 = arith.constant 13 : index
    %c0_363 = arith.constant 0 : index
    %c0_364 = arith.constant 0 : index
    %362 = vector.load %arg4[%c13_362, %c0_363, %c0_364] : memref<25x16x128xbf16, #tpu.memory_space<vmem>>, vector<1x16x128xbf16>
    %363 = vector.shape_cast %362 : vector<1x16x128xbf16> to vector<16x128xbf16>
    %cst_365 = arith.constant dense<0.000000e+00> : vector<16x128xf32>
    %364 = tpu.matmul %361, %363, %cst_365 {dimension_numbers = #tpu.dot_dimension_numbers<[1], [0], [0], [1], [0, 0, 1, 1], [], []>} : vector<16x16xbf16>, vector<16x128xbf16>, vector<16x128xf32> -> vector<16x128xf32>
    %365 = arith.addf %339, %364 : vector<16x128xf32>
    %c0_366 = arith.constant 0 : index
    %c14 = arith.constant 14 : index
    %c0_367 = arith.constant 0 : index
    %c0_368 = arith.constant 0 : index
    %366 = vector.load %arg1[%c0_366, %c14, %c0_367, %c0_368] : memref<4x25x16x160xbf16, #tpu.memory_space<vmem>>, vector<1x1x16x160xbf16>
    %367 = vector.shape_cast %366 : vector<1x1x16x160xbf16> to vector<16x160xbf16>
    %cst_369 = arith.constant dense<0.000000e+00> : vector<16x128xf32>
    %368 = tpu.matmul %367, %0, %cst_369 {dimension_numbers = #tpu.dot_dimension_numbers<[1], [0], [0], [1], [0, 0, 1, 1], [], []>} : vector<16x160xbf16>, vector<160x128xbf16>, vector<16x128xf32> -> vector<16x128xf32>
    %c1_370 = arith.constant 1 : index
    %c14_371 = arith.constant 14 : index
    %c0_372 = arith.constant 0 : index
    %c0_373 = arith.constant 0 : index
    %369 = vector.load %arg1[%c1_370, %c14_371, %c0_372, %c0_373] : memref<4x25x16x160xbf16, #tpu.memory_space<vmem>>, vector<1x1x16x160xbf16>
    %370 = vector.shape_cast %369 : vector<1x1x16x160xbf16> to vector<16x160xbf16>
    %cst_374 = arith.constant dense<0.000000e+00> : vector<16x128xf32>
    %371 = tpu.matmul %370, %0, %cst_374 {dimension_numbers = #tpu.dot_dimension_numbers<[1], [0], [0], [1], [0, 0, 1, 1], [], []>} : vector<16x160xbf16>, vector<160x128xbf16>, vector<16x128xf32> -> vector<16x128xf32>
    %372 = arith.maximumf %368, %371 : vector<16x128xf32>
    %c2_375 = arith.constant 2 : index
    %c14_376 = arith.constant 14 : index
    %c0_377 = arith.constant 0 : index
    %c0_378 = arith.constant 0 : index
    %373 = vector.load %arg1[%c2_375, %c14_376, %c0_377, %c0_378] : memref<4x25x16x160xbf16, #tpu.memory_space<vmem>>, vector<1x1x16x160xbf16>
    %374 = vector.shape_cast %373 : vector<1x1x16x160xbf16> to vector<16x160xbf16>
    %cst_379 = arith.constant dense<0.000000e+00> : vector<16x128xf32>
    %375 = tpu.matmul %374, %0, %cst_379 {dimension_numbers = #tpu.dot_dimension_numbers<[1], [0], [0], [1], [0, 0, 1, 1], [], []>} : vector<16x160xbf16>, vector<160x128xbf16>, vector<16x128xf32> -> vector<16x128xf32>
    %376 = arith.maximumf %372, %375 : vector<16x128xf32>
    %c3_380 = arith.constant 3 : index
    %c14_381 = arith.constant 14 : index
    %c0_382 = arith.constant 0 : index
    %c0_383 = arith.constant 0 : index
    %377 = vector.load %arg1[%c3_380, %c14_381, %c0_382, %c0_383] : memref<4x25x16x160xbf16, #tpu.memory_space<vmem>>, vector<1x1x16x160xbf16>
    %378 = vector.shape_cast %377 : vector<1x1x16x160xbf16> to vector<16x160xbf16>
    %cst_384 = arith.constant dense<0.000000e+00> : vector<16x128xf32>
    %379 = tpu.matmul %378, %0, %cst_384 {dimension_numbers = #tpu.dot_dimension_numbers<[1], [0], [0], [1], [0, 0, 1, 1], [], []>} : vector<16x160xbf16>, vector<160x128xbf16>, vector<16x128xf32> -> vector<16x128xf32>
    %380 = arith.maximumf %376, %379 : vector<16x128xf32>
    %c0_385 = arith.constant 0 : index
    %c0_386 = arith.constant 0 : index
    %381 = vector.load %arg3[%c0_385, %c0_386] : memref<1x128xf32, #tpu.memory_space<vmem>>, vector<1x128xf32>
    %382 = vector.broadcast %381 : vector<1x128xf32> to vector<16x128xf32>
    %383 = arith.addf %380, %382 : vector<16x128xf32>
    %cst_387 = arith.constant 0.000000e+00 : f32
    %384 = vector.broadcast %cst_387 : f32 to vector<16x128xf32>
    %385 = arith.maximumf %383, %384 : vector<16x128xf32>
    %386 = vector.extract_strided_slice %385 {offsets = [0, 0], sizes = [16, 16], strides = [1, 1]} : vector<16x128xf32> to vector<16x16xf32>
    %387 = arith.truncf %386 : vector<16x16xf32> to vector<16x16xbf16>
    %c14_388 = arith.constant 14 : index
    %c0_389 = arith.constant 0 : index
    %c0_390 = arith.constant 0 : index
    %388 = vector.load %arg4[%c14_388, %c0_389, %c0_390] : memref<25x16x128xbf16, #tpu.memory_space<vmem>>, vector<1x16x128xbf16>
    %389 = vector.shape_cast %388 : vector<1x16x128xbf16> to vector<16x128xbf16>
    %cst_391 = arith.constant dense<0.000000e+00> : vector<16x128xf32>
    %390 = tpu.matmul %387, %389, %cst_391 {dimension_numbers = #tpu.dot_dimension_numbers<[1], [0], [0], [1], [0, 0, 1, 1], [], []>} : vector<16x16xbf16>, vector<16x128xbf16>, vector<16x128xf32> -> vector<16x128xf32>
    %391 = arith.addf %365, %390 : vector<16x128xf32>
    %c0_392 = arith.constant 0 : index
    %c15 = arith.constant 15 : index
    %c0_393 = arith.constant 0 : index
    %c0_394 = arith.constant 0 : index
    %392 = vector.load %arg1[%c0_392, %c15, %c0_393, %c0_394] : memref<4x25x16x160xbf16, #tpu.memory_space<vmem>>, vector<1x1x16x160xbf16>
    %393 = vector.shape_cast %392 : vector<1x1x16x160xbf16> to vector<16x160xbf16>
    %cst_395 = arith.constant dense<0.000000e+00> : vector<16x128xf32>
    %394 = tpu.matmul %393, %0, %cst_395 {dimension_numbers = #tpu.dot_dimension_numbers<[1], [0], [0], [1], [0, 0, 1, 1], [], []>} : vector<16x160xbf16>, vector<160x128xbf16>, vector<16x128xf32> -> vector<16x128xf32>
    %c1_396 = arith.constant 1 : index
    %c15_397 = arith.constant 15 : index
    %c0_398 = arith.constant 0 : index
    %c0_399 = arith.constant 0 : index
    %395 = vector.load %arg1[%c1_396, %c15_397, %c0_398, %c0_399] : memref<4x25x16x160xbf16, #tpu.memory_space<vmem>>, vector<1x1x16x160xbf16>
    %396 = vector.shape_cast %395 : vector<1x1x16x160xbf16> to vector<16x160xbf16>
    %cst_400 = arith.constant dense<0.000000e+00> : vector<16x128xf32>
    %397 = tpu.matmul %396, %0, %cst_400 {dimension_numbers = #tpu.dot_dimension_numbers<[1], [0], [0], [1], [0, 0, 1, 1], [], []>} : vector<16x160xbf16>, vector<160x128xbf16>, vector<16x128xf32> -> vector<16x128xf32>
    %398 = arith.maximumf %394, %397 : vector<16x128xf32>
    %c2_401 = arith.constant 2 : index
    %c15_402 = arith.constant 15 : index
    %c0_403 = arith.constant 0 : index
    %c0_404 = arith.constant 0 : index
    %399 = vector.load %arg1[%c2_401, %c15_402, %c0_403, %c0_404] : memref<4x25x16x160xbf16, #tpu.memory_space<vmem>>, vector<1x1x16x160xbf16>
    %400 = vector.shape_cast %399 : vector<1x1x16x160xbf16> to vector<16x160xbf16>
    %cst_405 = arith.constant dense<0.000000e+00> : vector<16x128xf32>
    %401 = tpu.matmul %400, %0, %cst_405 {dimension_numbers = #tpu.dot_dimension_numbers<[1], [0], [0], [1], [0, 0, 1, 1], [], []>} : vector<16x160xbf16>, vector<160x128xbf16>, vector<16x128xf32> -> vector<16x128xf32>
    %402 = arith.maximumf %398, %401 : vector<16x128xf32>
    %c3_406 = arith.constant 3 : index
    %c15_407 = arith.constant 15 : index
    %c0_408 = arith.constant 0 : index
    %c0_409 = arith.constant 0 : index
    %403 = vector.load %arg1[%c3_406, %c15_407, %c0_408, %c0_409] : memref<4x25x16x160xbf16, #tpu.memory_space<vmem>>, vector<1x1x16x160xbf16>
    %404 = vector.shape_cast %403 : vector<1x1x16x160xbf16> to vector<16x160xbf16>
    %cst_410 = arith.constant dense<0.000000e+00> : vector<16x128xf32>
    %405 = tpu.matmul %404, %0, %cst_410 {dimension_numbers = #tpu.dot_dimension_numbers<[1], [0], [0], [1], [0, 0, 1, 1], [], []>} : vector<16x160xbf16>, vector<160x128xbf16>, vector<16x128xf32> -> vector<16x128xf32>
    %406 = arith.maximumf %402, %405 : vector<16x128xf32>
    %c0_411 = arith.constant 0 : index
    %c0_412 = arith.constant 0 : index
    %407 = vector.load %arg3[%c0_411, %c0_412] : memref<1x128xf32, #tpu.memory_space<vmem>>, vector<1x128xf32>
    %408 = vector.broadcast %407 : vector<1x128xf32> to vector<16x128xf32>
    %409 = arith.addf %406, %408 : vector<16x128xf32>
    %cst_413 = arith.constant 0.000000e+00 : f32
    %410 = vector.broadcast %cst_413 : f32 to vector<16x128xf32>
    %411 = arith.maximumf %409, %410 : vector<16x128xf32>
    %412 = vector.extract_strided_slice %411 {offsets = [0, 0], sizes = [16, 16], strides = [1, 1]} : vector<16x128xf32> to vector<16x16xf32>
    %413 = arith.truncf %412 : vector<16x16xf32> to vector<16x16xbf16>
    %c15_414 = arith.constant 15 : index
    %c0_415 = arith.constant 0 : index
    %c0_416 = arith.constant 0 : index
    %414 = vector.load %arg4[%c15_414, %c0_415, %c0_416] : memref<25x16x128xbf16, #tpu.memory_space<vmem>>, vector<1x16x128xbf16>
    %415 = vector.shape_cast %414 : vector<1x16x128xbf16> to vector<16x128xbf16>
    %cst_417 = arith.constant dense<0.000000e+00> : vector<16x128xf32>
    %416 = tpu.matmul %413, %415, %cst_417 {dimension_numbers = #tpu.dot_dimension_numbers<[1], [0], [0], [1], [0, 0, 1, 1], [], []>} : vector<16x16xbf16>, vector<16x128xbf16>, vector<16x128xf32> -> vector<16x128xf32>
    %417 = arith.addf %391, %416 : vector<16x128xf32>
    %c0_418 = arith.constant 0 : index
    %c16 = arith.constant 16 : index
    %c0_419 = arith.constant 0 : index
    %c0_420 = arith.constant 0 : index
    %418 = vector.load %arg1[%c0_418, %c16, %c0_419, %c0_420] : memref<4x25x16x160xbf16, #tpu.memory_space<vmem>>, vector<1x1x16x160xbf16>
    %419 = vector.shape_cast %418 : vector<1x1x16x160xbf16> to vector<16x160xbf16>
    %cst_421 = arith.constant dense<0.000000e+00> : vector<16x128xf32>
    %420 = tpu.matmul %419, %0, %cst_421 {dimension_numbers = #tpu.dot_dimension_numbers<[1], [0], [0], [1], [0, 0, 1, 1], [], []>} : vector<16x160xbf16>, vector<160x128xbf16>, vector<16x128xf32> -> vector<16x128xf32>
    %c1_422 = arith.constant 1 : index
    %c16_423 = arith.constant 16 : index
    %c0_424 = arith.constant 0 : index
    %c0_425 = arith.constant 0 : index
    %421 = vector.load %arg1[%c1_422, %c16_423, %c0_424, %c0_425] : memref<4x25x16x160xbf16, #tpu.memory_space<vmem>>, vector<1x1x16x160xbf16>
    %422 = vector.shape_cast %421 : vector<1x1x16x160xbf16> to vector<16x160xbf16>
    %cst_426 = arith.constant dense<0.000000e+00> : vector<16x128xf32>
    %423 = tpu.matmul %422, %0, %cst_426 {dimension_numbers = #tpu.dot_dimension_numbers<[1], [0], [0], [1], [0, 0, 1, 1], [], []>} : vector<16x160xbf16>, vector<160x128xbf16>, vector<16x128xf32> -> vector<16x128xf32>
    %424 = arith.maximumf %420, %423 : vector<16x128xf32>
    %c2_427 = arith.constant 2 : index
    %c16_428 = arith.constant 16 : index
    %c0_429 = arith.constant 0 : index
    %c0_430 = arith.constant 0 : index
    %425 = vector.load %arg1[%c2_427, %c16_428, %c0_429, %c0_430] : memref<4x25x16x160xbf16, #tpu.memory_space<vmem>>, vector<1x1x16x160xbf16>
    %426 = vector.shape_cast %425 : vector<1x1x16x160xbf16> to vector<16x160xbf16>
    %cst_431 = arith.constant dense<0.000000e+00> : vector<16x128xf32>
    %427 = tpu.matmul %426, %0, %cst_431 {dimension_numbers = #tpu.dot_dimension_numbers<[1], [0], [0], [1], [0, 0, 1, 1], [], []>} : vector<16x160xbf16>, vector<160x128xbf16>, vector<16x128xf32> -> vector<16x128xf32>
    %428 = arith.maximumf %424, %427 : vector<16x128xf32>
    %c3_432 = arith.constant 3 : index
    %c16_433 = arith.constant 16 : index
    %c0_434 = arith.constant 0 : index
    %c0_435 = arith.constant 0 : index
    %429 = vector.load %arg1[%c3_432, %c16_433, %c0_434, %c0_435] : memref<4x25x16x160xbf16, #tpu.memory_space<vmem>>, vector<1x1x16x160xbf16>
    %430 = vector.shape_cast %429 : vector<1x1x16x160xbf16> to vector<16x160xbf16>
    %cst_436 = arith.constant dense<0.000000e+00> : vector<16x128xf32>
    %431 = tpu.matmul %430, %0, %cst_436 {dimension_numbers = #tpu.dot_dimension_numbers<[1], [0], [0], [1], [0, 0, 1, 1], [], []>} : vector<16x160xbf16>, vector<160x128xbf16>, vector<16x128xf32> -> vector<16x128xf32>
    %432 = arith.maximumf %428, %431 : vector<16x128xf32>
    %c0_437 = arith.constant 0 : index
    %c0_438 = arith.constant 0 : index
    %433 = vector.load %arg3[%c0_437, %c0_438] : memref<1x128xf32, #tpu.memory_space<vmem>>, vector<1x128xf32>
    %434 = vector.broadcast %433 : vector<1x128xf32> to vector<16x128xf32>
    %435 = arith.addf %432, %434 : vector<16x128xf32>
    %cst_439 = arith.constant 0.000000e+00 : f32
    %436 = vector.broadcast %cst_439 : f32 to vector<16x128xf32>
    %437 = arith.maximumf %435, %436 : vector<16x128xf32>
    %438 = vector.extract_strided_slice %437 {offsets = [0, 0], sizes = [16, 16], strides = [1, 1]} : vector<16x128xf32> to vector<16x16xf32>
    %439 = arith.truncf %438 : vector<16x16xf32> to vector<16x16xbf16>
    %c16_440 = arith.constant 16 : index
    %c0_441 = arith.constant 0 : index
    %c0_442 = arith.constant 0 : index
    %440 = vector.load %arg4[%c16_440, %c0_441, %c0_442] : memref<25x16x128xbf16, #tpu.memory_space<vmem>>, vector<1x16x128xbf16>
    %441 = vector.shape_cast %440 : vector<1x16x128xbf16> to vector<16x128xbf16>
    %cst_443 = arith.constant dense<0.000000e+00> : vector<16x128xf32>
    %442 = tpu.matmul %439, %441, %cst_443 {dimension_numbers = #tpu.dot_dimension_numbers<[1], [0], [0], [1], [0, 0, 1, 1], [], []>} : vector<16x16xbf16>, vector<16x128xbf16>, vector<16x128xf32> -> vector<16x128xf32>
    %443 = arith.addf %417, %442 : vector<16x128xf32>
    %c0_444 = arith.constant 0 : index
    %c17 = arith.constant 17 : index
    %c0_445 = arith.constant 0 : index
    %c0_446 = arith.constant 0 : index
    %444 = vector.load %arg1[%c0_444, %c17, %c0_445, %c0_446] : memref<4x25x16x160xbf16, #tpu.memory_space<vmem>>, vector<1x1x16x160xbf16>
    %445 = vector.shape_cast %444 : vector<1x1x16x160xbf16> to vector<16x160xbf16>
    %cst_447 = arith.constant dense<0.000000e+00> : vector<16x128xf32>
    %446 = tpu.matmul %445, %0, %cst_447 {dimension_numbers = #tpu.dot_dimension_numbers<[1], [0], [0], [1], [0, 0, 1, 1], [], []>} : vector<16x160xbf16>, vector<160x128xbf16>, vector<16x128xf32> -> vector<16x128xf32>
    %c1_448 = arith.constant 1 : index
    %c17_449 = arith.constant 17 : index
    %c0_450 = arith.constant 0 : index
    %c0_451 = arith.constant 0 : index
    %447 = vector.load %arg1[%c1_448, %c17_449, %c0_450, %c0_451] : memref<4x25x16x160xbf16, #tpu.memory_space<vmem>>, vector<1x1x16x160xbf16>
    %448 = vector.shape_cast %447 : vector<1x1x16x160xbf16> to vector<16x160xbf16>
    %cst_452 = arith.constant dense<0.000000e+00> : vector<16x128xf32>
    %449 = tpu.matmul %448, %0, %cst_452 {dimension_numbers = #tpu.dot_dimension_numbers<[1], [0], [0], [1], [0, 0, 1, 1], [], []>} : vector<16x160xbf16>, vector<160x128xbf16>, vector<16x128xf32> -> vector<16x128xf32>
    %450 = arith.maximumf %446, %449 : vector<16x128xf32>
    %c2_453 = arith.constant 2 : index
    %c17_454 = arith.constant 17 : index
    %c0_455 = arith.constant 0 : index
    %c0_456 = arith.constant 0 : index
    %451 = vector.load %arg1[%c2_453, %c17_454, %c0_455, %c0_456] : memref<4x25x16x160xbf16, #tpu.memory_space<vmem>>, vector<1x1x16x160xbf16>
    %452 = vector.shape_cast %451 : vector<1x1x16x160xbf16> to vector<16x160xbf16>
    %cst_457 = arith.constant dense<0.000000e+00> : vector<16x128xf32>
    %453 = tpu.matmul %452, %0, %cst_457 {dimension_numbers = #tpu.dot_dimension_numbers<[1], [0], [0], [1], [0, 0, 1, 1], [], []>} : vector<16x160xbf16>, vector<160x128xbf16>, vector<16x128xf32> -> vector<16x128xf32>
    %454 = arith.maximumf %450, %453 : vector<16x128xf32>
    %c3_458 = arith.constant 3 : index
    %c17_459 = arith.constant 17 : index
    %c0_460 = arith.constant 0 : index
    %c0_461 = arith.constant 0 : index
    %455 = vector.load %arg1[%c3_458, %c17_459, %c0_460, %c0_461] : memref<4x25x16x160xbf16, #tpu.memory_space<vmem>>, vector<1x1x16x160xbf16>
    %456 = vector.shape_cast %455 : vector<1x1x16x160xbf16> to vector<16x160xbf16>
    %cst_462 = arith.constant dense<0.000000e+00> : vector<16x128xf32>
    %457 = tpu.matmul %456, %0, %cst_462 {dimension_numbers = #tpu.dot_dimension_numbers<[1], [0], [0], [1], [0, 0, 1, 1], [], []>} : vector<16x160xbf16>, vector<160x128xbf16>, vector<16x128xf32> -> vector<16x128xf32>
    %458 = arith.maximumf %454, %457 : vector<16x128xf32>
    %c0_463 = arith.constant 0 : index
    %c0_464 = arith.constant 0 : index
    %459 = vector.load %arg3[%c0_463, %c0_464] : memref<1x128xf32, #tpu.memory_space<vmem>>, vector<1x128xf32>
    %460 = vector.broadcast %459 : vector<1x128xf32> to vector<16x128xf32>
    %461 = arith.addf %458, %460 : vector<16x128xf32>
    %cst_465 = arith.constant 0.000000e+00 : f32
    %462 = vector.broadcast %cst_465 : f32 to vector<16x128xf32>
    %463 = arith.maximumf %461, %462 : vector<16x128xf32>
    %464 = vector.extract_strided_slice %463 {offsets = [0, 0], sizes = [16, 16], strides = [1, 1]} : vector<16x128xf32> to vector<16x16xf32>
    %465 = arith.truncf %464 : vector<16x16xf32> to vector<16x16xbf16>
    %c17_466 = arith.constant 17 : index
    %c0_467 = arith.constant 0 : index
    %c0_468 = arith.constant 0 : index
    %466 = vector.load %arg4[%c17_466, %c0_467, %c0_468] : memref<25x16x128xbf16, #tpu.memory_space<vmem>>, vector<1x16x128xbf16>
    %467 = vector.shape_cast %466 : vector<1x16x128xbf16> to vector<16x128xbf16>
    %cst_469 = arith.constant dense<0.000000e+00> : vector<16x128xf32>
    %468 = tpu.matmul %465, %467, %cst_469 {dimension_numbers = #tpu.dot_dimension_numbers<[1], [0], [0], [1], [0, 0, 1, 1], [], []>} : vector<16x16xbf16>, vector<16x128xbf16>, vector<16x128xf32> -> vector<16x128xf32>
    %469 = arith.addf %443, %468 : vector<16x128xf32>
    %c0_470 = arith.constant 0 : index
    %c18 = arith.constant 18 : index
    %c0_471 = arith.constant 0 : index
    %c0_472 = arith.constant 0 : index
    %470 = vector.load %arg1[%c0_470, %c18, %c0_471, %c0_472] : memref<4x25x16x160xbf16, #tpu.memory_space<vmem>>, vector<1x1x16x160xbf16>
    %471 = vector.shape_cast %470 : vector<1x1x16x160xbf16> to vector<16x160xbf16>
    %cst_473 = arith.constant dense<0.000000e+00> : vector<16x128xf32>
    %472 = tpu.matmul %471, %0, %cst_473 {dimension_numbers = #tpu.dot_dimension_numbers<[1], [0], [0], [1], [0, 0, 1, 1], [], []>} : vector<16x160xbf16>, vector<160x128xbf16>, vector<16x128xf32> -> vector<16x128xf32>
    %c1_474 = arith.constant 1 : index
    %c18_475 = arith.constant 18 : index
    %c0_476 = arith.constant 0 : index
    %c0_477 = arith.constant 0 : index
    %473 = vector.load %arg1[%c1_474, %c18_475, %c0_476, %c0_477] : memref<4x25x16x160xbf16, #tpu.memory_space<vmem>>, vector<1x1x16x160xbf16>
    %474 = vector.shape_cast %473 : vector<1x1x16x160xbf16> to vector<16x160xbf16>
    %cst_478 = arith.constant dense<0.000000e+00> : vector<16x128xf32>
    %475 = tpu.matmul %474, %0, %cst_478 {dimension_numbers = #tpu.dot_dimension_numbers<[1], [0], [0], [1], [0, 0, 1, 1], [], []>} : vector<16x160xbf16>, vector<160x128xbf16>, vector<16x128xf32> -> vector<16x128xf32>
    %476 = arith.maximumf %472, %475 : vector<16x128xf32>
    %c2_479 = arith.constant 2 : index
    %c18_480 = arith.constant 18 : index
    %c0_481 = arith.constant 0 : index
    %c0_482 = arith.constant 0 : index
    %477 = vector.load %arg1[%c2_479, %c18_480, %c0_481, %c0_482] : memref<4x25x16x160xbf16, #tpu.memory_space<vmem>>, vector<1x1x16x160xbf16>
    %478 = vector.shape_cast %477 : vector<1x1x16x160xbf16> to vector<16x160xbf16>
    %cst_483 = arith.constant dense<0.000000e+00> : vector<16x128xf32>
    %479 = tpu.matmul %478, %0, %cst_483 {dimension_numbers = #tpu.dot_dimension_numbers<[1], [0], [0], [1], [0, 0, 1, 1], [], []>} : vector<16x160xbf16>, vector<160x128xbf16>, vector<16x128xf32> -> vector<16x128xf32>
    %480 = arith.maximumf %476, %479 : vector<16x128xf32>
    %c3_484 = arith.constant 3 : index
    %c18_485 = arith.constant 18 : index
    %c0_486 = arith.constant 0 : index
    %c0_487 = arith.constant 0 : index
    %481 = vector.load %arg1[%c3_484, %c18_485, %c0_486, %c0_487] : memref<4x25x16x160xbf16, #tpu.memory_space<vmem>>, vector<1x1x16x160xbf16>
    %482 = vector.shape_cast %481 : vector<1x1x16x160xbf16> to vector<16x160xbf16>
    %cst_488 = arith.constant dense<0.000000e+00> : vector<16x128xf32>
    %483 = tpu.matmul %482, %0, %cst_488 {dimension_numbers = #tpu.dot_dimension_numbers<[1], [0], [0], [1], [0, 0, 1, 1], [], []>} : vector<16x160xbf16>, vector<160x128xbf16>, vector<16x128xf32> -> vector<16x128xf32>
    %484 = arith.maximumf %480, %483 : vector<16x128xf32>
    %c0_489 = arith.constant 0 : index
    %c0_490 = arith.constant 0 : index
    %485 = vector.load %arg3[%c0_489, %c0_490] : memref<1x128xf32, #tpu.memory_space<vmem>>, vector<1x128xf32>
    %486 = vector.broadcast %485 : vector<1x128xf32> to vector<16x128xf32>
    %487 = arith.addf %484, %486 : vector<16x128xf32>
    %cst_491 = arith.constant 0.000000e+00 : f32
    %488 = vector.broadcast %cst_491 : f32 to vector<16x128xf32>
    %489 = arith.maximumf %487, %488 : vector<16x128xf32>
    %490 = vector.extract_strided_slice %489 {offsets = [0, 0], sizes = [16, 16], strides = [1, 1]} : vector<16x128xf32> to vector<16x16xf32>
    %491 = arith.truncf %490 : vector<16x16xf32> to vector<16x16xbf16>
    %c18_492 = arith.constant 18 : index
    %c0_493 = arith.constant 0 : index
    %c0_494 = arith.constant 0 : index
    %492 = vector.load %arg4[%c18_492, %c0_493, %c0_494] : memref<25x16x128xbf16, #tpu.memory_space<vmem>>, vector<1x16x128xbf16>
    %493 = vector.shape_cast %492 : vector<1x16x128xbf16> to vector<16x128xbf16>
    %cst_495 = arith.constant dense<0.000000e+00> : vector<16x128xf32>
    %494 = tpu.matmul %491, %493, %cst_495 {dimension_numbers = #tpu.dot_dimension_numbers<[1], [0], [0], [1], [0, 0, 1, 1], [], []>} : vector<16x16xbf16>, vector<16x128xbf16>, vector<16x128xf32> -> vector<16x128xf32>
    %495 = arith.addf %469, %494 : vector<16x128xf32>
    %c0_496 = arith.constant 0 : index
    %c19 = arith.constant 19 : index
    %c0_497 = arith.constant 0 : index
    %c0_498 = arith.constant 0 : index
    %496 = vector.load %arg1[%c0_496, %c19, %c0_497, %c0_498] : memref<4x25x16x160xbf16, #tpu.memory_space<vmem>>, vector<1x1x16x160xbf16>
    %497 = vector.shape_cast %496 : vector<1x1x16x160xbf16> to vector<16x160xbf16>
    %cst_499 = arith.constant dense<0.000000e+00> : vector<16x128xf32>
    %498 = tpu.matmul %497, %0, %cst_499 {dimension_numbers = #tpu.dot_dimension_numbers<[1], [0], [0], [1], [0, 0, 1, 1], [], []>} : vector<16x160xbf16>, vector<160x128xbf16>, vector<16x128xf32> -> vector<16x128xf32>
    %c1_500 = arith.constant 1 : index
    %c19_501 = arith.constant 19 : index
    %c0_502 = arith.constant 0 : index
    %c0_503 = arith.constant 0 : index
    %499 = vector.load %arg1[%c1_500, %c19_501, %c0_502, %c0_503] : memref<4x25x16x160xbf16, #tpu.memory_space<vmem>>, vector<1x1x16x160xbf16>
    %500 = vector.shape_cast %499 : vector<1x1x16x160xbf16> to vector<16x160xbf16>
    %cst_504 = arith.constant dense<0.000000e+00> : vector<16x128xf32>
    %501 = tpu.matmul %500, %0, %cst_504 {dimension_numbers = #tpu.dot_dimension_numbers<[1], [0], [0], [1], [0, 0, 1, 1], [], []>} : vector<16x160xbf16>, vector<160x128xbf16>, vector<16x128xf32> -> vector<16x128xf32>
    %502 = arith.maximumf %498, %501 : vector<16x128xf32>
    %c2_505 = arith.constant 2 : index
    %c19_506 = arith.constant 19 : index
    %c0_507 = arith.constant 0 : index
    %c0_508 = arith.constant 0 : index
    %503 = vector.load %arg1[%c2_505, %c19_506, %c0_507, %c0_508] : memref<4x25x16x160xbf16, #tpu.memory_space<vmem>>, vector<1x1x16x160xbf16>
    %504 = vector.shape_cast %503 : vector<1x1x16x160xbf16> to vector<16x160xbf16>
    %cst_509 = arith.constant dense<0.000000e+00> : vector<16x128xf32>
    %505 = tpu.matmul %504, %0, %cst_509 {dimension_numbers = #tpu.dot_dimension_numbers<[1], [0], [0], [1], [0, 0, 1, 1], [], []>} : vector<16x160xbf16>, vector<160x128xbf16>, vector<16x128xf32> -> vector<16x128xf32>
    %506 = arith.maximumf %502, %505 : vector<16x128xf32>
    %c3_510 = arith.constant 3 : index
    %c19_511 = arith.constant 19 : index
    %c0_512 = arith.constant 0 : index
    %c0_513 = arith.constant 0 : index
    %507 = vector.load %arg1[%c3_510, %c19_511, %c0_512, %c0_513] : memref<4x25x16x160xbf16, #tpu.memory_space<vmem>>, vector<1x1x16x160xbf16>
    %508 = vector.shape_cast %507 : vector<1x1x16x160xbf16> to vector<16x160xbf16>
    %cst_514 = arith.constant dense<0.000000e+00> : vector<16x128xf32>
    %509 = tpu.matmul %508, %0, %cst_514 {dimension_numbers = #tpu.dot_dimension_numbers<[1], [0], [0], [1], [0, 0, 1, 1], [], []>} : vector<16x160xbf16>, vector<160x128xbf16>, vector<16x128xf32> -> vector<16x128xf32>
    %510 = arith.maximumf %506, %509 : vector<16x128xf32>
    %c0_515 = arith.constant 0 : index
    %c0_516 = arith.constant 0 : index
    %511 = vector.load %arg3[%c0_515, %c0_516] : memref<1x128xf32, #tpu.memory_space<vmem>>, vector<1x128xf32>
    %512 = vector.broadcast %511 : vector<1x128xf32> to vector<16x128xf32>
    %513 = arith.addf %510, %512 : vector<16x128xf32>
    %cst_517 = arith.constant 0.000000e+00 : f32
    %514 = vector.broadcast %cst_517 : f32 to vector<16x128xf32>
    %515 = arith.maximumf %513, %514 : vector<16x128xf32>
    %516 = vector.extract_strided_slice %515 {offsets = [0, 0], sizes = [16, 16], strides = [1, 1]} : vector<16x128xf32> to vector<16x16xf32>
    %517 = arith.truncf %516 : vector<16x16xf32> to vector<16x16xbf16>
    %c19_518 = arith.constant 19 : index
    %c0_519 = arith.constant 0 : index
    %c0_520 = arith.constant 0 : index
    %518 = vector.load %arg4[%c19_518, %c0_519, %c0_520] : memref<25x16x128xbf16, #tpu.memory_space<vmem>>, vector<1x16x128xbf16>
    %519 = vector.shape_cast %518 : vector<1x16x128xbf16> to vector<16x128xbf16>
    %cst_521 = arith.constant dense<0.000000e+00> : vector<16x128xf32>
    %520 = tpu.matmul %517, %519, %cst_521 {dimension_numbers = #tpu.dot_dimension_numbers<[1], [0], [0], [1], [0, 0, 1, 1], [], []>} : vector<16x16xbf16>, vector<16x128xbf16>, vector<16x128xf32> -> vector<16x128xf32>
    %521 = arith.addf %495, %520 : vector<16x128xf32>
    %c0_522 = arith.constant 0 : index
    %c20 = arith.constant 20 : index
    %c0_523 = arith.constant 0 : index
    %c0_524 = arith.constant 0 : index
    %522 = vector.load %arg1[%c0_522, %c20, %c0_523, %c0_524] : memref<4x25x16x160xbf16, #tpu.memory_space<vmem>>, vector<1x1x16x160xbf16>
    %523 = vector.shape_cast %522 : vector<1x1x16x160xbf16> to vector<16x160xbf16>
    %cst_525 = arith.constant dense<0.000000e+00> : vector<16x128xf32>
    %524 = tpu.matmul %523, %0, %cst_525 {dimension_numbers = #tpu.dot_dimension_numbers<[1], [0], [0], [1], [0, 0, 1, 1], [], []>} : vector<16x160xbf16>, vector<160x128xbf16>, vector<16x128xf32> -> vector<16x128xf32>
    %c1_526 = arith.constant 1 : index
    %c20_527 = arith.constant 20 : index
    %c0_528 = arith.constant 0 : index
    %c0_529 = arith.constant 0 : index
    %525 = vector.load %arg1[%c1_526, %c20_527, %c0_528, %c0_529] : memref<4x25x16x160xbf16, #tpu.memory_space<vmem>>, vector<1x1x16x160xbf16>
    %526 = vector.shape_cast %525 : vector<1x1x16x160xbf16> to vector<16x160xbf16>
    %cst_530 = arith.constant dense<0.000000e+00> : vector<16x128xf32>
    %527 = tpu.matmul %526, %0, %cst_530 {dimension_numbers = #tpu.dot_dimension_numbers<[1], [0], [0], [1], [0, 0, 1, 1], [], []>} : vector<16x160xbf16>, vector<160x128xbf16>, vector<16x128xf32> -> vector<16x128xf32>
    %528 = arith.maximumf %524, %527 : vector<16x128xf32>
    %c2_531 = arith.constant 2 : index
    %c20_532 = arith.constant 20 : index
    %c0_533 = arith.constant 0 : index
    %c0_534 = arith.constant 0 : index
    %529 = vector.load %arg1[%c2_531, %c20_532, %c0_533, %c0_534] : memref<4x25x16x160xbf16, #tpu.memory_space<vmem>>, vector<1x1x16x160xbf16>
    %530 = vector.shape_cast %529 : vector<1x1x16x160xbf16> to vector<16x160xbf16>
    %cst_535 = arith.constant dense<0.000000e+00> : vector<16x128xf32>
    %531 = tpu.matmul %530, %0, %cst_535 {dimension_numbers = #tpu.dot_dimension_numbers<[1], [0], [0], [1], [0, 0, 1, 1], [], []>} : vector<16x160xbf16>, vector<160x128xbf16>, vector<16x128xf32> -> vector<16x128xf32>
    %532 = arith.maximumf %528, %531 : vector<16x128xf32>
    %c3_536 = arith.constant 3 : index
    %c20_537 = arith.constant 20 : index
    %c0_538 = arith.constant 0 : index
    %c0_539 = arith.constant 0 : index
    %533 = vector.load %arg1[%c3_536, %c20_537, %c0_538, %c0_539] : memref<4x25x16x160xbf16, #tpu.memory_space<vmem>>, vector<1x1x16x160xbf16>
    %534 = vector.shape_cast %533 : vector<1x1x16x160xbf16> to vector<16x160xbf16>
    %cst_540 = arith.constant dense<0.000000e+00> : vector<16x128xf32>
    %535 = tpu.matmul %534, %0, %cst_540 {dimension_numbers = #tpu.dot_dimension_numbers<[1], [0], [0], [1], [0, 0, 1, 1], [], []>} : vector<16x160xbf16>, vector<160x128xbf16>, vector<16x128xf32> -> vector<16x128xf32>
    %536 = arith.maximumf %532, %535 : vector<16x128xf32>
    %c0_541 = arith.constant 0 : index
    %c0_542 = arith.constant 0 : index
    %537 = vector.load %arg3[%c0_541, %c0_542] : memref<1x128xf32, #tpu.memory_space<vmem>>, vector<1x128xf32>
    %538 = vector.broadcast %537 : vector<1x128xf32> to vector<16x128xf32>
    %539 = arith.addf %536, %538 : vector<16x128xf32>
    %cst_543 = arith.constant 0.000000e+00 : f32
    %540 = vector.broadcast %cst_543 : f32 to vector<16x128xf32>
    %541 = arith.maximumf %539, %540 : vector<16x128xf32>
    %542 = vector.extract_strided_slice %541 {offsets = [0, 0], sizes = [16, 16], strides = [1, 1]} : vector<16x128xf32> to vector<16x16xf32>
    %543 = arith.truncf %542 : vector<16x16xf32> to vector<16x16xbf16>
    %c20_544 = arith.constant 20 : index
    %c0_545 = arith.constant 0 : index
    %c0_546 = arith.constant 0 : index
    %544 = vector.load %arg4[%c20_544, %c0_545, %c0_546] : memref<25x16x128xbf16, #tpu.memory_space<vmem>>, vector<1x16x128xbf16>
    %545 = vector.shape_cast %544 : vector<1x16x128xbf16> to vector<16x128xbf16>
    %cst_547 = arith.constant dense<0.000000e+00> : vector<16x128xf32>
    %546 = tpu.matmul %543, %545, %cst_547 {dimension_numbers = #tpu.dot_dimension_numbers<[1], [0], [0], [1], [0, 0, 1, 1], [], []>} : vector<16x16xbf16>, vector<16x128xbf16>, vector<16x128xf32> -> vector<16x128xf32>
    %547 = arith.addf %521, %546 : vector<16x128xf32>
    %c0_548 = arith.constant 0 : index
    %c21 = arith.constant 21 : index
    %c0_549 = arith.constant 0 : index
    %c0_550 = arith.constant 0 : index
    %548 = vector.load %arg1[%c0_548, %c21, %c0_549, %c0_550] : memref<4x25x16x160xbf16, #tpu.memory_space<vmem>>, vector<1x1x16x160xbf16>
    %549 = vector.shape_cast %548 : vector<1x1x16x160xbf16> to vector<16x160xbf16>
    %cst_551 = arith.constant dense<0.000000e+00> : vector<16x128xf32>
    %550 = tpu.matmul %549, %0, %cst_551 {dimension_numbers = #tpu.dot_dimension_numbers<[1], [0], [0], [1], [0, 0, 1, 1], [], []>} : vector<16x160xbf16>, vector<160x128xbf16>, vector<16x128xf32> -> vector<16x128xf32>
    %c1_552 = arith.constant 1 : index
    %c21_553 = arith.constant 21 : index
    %c0_554 = arith.constant 0 : index
    %c0_555 = arith.constant 0 : index
    %551 = vector.load %arg1[%c1_552, %c21_553, %c0_554, %c0_555] : memref<4x25x16x160xbf16, #tpu.memory_space<vmem>>, vector<1x1x16x160xbf16>
    %552 = vector.shape_cast %551 : vector<1x1x16x160xbf16> to vector<16x160xbf16>
    %cst_556 = arith.constant dense<0.000000e+00> : vector<16x128xf32>
    %553 = tpu.matmul %552, %0, %cst_556 {dimension_numbers = #tpu.dot_dimension_numbers<[1], [0], [0], [1], [0, 0, 1, 1], [], []>} : vector<16x160xbf16>, vector<160x128xbf16>, vector<16x128xf32> -> vector<16x128xf32>
    %554 = arith.maximumf %550, %553 : vector<16x128xf32>
    %c2_557 = arith.constant 2 : index
    %c21_558 = arith.constant 21 : index
    %c0_559 = arith.constant 0 : index
    %c0_560 = arith.constant 0 : index
    %555 = vector.load %arg1[%c2_557, %c21_558, %c0_559, %c0_560] : memref<4x25x16x160xbf16, #tpu.memory_space<vmem>>, vector<1x1x16x160xbf16>
    %556 = vector.shape_cast %555 : vector<1x1x16x160xbf16> to vector<16x160xbf16>
    %cst_561 = arith.constant dense<0.000000e+00> : vector<16x128xf32>
    %557 = tpu.matmul %556, %0, %cst_561 {dimension_numbers = #tpu.dot_dimension_numbers<[1], [0], [0], [1], [0, 0, 1, 1], [], []>} : vector<16x160xbf16>, vector<160x128xbf16>, vector<16x128xf32> -> vector<16x128xf32>
    %558 = arith.maximumf %554, %557 : vector<16x128xf32>
    %c3_562 = arith.constant 3 : index
    %c21_563 = arith.constant 21 : index
    %c0_564 = arith.constant 0 : index
    %c0_565 = arith.constant 0 : index
    %559 = vector.load %arg1[%c3_562, %c21_563, %c0_564, %c0_565] : memref<4x25x16x160xbf16, #tpu.memory_space<vmem>>, vector<1x1x16x160xbf16>
    %560 = vector.shape_cast %559 : vector<1x1x16x160xbf16> to vector<16x160xbf16>
    %cst_566 = arith.constant dense<0.000000e+00> : vector<16x128xf32>
    %561 = tpu.matmul %560, %0, %cst_566 {dimension_numbers = #tpu.dot_dimension_numbers<[1], [0], [0], [1], [0, 0, 1, 1], [], []>} : vector<16x160xbf16>, vector<160x128xbf16>, vector<16x128xf32> -> vector<16x128xf32>
    %562 = arith.maximumf %558, %561 : vector<16x128xf32>
    %c0_567 = arith.constant 0 : index
    %c0_568 = arith.constant 0 : index
    %563 = vector.load %arg3[%c0_567, %c0_568] : memref<1x128xf32, #tpu.memory_space<vmem>>, vector<1x128xf32>
    %564 = vector.broadcast %563 : vector<1x128xf32> to vector<16x128xf32>
    %565 = arith.addf %562, %564 : vector<16x128xf32>
    %cst_569 = arith.constant 0.000000e+00 : f32
    %566 = vector.broadcast %cst_569 : f32 to vector<16x128xf32>
    %567 = arith.maximumf %565, %566 : vector<16x128xf32>
    %568 = vector.extract_strided_slice %567 {offsets = [0, 0], sizes = [16, 16], strides = [1, 1]} : vector<16x128xf32> to vector<16x16xf32>
    %569 = arith.truncf %568 : vector<16x16xf32> to vector<16x16xbf16>
    %c21_570 = arith.constant 21 : index
    %c0_571 = arith.constant 0 : index
    %c0_572 = arith.constant 0 : index
    %570 = vector.load %arg4[%c21_570, %c0_571, %c0_572] : memref<25x16x128xbf16, #tpu.memory_space<vmem>>, vector<1x16x128xbf16>
    %571 = vector.shape_cast %570 : vector<1x16x128xbf16> to vector<16x128xbf16>
    %cst_573 = arith.constant dense<0.000000e+00> : vector<16x128xf32>
    %572 = tpu.matmul %569, %571, %cst_573 {dimension_numbers = #tpu.dot_dimension_numbers<[1], [0], [0], [1], [0, 0, 1, 1], [], []>} : vector<16x16xbf16>, vector<16x128xbf16>, vector<16x128xf32> -> vector<16x128xf32>
    %573 = arith.addf %547, %572 : vector<16x128xf32>
    %c0_574 = arith.constant 0 : index
    %c22 = arith.constant 22 : index
    %c0_575 = arith.constant 0 : index
    %c0_576 = arith.constant 0 : index
    %574 = vector.load %arg1[%c0_574, %c22, %c0_575, %c0_576] : memref<4x25x16x160xbf16, #tpu.memory_space<vmem>>, vector<1x1x16x160xbf16>
    %575 = vector.shape_cast %574 : vector<1x1x16x160xbf16> to vector<16x160xbf16>
    %cst_577 = arith.constant dense<0.000000e+00> : vector<16x128xf32>
    %576 = tpu.matmul %575, %0, %cst_577 {dimension_numbers = #tpu.dot_dimension_numbers<[1], [0], [0], [1], [0, 0, 1, 1], [], []>} : vector<16x160xbf16>, vector<160x128xbf16>, vector<16x128xf32> -> vector<16x128xf32>
    %c1_578 = arith.constant 1 : index
    %c22_579 = arith.constant 22 : index
    %c0_580 = arith.constant 0 : index
    %c0_581 = arith.constant 0 : index
    %577 = vector.load %arg1[%c1_578, %c22_579, %c0_580, %c0_581] : memref<4x25x16x160xbf16, #tpu.memory_space<vmem>>, vector<1x1x16x160xbf16>
    %578 = vector.shape_cast %577 : vector<1x1x16x160xbf16> to vector<16x160xbf16>
    %cst_582 = arith.constant dense<0.000000e+00> : vector<16x128xf32>
    %579 = tpu.matmul %578, %0, %cst_582 {dimension_numbers = #tpu.dot_dimension_numbers<[1], [0], [0], [1], [0, 0, 1, 1], [], []>} : vector<16x160xbf16>, vector<160x128xbf16>, vector<16x128xf32> -> vector<16x128xf32>
    %580 = arith.maximumf %576, %579 : vector<16x128xf32>
    %c2_583 = arith.constant 2 : index
    %c22_584 = arith.constant 22 : index
    %c0_585 = arith.constant 0 : index
    %c0_586 = arith.constant 0 : index
    %581 = vector.load %arg1[%c2_583, %c22_584, %c0_585, %c0_586] : memref<4x25x16x160xbf16, #tpu.memory_space<vmem>>, vector<1x1x16x160xbf16>
    %582 = vector.shape_cast %581 : vector<1x1x16x160xbf16> to vector<16x160xbf16>
    %cst_587 = arith.constant dense<0.000000e+00> : vector<16x128xf32>
    %583 = tpu.matmul %582, %0, %cst_587 {dimension_numbers = #tpu.dot_dimension_numbers<[1], [0], [0], [1], [0, 0, 1, 1], [], []>} : vector<16x160xbf16>, vector<160x128xbf16>, vector<16x128xf32> -> vector<16x128xf32>
    %584 = arith.maximumf %580, %583 : vector<16x128xf32>
    %c3_588 = arith.constant 3 : index
    %c22_589 = arith.constant 22 : index
    %c0_590 = arith.constant 0 : index
    %c0_591 = arith.constant 0 : index
    %585 = vector.load %arg1[%c3_588, %c22_589, %c0_590, %c0_591] : memref<4x25x16x160xbf16, #tpu.memory_space<vmem>>, vector<1x1x16x160xbf16>
    %586 = vector.shape_cast %585 : vector<1x1x16x160xbf16> to vector<16x160xbf16>
    %cst_592 = arith.constant dense<0.000000e+00> : vector<16x128xf32>
    %587 = tpu.matmul %586, %0, %cst_592 {dimension_numbers = #tpu.dot_dimension_numbers<[1], [0], [0], [1], [0, 0, 1, 1], [], []>} : vector<16x160xbf16>, vector<160x128xbf16>, vector<16x128xf32> -> vector<16x128xf32>
    %588 = arith.maximumf %584, %587 : vector<16x128xf32>
    %c0_593 = arith.constant 0 : index
    %c0_594 = arith.constant 0 : index
    %589 = vector.load %arg3[%c0_593, %c0_594] : memref<1x128xf32, #tpu.memory_space<vmem>>, vector<1x128xf32>
    %590 = vector.broadcast %589 : vector<1x128xf32> to vector<16x128xf32>
    %591 = arith.addf %588, %590 : vector<16x128xf32>
    %cst_595 = arith.constant 0.000000e+00 : f32
    %592 = vector.broadcast %cst_595 : f32 to vector<16x128xf32>
    %593 = arith.maximumf %591, %592 : vector<16x128xf32>
    %594 = vector.extract_strided_slice %593 {offsets = [0, 0], sizes = [16, 16], strides = [1, 1]} : vector<16x128xf32> to vector<16x16xf32>
    %595 = arith.truncf %594 : vector<16x16xf32> to vector<16x16xbf16>
    %c22_596 = arith.constant 22 : index
    %c0_597 = arith.constant 0 : index
    %c0_598 = arith.constant 0 : index
    %596 = vector.load %arg4[%c22_596, %c0_597, %c0_598] : memref<25x16x128xbf16, #tpu.memory_space<vmem>>, vector<1x16x128xbf16>
    %597 = vector.shape_cast %596 : vector<1x16x128xbf16> to vector<16x128xbf16>
    %cst_599 = arith.constant dense<0.000000e+00> : vector<16x128xf32>
    %598 = tpu.matmul %595, %597, %cst_599 {dimension_numbers = #tpu.dot_dimension_numbers<[1], [0], [0], [1], [0, 0, 1, 1], [], []>} : vector<16x16xbf16>, vector<16x128xbf16>, vector<16x128xf32> -> vector<16x128xf32>
    %599 = arith.addf %573, %598 : vector<16x128xf32>
    %c0_600 = arith.constant 0 : index
    %c23 = arith.constant 23 : index
    %c0_601 = arith.constant 0 : index
    %c0_602 = arith.constant 0 : index
    %600 = vector.load %arg1[%c0_600, %c23, %c0_601, %c0_602] : memref<4x25x16x160xbf16, #tpu.memory_space<vmem>>, vector<1x1x16x160xbf16>
    %601 = vector.shape_cast %600 : vector<1x1x16x160xbf16> to vector<16x160xbf16>
    %cst_603 = arith.constant dense<0.000000e+00> : vector<16x128xf32>
    %602 = tpu.matmul %601, %0, %cst_603 {dimension_numbers = #tpu.dot_dimension_numbers<[1], [0], [0], [1], [0, 0, 1, 1], [], []>} : vector<16x160xbf16>, vector<160x128xbf16>, vector<16x128xf32> -> vector<16x128xf32>
    %c1_604 = arith.constant 1 : index
    %c23_605 = arith.constant 23 : index
    %c0_606 = arith.constant 0 : index
    %c0_607 = arith.constant 0 : index
    %603 = vector.load %arg1[%c1_604, %c23_605, %c0_606, %c0_607] : memref<4x25x16x160xbf16, #tpu.memory_space<vmem>>, vector<1x1x16x160xbf16>
    %604 = vector.shape_cast %603 : vector<1x1x16x160xbf16> to vector<16x160xbf16>
    %cst_608 = arith.constant dense<0.000000e+00> : vector<16x128xf32>
    %605 = tpu.matmul %604, %0, %cst_608 {dimension_numbers = #tpu.dot_dimension_numbers<[1], [0], [0], [1], [0, 0, 1, 1], [], []>} : vector<16x160xbf16>, vector<160x128xbf16>, vector<16x128xf32> -> vector<16x128xf32>
    %606 = arith.maximumf %602, %605 : vector<16x128xf32>
    %c2_609 = arith.constant 2 : index
    %c23_610 = arith.constant 23 : index
    %c0_611 = arith.constant 0 : index
    %c0_612 = arith.constant 0 : index
    %607 = vector.load %arg1[%c2_609, %c23_610, %c0_611, %c0_612] : memref<4x25x16x160xbf16, #tpu.memory_space<vmem>>, vector<1x1x16x160xbf16>
    %608 = vector.shape_cast %607 : vector<1x1x16x160xbf16> to vector<16x160xbf16>
    %cst_613 = arith.constant dense<0.000000e+00> : vector<16x128xf32>
    %609 = tpu.matmul %608, %0, %cst_613 {dimension_numbers = #tpu.dot_dimension_numbers<[1], [0], [0], [1], [0, 0, 1, 1], [], []>} : vector<16x160xbf16>, vector<160x128xbf16>, vector<16x128xf32> -> vector<16x128xf32>
    %610 = arith.maximumf %606, %609 : vector<16x128xf32>
    %c3_614 = arith.constant 3 : index
    %c23_615 = arith.constant 23 : index
    %c0_616 = arith.constant 0 : index
    %c0_617 = arith.constant 0 : index
    %611 = vector.load %arg1[%c3_614, %c23_615, %c0_616, %c0_617] : memref<4x25x16x160xbf16, #tpu.memory_space<vmem>>, vector<1x1x16x160xbf16>
    %612 = vector.shape_cast %611 : vector<1x1x16x160xbf16> to vector<16x160xbf16>
    %cst_618 = arith.constant dense<0.000000e+00> : vector<16x128xf32>
    %613 = tpu.matmul %612, %0, %cst_618 {dimension_numbers = #tpu.dot_dimension_numbers<[1], [0], [0], [1], [0, 0, 1, 1], [], []>} : vector<16x160xbf16>, vector<160x128xbf16>, vector<16x128xf32> -> vector<16x128xf32>
    %614 = arith.maximumf %610, %613 : vector<16x128xf32>
    %c0_619 = arith.constant 0 : index
    %c0_620 = arith.constant 0 : index
    %615 = vector.load %arg3[%c0_619, %c0_620] : memref<1x128xf32, #tpu.memory_space<vmem>>, vector<1x128xf32>
    %616 = vector.broadcast %615 : vector<1x128xf32> to vector<16x128xf32>
    %617 = arith.addf %614, %616 : vector<16x128xf32>
    %cst_621 = arith.constant 0.000000e+00 : f32
    %618 = vector.broadcast %cst_621 : f32 to vector<16x128xf32>
    %619 = arith.maximumf %617, %618 : vector<16x128xf32>
    %620 = vector.extract_strided_slice %619 {offsets = [0, 0], sizes = [16, 16], strides = [1, 1]} : vector<16x128xf32> to vector<16x16xf32>
    %621 = arith.truncf %620 : vector<16x16xf32> to vector<16x16xbf16>
    %c23_622 = arith.constant 23 : index
    %c0_623 = arith.constant 0 : index
    %c0_624 = arith.constant 0 : index
    %622 = vector.load %arg4[%c23_622, %c0_623, %c0_624] : memref<25x16x128xbf16, #tpu.memory_space<vmem>>, vector<1x16x128xbf16>
    %623 = vector.shape_cast %622 : vector<1x16x128xbf16> to vector<16x128xbf16>
    %cst_625 = arith.constant dense<0.000000e+00> : vector<16x128xf32>
    %624 = tpu.matmul %621, %623, %cst_625 {dimension_numbers = #tpu.dot_dimension_numbers<[1], [0], [0], [1], [0, 0, 1, 1], [], []>} : vector<16x16xbf16>, vector<16x128xbf16>, vector<16x128xf32> -> vector<16x128xf32>
    %625 = arith.addf %599, %624 : vector<16x128xf32>
    %c0_626 = arith.constant 0 : index
    %c24 = arith.constant 24 : index
    %c0_627 = arith.constant 0 : index
    %c0_628 = arith.constant 0 : index
    %626 = vector.load %arg1[%c0_626, %c24, %c0_627, %c0_628] : memref<4x25x16x160xbf16, #tpu.memory_space<vmem>>, vector<1x1x16x160xbf16>
    %627 = vector.shape_cast %626 : vector<1x1x16x160xbf16> to vector<16x160xbf16>
    %cst_629 = arith.constant dense<0.000000e+00> : vector<16x128xf32>
    %628 = tpu.matmul %627, %0, %cst_629 {dimension_numbers = #tpu.dot_dimension_numbers<[1], [0], [0], [1], [0, 0, 1, 1], [], []>} : vector<16x160xbf16>, vector<160x128xbf16>, vector<16x128xf32> -> vector<16x128xf32>
    %c1_630 = arith.constant 1 : index
    %c24_631 = arith.constant 24 : index
    %c0_632 = arith.constant 0 : index
    %c0_633 = arith.constant 0 : index
    %629 = vector.load %arg1[%c1_630, %c24_631, %c0_632, %c0_633] : memref<4x25x16x160xbf16, #tpu.memory_space<vmem>>, vector<1x1x16x160xbf16>
    %630 = vector.shape_cast %629 : vector<1x1x16x160xbf16> to vector<16x160xbf16>
    %cst_634 = arith.constant dense<0.000000e+00> : vector<16x128xf32>
    %631 = tpu.matmul %630, %0, %cst_634 {dimension_numbers = #tpu.dot_dimension_numbers<[1], [0], [0], [1], [0, 0, 1, 1], [], []>} : vector<16x160xbf16>, vector<160x128xbf16>, vector<16x128xf32> -> vector<16x128xf32>
    %632 = arith.maximumf %628, %631 : vector<16x128xf32>
    %c2_635 = arith.constant 2 : index
    %c24_636 = arith.constant 24 : index
    %c0_637 = arith.constant 0 : index
    %c0_638 = arith.constant 0 : index
    %633 = vector.load %arg1[%c2_635, %c24_636, %c0_637, %c0_638] : memref<4x25x16x160xbf16, #tpu.memory_space<vmem>>, vector<1x1x16x160xbf16>
    %634 = vector.shape_cast %633 : vector<1x1x16x160xbf16> to vector<16x160xbf16>
    %cst_639 = arith.constant dense<0.000000e+00> : vector<16x128xf32>
    %635 = tpu.matmul %634, %0, %cst_639 {dimension_numbers = #tpu.dot_dimension_numbers<[1], [0], [0], [1], [0, 0, 1, 1], [], []>} : vector<16x160xbf16>, vector<160x128xbf16>, vector<16x128xf32> -> vector<16x128xf32>
    %636 = arith.maximumf %632, %635 : vector<16x128xf32>
    %c3_640 = arith.constant 3 : index
    %c24_641 = arith.constant 24 : index
    %c0_642 = arith.constant 0 : index
    %c0_643 = arith.constant 0 : index
    %637 = vector.load %arg1[%c3_640, %c24_641, %c0_642, %c0_643] : memref<4x25x16x160xbf16, #tpu.memory_space<vmem>>, vector<1x1x16x160xbf16>
    %638 = vector.shape_cast %637 : vector<1x1x16x160xbf16> to vector<16x160xbf16>
    %cst_644 = arith.constant dense<0.000000e+00> : vector<16x128xf32>
    %639 = tpu.matmul %638, %0, %cst_644 {dimension_numbers = #tpu.dot_dimension_numbers<[1], [0], [0], [1], [0, 0, 1, 1], [], []>} : vector<16x160xbf16>, vector<160x128xbf16>, vector<16x128xf32> -> vector<16x128xf32>
    %640 = arith.maximumf %636, %639 : vector<16x128xf32>
    %c0_645 = arith.constant 0 : index
    %c0_646 = arith.constant 0 : index
    %641 = vector.load %arg3[%c0_645, %c0_646] : memref<1x128xf32, #tpu.memory_space<vmem>>, vector<1x128xf32>
    %642 = vector.broadcast %641 : vector<1x128xf32> to vector<16x128xf32>
    %643 = arith.addf %640, %642 : vector<16x128xf32>
    %cst_647 = arith.constant 0.000000e+00 : f32
    %644 = vector.broadcast %cst_647 : f32 to vector<16x128xf32>
    %645 = arith.maximumf %643, %644 : vector<16x128xf32>
    %646 = vector.extract_strided_slice %645 {offsets = [0, 0], sizes = [16, 16], strides = [1, 1]} : vector<16x128xf32> to vector<16x16xf32>
    %647 = arith.truncf %646 : vector<16x16xf32> to vector<16x16xbf16>
    %c24_648 = arith.constant 24 : index
    %c0_649 = arith.constant 0 : index
    %c0_650 = arith.constant 0 : index
    %648 = vector.load %arg4[%c24_648, %c0_649, %c0_650] : memref<25x16x128xbf16, #tpu.memory_space<vmem>>, vector<1x16x128xbf16>
    %649 = vector.shape_cast %648 : vector<1x16x128xbf16> to vector<16x128xbf16>
    %cst_651 = arith.constant dense<0.000000e+00> : vector<16x128xf32>
    %650 = tpu.matmul %647, %649, %cst_651 {dimension_numbers = #tpu.dot_dimension_numbers<[1], [0], [0], [1], [0, 0, 1, 1], [], []>} : vector<16x16xbf16>, vector<16x128xbf16>, vector<16x128xf32> -> vector<16x128xf32>
    %651 = arith.addf %625, %650 : vector<16x128xf32>
    %c0_652 = arith.constant 0 : index
    %c0_653 = arith.constant 0 : index
    %652 = vector.load %arg5[%c0_652, %c0_653] : memref<1x128xf32, #tpu.memory_space<vmem>>, vector<1x128xf32>
    %653 = vector.broadcast %652 : vector<1x128xf32> to vector<16x128xf32>
    %654 = arith.addf %651, %653 : vector<16x128xf32>
    %cst_654 = arith.constant 0.000000e+00 : f32
    %655 = vector.broadcast %cst_654 : f32 to vector<16x128xf32>
    %656 = arith.maximumf %654, %655 : vector<16x128xf32>
    %657 = arith.truncf %656 : vector<16x128xf32> to vector<16x128xbf16>
    %c0_655 = arith.constant 0 : index
    %c0_656 = arith.constant 0 : index
    %658 = vector.load %arg6[%c0_655, %c0_656] : memref<128x128xbf16, #tpu.memory_space<vmem>>, vector<128x128xbf16>
    %cst_657 = arith.constant dense<0.000000e+00> : vector<16x128xf32>
    %659 = tpu.matmul %657, %658, %cst_657 {dimension_numbers = #tpu.dot_dimension_numbers<[1], [0], [0], [1], [0, 0, 1, 1], [], []>} : vector<16x128xbf16>, vector<128x128xbf16>, vector<16x128xf32> -> vector<16x128xf32>
    %c0_658 = arith.constant 0 : index
    %c0_659 = arith.constant 0 : index
    %660 = vector.load %arg7[%c0_658, %c0_659] : memref<1x128xf32, #tpu.memory_space<vmem>>, vector<1x128xf32>
    %661 = vector.broadcast %660 : vector<1x128xf32> to vector<16x128xf32>
    %662 = arith.addf %659, %661 : vector<16x128xf32>
    %cst_660 = arith.constant 0.000000e+00 : f32
    %663 = vector.broadcast %cst_660 : f32 to vector<16x128xf32>
    %664 = arith.maximumf %662, %663 : vector<16x128xf32>
    %665 = arith.truncf %664 : vector<16x128xf32> to vector<16x128xbf16>
    %c0_661 = arith.constant 0 : index
    %c0_662 = arith.constant 0 : index
    %666 = vector.load %arg8[%c0_661, %c0_662] : memref<128x128xbf16, #tpu.memory_space<vmem>>, vector<128x128xbf16>
    %cst_663 = arith.constant dense<0.000000e+00> : vector<16x128xf32>
    %667 = tpu.matmul %665, %666, %cst_663 {dimension_numbers = #tpu.dot_dimension_numbers<[1], [0], [0], [1], [0, 0, 1, 1], [], []>} : vector<16x128xbf16>, vector<128x128xbf16>, vector<16x128xf32> -> vector<16x128xf32>
    %c0_664 = arith.constant 0 : index
    %c0_665 = arith.constant 0 : index
    %668 = vector.load %arg9[%c0_664, %c0_665] : memref<1x128xf32, #tpu.memory_space<vmem>>, vector<1x128xf32>
    %669 = vector.broadcast %668 : vector<1x128xf32> to vector<16x128xf32>
    %670 = arith.addf %667, %669 : vector<16x128xf32>
    %cst_666 = arith.constant 0.000000e+00 : f32
    %671 = vector.broadcast %cst_666 : f32 to vector<16x128xf32>
    %672 = arith.maximumf %670, %671 : vector<16x128xf32>
    %673 = arith.truncf %672 : vector<16x128xf32> to vector<16x128xbf16>
    %c0_667 = arith.constant 0 : index
    %c0_668 = arith.constant 0 : index
    %674 = vector.load %arg10[%c0_667, %c0_668] : memref<128x128xbf16, #tpu.memory_space<vmem>>, vector<128x128xbf16>
    %cst_669 = arith.constant dense<0.000000e+00> : vector<16x128xf32>
    %675 = tpu.matmul %673, %674, %cst_669 {dimension_numbers = #tpu.dot_dimension_numbers<[1], [0], [0], [1], [0, 0, 1, 1], [], []>} : vector<16x128xbf16>, vector<128x128xbf16>, vector<16x128xf32> -> vector<16x128xf32>
    %c0_670 = arith.constant 0 : index
    %c0_671 = arith.constant 0 : index
    %676 = vector.load %arg11[%c0_670, %c0_671] : memref<1x128xf32, #tpu.memory_space<vmem>>, vector<1x128xf32>
    %677 = vector.broadcast %676 : vector<1x128xf32> to vector<16x128xf32>
    %678 = arith.addf %675, %677 : vector<16x128xf32>
    %679 = vector.extract_strided_slice %678 {offsets = [0, 0], sizes = [16, 8], strides = [1, 1]} : vector<16x128xf32> to vector<16x8xf32>
    %c0_672 = arith.constant 0 : index
    %c0_673 = arith.constant 0 : index
    %680 = vector.load %arg12[%c0_672, %c0_673] : memref<16x8xf32, #tpu.memory_space<vmem>>, vector<16x8xf32>
    tpu.vector_store %arg12[%c0_672, %c0_673], %679 {strides = array<i32>} : memref<16x8xf32, #tpu.memory_space<vmem>>, vector<16x8xf32>,
    return
  }
  func.func @transform_0(%arg0: i32) -> (i32, i32, i32, i32) {
    %c0_i32 = arith.constant 0 : i32
    %c0_i32_0 = arith.constant 0 : i32
    %c0_i32_1 = arith.constant 0 : i32
    %c0_i32_2 = arith.constant 0 : i32
    return %c0_i32, %c0_i32_0, %arg0, %c0_i32_1 : i32, i32, i32, i32
  }
  func.func @transform_1(%arg0: i32) -> (i32, i32) {
    %c0_i32 = arith.constant 0 : i32
    %c0_i32_0 = arith.constant 0 : i32
    %c0_i32_1 = arith.constant 0 : i32
    return %c0_i32, %c0_i32_0 : i32, i32
  }
  func.func @transform_2(%arg0: i32) -> (i32, i32) {
    %c0_i32 = arith.constant 0 : i32
    %c0_i32_0 = arith.constant 0 : i32
    %c0_i32_1 = arith.constant 0 : i32
    return %c0_i32, %c0_i32_0 : i32, i32
  }
  func.func @transform_3(%arg0: i32) -> (i32, i32, i32) {
    %c0_i32 = arith.constant 0 : i32
    %c0_i32_0 = arith.constant 0 : i32
    %c0_i32_1 = arith.constant 0 : i32
    %c0_i32_2 = arith.constant 0 : i32
    return %c0_i32, %c0_i32_0, %c0_i32_1 : i32, i32, i32
  }
  func.func @transform_4(%arg0: i32) -> (i32, i32) {
    %c0_i32 = arith.constant 0 : i32
    %c0_i32_0 = arith.constant 0 : i32
    %c0_i32_1 = arith.constant 0 : i32
    return %c0_i32, %c0_i32_0 : i32, i32
  }
  func.func @transform_5(%arg0: i32) -> (i32, i32) {
    %c0_i32 = arith.constant 0 : i32
    %c0_i32_0 = arith.constant 0 : i32
    %c0_i32_1 = arith.constant 0 : i32
    return %c0_i32, %c0_i32_0 : i32, i32
  }
  func.func @transform_6(%arg0: i32) -> (i32, i32) {
    %c0_i32 = arith.constant 0 : i32
    %c0_i32_0 = arith.constant 0 : i32
    %c0_i32_1 = arith.constant 0 : i32
    return %c0_i32, %c0_i32_0 : i32, i32
  }
  func.func @transform_7(%arg0: i32) -> (i32, i32) {
    %c0_i32 = arith.constant 0 : i32
    %c0_i32_0 = arith.constant 0 : i32
    %c0_i32_1 = arith.constant 0 : i32
    return %c0_i32, %c0_i32_0 : i32, i32
  }
  func.func @transform_8(%arg0: i32) -> (i32, i32) {
    %c0_i32 = arith.constant 0 : i32
    %c0_i32_0 = arith.constant 0 : i32
    %c0_i32_1 = arith.constant 0 : i32
    return %c0_i32, %c0_i32_0 : i32, i32
  }
  func.func @transform_9(%arg0: i32) -> (i32, i32) {
    %c0_i32 = arith.constant 0 : i32
    %c0_i32_0 = arith.constant 0 : i32
    %c0_i32_1 = arith.constant 0 : i32
    return %c0_i32, %c0_i32_0 : i32, i32
  }
  func.func @transform_10(%arg0: i32) -> (i32, i32) {
    %c0_i32 = arith.constant 0 : i32
    %c0_i32_0 = arith.constant 0 : i32
    %c0_i32_1 = arith.constant 0 : i32
    return %c0_i32, %c0_i32_0 : i32, i32
  }
  func.func @transform_11(%arg0: i32) -> (i32, i32) {
    %c0_i32 = arith.constant 0 : i32
    %c0_i32_0 = arith.constant 0 : i32
    return %arg0, %c0_i32 : i32, i32
  }
}

</mosaic_0001>

<llo_original>
// kernel: lenet5_forward.2
$region0: #{lenet5_forward.2}
  #allocation0 [shape = 'u32[]', space=smem, size = 0x4, offset = 0x4, fixed_abs, tag = 'smem constant byte address 0x4 - core index']
  #allocation1 [shape = 'u32[144,128]{1,0:T(1,128)}', space=vmem, size = 0x12000, scoped, tag = 'internal scratch']
  %s0 = inlined_call_operand.vmem [shape: bf16[4,400,32], index: 0, kind: input, shape index: {}]
  %s1 = inlined_call_operand.vmem [shape: bf16[32,128], index: 1, kind: input, shape index: {}]
  %s2 = inlined_call_operand.vmem [shape: f32[1,128], index: 2, kind: input, shape index: {}]
  %s3 = inlined_call_operand.vmem [shape: bf16[400,8], index: 3, kind: output, shape index: {}]
  %s4 = sld [smem:[#allocation0]]
  $region22: #{lenet5_forward.2} parent=0
    _
  %s6 = ssub.s32 1, %s4
  %s7 = scalar_select 0, %s6, %s4
  // Predicated region
  $region2: #{lenet5_forward.2} parent=0 // pred_check
    _
  $region3: #{lenet5_forward.2} parent=0 // pred_check_branch
    %9 = sbr.rel (0) target = $region5
  $region4: #{lenet5_forward.2} parent=0 // pred_region
    _
  $region5: #{lenet5_forward.2} parent=0 // pred_fallthru
    _
  // Predicated region
  $region6: #{lenet5_forward.2} parent=0 // pred_check
    _
  $region7: #{lenet5_forward.2} parent=0 // pred_check_branch
    %11 = sbr.rel (0) target = $region9
  $region8: #{lenet5_forward.2} parent=0 // pred_region
    _
  $region9: #{lenet5_forward.2} parent=0 // pred_fallthru
    _
  // Predicated region
  $region10: #{lenet5_forward.2} parent=0 // pred_check
    _
  $region11: #{lenet5_forward.2} parent=0 // pred_check_branch
    %13 = sbr.rel (0) target = $region13
  $region12: #{lenet5_forward.2} parent=0 // pred_region
    _
  $region13: #{lenet5_forward.2} parent=0 // pred_fallthru
    _
  %v15 = vld [vmem:[%s1] sm:$0xf]
  %v16 = vld [vmem:[%s1 + $0x4] sm:$0xf]
  %v17 = vld [vmem:[%s1 + $0x8] sm:$0xf]
  %v18 = vld [vmem:[%s1 + $0xc] sm:$0xf]
  %v19 = vld [vmem:[%s0] sm:$0xf]
  %v20 = vld [vmem:[%s0 + $0x4] sm:$0xf]
  %v21 = vld [vmem:[%s0 + $0x8] sm:$0xf]
  %v22 = vld [vmem:[%s0 + $0xc] sm:$0xf]
  %v23 = vld [vmem:[%s0 + $0x10] sm:$0xf]
  %v24 = vld [vmem:[%s0 + $0x14] sm:$0xf]
  %v25 = vld [vmem:[%s0 + $0x18] sm:$0xf]
  %v26 = vld [vmem:[%s0 + $0x1c] sm:$0xf]
  %v27 = vld [vmem:[%s0 + $0x20] sm:$0xf]
  %v28 = vld [vmem:[%s0 + $0x24] sm:$0xf]
  %v29 = vld [vmem:[%s0 + $0x28] sm:$0xf]
  %v30 = vld [vmem:[%s0 + $0x2c] sm:$0xf]
  %v31 = vld [vmem:[%s0 + $0x30] sm:$0xf]
  %v32 = vld [vmem:[%s0 + $0x34] sm:$0xf]
  %v33 = vld [vmem:[%s0 + $0x38] sm:$0xf]
  %v34 = vld [vmem:[%s0 + $0x3c] sm:$0xf]
  %v35 = vld [vmem:[%s0 + $0x40] sm:$0xf]
  %v36 = vld [vmem:[%s0 + $0x44] sm:$0xf]
  %v37 = vld [vmem:[%s0 + $0x48] sm:$0xf]
  %v38 = vld [vmem:[%s0 + $0x4c] sm:$0xf]
  %v39 = vld [vmem:[%s0 + $0x50] sm:$0xf]
  %v40 = vld [vmem:[%s0 + $0x54] sm:$0xf]
  %v41 = vld [vmem:[%s0 + $0x58] sm:$0xf]
  %v42 = vld [vmem:[%s0 + $0x5c] sm:$0xf]
  %v43 = vld [vmem:[%s0 + $0x60] sm:$0xf]
  %v44 = vld [vmem:[%s0 + $0x64] sm:$0xf]
  %v45 = vld [vmem:[%s0 + $0x68] sm:$0xf]
  %v46 = vld [vmem:[%s0 + $0x6c] sm:$0xf]
  %v47 = vld [vmem:[%s0 + $0x70] sm:$0xf]
  %v48 = vld [vmem:[%s0 + $0x74] sm:$0xf]
  %v49 = vld [vmem:[%s0 + $0x78] sm:$0xf]
  %v50 = vld [vmem:[%s0 + $0x7c] sm:$0xf]
  %v51 = vld [vmem:[%s0 + $0x80] sm:$0xf]
  %v52 = vld [vmem:[%s0 + $0x84] sm:$0xf]
  %v53 = vld [vmem:[%s0 + $0x88] sm:$0xf]
  %v54 = vld [vmem:[%s0 + $0x8c] sm:$0xf]
  %v55 = vld [vmem:[%s0 + $0x90] sm:$0xf]
  %v56 = vld [vmem:[%s0 + $0x94] sm:$0xf]
  %v57 = vld [vmem:[%s0 + $0x98] sm:$0xf]
  %v58 = vld [vmem:[%s0 + $0x9c] sm:$0xf]
  %v59 = vld [vmem:[%s0 + $0xa0] sm:$0xf]
  %v60 = vld [vmem:[%s0 + $0xa4] sm:$0xf]
  %v61 = vld [vmem:[%s0 + $0xa8] sm:$0xf]
  %v62 = vld [vmem:[%s0 + $0xac] sm:$0xf]
  %v63 = vld [vmem:[%s0 + $0xb0] sm:$0xf]
  %v64 = vld [vmem:[%s0 + $0xb4] sm:$0xf]
  %v65 = vld [vmem:[%s0 + $0xb8] sm:$0xf]
  %v66 = vld [vmem:[%s0 + $0xbc] sm:$0xf]
  %v67 = vld [vmem:[%s0 + $0xc0] sm:$0xf]
  %v68 = vld [vmem:[%s0 + $0xc4] sm:$0xf]
  %v119 = vunpack.c.l.b16 %v19
  %v120 = vunpack.c.l.b16 %v20
  %v121 = vunpack.c.l.b16 %v21
  %v122 = vunpack.c.l.b16 %v22
  %v123 = vunpack.c.l.b16 %v23
  %v124 = vunpack.c.l.b16 %v24
  %v125 = vunpack.c.l.b16 %v25
  %v126 = vunpack.c.l.b16 %v26
  %v127 = vunpack.c.l.b16 %v27
  %v128 = vunpack.c.l.b16 %v28
  %v129 = vunpack.c.l.b16 %v29
  %v130 = vunpack.c.l.b16 %v30
  %v131 = vunpack.c.l.b16 %v31
  %v132 = vunpack.c.l.b16 %v32
  %v133 = vunpack.c.l.b16 %v33
  %v134 = vunpack.c.l.b16 %v34
  %v135 = vunpack.c.l.b16 %v35
  %v136 = vunpack.c.l.b16 %v36
  %v137 = vunpack.c.l.b16 %v37
  %v138 = vunpack.c.l.b16 %v38
  %v139 = vunpack.c.l.b16 %v39
  %v140 = vunpack.c.l.b16 %v40
  %v141 = vunpack.c.l.b16 %v41
  %v142 = vunpack.c.l.b16 %v42
  %v143 = vunpack.c.l.b16 %v43
  %v144 = vunpack.c.l.b16 %v44
  %v145 = vunpack.c.l.b16 %v45
  %v146 = vunpack.c.l.b16 %v46
  %v147 = vunpack.c.l.b16 %v47
  %v148 = vunpack.c.l.b16 %v48
  %v149 = vunpack.c.l.b16 %v49
  %v150 = vunpack.c.l.b16 %v50
  %v151 = vunpack.c.l.b16 %v51
  %v152 = vunpack.c.l.b16 %v52
  %v153 = vunpack.c.l.b16 %v53
  %v154 = vunpack.c.l.b16 %v54
  %v155 = vunpack.c.l.b16 %v55
  %v156 = vunpack.c.l.b16 %v56
  %v157 = vunpack.c.l.b16 %v57
  %v158 = vunpack.c.l.b16 %v58
  %v159 = vunpack.c.l.b16 %v59
  %v160 = vunpack.c.l.b16 %v60
  %v161 = vunpack.c.l.b16 %v61
  %v162 = vunpack.c.l.b16 %v62
  %v163 = vunpack.c.l.b16 %v63
  %v164 = vunpack.c.l.b16 %v64
  %v165 = vunpack.c.l.b16 %v65
  %v166 = vunpack.c.l.b16 %v66
  %v167 = vunpack.c.l.b16 %v67
  %v168 = vunpack.c.l.b16 %v68
  %v169 = vpack.c.b16 %v120, %v119
  %v170 = vpack.c.b16 %v122, %v121
  %v171 = vpack.c.b16 %v124, %v123
  %v172 = vpack.c.b16 %v126, %v125
  %v173 = vpack.c.b16 %v128, %v127
  %v174 = vpack.c.b16 %v130, %v129
  %v175 = vpack.c.b16 %v132, %v131
  %v176 = vpack.c.b16 %v134, %v133
  %v177 = vpack.c.b16 %v136, %v135
  %v178 = vpack.c.b16 %v138, %v137
  %v179 = vpack.c.b16 %v140, %v139
  %v180 = vpack.c.b16 %v142, %v141
  %v181 = vpack.c.b16 %v144, %v143
  %v182 = vpack.c.b16 %v146, %v145
  %v183 = vpack.c.b16 %v148, %v147
  %v184 = vpack.c.b16 %v150, %v149
  %v185 = vpack.c.b16 %v152, %v151
  %v186 = vpack.c.b16 %v154, %v153
  %v187 = vpack.c.b16 %v156, %v155
  %v188 = vpack.c.b16 %v158, %v157
  %v189 = vpack.c.b16 %v160, %v159
  %v190 = vpack.c.b16 %v162, %v161
  %v191 = vpack.c.b16 %v164, %v163
  %v192 = vpack.c.b16 %v166, %v165
  %v193 = vpack.c.b16 %v168, %v167
  %v198 = vunpack.c.l.b16 %v15
  %v199 = vunpack.c.l.b16 %v16
  %v200 = vunpack.c.l.b16 %v17
  %v201 = vunpack.c.l.b16 %v18
  %v202 = vpack.c.b16 %v199, %v198
  %v203 = vpack.c.b16 %v201, %v200
  %vm206 = vcmask 261120
  %v208 = vsel %vm206, %v169, 0
  %v211 = vsel %vm206, %v170, 0
  %v214 = vsel %vm206, %v171, 0
  %v217 = vsel %vm206, %v172, 0
  %v220 = vsel %vm206, %v173, 0
  %v223 = vsel %vm206, %v174, 0
  %v226 = vsel %vm206, %v175, 0
  %v229 = vsel %vm206, %v176, 0
  %v232 = vsel %vm206, %v177, 0
  %v235 = vsel %vm206, %v178, 0
  %v238 = vsel %vm206, %v179, 0
  %v241 = vsel %vm206, %v180, 0
  %v244 = vsel %vm206, %v181, 0
  %v247 = vsel %vm206, %v182, 0
  %v250 = vsel %vm206, %v183, 0
  %v253 = vsel %vm206, %v184, 0
  %v256 = vsel %vm206, %v185, 0
  %v259 = vsel %vm206, %v186, 0
  %v262 = vsel %vm206, %v187, 0
  %v265 = vsel %vm206, %v188, 0
  %v268 = vsel %vm206, %v189, 0
  %v271 = vsel %vm206, %v190, 0
  %v274 = vsel %vm206, %v191, 0
  %v277 = vsel %vm206, %v192, 0
  %v280 = vsel %vm206, %v193, 0
  %282 = vmatprep.subr.bf16.mxu0 0
  %283 = vmatpush1.bf16.msra.mxu0 0
  %284 = vmatprep.subr.bf16.mxu0 0
  %285 = vmatpush1.bf16.msra.mxu0 0
  %286 = vmatprep.subr.bf16.mxu0 0
  %287 = vmatpush1.bf16.msra.mxu0 0
  %288 = vmatprep.subr.bf16.mxu0 0
  %289 = vmatpush1.bf16.msra.mxu0 0
  %290 = vmatprep.subr.bf16.mxu0 0
  %291 = vmatpush1.bf16.msra.mxu0 0
  %292 = vmatprep.subr.bf16.mxu0 0
  %293 = vmatpush1.bf16.msra.mxu0 0
  %294 = vmatprep.subr.bf16.mxu0 0
  %295 = vmatpush1.bf16.msra.mxu0 %v203
  %296 = vmatprep.subr.bf16.mxu0 0
  %297 = vmatpush1.bf16.msra.mxu0 %v202
  %298 = vmatprep.subr.bf16.mxu0 0
  %299 = vmatpush2.bf16.msra.mxu0 0
  %300 = vmatprep.subr.bf16.mxu0 0
  %301 = vmatpush2.bf16.msra.mxu0 0
  %302 = vmatprep.subr.bf16.mxu0 0
  %303 = vmatpush2.bf16.msra.mxu0 0
  %304 = vmatprep.subr.bf16.mxu0 0
  %305 = vmatpush2.bf16.msra.mxu0 0
  %306 = vmatprep.subr.bf16.mxu0 0
  %307 = vmatpush2.bf16.msra.mxu0 0
  %308 = vmatprep.subr.bf16.mxu0 0
  %309 = vmatpush2.bf16.msra.mxu0 0
  %310 = vmatprep.subr.bf16.mxu0 0
  %311 = vmatpush2.bf16.msra.mxu0 0
  %312 = vmatprep.subr.bf16.mxu0 0
  %313 = vmatpush2.bf16.msra.mxu0 0
  %314 = vmatprep.mubr.bf16.mxu0 0
  %315 = vmatmul.mubr.bf16.gmra.mxu0 %v208
  %v316 = vpop.f32.mrf.mxu0
  %v317 = vadd.f32 0.0, %v316
  %v318 = vpop.f32.mrf.mxu0
  %v319 = vpop.f32.mrf.mxu0
  %v320 = vadd.f32 0.0, %v319
  %v321 = vpop.f32.mrf.mxu0
  %322 = vmatprep.mubr.bf16.mxu0 0
  %323 = vmatmul.mubr.bf16.gmra.mxu0 %v211
  %v324 = vpop.f32.mrf.mxu0
  %v325 = vadd.f32 0.0, %v324
  %v326 = vpop.f32.mrf.mxu0
  %v327 = vpop.f32.mrf.mxu0
  %v328 = vadd.f32 0.0, %v327
  %v329 = vpop.f32.mrf.mxu0
  %330 = vmatprep.mubr.bf16.mxu0 0
  %331 = vmatmul.mubr.bf16.gmra.mxu0 %v214
  %v332 = vpop.f32.mrf.mxu0
  %v333 = vadd.f32 0.0, %v332
  %v334 = vpop.f32.mrf.mxu0
  %v335 = vpop.f32.mrf.mxu0
  %v336 = vadd.f32 0.0, %v335
  %v337 = vpop.f32.mrf.mxu0
  %338 = vmatprep.mubr.bf16.mxu0 0
  %339 = vmatmul.mubr.bf16.gmra.mxu0 %v217
  %v340 = vpop.f32.mrf.mxu0
  %v341 = vadd.f32 0.0, %v340
  %v342 = vpop.f32.mrf.mxu0
  %v343 = vpop.f32.mrf.mxu0
  %v344 = vadd.f32 0.0, %v343
  %v345 = vpop.f32.mrf.mxu0
  %346 = vmatprep.mubr.bf16.mxu0 0
  %347 = vmatmul.mubr.bf16.gmra.mxu0 %v220
  %v348 = vpop.f32.mrf.mxu0
  %v349 = vadd.f32 0.0, %v348
  %v350 = vpop.f32.mrf.mxu0
  %v351 = vpop.f32.mrf.mxu0
  %v352 = vadd.f32 0.0, %v351
  %v353 = vpop.f32.mrf.mxu0
  %354 = vmatprep.mubr.bf16.mxu0 0
  %355 = vmatmul.mubr.bf16.gmra.mxu0 %v223
  %v356 = vpop.f32.mrf.mxu0
  %v357 = vadd.f32 0.0, %v356
  %v358 = vpop.f32.mrf.mxu0
  %v359 = vpop.f32.mrf.mxu0
  %v360 = vadd.f32 0.0, %v359
  %v361 = vpop.f32.mrf.mxu0
  %362 = vmatprep.mubr.bf16.mxu0 0
  %363 = vmatmul.mubr.bf16.gmra.mxu0 %v226
  %v364 = vpop.f32.mrf.mxu0
  %v365 = vadd.f32 0.0, %v364
  %v366 = vpop.f32.mrf.mxu0
  %v367 = vpop.f32.mrf.mxu0
  %v368 = vadd.f32 0.0, %v367
  %v369 = vpop.f32.mrf.mxu0
  %370 = vmatprep.mubr.bf16.mxu0 0
  %371 = vmatmul.mubr.bf16.gmra.mxu0 %v229
  %v372 = vpop.f32.mrf.mxu0
  %v373 = vadd.f32 0.0, %v372
  %v374 = vpop.f32.mrf.mxu0
  %v375 = vpop.f32.mrf.mxu0
  %v376 = vadd.f32 0.0, %v375
  %v377 = vpop.f32.mrf.mxu0
  %378 = vmatprep.mubr.bf16.mxu0 0
  %379 = vmatmul.mubr.bf16.gmra.mxu0 %v232
  %v380 = vpop.f32.mrf.mxu0
  %v381 = vadd.f32 0.0, %v380
  %v382 = vpop.f32.mrf.mxu0
  %v383 = vpop.f32.mrf.mxu0
  %v384 = vadd.f32 0.0, %v383
  %v385 = vpop.f32.mrf.mxu0
  %386 = vmatprep.mubr.bf16.mxu0 0
  %387 = vmatmul.mubr.bf16.gmra.mxu0 %v235
  %v388 = vpop.f32.mrf.mxu0
  %v389 = vadd.f32 0.0, %v388
  %v390 = vpop.f32.mrf.mxu0
  %v391 = vpop.f32.mrf.mxu0
  %v392 = vadd.f32 0.0, %v391
  %v393 = vpop.f32.mrf.mxu0
  %394 = vmatprep.mubr.bf16.mxu0 0
  %395 = vmatmul.mubr.bf16.gmra.mxu0 %v238
  %v396 = vpop.f32.mrf.mxu0
  %v397 = vadd.f32 0.0, %v396
  %v398 = vpop.f32.mrf.mxu0
  %v399 = vpop.f32.mrf.mxu0
  %v400 = vadd.f32 0.0, %v399
  %v401 = vpop.f32.mrf.mxu0
  %402 = vmatprep.mubr.bf16.mxu0 0
  %403 = vmatmul.mubr.bf16.gmra.mxu0 %v241
  %v404 = vpop.f32.mrf.mxu0
  %v405 = vadd.f32 0.0, %v404
  %v406 = vpop.f32.mrf.mxu0
  %v407 = vpop.f32.mrf.mxu0
  %v408 = vadd.f32 0.0, %v407
  %v409 = vpop.f32.mrf.mxu0
  %410 = vmatprep.mubr.bf16.mxu0 0
  %411 = vmatmul.mubr.bf16.gmra.mxu0 %v244
  %v412 = vpop.f32.mrf.mxu0
  %v413 = vadd.f32 0.0, %v412
  %v414 = vpop.f32.mrf.mxu0
  %v415 = vpop.f32.mrf.mxu0
  %v416 = vadd.f32 0.0, %v415
  %v417 = vpop.f32.mrf.mxu0
  %418 = vmatprep.mubr.bf16.mxu0 0
  %419 = vmatmul.mubr.bf16.gmra.mxu0 %v247
  %v420 = vpop.f32.mrf.mxu0
  %v421 = vadd.f32 0.0, %v420
  %v422 = vpop.f32.mrf.mxu0
  %v423 = vpop.f32.mrf.mxu0
  %v424 = vadd.f32 0.0, %v423
  %v425 = vpop.f32.mrf.mxu0
  %426 = vmatprep.mubr.bf16.mxu0 0
  %427 = vmatmul.mubr.bf16.gmra.mxu0 %v250
  %v428 = vpop.f32.mrf.mxu0
  %v429 = vadd.f32 0.0, %v428
  %v430 = vpop.f32.mrf.mxu0
  %v431 = vpop.f32.mrf.mxu0
  %v432 = vadd.f32 0.0, %v431
  %v433 = vpop.f32.mrf.mxu0
  %434 = vmatprep.mubr.bf16.mxu0 0
  %435 = vmatmul.mubr.bf16.gmra.mxu0 %v253
  %v436 = vpop.f32.mrf.mxu0
  %v437 = vadd.f32 0.0, %v436
  %v438 = vpop.f32.mrf.mxu0
  %v439 = vpop.f32.mrf.mxu0
  %v440 = vadd.f32 0.0, %v439
  %v441 = vpop.f32.mrf.mxu0
  %442 = vmatprep.mubr.bf16.mxu0 0
  %443 = vmatmul.mubr.bf16.gmra.mxu0 %v256
  %v444 = vpop.f32.mrf.mxu0
  %v445 = vadd.f32 0.0, %v444
  %v446 = vpop.f32.mrf.mxu0
  %v447 = vpop.f32.mrf.mxu0
  %v448 = vadd.f32 0.0, %v447
  %v449 = vpop.f32.mrf.mxu0
  %450 = vmatprep.mubr.bf16.mxu0 0
  %451 = vmatmul.mubr.bf16.gmra.mxu0 %v259
  %v452 = vpop.f32.mrf.mxu0
  %v453 = vadd.f32 0.0, %v452
  %v454 = vpop.f32.mrf.mxu0
  %v455 = vpop.f32.mrf.mxu0
  %v456 = vadd.f32 0.0, %v455
  %v457 = vpop.f32.mrf.mxu0
  %458 = vmatprep.mubr.bf16.mxu0 0
  %459 = vmatmul.mubr.bf16.gmra.mxu0 %v262
  %v460 = vpop.f32.mrf.mxu0
  %v461 = vadd.f32 0.0, %v460
  %v462 = vpop.f32.mrf.mxu0
  %v463 = vpop.f32.mrf.mxu0
  %v464 = vadd.f32 0.0, %v463
  %v465 = vpop.f32.mrf.mxu0
  %466 = vmatprep.mubr.bf16.mxu0 0
  %467 = vmatmul.mubr.bf16.gmra.mxu0 %v265
  %v468 = vpop.f32.mrf.mxu0
  %v469 = vadd.f32 0.0, %v468
  %v470 = vpop.f32.mrf.mxu0
  %v471 = vpop.f32.mrf.mxu0
  %v472 = vadd.f32 0.0, %v471
  %v473 = vpop.f32.mrf.mxu0
  %474 = vmatprep.mubr.bf16.mxu0 0
  %475 = vmatmul.mubr.bf16.gmra.mxu0 %v268
  %v476 = vpop.f32.mrf.mxu0
  %v477 = vadd.f32 0.0, %v476
  %v478 = vpop.f32.mrf.mxu0
  %v479 = vpop.f32.mrf.mxu0
  %v480 = vadd.f32 0.0, %v479
  %v481 = vpop.f32.mrf.mxu0
  %482 = vmatprep.mubr.bf16.mxu0 0
  %483 = vmatmul.mubr.bf16.gmra.mxu0 %v271
  %v484 = vpop.f32.mrf.mxu0
  %v485 = vadd.f32 0.0, %v484
  %v486 = vpop.f32.mrf.mxu0
  %v487 = vpop.f32.mrf.mxu0
  %v488 = vadd.f32 0.0, %v487
  %v489 = vpop.f32.mrf.mxu0
  %490 = vmatprep.mubr.bf16.mxu0 0
  %491 = vmatmul.mubr.bf16.gmra.mxu0 %v274
  %v492 = vpop.f32.mrf.mxu0
  %v493 = vadd.f32 0.0, %v492
  %v494 = vpop.f32.mrf.mxu0
  %v495 = vpop.f32.mrf.mxu0
  %v496 = vadd.f32 0.0, %v495
  %v497 = vpop.f32.mrf.mxu0
  %498 = vmatprep.mubr.bf16.mxu0 0
  %499 = vmatmul.mubr.bf16.gmra.mxu0 %v277
  %v500 = vpop.f32.mrf.mxu0
  %v501 = vadd.f32 0.0, %v500
  %v502 = vpop.f32.mrf.mxu0
  %v503 = vpop.f32.mrf.mxu0
  %v504 = vadd.f32 0.0, %v503
  %v505 = vpop.f32.mrf.mxu0
  %506 = vmatprep.mubr.bf16.mxu0 0
  %507 = vmatmul.mubr.bf16.gmra.mxu0 %v280
  %v508 = vpop.f32.mrf.mxu0
  %v509 = vadd.f32 0.0, %v508
  %v510 = vpop.f32.mrf.mxu0
  %v511 = vpop.f32.mrf.mxu0
  %v512 = vadd.f32 0.0, %v511
  %v513 = vpop.f32.mrf.mxu0
  %514 = vdwg.mxu0
  %s515 = scalar_lea.vmem %s0, 200
  %v516 = vld [vmem:[%s515] sm:$0xf]
  %v517 = vld [vmem:[%s515 + $0x4] sm:$0xf]
  %v518 = vld [vmem:[%s515 + $0x8] sm:$0xf]
  %v519 = vld [vmem:[%s515 + $0xc] sm:$0xf]
  %v520 = vld [vmem:[%s515 + $0x10] sm:$0xf]
  %v521 = vld [vmem:[%s515 + $0x14] sm:$0xf]
  %v522 = vld [vmem:[%s515 + $0x18] sm:$0xf]
  %v523 = vld [vmem:[%s515 + $0x1c] sm:$0xf]
  %v524 = vld [vmem:[%s515 + $0x20] sm:$0xf]
  %v525 = vld [vmem:[%s515 + $0x24] sm:$0xf]
  %v526 = vld [vmem:[%s515 + $0x28] sm:$0xf]
  %v527 = vld [vmem:[%s515 + $0x2c] sm:$0xf]
  %v528 = vld [vmem:[%s515 + $0x30] sm:$0xf]
  %v529 = vld [vmem:[%s515 + $0x34] sm:$0xf]
  %v530 = vld [vmem:[%s515 + $0x38] sm:$0xf]
  %v531 = vld [vmem:[%s515 + $0x3c] sm:$0xf]
  %v532 = vld [vmem:[%s515 + $0x40] sm:$0xf]
  %v533 = vld [vmem:[%s515 + $0x44] sm:$0xf]
  %v534 = vld [vmem:[%s515 + $0x48] sm:$0xf]
  %v535 = vld [vmem:[%s515 + $0x4c] sm:$0xf]
  %v536 = vld [vmem:[%s515 + $0x50] sm:$0xf]
  %v537 = vld [vmem:[%s515 + $0x54] sm:$0xf]
  %v538 = vld [vmem:[%s515 + $0x58] sm:$0xf]
  %v539 = vld [vmem:[%s515 + $0x5c] sm:$0xf]
  %v540 = vld [vmem:[%s515 + $0x60] sm:$0xf]
  %v541 = vld [vmem:[%s515 + $0x64] sm:$0xf]
  %v542 = vld [vmem:[%s515 + $0x68] sm:$0xf]
  %v543 = vld [vmem:[%s515 + $0x6c] sm:$0xf]
  %v544 = vld [vmem:[%s515 + $0x70] sm:$0xf]
  %v545 = vld [vmem:[%s515 + $0x74] sm:$0xf]
  %v546 = vld [vmem:[%s515 + $0x78] sm:$0xf]
  %v547 = vld [vmem:[%s515 + $0x7c] sm:$0xf]
  %v548 = vld [vmem:[%s515 + $0x80] sm:$0xf]
  %v549 = vld [vmem:[%s515 + $0x84] sm:$0xf]
  %v550 = vld [vmem:[%s515 + $0x88] sm:$0xf]
  %v551 = vld [vmem:[%s515 + $0x8c] sm:$0xf]
  %v552 = vld [vmem:[%s515 + $0x90] sm:$0xf]
  %v553 = vld [vmem:[%s515 + $0x94] sm:$0xf]
  %v554 = vld [vmem:[%s515 + $0x98] sm:$0xf]
  %v555 = vld [vmem:[%s515 + $0x9c] sm:$0xf]
  %v556 = vld [vmem:[%s515 + $0xa0] sm:$0xf]
  %v557 = vld [vmem:[%s515 + $0xa4] sm:$0xf]
  %v558 = vld [vmem:[%s515 + $0xa8] sm:$0xf]
  %v559 = vld [vmem:[%s515 + $0xac] sm:$0xf]
  %v560 = vld [vmem:[%s515 + $0xb0] sm:$0xf]
  %v561 = vld [vmem:[%s515 + $0xb4] sm:$0xf]
  %v562 = vld [vmem:[%s515 + $0xb8] sm:$0xf]
  %v563 = vld [vmem:[%s515 + $0xbc] sm:$0xf]
  %v564 = vld [vmem:[%s515 + $0xc0] sm:$0xf]
  %v565 = vld [vmem:[%s515 + $0xc4] sm:$0xf]
  %v616 = vunpack.c.l.b16 %v516
  %v617 = vunpack.c.l.b16 %v517
  %v618 = vunpack.c.l.b16 %v518
  %v619 = vunpack.c.l.b16 %v519
  %v620 = vunpack.c.l.b16 %v520
  %v621 = vunpack.c.l.b16 %v521
  %v622 = vunpack.c.l.b16 %v522
  %v623 = vunpack.c.l.b16 %v523
  %v624 = vunpack.c.l.b16 %v524
  %v625 = vunpack.c.l.b16 %v525
  %v626 = vunpack.c.l.b16 %v526
  %v627 = vunpack.c.l.b16 %v527
  %v628 = vunpack.c.l.b16 %v528
  %v629 = vunpack.c.l.b16 %v529
  %v630 = vunpack.c.l.b16 %v530
  %v631 = vunpack.c.l.b16 %v531
  %v632 = vunpack.c.l.b16 %v532
  %v633 = vunpack.c.l.b16 %v533
  %v634 = vunpack.c.l.b16 %v534
  %v635 = vunpack.c.l.b16 %v535
  %v636 = vunpack.c.l.b16 %v536
  %v637 = vunpack.c.l.b16 %v537
  %v638 = vunpack.c.l.b16 %v538
  %v639 = vunpack.c.l.b16 %v539
  %v640 = vunpack.c.l.b16 %v540
  %v641 = vunpack.c.l.b16 %v541
  %v642 = vunpack.c.l.b16 %v542
  %v643 = vunpack.c.l.b16 %v543
  %v644 = vunpack.c.l.b16 %v544
  %v645 = vunpack.c.l.b16 %v545
  %v646 = vunpack.c.l.b16 %v546
  %v647 = vunpack.c.l.b16 %v547
  %v648 = vunpack.c.l.b16 %v548
  %v649 = vunpack.c.l.b16 %v549
  %v650 = vunpack.c.l.b16 %v550
  %v651 = vunpack.c.l.b16 %v551
  %v652 = vunpack.c.l.b16 %v552
  %v653 = vunpack.c.l.b16 %v553
  %v654 = vunpack.c.l.b16 %v554
  %v655 = vunpack.c.l.b16 %v555
  %v656 = vunpack.c.l.b16 %v556
  %v657 = vunpack.c.l.b16 %v557
  %v658 = vunpack.c.l.b16 %v558
  %v659 = vunpack.c.l.b16 %v559
  %v660 = vunpack.c.l.b16 %v560
  %v661 = vunpack.c.l.b16 %v561
  %v662 = vunpack.c.l.b16 %v562
  %v663 = vunpack.c.l.b16 %v563
  %v664 = vunpack.c.l.b16 %v564
  %v665 = vunpack.c.l.b16 %v565
  %v666 = vpack.c.b16 %v617, %v616
  %v667 = vpack.c.b16 %v619, %v618
  %v668 = vpack.c.b16 %v621, %v620
  %v669 = vpack.c.b16 %v623, %v622
  %v670 = vpack.c.b16 %v625, %v624
  %v671 = vpack.c.b16 %v627, %v626
  %v672 = vpack.c.b16 %v629, %v628
  %v673 = vpack.c.b16 %v631, %v630
  %v674 = vpack.c.b16 %v633, %v632
  %v675 = vpack.c.b16 %v635, %v634
  %v676 = vpack.c.b16 %v637, %v636
  %v677 = vpack.c.b16 %v639, %v638
  %v678 = vpack.c.b16 %v641, %v640
  %v679 = vpack.c.b16 %v643, %v642
  %v680 = vpack.c.b16 %v645, %v644
  %v681 = vpack.c.b16 %v647, %v646
  %v682 = vpack.c.b16 %v649, %v648
  %v683 = vpack.c.b16 %v651, %v650
  %v684 = vpack.c.b16 %v653, %v652
  %v685 = vpack.c.b16 %v655, %v654
  %v686 = vpack.c.b16 %v657, %v656
  %v687 = vpack.c.b16 %v659, %v658
  %v688 = vpack.c.b16 %v661, %v660
  %v689 = vpack.c.b16 %v663, %v662
  %v690 = vpack.c.b16 %v665, %v664
  %v692 = vsel %vm206, %v666, 0
  %v695 = vsel %vm206, %v667, 0
  %v698 = vsel %vm206, %v668, 0
  %v701 = vsel %vm206, %v669, 0
  %v704 = vsel %vm206, %v670, 0
  %v707 = vsel %vm206, %v671, 0
  %v710 = vsel %vm206, %v672, 0
  %v713 = vsel %vm206, %v673, 0
  %v716 = vsel %vm206, %v674, 0
  %v719 = vsel %vm206, %v675, 0
  %v722 = vsel %vm206, %v676, 0
  %v725 = vsel %vm206, %v677, 0
  %v728 = vsel %vm206, %v678, 0
  %v731 = vsel %vm206, %v679, 0
  %v734 = vsel %vm206, %v680, 0
  %v737 = vsel %vm206, %v681, 0
  %v740 = vsel %vm206, %v682, 0
  %v743 = vsel %vm206, %v683, 0
  %v746 = vsel %vm206, %v684, 0
  %v749 = vsel %vm206, %v685, 0
  %v752 = vsel %vm206, %v686, 0
  %v755 = vsel %vm206, %v687, 0
  %v758 = vsel %vm206, %v688, 0
  %v761 = vsel %vm206, %v689, 0
  %v764 = vsel %vm206, %v690, 0
  %766 = vmatprep.subr.bf16.mxu0 0
  %767 = vmatpush1.bf16.msra.mxu0 0
  %768 = vmatprep.subr.bf16.mxu0 0
  %769 = vmatpush1.bf16.msra.mxu0 0
  %770 = vmatprep.subr.bf16.mxu0 0
  %771 = vmatpush1.bf16.msra.mxu0 0
  %772 = vmatprep.subr.bf16.mxu0 0
  %773 = vmatpush1.bf16.msra.mxu0 0
  %774 = vmatprep.subr.bf16.mxu0 0
  %775 = vmatpush1.bf16.msra.mxu0 0
  %776 = vmatprep.subr.bf16.mxu0 0
  %777 = vmatpush1.bf16.msra.mxu0 0
  %778 = vmatprep.subr.bf16.mxu0 0
  %779 = vmatpush1.bf16.msra.mxu0 %v203
  %780 = vmatprep.subr.bf16.mxu0 0
  %781 = vmatpush1.bf16.msra.mxu0 %v202
  %782 = vmatprep.subr.bf16.mxu0 0
  %783 = vmatpush2.bf16.msra.mxu0 0
  %784 = vmatprep.subr.bf16.mxu0 0
  %785 = vmatpush2.bf16.msra.mxu0 0
  %786 = vmatprep.subr.bf16.mxu0 0
  %787 = vmatpush2.bf16.msra.mxu0 0
  %788 = vmatprep.subr.bf16.mxu0 0
  %789 = vmatpush2.bf16.msra.mxu0 0
  %790 = vmatprep.subr.bf16.mxu0 0
  %791 = vmatpush2.bf16.msra.mxu0 0
  %792 = vmatprep.subr.bf16.mxu0 0
  %793 = vmatpush2.bf16.msra.mxu0 0
  %794 = vmatprep.subr.bf16.mxu0 0
  %795 = vmatpush2.bf16.msra.mxu0 0
  %796 = vmatprep.subr.bf16.mxu0 0
  %797 = vmatpush2.bf16.msra.mxu0 0
  %798 = vmatprep.mubr.bf16.mxu0 0
  %799 = vmatmul.mubr.bf16.gmra.mxu0 %v692
  %v800 = vpop.f32.mrf.mxu0
  %v801 = vadd.f32 0.0, %v800
  %v802 = vpop.f32.mrf.mxu0
  %v803 = vpop.f32.mrf.mxu0
  %v804 = vadd.f32 0.0, %v803
  %v805 = vpop.f32.mrf.mxu0
  %806 = vmatprep.mubr.bf16.mxu0 0
  %807 = vmatmul.mubr.bf16.gmra.mxu0 %v695
  %v808 = vpop.f32.mrf.mxu0
  %v809 = vadd.f32 0.0, %v808
  %v810 = vpop.f32.mrf.mxu0
  %v811 = vpop.f32.mrf.mxu0
  %v812 = vadd.f32 0.0, %v811
  %v813 = vpop.f32.mrf.mxu0
  %814 = vmatprep.mubr.bf16.mxu0 0
  %815 = vmatmul.mubr.bf16.gmra.mxu0 %v698
  %v816 = vpop.f32.mrf.mxu0
  %v817 = vadd.f32 0.0, %v816
  %v818 = vpop.f32.mrf.mxu0
  %v819 = vpop.f32.mrf.mxu0
  %v820 = vadd.f32 0.0, %v819
  %v821 = vpop.f32.mrf.mxu0
  %822 = vmatprep.mubr.bf16.mxu0 0
  %823 = vmatmul.mubr.bf16.gmra.mxu0 %v701
  %v824 = vpop.f32.mrf.mxu0
  %v825 = vadd.f32 0.0, %v824
  %v826 = vpop.f32.mrf.mxu0
  %v827 = vpop.f32.mrf.mxu0
  %v828 = vadd.f32 0.0, %v827
  %v829 = vpop.f32.mrf.mxu0
  %830 = vmatprep.mubr.bf16.mxu0 0
  %831 = vmatmul.mubr.bf16.gmra.mxu0 %v704
  %v832 = vpop.f32.mrf.mxu0
  %v833 = vadd.f32 0.0, %v832
  %v834 = vpop.f32.mrf.mxu0
  %v835 = vpop.f32.mrf.mxu0
  %v836 = vadd.f32 0.0, %v835
  %v837 = vpop.f32.mrf.mxu0
  %838 = vmatprep.mubr.bf16.mxu0 0
  %839 = vmatmul.mubr.bf16.gmra.mxu0 %v707
  %v840 = vpop.f32.mrf.mxu0
  %v841 = vadd.f32 0.0, %v840
  %v842 = vpop.f32.mrf.mxu0
  %v843 = vpop.f32.mrf.mxu0
  %v844 = vadd.f32 0.0, %v843
  %v845 = vpop.f32.mrf.mxu0
  %846 = vmatprep.mubr.bf16.mxu0 0
  %847 = vmatmul.mubr.bf16.gmra.mxu0 %v710
  %v848 = vpop.f32.mrf.mxu0
  %v849 = vadd.f32 0.0, %v848
  %v850 = vpop.f32.mrf.mxu0
  %v851 = vpop.f32.mrf.mxu0
  %v852 = vadd.f32 0.0, %v851
  %v853 = vpop.f32.mrf.mxu0
  %854 = vmatprep.mubr.bf16.mxu0 0
  %855 = vmatmul.mubr.bf16.gmra.mxu0 %v713
  %v856 = vpop.f32.mrf.mxu0
  %v857 = vadd.f32 0.0, %v856
  %v858 = vpop.f32.mrf.mxu0
  %v859 = vpop.f32.mrf.mxu0
  %v860 = vadd.f32 0.0, %v859
  %v861 = vpop.f32.mrf.mxu0
  %862 = vmatprep.mubr.bf16.mxu0 0
  %863 = vmatmul.mubr.bf16.gmra.mxu0 %v716
  %v864 = vpop.f32.mrf.mxu0
  %v865 = vadd.f32 0.0, %v864
  %v866 = vpop.f32.mrf.mxu0
  %v867 = vpop.f32.mrf.mxu0
  %v868 = vadd.f32 0.0, %v867
  %v869 = vpop.f32.mrf.mxu0
  %870 = vmatprep.mubr.bf16.mxu0 0
  %871 = vmatmul.mubr.bf16.gmra.mxu0 %v719
  %v872 = vpop.f32.mrf.mxu0
  %v873 = vadd.f32 0.0, %v872
  %v874 = vpop.f32.mrf.mxu0
  %v875 = vpop.f32.mrf.mxu0
  %v876 = vadd.f32 0.0, %v875
  %v877 = vpop.f32.mrf.mxu0
  %878 = vmatprep.mubr.bf16.mxu0 0
  %879 = vmatmul.mubr.bf16.gmra.mxu0 %v722
  %v880 = vpop.f32.mrf.mxu0
  %v881 = vadd.f32 0.0, %v880
  %v882 = vpop.f32.mrf.mxu0
  %v883 = vpop.f32.mrf.mxu0
  %v884 = vadd.f32 0.0, %v883
  %v885 = vpop.f32.mrf.mxu0
  %886 = vmatprep.mubr.bf16.mxu0 0
  %887 = vmatmul.mubr.bf16.gmra.mxu0 %v725
  %v888 = vpop.f32.mrf.mxu0
  %v889 = vadd.f32 0.0, %v888
  %v890 = vpop.f32.mrf.mxu0
  %v891 = vpop.f32.mrf.mxu0
  %v892 = vadd.f32 0.0, %v891
  %v893 = vpop.f32.mrf.mxu0
  %894 = vmatprep.mubr.bf16.mxu0 0
  %895 = vmatmul.mubr.bf16.gmra.mxu0 %v728
  %v896 = vpop.f32.mrf.mxu0
  %v897 = vadd.f32 0.0, %v896
  %v898 = vpop.f32.mrf.mxu0
  %v899 = vpop.f32.mrf.mxu0
  %v900 = vadd.f32 0.0, %v899
  %v901 = vpop.f32.mrf.mxu0
  %902 = vmatprep.mubr.bf16.mxu0 0
  %903 = vmatmul.mubr.bf16.gmra.mxu0 %v731
  %v904 = vpop.f32.mrf.mxu0
  %v905 = vadd.f32 0.0, %v904
  %v906 = vpop.f32.mrf.mxu0
  %v907 = vpop.f32.mrf.mxu0
  %v908 = vadd.f32 0.0, %v907
  %v909 = vpop.f32.mrf.mxu0
  %910 = vmatprep.mubr.bf16.mxu0 0
  %911 = vmatmul.mubr.bf16.gmra.mxu0 %v734
  %v912 = vpop.f32.mrf.mxu0
  %v913 = vadd.f32 0.0, %v912
  %v914 = vpop.f32.mrf.mxu0
  %v915 = vpop.f32.mrf.mxu0
  %v916 = vadd.f32 0.0, %v915
  %v917 = vpop.f32.mrf.mxu0
  %918 = vmatprep.mubr.bf16.mxu0 0
  %919 = vmatmul.mubr.bf16.gmra.mxu0 %v737
  %v920 = vpop.f32.mrf.mxu0
  %v921 = vadd.f32 0.0, %v920
  %v922 = vpop.f32.mrf.mxu0
  %v923 = vpop.f32.mrf.mxu0
  %v924 = vadd.f32 0.0, %v923
  %v925 = vpop.f32.mrf.mxu0
  %926 = vmatprep.mubr.bf16.mxu0 0
  %927 = vmatmul.mubr.bf16.gmra.mxu0 %v740
  %v928 = vpop.f32.mrf.mxu0
  %v929 = vadd.f32 0.0, %v928
  %v930 = vpop.f32.mrf.mxu0
  %v931 = vpop.f32.mrf.mxu0
  %v932 = vadd.f32 0.0, %v931
  %v933 = vpop.f32.mrf.mxu0
  %934 = vmatprep.mubr.bf16.mxu0 0
  %935 = vmatmul.mubr.bf16.gmra.mxu0 %v743
  %v936 = vpop.f32.mrf.mxu0
  %v937 = vadd.f32 0.0, %v936
  %v938 = vpop.f32.mrf.mxu0
  %v939 = vpop.f32.mrf.mxu0
  %v940 = vadd.f32 0.0, %v939
  %v941 = vpop.f32.mrf.mxu0
  %942 = vmatprep.mubr.bf16.mxu0 0
  %943 = vmatmul.mubr.bf16.gmra.mxu0 %v746
  %v944 = vpop.f32.mrf.mxu0
  %v945 = vadd.f32 0.0, %v944
  %v946 = vpop.f32.mrf.mxu0
  %v947 = vpop.f32.mrf.mxu0
  %v948 = vadd.f32 0.0, %v947
  %v949 = vpop.f32.mrf.mxu0
  %950 = vmatprep.mubr.bf16.mxu0 0
  %951 = vmatmul.mubr.bf16.gmra.mxu0 %v749
  %v952 = vpop.f32.mrf.mxu0
  %v953 = vadd.f32 0.0, %v952
  %v954 = vpop.f32.mrf.mxu0
  %v955 = vpop.f32.mrf.mxu0
  %v956 = vadd.f32 0.0, %v955
  %v957 = vpop.f32.mrf.mxu0
  %958 = vmatprep.mubr.bf16.mxu0 0
  %959 = vmatmul.mubr.bf16.gmra.mxu0 %v752
  %v960 = vpop.f32.mrf.mxu0
  %v961 = vadd.f32 0.0, %v960
  %v962 = vpop.f32.mrf.mxu0
  %v963 = vpop.f32.mrf.mxu0
  %v964 = vadd.f32 0.0, %v963
  %v965 = vpop.f32.mrf.mxu0
  %966 = vmatprep.mubr.bf16.mxu0 0
  %967 = vmatmul.mubr.bf16.gmra.mxu0 %v755
  %v968 = vpop.f32.mrf.mxu0
  %v969 = vadd.f32 0.0, %v968
  %v970 = vpop.f32.mrf.mxu0
  %v971 = vpop.f32.mrf.mxu0
  %v972 = vadd.f32 0.0, %v971
  %v973 = vpop.f32.mrf.mxu0
  %974 = vmatprep.mubr.bf16.mxu0 0
  %975 = vmatmul.mubr.bf16.gmra.mxu0 %v758
  %v976 = vpop.f32.mrf.mxu0
  %v977 = vadd.f32 0.0, %v976
  %v978 = vpop.f32.mrf.mxu0
  %v979 = vpop.f32.mrf.mxu0
  %v980 = vadd.f32 0.0, %v979
  %v981 = vpop.f32.mrf.mxu0
  %982 = vmatprep.mubr.bf16.mxu0 0
  %983 = vmatmul.mubr.bf16.gmra.mxu0 %v761
  %v984 = vpop.f32.mrf.mxu0
  %v985 = vadd.f32 0.0, %v984
  %v986 = vpop.f32.mrf.mxu0
  %v987 = vpop.f32.mrf.mxu0
  %v988 = vadd.f32 0.0, %v987
  %v989 = vpop.f32.mrf.mxu0
  %990 = vmatprep.mubr.bf16.mxu0 0
  %991 = vmatmul.mubr.bf16.gmra.mxu0 %v764
  %v992 = vpop.f32.mrf.mxu0
  %v993 = vadd.f32 0.0, %v992
  %v994 = vpop.f32.mrf.mxu0
  %v995 = vpop.f32.mrf.mxu0
  %v996 = vadd.f32 0.0, %v995
  %v997 = vpop.f32.mrf.mxu0
  %998 = vdwg.mxu0
  %v999 = vmax.f32 %v317, %v801
  %v1000 = vmax.f32 %v320, %v804
  %v1001 = vmax.f32 %v325, %v809
  %v1002 = vmax.f32 %v328, %v812
  %v1003 = vmax.f32 %v333, %v817
  %v1004 = vmax.f32 %v336, %v820
  %v1005 = vmax.f32 %v341, %v825
  %v1006 = vmax.f32 %v344, %v828
  %v1007 = vmax.f32 %v349, %v833
  %v1008 = vmax.f32 %v352, %v836
  %v1009 = vmax.f32 %v357, %v841
  %v1010 = vmax.f32 %v360, %v844
  %v1011 = vmax.f32 %v365, %v849
  %v1012 = vmax.f32 %v368, %v852
  %v1013 = vmax.f32 %v373, %v857
  %v1014 = vmax.f32 %v376, %v860
  %v1015 = vmax.f32 %v381, %v865
  %v1016 = vmax.f32 %v384, %v868
  %v1017 = vmax.f32 %v389, %v873
  %v1018 = vmax.f32 %v392, %v876
  %v1019 = vmax.f32 %v397, %v881
  %v1020 = vmax.f32 %v400, %v884
  %v1021 = vmax.f32 %v405, %v889
  %v1022 = vmax.f32 %v408, %v892
  %v1023 = vmax.f32 %v413, %v897
  %v1024 = vmax.f32 %v416, %v900
  %v1025 = vmax.f32 %v421, %v905
  %v1026 = vmax.f32 %v424, %v908
  %v1027 = vmax.f32 %v429, %v913
  %v1028 = vmax.f32 %v432, %v916
  %v1029 = vmax.f32 %v437, %v921
  %v1030 = vmax.f32 %v440, %v924
  %v1031 = vmax.f32 %v445, %v929
  %v1032 = vmax.f32 %v448, %v932
  %v1033 = vmax.f32 %v453, %v937
  %v1034 = vmax.f32 %v456, %v940
  %v1035 = vmax.f32 %v461, %v945
  %v1036 = vmax.f32 %v464, %v948
  %v1037 = vmax.f32 %v469, %v953
  %v1038 = vmax.f32 %v472, %v956
  %v1039 = vmax.f32 %v477, %v961
  %v1040 = vmax.f32 %v480, %v964
  %v1041 = vmax.f32 %v485, %v969
  %v1042 = vmax.f32 %v488, %v972
  %v1043 = vmax.f32 %v493, %v977
  %v1044 = vmax.f32 %v496, %v980
  %v1045 = vmax.f32 %v501, %v985
  %v1046 = vmax.f32 %v504, %v988
  %v1047 = vmax.f32 %v509, %v993
  %v1048 = vmax.f32 %v512, %v996
  %s1049 = scalar_lea.vmem %s0, 400
  %v1050 = vld [vmem:[%s1049] sm:$0xf]
  %v1051 = vld [vmem:[%s1049 + $0x4] sm:$0xf]
  %v1052 = vld [vmem:[%s1049 + $0x8] sm:$0xf]
  %v1053 = vld [vmem:[%s1049 + $0xc] sm:$0xf]
  %v1054 = vld [vmem:[%s1049 + $0x10] sm:$0xf]
  %v1055 = vld [vmem:[%s1049 + $0x14] sm:$0xf]
  %v1056 = vld [vmem:[%s1049 + $0x18] sm:$0xf]
  %v1057 = vld [vmem:[%s1049 + $0x1c] sm:$0xf]
  %v1058 = vld [vmem:[%s1049 + $0x20] sm:$0xf]
  %v1059 = vld [vmem:[%s1049 + $0x24] sm:$0xf]
  %v1060 = vld [vmem:[%s1049 + $0x28] sm:$0xf]
  %v1061 = vld [vmem:[%s1049 + $0x2c] sm:$0xf]
  %v1062 = vld [vmem:[%s1049 + $0x30] sm:$0xf]
  %v1063 = vld [vmem:[%s1049 + $0x34] sm:$0xf]
  %v1064 = vld [vmem:[%s1049 + $0x38] sm:$0xf]
  %v1065 = vld [vmem:[%s1049 + $0x3c] sm:$0xf]
  %v1066 = vld [vmem:[%s1049 + $0x40] sm:$0xf]
  %v1067 = vld [vmem:[%s1049 + $0x44] sm:$0xf]
  %v1068 = vld [vmem:[%s1049 + $0x48] sm:$0xf]
  %v1069 = vld [vmem:[%s1049 + $0x4c] sm:$0xf]
  %v1070 = vld [vmem:[%s1049 + $0x50] sm:$0xf]
  %v1071 = vld [vmem:[%s1049 + $0x54] sm:$0xf]
  %v1072 = vld [vmem:[%s1049 + $0x58] sm:$0xf]
  %v1073 = vld [vmem:[%s1049 + $0x5c] sm:$0xf]
  %v1074 = vld [vmem:[%s1049 + $0x60] sm:$0xf]
  %v1075 = vld [vmem:[%s1049 + $0x64] sm:$0xf]
  %v1076 = vld [vmem:[%s1049 + $0x68] sm:$0xf]
  %v1077 = vld [vmem:[%s1049 + $0x6c] sm:$0xf]
  %v1078 = vld [vmem:[%s1049 + $0x70] sm:$0xf]
  %v1079 = vld [vmem:[%s1049 + $0x74] sm:$0xf]
  %v1080 = vld [vmem:[%s1049 + $0x78] sm:$0xf]
  %v1081 = vld [vmem:[%s1049 + $0x7c] sm:$0xf]
  %v1082 = vld [vmem:[%s1049 + $0x80] sm:$0xf]
  %v1083 = vld [vmem:[%s1049 + $0x84] sm:$0xf]
  %v1084 = vld [vmem:[%s1049 + $0x88] sm:$0xf]
  %v1085 = vld [vmem:[%s1049 + $0x8c] sm:$0xf]
  %v1086 = vld [vmem:[%s1049 + $0x90] sm:$0xf]
  %v1087 = vld [vmem:[%s1049 + $0x94] sm:$0xf]
  %v1088 = vld [vmem:[%s1049 + $0x98] sm:$0xf]
  %v1089 = vld [vmem:[%s1049 + $0x9c] sm:$0xf]
  %v1090 = vld [vmem:[%s1049 + $0xa0] sm:$0xf]
  %v1091 = vld [vmem:[%s1049 + $0xa4] sm:$0xf]
  %v1092 = vld [vmem:[%s1049 + $0xa8] sm:$0xf]
  %v1093 = vld [vmem:[%s1049 + $0xac] sm:$0xf]
  %v1094 = vld [vmem:[%s1049 + $0xb0] sm:$0xf]
  %v1095 = vld [vmem:[%s1049 + $0xb4] sm:$0xf]
  %v1096 = vld [vmem:[%s1049 + $0xb8] sm:$0xf]
  %v1097 = vld [vmem:[%s1049 + $0xbc] sm:$0xf]
  %v1098 = vld [vmem:[%s1049 + $0xc0] sm:$0xf]
  %v1099 = vld [vmem:[%s1049 + $0xc4] sm:$0xf]
  %v1150 = vunpack.c.l.b16 %v1050
  %v1151 = vunpack.c.l.b16 %v1051
  %v1152 = vunpack.c.l.b16 %v1052
  %v1153 = vunpack.c.l.b16 %v1053
  %v1154 = vunpack.c.l.b16 %v1054
  %v1155 = vunpack.c.l.b16 %v1055
  %v1156 = vunpack.c.l.b16 %v1056
  %v1157 = vunpack.c.l.b16 %v1057
  %v1158 = vunpack.c.l.b16 %v1058
  %v1159 = vunpack.c.l.b16 %v1059
  %v1160 = vunpack.c.l.b16 %v1060
  %v1161 = vunpack.c.l.b16 %v1061
  %v1162 = vunpack.c.l.b16 %v1062
  %v1163 = vunpack.c.l.b16 %v1063
  %v1164 = vunpack.c.l.b16 %v1064
  %v1165 = vunpack.c.l.b16 %v1065
  %v1166 = vunpack.c.l.b16 %v1066
  %v1167 = vunpack.c.l.b16 %v1067
  %v1168 = vunpack.c.l.b16 %v1068
  %v1169 = vunpack.c.l.b16 %v1069
  %v1170 = vunpack.c.l.b16 %v1070
  %v1171 = vunpack.c.l.b16 %v1071
  %v1172 = vunpack.c.l.b16 %v1072
  %v1173 = vunpack.c.l.b16 %v1073
  %v1174 = vunpack.c.l.b16 %v1074
  %v1175 = vunpack.c.l.b16 %v1075
  %v1176 = vunpack.c.l.b16 %v1076
  %v1177 = vunpack.c.l.b16 %v1077
  %v1178 = vunpack.c.l.b16 %v1078
  %v1179 = vunpack.c.l.b16 %v1079
  %v1180 = vunpack.c.l.b16 %v1080
  %v1181 = vunpack.c.l.b16 %v1081
  %v1182 = vunpack.c.l.b16 %v1082
  %v1183 = vunpack.c.l.b16 %v1083
  %v1184 = vunpack.c.l.b16 %v1084
  %v1185 = vunpack.c.l.b16 %v1085
  %v1186 = vunpack.c.l.b16 %v1086
  %v1187 = vunpack.c.l.b16 %v1087
  %v1188 = vunpack.c.l.b16 %v1088
  %v1189 = vunpack.c.l.b16 %v1089
  %v1190 = vunpack.c.l.b16 %v1090
  %v1191 = vunpack.c.l.b16 %v1091
  %v1192 = vunpack.c.l.b16 %v1092
  %v1193 = vunpack.c.l.b16 %v1093
  %v1194 = vunpack.c.l.b16 %v1094
  %v1195 = vunpack.c.l.b16 %v1095
  %v1196 = vunpack.c.l.b16 %v1096
  %v1197 = vunpack.c.l.b16 %v1097
  %v1198 = vunpack.c.l.b16 %v1098
  %v1199 = vunpack.c.l.b16 %v1099
  %v1200 = vpack.c.b16 %v1151, %v1150
  %v1201 = vpack.c.b16 %v1153, %v1152
  %v1202 = vpack.c.b16 %v1155, %v1154
  %v1203 = vpack.c.b16 %v1157, %v1156
  %v1204 = vpack.c.b16 %v1159, %v1158
  %v1205 = vpack.c.b16 %v1161, %v1160
  %v1206 = vpack.c.b16 %v1163, %v1162
  %v1207 = vpack.c.b16 %v1165, %v1164
  %v1208 = vpack.c.b16 %v1167, %v1166
  %v1209 = vpack.c.b16 %v1169, %v1168
  %v1210 = vpack.c.b16 %v1171, %v1170
  %v1211 = vpack.c.b16 %v1173, %v1172
  %v1212 = vpack.c.b16 %v1175, %v1174
  %v1213 = vpack.c.b16 %v1177, %v1176
  %v1214 = vpack.c.b16 %v1179, %v1178
  %v1215 = vpack.c.b16 %v1181, %v1180
  %v1216 = vpack.c.b16 %v1183, %v1182
  %v1217 = vpack.c.b16 %v1185, %v1184
  %v1218 = vpack.c.b16 %v1187, %v1186
  %v1219 = vpack.c.b16 %v1189, %v1188
  %v1220 = vpack.c.b16 %v1191, %v1190
  %v1221 = vpack.c.b16 %v1193, %v1192
  %v1222 = vpack.c.b16 %v1195, %v1194
  %v1223 = vpack.c.b16 %v1197, %v1196
  %v1224 = vpack.c.b16 %v1199, %v1198
  %v1226 = vsel %vm206, %v1200, 0
  %v1229 = vsel %vm206, %v1201, 0
  %v1232 = vsel %vm206, %v1202, 0
  %v1235 = vsel %vm206, %v1203, 0
  %v1238 = vsel %vm206, %v1204, 0
  %v1241 = vsel %vm206, %v1205, 0
  %v1244 = vsel %vm206, %v1206, 0
  %v1247 = vsel %vm206, %v1207, 0
  %v1250 = vsel %vm206, %v1208, 0
  %v1253 = vsel %vm206, %v1209, 0
  %v1256 = vsel %vm206, %v1210, 0
  %v1259 = vsel %vm206, %v1211, 0
  %v1262 = vsel %vm206, %v1212, 0
  %v1265 = vsel %vm206, %v1213, 0
  %v1268 = vsel %vm206, %v1214, 0
  %v1271 = vsel %vm206, %v1215, 0
  %v1274 = vsel %vm206, %v1216, 0
  %v1277 = vsel %vm206, %v1217, 0
  %v1280 = vsel %vm206, %v1218, 0
  %v1283 = vsel %vm206, %v1219, 0
  %v1286 = vsel %vm206, %v1220, 0
  %v1289 = vsel %vm206, %v1221, 0
  %v1292 = vsel %vm206, %v1222, 0
  %v1295 = vsel %vm206, %v1223, 0
  %v1298 = vsel %vm206, %v1224, 0
  %1300 = vmatprep.subr.bf16.mxu0 0
  %1301 = vmatpush1.bf16.msra.mxu0 0
  %1302 = vmatprep.subr.bf16.mxu0 0
  %1303 = vmatpush1.bf16.msra.mxu0 0
  %1304 = vmatprep.subr.bf16.mxu0 0
  %1305 = vmatpush1.bf16.msra.mxu0 0
  %1306 = vmatprep.subr.bf16.mxu0 0
  %1307 = vmatpush1.bf16.msra.mxu0 0
  %1308 = vmatprep.subr.bf16.mxu0 0
  %1309 = vmatpush1.bf16.msra.mxu0 0
  %1310 = vmatprep.subr.bf16.mxu0 0
  %1311 = vmatpush1.bf16.msra.mxu0 0
  %1312 = vmatprep.subr.bf16.mxu0 0
  %1313 = vmatpush1.bf16.msra.mxu0 %v203
  %1314 = vmatprep.subr.bf16.mxu0 0
  %1315 = vmatpush1.bf16.msra.mxu0 %v202
  %1316 = vmatprep.subr.bf16.mxu0 0
  %1317 = vmatpush2.bf16.msra.mxu0 0
  %1318 = vmatprep.subr.bf16.mxu0 0
  %1319 = vmatpush2.bf16.msra.mxu0 0
  %1320 = vmatprep.subr.bf16.mxu0 0
  %1321 = vmatpush2.bf16.msra.mxu0 0
  %1322 = vmatprep.subr.bf16.mxu0 0
  %1323 = vmatpush2.bf16.msra.mxu0 0
  %1324 = vmatprep.subr.bf16.mxu0 0
  %1325 = vmatpush2.bf16.msra.mxu0 0
  %1326 = vmatprep.subr.bf16.mxu0 0
  %1327 = vmatpush2.bf16.msra.mxu0 0
  %1328 = vmatprep.subr.bf16.mxu0 0
  %1329 = vmatpush2.bf16.msra.mxu0 0
  %1330 = vmatprep.subr.bf16.mxu0 0
  %1331 = vmatpush2.bf16.msra.mxu0 0
  %1332 = vmatprep.mubr.bf16.mxu0 0
  %1333 = vmatmul.mubr.bf16.gmra.mxu0 %v1226
  %v1334 = vpop.f32.mrf.mxu0
  %v1335 = vadd.f32 0.0, %v1334
  %v1336 = vpop.f32.mrf.mxu0
  %v1337 = vpop.f32.mrf.mxu0
  %v1338 = vadd.f32 0.0, %v1337
  %v1339 = vpop.f32.mrf.mxu0
  %1340 = vmatprep.mubr.bf16.mxu0 0
  %1341 = vmatmul.mubr.bf16.gmra.mxu0 %v1229
  %v1342 = vpop.f32.mrf.mxu0
  %v1343 = vadd.f32 0.0, %v1342
  %v1344 = vpop.f32.mrf.mxu0
  %v1345 = vpop.f32.mrf.mxu0
  %v1346 = vadd.f32 0.0, %v1345
  %v1347 = vpop.f32.mrf.mxu0
  %1348 = vmatprep.mubr.bf16.mxu0 0
  %1349 = vmatmul.mubr.bf16.gmra.mxu0 %v1232
  %v1350 = vpop.f32.mrf.mxu0
  %v1351 = vadd.f32 0.0, %v1350
  %v1352 = vpop.f32.mrf.mxu0
  %v1353 = vpop.f32.mrf.mxu0
  %v1354 = vadd.f32 0.0, %v1353
  %v1355 = vpop.f32.mrf.mxu0
  %1356 = vmatprep.mubr.bf16.mxu0 0
  %1357 = vmatmul.mubr.bf16.gmra.mxu0 %v1235
  %v1358 = vpop.f32.mrf.mxu0
  %v1359 = vadd.f32 0.0, %v1358
  %v1360 = vpop.f32.mrf.mxu0
  %v1361 = vpop.f32.mrf.mxu0
  %v1362 = vadd.f32 0.0, %v1361
  %v1363 = vpop.f32.mrf.mxu0
  %1364 = vmatprep.mubr.bf16.mxu0 0
  %1365 = vmatmul.mubr.bf16.gmra.mxu0 %v1238
  %v1366 = vpop.f32.mrf.mxu0
  %v1367 = vadd.f32 0.0, %v1366
  %v1368 = vpop.f32.mrf.mxu0
  %v1369 = vpop.f32.mrf.mxu0
  %v1370 = vadd.f32 0.0, %v1369
  %v1371 = vpop.f32.mrf.mxu0
  %1372 = vmatprep.mubr.bf16.mxu0 0
  %1373 = vmatmul.mubr.bf16.gmra.mxu0 %v1241
  %v1374 = vpop.f32.mrf.mxu0
  %v1375 = vadd.f32 0.0, %v1374
  %v1376 = vpop.f32.mrf.mxu0
  %v1377 = vpop.f32.mrf.mxu0
  %v1378 = vadd.f32 0.0, %v1377
  %v1379 = vpop.f32.mrf.mxu0
  %1380 = vmatprep.mubr.bf16.mxu0 0
  %1381 = vmatmul.mubr.bf16.gmra.mxu0 %v1244
  %v1382 = vpop.f32.mrf.mxu0
  %v1383 = vadd.f32 0.0, %v1382
  %v1384 = vpop.f32.mrf.mxu0
  %v1385 = vpop.f32.mrf.mxu0
  %v1386 = vadd.f32 0.0, %v1385
  %v1387 = vpop.f32.mrf.mxu0
  %1388 = vmatprep.mubr.bf16.mxu0 0
  %1389 = vmatmul.mubr.bf16.gmra.mxu0 %v1247
  %v1390 = vpop.f32.mrf.mxu0
  %v1391 = vadd.f32 0.0, %v1390
  %v1392 = vpop.f32.mrf.mxu0
  %v1393 = vpop.f32.mrf.mxu0
  %v1394 = vadd.f32 0.0, %v1393
  %v1395 = vpop.f32.mrf.mxu0
  %1396 = vmatprep.mubr.bf16.mxu0 0
  %1397 = vmatmul.mubr.bf16.gmra.mxu0 %v1250
  %v1398 = vpop.f32.mrf.mxu0
  %v1399 = vadd.f32 0.0, %v1398
  %v1400 = vpop.f32.mrf.mxu0
  %v1401 = vpop.f32.mrf.mxu0
  %v1402 = vadd.f32 0.0, %v1401
  %v1403 = vpop.f32.mrf.mxu0
  %1404 = vmatprep.mubr.bf16.mxu0 0
  %1405 = vmatmul.mubr.bf16.gmra.mxu0 %v1253
  %v1406 = vpop.f32.mrf.mxu0
  %v1407 = vadd.f32 0.0, %v1406
  %v1408 = vpop.f32.mrf.mxu0
  %v1409 = vpop.f32.mrf.mxu0
  %v1410 = vadd.f32 0.0, %v1409
  %v1411 = vpop.f32.mrf.mxu0
  %1412 = vmatprep.mubr.bf16.mxu0 0
  %1413 = vmatmul.mubr.bf16.gmra.mxu0 %v1256
  %v1414 = vpop.f32.mrf.mxu0
  %v1415 = vadd.f32 0.0, %v1414
  %v1416 = vpop.f32.mrf.mxu0
  %v1417 = vpop.f32.mrf.mxu0
  %v1418 = vadd.f32 0.0, %v1417
  %v1419 = vpop.f32.mrf.mxu0
  %1420 = vmatprep.mubr.bf16.mxu0 0
  %1421 = vmatmul.mubr.bf16.gmra.mxu0 %v1259
  %v1422 = vpop.f32.mrf.mxu0
  %v1423 = vadd.f32 0.0, %v1422
  %v1424 = vpop.f32.mrf.mxu0
  %v1425 = vpop.f32.mrf.mxu0
  %v1426 = vadd.f32 0.0, %v1425
  %v1427 = vpop.f32.mrf.mxu0
  %1428 = vmatprep.mubr.bf16.mxu0 0
  %1429 = vmatmul.mubr.bf16.gmra.mxu0 %v1262
  %v1430 = vpop.f32.mrf.mxu0
  %v1431 = vadd.f32 0.0, %v1430
  %v1432 = vpop.f32.mrf.mxu0
  %v1433 = vpop.f32.mrf.mxu0
  %v1434 = vadd.f32 0.0, %v1433
  %v1435 = vpop.f32.mrf.mxu0
  %1436 = vmatprep.mubr.bf16.mxu0 0
  %1437 = vmatmul.mubr.bf16.gmra.mxu0 %v1265
  %v1438 = vpop.f32.mrf.mxu0
  %v1439 = vadd.f32 0.0, %v1438
  %v1440 = vpop.f32.mrf.mxu0
  %v1441 = vpop.f32.mrf.mxu0
  %v1442 = vadd.f32 0.0, %v1441
  %v1443 = vpop.f32.mrf.mxu0
  %1444 = vmatprep.mubr.bf16.mxu0 0
  %1445 = vmatmul.mubr.bf16.gmra.mxu0 %v1268
  %v1446 = vpop.f32.mrf.mxu0
  %v1447 = vadd.f32 0.0, %v1446
  %v1448 = vpop.f32.mrf.mxu0
  %v1449 = vpop.f32.mrf.mxu0
  %v1450 = vadd.f32 0.0, %v1449
  %v1451 = vpop.f32.mrf.mxu0
  %1452 = vmatprep.mubr.bf16.mxu0 0
  %1453 = vmatmul.mubr.bf16.gmra.mxu0 %v1271
  %v1454 = vpop.f32.mrf.mxu0
  %v1455 = vadd.f32 0.0, %v1454
  %v1456 = vpop.f32.mrf.mxu0
  %v1457 = vpop.f32.mrf.mxu0
  %v1458 = vadd.f32 0.0, %v1457
  %v1459 = vpop.f32.mrf.mxu0
  %1460 = vmatprep.mubr.bf16.mxu0 0
  %1461 = vmatmul.mubr.bf16.gmra.mxu0 %v1274
  %v1462 = vpop.f32.mrf.mxu0
  %v1463 = vadd.f32 0.0, %v1462
  %v1464 = vpop.f32.mrf.mxu0
  %v1465 = vpop.f32.mrf.mxu0
  %v1466 = vadd.f32 0.0, %v1465
  %v1467 = vpop.f32.mrf.mxu0
  %1468 = vmatprep.mubr.bf16.mxu0 0
  %1469 = vmatmul.mubr.bf16.gmra.mxu0 %v1277
  %v1470 = vpop.f32.mrf.mxu0
  %v1471 = vadd.f32 0.0, %v1470
  %v1472 = vpop.f32.mrf.mxu0
  %v1473 = vpop.f32.mrf.mxu0
  %v1474 = vadd.f32 0.0, %v1473
  %v1475 = vpop.f32.mrf.mxu0
  %1476 = vmatprep.mubr.bf16.mxu0 0
  %1477 = vmatmul.mubr.bf16.gmra.mxu0 %v1280
  %v1478 = vpop.f32.mrf.mxu0
  %v1479 = vadd.f32 0.0, %v1478
  %v1480 = vpop.f32.mrf.mxu0
  %v1481 = vpop.f32.mrf.mxu0
  %v1482 = vadd.f32 0.0, %v1481
  %v1483 = vpop.f32.mrf.mxu0
  %1484 = vmatprep.mubr.bf16.mxu0 0
  %1485 = vmatmul.mubr.bf16.gmra.mxu0 %v1283
  %v1486 = vpop.f32.mrf.mxu0
  %v1487 = vadd.f32 0.0, %v1486
  %v1488 = vpop.f32.mrf.mxu0
  %v1489 = vpop.f32.mrf.mxu0
  %v1490 = vadd.f32 0.0, %v1489
  %v1491 = vpop.f32.mrf.mxu0
  %1492 = vmatprep.mubr.bf16.mxu0 0
  %1493 = vmatmul.mubr.bf16.gmra.mxu0 %v1286
  %v1494 = vpop.f32.mrf.mxu0
  %v1495 = vadd.f32 0.0, %v1494
  %v1496 = vpop.f32.mrf.mxu0
  %v1497 = vpop.f32.mrf.mxu0
  %v1498 = vadd.f32 0.0, %v1497
  %v1499 = vpop.f32.mrf.mxu0
  %1500 = vmatprep.mubr.bf16.mxu0 0
  %1501 = vmatmul.mubr.bf16.gmra.mxu0 %v1289
  %v1502 = vpop.f32.mrf.mxu0
  %v1503 = vadd.f32 0.0, %v1502
  %v1504 = vpop.f32.mrf.mxu0
  %v1505 = vpop.f32.mrf.mxu0
  %v1506 = vadd.f32 0.0, %v1505
  %v1507 = vpop.f32.mrf.mxu0
  %1508 = vmatprep.mubr.bf16.mxu0 0
  %1509 = vmatmul.mubr.bf16.gmra.mxu0 %v1292
  %v1510 = vpop.f32.mrf.mxu0
  %v1511 = vadd.f32 0.0, %v1510
  %v1512 = vpop.f32.mrf.mxu0
  %v1513 = vpop.f32.mrf.mxu0
  %v1514 = vadd.f32 0.0, %v1513
  %v1515 = vpop.f32.mrf.mxu0
  %1516 = vmatprep.mubr.bf16.mxu0 0
  %1517 = vmatmul.mubr.bf16.gmra.mxu0 %v1295
  %v1518 = vpop.f32.mrf.mxu0
  %v1519 = vadd.f32 0.0, %v1518
  %v1520 = vpop.f32.mrf.mxu0
  %v1521 = vpop.f32.mrf.mxu0
  %v1522 = vadd.f32 0.0, %v1521
  %v1523 = vpop.f32.mrf.mxu0
  %1524 = vmatprep.mubr.bf16.mxu0 0
  %1525 = vmatmul.mubr.bf16.gmra.mxu0 %v1298
  %v1526 = vpop.f32.mrf.mxu0
  %v1527 = vadd.f32 0.0, %v1526
  %v1528 = vpop.f32.mrf.mxu0
  %v1529 = vpop.f32.mrf.mxu0
  %v1530 = vadd.f32 0.0, %v1529
  %v1531 = vpop.f32.mrf.mxu0
  %1532 = vdwg.mxu0
  %v1533 = vmax.f32 %v999, %v1335
  %v1534 = vmax.f32 %v1000, %v1338
  %v1535 = vmax.f32 %v1001, %v1343
  %v1536 = vmax.f32 %v1002, %v1346
  %v1537 = vmax.f32 %v1003, %v1351
  %v1538 = vmax.f32 %v1004, %v1354
  %v1539 = vmax.f32 %v1005, %v1359
  %v1540 = vmax.f32 %v1006, %v1362
  %v1541 = vmax.f32 %v1007, %v1367
  %v1542 = vmax.f32 %v1008, %v1370
  %v1543 = vmax.f32 %v1009, %v1375
  %v1544 = vmax.f32 %v1010, %v1378
  %v1545 = vmax.f32 %v1011, %v1383
  %v1546 = vmax.f32 %v1012, %v1386
  %v1547 = vmax.f32 %v1013, %v1391
  %v1548 = vmax.f32 %v1014, %v1394
  %v1549 = vmax.f32 %v1015, %v1399
  %v1550 = vmax.f32 %v1016, %v1402
  %v1551 = vmax.f32 %v1017, %v1407
  %v1552 = vmax.f32 %v1018, %v1410
  %v1553 = vmax.f32 %v1019, %v1415
  %v1554 = vmax.f32 %v1020, %v1418
  %v1555 = vmax.f32 %v1021, %v1423
  %v1556 = vmax.f32 %v1022, %v1426
  %v1557 = vmax.f32 %v1023, %v1431
  %v1558 = vmax.f32 %v1024, %v1434
  %v1559 = vmax.f32 %v1025, %v1439
  %v1560 = vmax.f32 %v1026, %v1442
  %v1561 = vmax.f32 %v1027, %v1447
  %v1562 = vmax.f32 %v1028, %v1450
  %v1563 = vmax.f32 %v1029, %v1455
  %v1564 = vmax.f32 %v1030, %v1458
  %v1565 = vmax.f32 %v1031, %v1463
  %v1566 = vmax.f32 %v1032, %v1466
  %v1567 = vmax.f32 %v1033, %v1471
  %v1568 = vmax.f32 %v1034, %v1474
  %v1569 = vmax.f32 %v1035, %v1479
  %v1570 = vmax.f32 %v1036, %v1482
  %v1571 = vmax.f32 %v1037, %v1487
  %v1572 = vmax.f32 %v1038, %v1490
  %v1573 = vmax.f32 %v1039, %v1495
  %v1574 = vmax.f32 %v1040, %v1498
  %v1575 = vmax.f32 %v1041, %v1503
  %v1576 = vmax.f32 %v1042, %v1506
  %v1577 = vmax.f32 %v1043, %v1511
  %v1578 = vmax.f32 %v1044, %v1514
  %v1579 = vmax.f32 %v1045, %v1519
  %v1580 = vmax.f32 %v1046, %v1522
  %v1581 = vmax.f32 %v1047, %v1527
  %v1582 = vmax.f32 %v1048, %v1530
  %s1583 = scalar_lea.vmem %s0, 600
  %v1584 = vld [vmem:[%s1583] sm:$0xf]
  %v1585 = vld [vmem:[%s1583 + $0x4] sm:$0xf]
  %v1586 = vld [vmem:[%s1583 + $0x8] sm:$0xf]
  %v1587 = vld [vmem:[%s1583 + $0xc] sm:$0xf]
  %v1588 = vld [vmem:[%s1583 + $0x10] sm:$0xf]
  %v1589 = vld [vmem:[%s1583 + $0x14] sm:$0xf]
  %v1590 = vld [vmem:[%s1583 + $0x18] sm:$0xf]
  %v1591 = vld [vmem:[%s1583 + $0x1c] sm:$0xf]
  %v1592 = vld [vmem:[%s1583 + $0x20] sm:$0xf]
  %v1593 = vld [vmem:[%s1583 + $0x24] sm:$0xf]
  %v1594 = vld [vmem:[%s1583 + $0x28] sm:$0xf]
  %v1595 = vld [vmem:[%s1583 + $0x2c] sm:$0xf]
  %v1596 = vld [vmem:[%s1583 + $0x30] sm:$0xf]
  %v1597 = vld [vmem:[%s1583 + $0x34] sm:$0xf]
  %v1598 = vld [vmem:[%s1583 + $0x38] sm:$0xf]
  %v1599 = vld [vmem:[%s1583 + $0x3c] sm:$0xf]
  %v1600 = vld [vmem:[%s1583 + $0x40] sm:$0xf]
  %v1601 = vld [vmem:[%s1583 + $0x44] sm:$0xf]
  %v1602 = vld [vmem:[%s1583 + $0x48] sm:$0xf]
  %v1603 = vld [vmem:[%s1583 + $0x4c] sm:$0xf]
  %v1604 = vld [vmem:[%s1583 + $0x50] sm:$0xf]
  %v1605 = vld [vmem:[%s1583 + $0x54] sm:$0xf]
  %v1606 = vld [vmem:[%s1583 + $0x58] sm:$0xf]
  %v1607 = vld [vmem:[%s1583 + $0x5c] sm:$0xf]
  %v1608 = vld [vmem:[%s1583 + $0x60] sm:$0xf]
  %v1609 = vld [vmem:[%s1583 + $0x64] sm:$0xf]
  %v1610 = vld [vmem:[%s1583 + $0x68] sm:$0xf]
  %v1611 = vld [vmem:[%s1583 + $0x6c] sm:$0xf]
  %v1612 = vld [vmem:[%s1583 + $0x70] sm:$0xf]
  %v1613 = vld [vmem:[%s1583 + $0x74] sm:$0xf]
  %v1614 = vld [vmem:[%s1583 + $0x78] sm:$0xf]
  %v1615 = vld [vmem:[%s1583 + $0x7c] sm:$0xf]
  %v1616 = vld [vmem:[%s1583 + $0x80] sm:$0xf]
  %v1617 = vld [vmem:[%s1583 + $0x84] sm:$0xf]
  %v1618 = vld [vmem:[%s1583 + $0x88] sm:$0xf]
  %v1619 = vld [vmem:[%s1583 + $0x8c] sm:$0xf]
  %v1620 = vld [vmem:[%s1583 + $0x90] sm:$0xf]
  %v1621 = vld [vmem:[%s1583 + $0x94] sm:$0xf]
  %v1622 = vld [vmem:[%s1583 + $0x98] sm:$0xf]
  %v1623 = vld [vmem:[%s1583 + $0x9c] sm:$0xf]
  %v1624 = vld [vmem:[%s1583 + $0xa0] sm:$0xf]
  %v1625 = vld [vmem:[%s1583 + $0xa4] sm:$0xf]
  %v1626 = vld [vmem:[%s1583 + $0xa8] sm:$0xf]
  %v1627 = vld [vmem:[%s1583 + $0xac] sm:$0xf]
  %v1628 = vld [vmem:[%s1583 + $0xb0] sm:$0xf]
  %v1629 = vld [vmem:[%s1583 + $0xb4] sm:$0xf]
  %v1630 = vld [vmem:[%s1583 + $0xb8] sm:$0xf]
  %v1631 = vld [vmem:[%s1583 + $0xbc] sm:$0xf]
  %v1632 = vld [vmem:[%s1583 + $0xc0] sm:$0xf]
  %v1633 = vld [vmem:[%s1583 + $0xc4] sm:$0xf]
  %v1684 = vunpack.c.l.b16 %v1584
  %v1685 = vunpack.c.l.b16 %v1585
  %v1686 = vunpack.c.l.b16 %v1586
  %v1687 = vunpack.c.l.b16 %v1587
  %v1688 = vunpack.c.l.b16 %v1588
  %v1689 = vunpack.c.l.b16 %v1589
  %v1690 = vunpack.c.l.b16 %v1590
  %v1691 = vunpack.c.l.b16 %v1591
  %v1692 = vunpack.c.l.b16 %v1592
  %v1693 = vunpack.c.l.b16 %v1593
  %v1694 = vunpack.c.l.b16 %v1594
  %v1695 = vunpack.c.l.b16 %v1595
  %v1696 = vunpack.c.l.b16 %v1596
  %v1697 = vunpack.c.l.b16 %v1597
  %v1698 = vunpack.c.l.b16 %v1598
  %v1699 = vunpack.c.l.b16 %v1599
  %v1700 = vunpack.c.l.b16 %v1600
  %v1701 = vunpack.c.l.b16 %v1601
  %v1702 = vunpack.c.l.b16 %v1602
  %v1703 = vunpack.c.l.b16 %v1603
  %v1704 = vunpack.c.l.b16 %v1604
  %v1705 = vunpack.c.l.b16 %v1605
  %v1706 = vunpack.c.l.b16 %v1606
  %v1707 = vunpack.c.l.b16 %v1607
  %v1708 = vunpack.c.l.b16 %v1608
  %v1709 = vunpack.c.l.b16 %v1609
  %v1710 = vunpack.c.l.b16 %v1610
  %v1711 = vunpack.c.l.b16 %v1611
  %v1712 = vunpack.c.l.b16 %v1612
  %v1713 = vunpack.c.l.b16 %v1613
  %v1714 = vunpack.c.l.b16 %v1614
  %v1715 = vunpack.c.l.b16 %v1615
  %v1716 = vunpack.c.l.b16 %v1616
  %v1717 = vunpack.c.l.b16 %v1617
  %v1718 = vunpack.c.l.b16 %v1618
  %v1719 = vunpack.c.l.b16 %v1619
  %v1720 = vunpack.c.l.b16 %v1620
  %v1721 = vunpack.c.l.b16 %v1621
  %v1722 = vunpack.c.l.b16 %v1622
  %v1723 = vunpack.c.l.b16 %v1623
  %v1724 = vunpack.c.l.b16 %v1624
  %v1725 = vunpack.c.l.b16 %v1625
  %v1726 = vunpack.c.l.b16 %v1626
  %v1727 = vunpack.c.l.b16 %v1627
  %v1728 = vunpack.c.l.b16 %v1628
  %v1729 = vunpack.c.l.b16 %v1629
  %v1730 = vunpack.c.l.b16 %v1630
  %v1731 = vunpack.c.l.b16 %v1631
  %v1732 = vunpack.c.l.b16 %v1632
  %v1733 = vunpack.c.l.b16 %v1633
  %v1734 = vpack.c.b16 %v1685, %v1684
  %v1735 = vpack.c.b16 %v1687, %v1686
  %v1736 = vpack.c.b16 %v1689, %v1688
  %v1737 = vpack.c.b16 %v1691, %v1690
  %v1738 = vpack.c.b16 %v1693, %v1692
  %v1739 = vpack.c.b16 %v1695, %v1694
  %v1740 = vpack.c.b16 %v1697, %v1696
  %v1741 = vpack.c.b16 %v1699, %v1698
  %v1742 = vpack.c.b16 %v1701, %v1700
  %v1743 = vpack.c.b16 %v1703, %v1702
  %v1744 = vpack.c.b16 %v1705, %v1704
  %v1745 = vpack.c.b16 %v1707, %v1706
  %v1746 = vpack.c.b16 %v1709, %v1708
  %v1747 = vpack.c.b16 %v1711, %v1710
  %v1748 = vpack.c.b16 %v1713, %v1712
  %v1749 = vpack.c.b16 %v1715, %v1714
  %v1750 = vpack.c.b16 %v1717, %v1716
  %v1751 = vpack.c.b16 %v1719, %v1718
  %v1752 = vpack.c.b16 %v1721, %v1720
  %v1753 = vpack.c.b16 %v1723, %v1722
  %v1754 = vpack.c.b16 %v1725, %v1724
  %v1755 = vpack.c.b16 %v1727, %v1726
  %v1756 = vpack.c.b16 %v1729, %v1728
  %v1757 = vpack.c.b16 %v1731, %v1730
  %v1758 = vpack.c.b16 %v1733, %v1732
  %v1760 = vsel %vm206, %v1734, 0
  %v1763 = vsel %vm206, %v1735, 0
  %v1766 = vsel %vm206, %v1736, 0
  %v1769 = vsel %vm206, %v1737, 0
  %v1772 = vsel %vm206, %v1738, 0
  %v1775 = vsel %vm206, %v1739, 0
  %v1778 = vsel %vm206, %v1740, 0
  %v1781 = vsel %vm206, %v1741, 0
  %v1784 = vsel %vm206, %v1742, 0
  %v1787 = vsel %vm206, %v1743, 0
  %v1790 = vsel %vm206, %v1744, 0
  %v1793 = vsel %vm206, %v1745, 0
  %v1796 = vsel %vm206, %v1746, 0
  %v1799 = vsel %vm206, %v1747, 0
  %v1802 = vsel %vm206, %v1748, 0
  %v1805 = vsel %vm206, %v1749, 0
  %v1808 = vsel %vm206, %v1750, 0
  %v1811 = vsel %vm206, %v1751, 0
  %v1814 = vsel %vm206, %v1752, 0
  %v1817 = vsel %vm206, %v1753, 0
  %v1820 = vsel %vm206, %v1754, 0
  %v1823 = vsel %vm206, %v1755, 0
  %v1826 = vsel %vm206, %v1756, 0
  %v1829 = vsel %vm206, %v1757, 0
  %v1832 = vsel %vm206, %v1758, 0
  %1834 = vmatprep.subr.bf16.mxu0 0
  %1835 = vmatpush1.bf16.msra.mxu0 0
  %1836 = vmatprep.subr.bf16.mxu0 0
  %1837 = vmatpush1.bf16.msra.mxu0 0
  %1838 = vmatprep.subr.bf16.mxu0 0
  %1839 = vmatpush1.bf16.msra.mxu0 0
  %1840 = vmatprep.subr.bf16.mxu0 0
  %1841 = vmatpush1.bf16.msra.mxu0 0
  %1842 = vmatprep.subr.bf16.mxu0 0
  %1843 = vmatpush1.bf16.msra.mxu0 0
  %1844 = vmatprep.subr.bf16.mxu0 0
  %1845 = vmatpush1.bf16.msra.mxu0 0
  %1846 = vmatprep.subr.bf16.mxu0 0
  %1847 = vmatpush1.bf16.msra.mxu0 %v203
  %1848 = vmatprep.subr.bf16.mxu0 0
  %1849 = vmatpush1.bf16.msra.mxu0 %v202
  %1850 = vmatprep.subr.bf16.mxu0 0
  %1851 = vmatpush2.bf16.msra.mxu0 0
  %1852 = vmatprep.subr.bf16.mxu0 0
  %1853 = vmatpush2.bf16.msra.mxu0 0
  %1854 = vmatprep.subr.bf16.mxu0 0
  %1855 = vmatpush2.bf16.msra.mxu0 0
  %1856 = vmatprep.subr.bf16.mxu0 0
  %1857 = vmatpush2.bf16.msra.mxu0 0
  %1858 = vmatprep.subr.bf16.mxu0 0
  %1859 = vmatpush2.bf16.msra.mxu0 0
  %1860 = vmatprep.subr.bf16.mxu0 0
  %1861 = vmatpush2.bf16.msra.mxu0 0
  %1862 = vmatprep.subr.bf16.mxu0 0
  %1863 = vmatpush2.bf16.msra.mxu0 0
  %1864 = vmatprep.subr.bf16.mxu0 0
  %1865 = vmatpush2.bf16.msra.mxu0 0
  %1866 = vmatprep.mubr.bf16.mxu0 0
  %1867 = vmatmul.mubr.bf16.gmra.mxu0 %v1760
  %v1868 = vpop.f32.mrf.mxu0
  %v1869 = vadd.f32 0.0, %v1868
  %v1870 = vpop.f32.mrf.mxu0
  %v1871 = vpop.f32.mrf.mxu0
  %v1872 = vadd.f32 0.0, %v1871
  %v1873 = vpop.f32.mrf.mxu0
  %1874 = vmatprep.mubr.bf16.mxu0 0
  %1875 = vmatmul.mubr.bf16.gmra.mxu0 %v1763
  %v1876 = vpop.f32.mrf.mxu0
  %v1877 = vadd.f32 0.0, %v1876
  %v1878 = vpop.f32.mrf.mxu0
  %v1879 = vpop.f32.mrf.mxu0
  %v1880 = vadd.f32 0.0, %v1879
  %v1881 = vpop.f32.mrf.mxu0
  %1882 = vmatprep.mubr.bf16.mxu0 0
  %1883 = vmatmul.mubr.bf16.gmra.mxu0 %v1766
  %v1884 = vpop.f32.mrf.mxu0
  %v1885 = vadd.f32 0.0, %v1884
  %v1886 = vpop.f32.mrf.mxu0
  %v1887 = vpop.f32.mrf.mxu0
  %v1888 = vadd.f32 0.0, %v1887
  %v1889 = vpop.f32.mrf.mxu0
  %1890 = vmatprep.mubr.bf16.mxu0 0
  %1891 = vmatmul.mubr.bf16.gmra.mxu0 %v1769
  %v1892 = vpop.f32.mrf.mxu0
  %v1893 = vadd.f32 0.0, %v1892
  %v1894 = vpop.f32.mrf.mxu0
  %v1895 = vpop.f32.mrf.mxu0
  %v1896 = vadd.f32 0.0, %v1895
  %v1897 = vpop.f32.mrf.mxu0
  %1898 = vmatprep.mubr.bf16.mxu0 0
  %1899 = vmatmul.mubr.bf16.gmra.mxu0 %v1772
  %v1900 = vpop.f32.mrf.mxu0
  %v1901 = vadd.f32 0.0, %v1900
  %v1902 = vpop.f32.mrf.mxu0
  %v1903 = vpop.f32.mrf.mxu0
  %v1904 = vadd.f32 0.0, %v1903
  %v1905 = vpop.f32.mrf.mxu0
  %1906 = vmatprep.mubr.bf16.mxu0 0
  %1907 = vmatmul.mubr.bf16.gmra.mxu0 %v1775
  %v1908 = vpop.f32.mrf.mxu0
  %v1909 = vadd.f32 0.0, %v1908
  %v1910 = vpop.f32.mrf.mxu0
  %v1911 = vpop.f32.mrf.mxu0
  %v1912 = vadd.f32 0.0, %v1911
  %v1913 = vpop.f32.mrf.mxu0
  %1914 = vmatprep.mubr.bf16.mxu0 0
  %1915 = vmatmul.mubr.bf16.gmra.mxu0 %v1778
  %v1916 = vpop.f32.mrf.mxu0
  %v1917 = vadd.f32 0.0, %v1916
  %v1918 = vpop.f32.mrf.mxu0
  %v1919 = vpop.f32.mrf.mxu0
  %v1920 = vadd.f32 0.0, %v1919
  %v1921 = vpop.f32.mrf.mxu0
  %1922 = vmatprep.mubr.bf16.mxu0 0
  %1923 = vmatmul.mubr.bf16.gmra.mxu0 %v1781
  %v1924 = vpop.f32.mrf.mxu0
  %v1925 = vadd.f32 0.0, %v1924
  %v1926 = vpop.f32.mrf.mxu0
  %v1927 = vpop.f32.mrf.mxu0
  %v1928 = vadd.f32 0.0, %v1927
  %v1929 = vpop.f32.mrf.mxu0
  %1930 = vmatprep.mubr.bf16.mxu0 0
  %1931 = vmatmul.mubr.bf16.gmra.mxu0 %v1784
  %v1932 = vpop.f32.mrf.mxu0
  %v1933 = vadd.f32 0.0, %v1932
  %v1934 = vpop.f32.mrf.mxu0
  %v1935 = vpop.f32.mrf.mxu0
  %v1936 = vadd.f32 0.0, %v1935
  %v1937 = vpop.f32.mrf.mxu0
  %1938 = vmatprep.mubr.bf16.mxu0 0
  %1939 = vmatmul.mubr.bf16.gmra.mxu0 %v1787
  %v1940 = vpop.f32.mrf.mxu0
  %v1941 = vadd.f32 0.0, %v1940
  %v1942 = vpop.f32.mrf.mxu0
  %v1943 = vpop.f32.mrf.mxu0
  %v1944 = vadd.f32 0.0, %v1943
  %v1945 = vpop.f32.mrf.mxu0
  %1946 = vmatprep.mubr.bf16.mxu0 0
  %1947 = vmatmul.mubr.bf16.gmra.mxu0 %v1790
  %v1948 = vpop.f32.mrf.mxu0
  %v1949 = vadd.f32 0.0, %v1948
  %v1950 = vpop.f32.mrf.mxu0
  %v1951 = vpop.f32.mrf.mxu0
  %v1952 = vadd.f32 0.0, %v1951
  %v1953 = vpop.f32.mrf.mxu0
  %1954 = vmatprep.mubr.bf16.mxu0 0
  %1955 = vmatmul.mubr.bf16.gmra.mxu0 %v1793
  %v1956 = vpop.f32.mrf.mxu0
  %v1957 = vadd.f32 0.0, %v1956
  %v1958 = vpop.f32.mrf.mxu0
  %v1959 = vpop.f32.mrf.mxu0
  %v1960 = vadd.f32 0.0, %v1959
  %v1961 = vpop.f32.mrf.mxu0
  %1962 = vmatprep.mubr.bf16.mxu0 0
  %1963 = vmatmul.mubr.bf16.gmra.mxu0 %v1796
  %v1964 = vpop.f32.mrf.mxu0
  %v1965 = vadd.f32 0.0, %v1964
  %v1966 = vpop.f32.mrf.mxu0
  %v1967 = vpop.f32.mrf.mxu0
  %v1968 = vadd.f32 0.0, %v1967
  %v1969 = vpop.f32.mrf.mxu0
  %1970 = vmatprep.mubr.bf16.mxu0 0
  %1971 = vmatmul.mubr.bf16.gmra.mxu0 %v1799
  %v1972 = vpop.f32.mrf.mxu0
  %v1973 = vadd.f32 0.0, %v1972
  %v1974 = vpop.f32.mrf.mxu0
  %v1975 = vpop.f32.mrf.mxu0
  %v1976 = vadd.f32 0.0, %v1975
  %v1977 = vpop.f32.mrf.mxu0
  %1978 = vmatprep.mubr.bf16.mxu0 0
  %1979 = vmatmul.mubr.bf16.gmra.mxu0 %v1802
  %v1980 = vpop.f32.mrf.mxu0
  %v1981 = vadd.f32 0.0, %v1980
  %v1982 = vpop.f32.mrf.mxu0
  %v1983 = vpop.f32.mrf.mxu0
  %v1984 = vadd.f32 0.0, %v1983
  %v1985 = vpop.f32.mrf.mxu0
  %1986 = vmatprep.mubr.bf16.mxu0 0
  %1987 = vmatmul.mubr.bf16.gmra.mxu0 %v1805
  %v1988 = vpop.f32.mrf.mxu0
  %v1989 = vadd.f32 0.0, %v1988
  %v1990 = vpop.f32.mrf.mxu0
  %v1991 = vpop.f32.mrf.mxu0
  %v1992 = vadd.f32 0.0, %v1991
  %v1993 = vpop.f32.mrf.mxu0
  %1994 = vmatprep.mubr.bf16.mxu0 0
  %1995 = vmatmul.mubr.bf16.gmra.mxu0 %v1808
  %v1996 = vpop.f32.mrf.mxu0
  %v1997 = vadd.f32 0.0, %v1996
  %v1998 = vpop.f32.mrf.mxu0
  %v1999 = vpop.f32.mrf.mxu0
  %v2000 = vadd.f32 0.0, %v1999
  %v2001 = vpop.f32.mrf.mxu0
  %2002 = vmatprep.mubr.bf16.mxu0 0
  %2003 = vmatmul.mubr.bf16.gmra.mxu0 %v1811
  %v2004 = vpop.f32.mrf.mxu0
  %v2005 = vadd.f32 0.0, %v2004
  %v2006 = vpop.f32.mrf.mxu0
  %v2007 = vpop.f32.mrf.mxu0
  %v2008 = vadd.f32 0.0, %v2007
  %v2009 = vpop.f32.mrf.mxu0
  %2010 = vmatprep.mubr.bf16.mxu0 0
  %2011 = vmatmul.mubr.bf16.gmra.mxu0 %v1814
  %v2012 = vpop.f32.mrf.mxu0
  %v2013 = vadd.f32 0.0, %v2012
  %v2014 = vpop.f32.mrf.mxu0
  %v2015 = vpop.f32.mrf.mxu0
  %v2016 = vadd.f32 0.0, %v2015
  %v2017 = vpop.f32.mrf.mxu0
  %2018 = vmatprep.mubr.bf16.mxu0 0
  %2019 = vmatmul.mubr.bf16.gmra.mxu0 %v1817
  %v2020 = vpop.f32.mrf.mxu0
  %v2021 = vadd.f32 0.0, %v2020
  %v2022 = vpop.f32.mrf.mxu0
  %v2023 = vpop.f32.mrf.mxu0
  %v2024 = vadd.f32 0.0, %v2023
  %v2025 = vpop.f32.mrf.mxu0
  %2026 = vmatprep.mubr.bf16.mxu0 0
  %2027 = vmatmul.mubr.bf16.gmra.mxu0 %v1820
  %v2028 = vpop.f32.mrf.mxu0
  %v2029 = vadd.f32 0.0, %v2028
  %v2030 = vpop.f32.mrf.mxu0
  %v2031 = vpop.f32.mrf.mxu0
  %v2032 = vadd.f32 0.0, %v2031
  %v2033 = vpop.f32.mrf.mxu0
  %2034 = vmatprep.mubr.bf16.mxu0 0
  %2035 = vmatmul.mubr.bf16.gmra.mxu0 %v1823
  %v2036 = vpop.f32.mrf.mxu0
  %v2037 = vadd.f32 0.0, %v2036
  %v2038 = vpop.f32.mrf.mxu0
  %v2039 = vpop.f32.mrf.mxu0
  %v2040 = vadd.f32 0.0, %v2039
  %v2041 = vpop.f32.mrf.mxu0
  %2042 = vmatprep.mubr.bf16.mxu0 0
  %2043 = vmatmul.mubr.bf16.gmra.mxu0 %v1826
  %v2044 = vpop.f32.mrf.mxu0
  %v2045 = vadd.f32 0.0, %v2044
  %v2046 = vpop.f32.mrf.mxu0
  %v2047 = vpop.f32.mrf.mxu0
  %v2048 = vadd.f32 0.0, %v2047
  %v2049 = vpop.f32.mrf.mxu0
  %2050 = vmatprep.mubr.bf16.mxu0 0
  %2051 = vmatmul.mubr.bf16.gmra.mxu0 %v1829
  %v2052 = vpop.f32.mrf.mxu0
  %v2053 = vadd.f32 0.0, %v2052
  %v2054 = vpop.f32.mrf.mxu0
  %v2055 = vpop.f32.mrf.mxu0
  %v2056 = vadd.f32 0.0, %v2055
  %v2057 = vpop.f32.mrf.mxu0
  %2058 = vmatprep.mubr.bf16.mxu0 0
  %2059 = vmatmul.mubr.bf16.gmra.mxu0 %v1832
  %v2060 = vpop.f32.mrf.mxu0
  %v2061 = vadd.f32 0.0, %v2060
  %v2062 = vpop.f32.mrf.mxu0
  %v2063 = vpop.f32.mrf.mxu0
  %v2064 = vadd.f32 0.0, %v2063
  %v2065 = vpop.f32.mrf.mxu0
  %2066 = vdwg.mxu0
  %v2067 = vmax.f32 %v1533, %v1869
  %v2068 = vmax.f32 %v1534, %v1872
  %v2069 = vmax.f32 %v1535, %v1877
  %v2070 = vmax.f32 %v1536, %v1880
  %v2071 = vmax.f32 %v1537, %v1885
  %v2072 = vmax.f32 %v1538, %v1888
  %v2073 = vmax.f32 %v1539, %v1893
  %v2074 = vmax.f32 %v1540, %v1896
  %v2075 = vmax.f32 %v1541, %v1901
  %v2076 = vmax.f32 %v1542, %v1904
  %v2077 = vmax.f32 %v1543, %v1909
  %v2078 = vmax.f32 %v1544, %v1912
  %v2079 = vmax.f32 %v1545, %v1917
  %v2080 = vmax.f32 %v1546, %v1920
  %v2081 = vmax.f32 %v1547, %v1925
  %v2082 = vmax.f32 %v1548, %v1928
  %v2083 = vmax.f32 %v1549, %v1933
  %v2084 = vmax.f32 %v1550, %v1936
  %v2085 = vmax.f32 %v1551, %v1941
  %v2086 = vmax.f32 %v1552, %v1944
  %v2087 = vmax.f32 %v1553, %v1949
  %v2088 = vmax.f32 %v1554, %v1952
  %v2089 = vmax.f32 %v1555, %v1957
  %v2090 = vmax.f32 %v1556, %v1960
  %v2091 = vmax.f32 %v1557, %v1965
  %v2092 = vmax.f32 %v1558, %v1968
  %v2093 = vmax.f32 %v1559, %v1973
  %v2094 = vmax.f32 %v1560, %v1976
  %v2095 = vmax.f32 %v1561, %v1981
  %v2096 = vmax.f32 %v1562, %v1984
  %v2097 = vmax.f32 %v1563, %v1989
  %v2098 = vmax.f32 %v1564, %v1992
  %v2099 = vmax.f32 %v1565, %v1997
  %v2100 = vmax.f32 %v1566, %v2000
  %v2101 = vmax.f32 %v1567, %v2005
  %v2102 = vmax.f32 %v1568, %v2008
  %v2103 = vmax.f32 %v1569, %v2013
  %v2104 = vmax.f32 %v1570, %v2016
  %v2105 = vmax.f32 %v1571, %v2021
  %v2106 = vmax.f32 %v1572, %v2024
  %v2107 = vmax.f32 %v1573, %v2029
  %v2108 = vmax.f32 %v1574, %v2032
  %v2109 = vmax.f32 %v1575, %v2037
  %v2110 = vmax.f32 %v1576, %v2040
  %v2111 = vmax.f32 %v1577, %v2045
  %v2112 = vmax.f32 %v1578, %v2048
  %v2113 = vmax.f32 %v1579, %v2053
  %v2114 = vmax.f32 %v1580, %v2056
  %v2115 = vmax.f32 %v1581, %v2061
  %v2116 = vmax.f32 %v1582, %v2064
  %v2117 = vld [vmem:[%s2] sm:$0x1]
  %v2119 = vlaneseq
  %v2120 = vshrl.u32 %v2119, 7
  %v2121 = vsub.s32 0, %v2120
  %v2122 = vrot.slane %v2117, %v2121
  %v2124 = vadd.f32 %v2067, %v2122
  %v2125 = vadd.f32 %v2068, %v2122
  %v2126 = vadd.f32 %v2069, %v2122
  %v2127 = vadd.f32 %v2070, %v2122
  %v2128 = vadd.f32 %v2071, %v2122
  %v2129 = vadd.f32 %v2072, %v2122
  %v2130 = vadd.f32 %v2073, %v2122
  %v2131 = vadd.f32 %v2074, %v2122
  %v2132 = vadd.f32 %v2075, %v2122
  %v2133 = vadd.f32 %v2076, %v2122
  %v2134 = vadd.f32 %v2077, %v2122
  %v2135 = vadd.f32 %v2078, %v2122
  %v2136 = vadd.f32 %v2079, %v2122
  %v2137 = vadd.f32 %v2080, %v2122
  %v2138 = vadd.f32 %v2081, %v2122
  %v2139 = vadd.f32 %v2082, %v2122
  %v2140 = vadd.f32 %v2083, %v2122
  %v2141 = vadd.f32 %v2084, %v2122
  %v2142 = vadd.f32 %v2085, %v2122
  %v2143 = vadd.f32 %v2086, %v2122
  %v2144 = vadd.f32 %v2087, %v2122
  %v2145 = vadd.f32 %v2088, %v2122
  %v2146 = vadd.f32 %v2089, %v2122
  %v2147 = vadd.f32 %v2090, %v2122
  %v2148 = vadd.f32 %v2091, %v2122
  %v2149 = vadd.f32 %v2092, %v2122
  %v2150 = vadd.f32 %v2093, %v2122
  %v2151 = vadd.f32 %v2094, %v2122
  %v2152 = vadd.f32 %v2095, %v2122
  %v2153 = vadd.f32 %v2096, %v2122
  %v2154 = vadd.f32 %v2097, %v2122
  %v2155 = vadd.f32 %v2098, %v2122
  %v2156 = vadd.f32 %v2099, %v2122
  %v2157 = vadd.f32 %v2100, %v2122
  %v2158 = vadd.f32 %v2101, %v2122
  %v2159 = vadd.f32 %v2102, %v2122
  %v2160 = vadd.f32 %v2103, %v2122
  %v2161 = vadd.f32 %v2104, %v2122
  %v2162 = vadd.f32 %v2105, %v2122
  %v2163 = vadd.f32 %v2106, %v2122
  %v2164 = vadd.f32 %v2107, %v2122
  %v2165 = vadd.f32 %v2108, %v2122
  %v2166 = vadd.f32 %v2109, %v2122
  %v2167 = vadd.f32 %v2110, %v2122
  %v2168 = vadd.f32 %v2111, %v2122
  %v2169 = vadd.f32 %v2112, %v2122
  %v2170 = vadd.f32 %v2113, %v2122
  %v2171 = vadd.f32 %v2114, %v2122
  %v2172 = vadd.f32 %v2115, %v2122
  %v2173 = vadd.f32 %v2116, %v2122
  %v2174 = vmax.f32 %v2124, 0.0
  %v2175 = vmax.f32 %v2125, 0.0
  %v2176 = vmax.f32 %v2126, 0.0
  %v2177 = vmax.f32 %v2127, 0.0
  %v2178 = vmax.f32 %v2128, 0.0
  %v2179 = vmax.f32 %v2129, 0.0
  %v2180 = vmax.f32 %v2130, 0.0
  %v2181 = vmax.f32 %v2131, 0.0
  %v2182 = vmax.f32 %v2132, 0.0
  %v2183 = vmax.f32 %v2133, 0.0
  %v2184 = vmax.f32 %v2134, 0.0
  %v2185 = vmax.f32 %v2135, 0.0
  %v2186 = vmax.f32 %v2136, 0.0
  %v2187 = vmax.f32 %v2137, 0.0
  %v2188 = vmax.f32 %v2138, 0.0
  %v2189 = vmax.f32 %v2139, 0.0
  %v2190 = vmax.f32 %v2140, 0.0
  %v2191 = vmax.f32 %v2141, 0.0
  %v2192 = vmax.f32 %v2142, 0.0
  %v2193 = vmax.f32 %v2143, 0.0
  %v2194 = vmax.f32 %v2144, 0.0
  %v2195 = vmax.f32 %v2145, 0.0
  %v2196 = vmax.f32 %v2146, 0.0
  %v2197 = vmax.f32 %v2147, 0.0
  %v2198 = vmax.f32 %v2148, 0.0
  %v2199 = vmax.f32 %v2149, 0.0
  %v2200 = vmax.f32 %v2150, 0.0
  %v2201 = vmax.f32 %v2151, 0.0
  %v2202 = vmax.f32 %v2152, 0.0
  %v2203 = vmax.f32 %v2153, 0.0
  %v2204 = vmax.f32 %v2154, 0.0
  %v2205 = vmax.f32 %v2155, 0.0
  %v2206 = vmax.f32 %v2156, 0.0
  %v2207 = vmax.f32 %v2157, 0.0
  %v2208 = vmax.f32 %v2158, 0.0
  %v2209 = vmax.f32 %v2159, 0.0
  %v2210 = vmax.f32 %v2160, 0.0
  %v2211 = vmax.f32 %v2161, 0.0
  %v2212 = vmax.f32 %v2162, 0.0
  %v2213 = vmax.f32 %v2163, 0.0
  %v2214 = vmax.f32 %v2164, 0.0
  %v2215 = vmax.f32 %v2165, 0.0
  %v2216 = vmax.f32 %v2166, 0.0
  %v2217 = vmax.f32 %v2167, 0.0
  %v2218 = vmax.f32 %v2168, 0.0
  %v2219 = vmax.f32 %v2169, 0.0
  %v2220 = vmax.f32 %v2170, 0.0
  %v2221 = vmax.f32 %v2171, 0.0
  %v2222 = vmax.f32 %v2172, 0.0
  %v2223 = vmax.f32 %v2173, 0.0
  %v2224 = vpack.c.bf16 %v2175, %v2174
  %v2225 = vpack.c.bf16 %v2177, %v2176
  %v2226 = vpack.c.bf16 %v2179, %v2178
  %v2227 = vpack.c.bf16 %v2181, %v2180
  %v2228 = vpack.c.bf16 %v2183, %v2182
  %v2229 = vpack.c.bf16 %v2185, %v2184
  %v2230 = vpack.c.bf16 %v2187, %v2186
  %v2231 = vpack.c.bf16 %v2189, %v2188
  %v2232 = vpack.c.bf16 %v2191, %v2190
  %v2233 = vpack.c.bf16 %v2193, %v2192
  %v2234 = vpack.c.bf16 %v2195, %v2194
  %v2235 = vpack.c.bf16 %v2197, %v2196
  %v2236 = vpack.c.bf16 %v2199, %v2198
  %v2237 = vpack.c.bf16 %v2201, %v2200
  %v2238 = vpack.c.bf16 %v2203, %v2202
  %v2239 = vpack.c.bf16 %v2205, %v2204
  %v2240 = vpack.c.bf16 %v2207, %v2206
  %v2241 = vpack.c.bf16 %v2209, %v2208
  %v2242 = vpack.c.bf16 %v2211, %v2210
  %v2243 = vpack.c.bf16 %v2213, %v2212
  %v2244 = vpack.c.bf16 %v2215, %v2214
  %v2245 = vpack.c.bf16 %v2217, %v2216
  %v2246 = vpack.c.bf16 %v2219, %v2218
  %v2247 = vpack.c.bf16 %v2221, %v2220
  %v2248 = vpack.c.bf16 %v2223, %v2222
  %v2274 = vunpack.c.l.b16 %v2224
  %v2275 = vunpack.c.h.b16 %v2224
  %v2276 = vunpack.c.l.b16 %v2225
  %v2277 = vunpack.c.h.b16 %v2225
  %v2278 = vunpack.c.l.b16 %v2226
  %v2279 = vunpack.c.h.b16 %v2226
  %v2280 = vunpack.c.l.b16 %v2227
  %v2281 = vunpack.c.h.b16 %v2227
  %v2282 = vunpack.c.l.b16 %v2228
  %v2283 = vunpack.c.h.b16 %v2228
  %v2284 = vunpack.c.l.b16 %v2229
  %v2285 = vunpack.c.h.b16 %v2229
  %v2286 = vunpack.c.l.b16 %v2230
  %v2287 = vunpack.c.h.b16 %v2230
  %v2288 = vunpack.c.l.b16 %v2231
  %v2289 = vunpack.c.h.b16 %v2231
  %v2290 = vunpack.c.l.b16 %v2232
  %v2291 = vunpack.c.h.b16 %v2232
  %v2292 = vunpack.c.l.b16 %v2233
  %v2293 = vunpack.c.h.b16 %v2233
  %v2294 = vunpack.c.l.b16 %v2234
  %v2295 = vunpack.c.h.b16 %v2234
  %v2296 = vunpack.c.l.b16 %v2235
  %v2297 = vunpack.c.h.b16 %v2235
  %v2298 = vunpack.c.l.b16 %v2236
  %v2299 = vunpack.c.h.b16 %v2236
  %v2300 = vunpack.c.l.b16 %v2237
  %v2301 = vunpack.c.h.b16 %v2237
  %v2302 = vunpack.c.l.b16 %v2238
  %v2303 = vunpack.c.h.b16 %v2238
  %v2304 = vunpack.c.l.b16 %v2239
  %v2305 = vunpack.c.h.b16 %v2239
  %v2306 = vunpack.c.l.b16 %v2240
  %v2307 = vunpack.c.h.b16 %v2240
  %v2308 = vunpack.c.l.b16 %v2241
  %v2309 = vunpack.c.h.b16 %v2241
  %v2310 = vunpack.c.l.b16 %v2242
  %v2311 = vunpack.c.h.b16 %v2242
  %v2312 = vunpack.c.l.b16 %v2243
  %v2313 = vunpack.c.h.b16 %v2243
  %v2314 = vunpack.c.l.b16 %v2244
  %v2315 = vunpack.c.h.b16 %v2244
  %v2316 = vunpack.c.l.b16 %v2245
  %v2317 = vunpack.c.h.b16 %v2245
  %v2318 = vunpack.c.l.b16 %v2246
  %v2319 = vunpack.c.h.b16 %v2246
  %v2320 = vunpack.c.l.b16 %v2247
  %v2321 = vunpack.c.h.b16 %v2247
  %v2322 = vunpack.c.l.b16 %v2248
  %v2323 = vunpack.c.h.b16 %v2248
  %v2324 = vpack.c.b16 %v2274, %v2274
  %v2325 = vpack.c.b16 %v2275, %v2275
  %v2326 = vpack.c.b16 %v2276, %v2276
  %v2327 = vpack.c.b16 %v2277, %v2277
  %v2328 = vpack.c.b16 %v2278, %v2278
  %v2329 = vpack.c.b16 %v2279, %v2279
  %v2330 = vpack.c.b16 %v2280, %v2280
  %v2331 = vpack.c.b16 %v2281, %v2281
  %v2332 = vpack.c.b16 %v2282, %v2282
  %v2333 = vpack.c.b16 %v2283, %v2283
  %v2334 = vpack.c.b16 %v2284, %v2284
  %v2335 = vpack.c.b16 %v2285, %v2285
  %v2336 = vpack.c.b16 %v2286, %v2286
  %v2337 = vpack.c.b16 %v2287, %v2287
  %v2338 = vpack.c.b16 %v2288, %v2288
  %v2339 = vpack.c.b16 %v2289, %v2289
  %v2340 = vpack.c.b16 %v2290, %v2290
  %v2341 = vpack.c.b16 %v2291, %v2291
  %v2342 = vpack.c.b16 %v2292, %v2292
  %v2343 = vpack.c.b16 %v2293, %v2293
  %v2344 = vpack.c.b16 %v2294, %v2294
  %v2345 = vpack.c.b16 %v2295, %v2295
  %v2346 = vpack.c.b16 %v2296, %v2296
  %v2347 = vpack.c.b16 %v2297, %v2297
  %v2348 = vpack.c.b16 %v2298, %v2298
  %v2349 = vpack.c.b16 %v2299, %v2299
  %v2350 = vpack.c.b16 %v2300, %v2300
  %v2351 = vpack.c.b16 %v2301, %v2301
  %v2352 = vpack.c.b16 %v2302, %v2302
  %v2353 = vpack.c.b16 %v2303, %v2303
  %v2354 = vpack.c.b16 %v2304, %v2304
  %v2355 = vpack.c.b16 %v2305, %v2305
  %v2356 = vpack.c.b16 %v2306, %v2306
  %v2357 = vpack.c.b16 %v2307, %v2307
  %v2358 = vpack.c.b16 %v2308, %v2308
  %v2359 = vpack.c.b16 %v2309, %v2309
  %v2360 = vpack.c.b16 %v2310, %v2310
  %v2361 = vpack.c.b16 %v2311, %v2311
  %v2362 = vpack.c.b16 %v2312, %v2312
  %v2363 = vpack.c.b16 %v2313, %v2313
  %v2364 = vpack.c.b16 %v2314, %v2314
  %v2365 = vpack.c.b16 %v2315, %v2315
  %v2366 = vpack.c.b16 %v2316, %v2316
  %v2367 = vpack.c.b16 %v2317, %v2317
  %v2368 = vpack.c.b16 %v2318, %v2318
  %v2369 = vpack.c.b16 %v2319, %v2319
  %v2370 = vpack.c.b16 %v2320, %v2320
  %v2371 = vpack.c.b16 %v2321, %v2321
  %v2372 = vpack.c.b16 %v2322, %v2322
  %v2373 = vpack.c.b16 %v2323, %v2323
  %vm2424 = vcmask 60416
  %2425 = vst.msk [vmem:[%s3] sm:$0xf] %vm2424, %v2324
  %2426 = vst.msk [vmem:[%s3 + $0x4] sm:$0xf] %vm2424, %v2325
  %2427 = vst.msk [vmem:[%s3 + $0x8] sm:$0xf] %vm2424, %v2326
  %2428 = vst.msk [vmem:[%s3 + $0xc] sm:$0xf] %vm2424, %v2327
  %2429 = vst.msk [vmem:[%s3 + $0x10] sm:$0xf] %vm2424, %v2328
  %2430 = vst.msk [vmem:[%s3 + $0x14] sm:$0xf] %vm2424, %v2329
  %2431 = vst.msk [vmem:[%s3 + $0x18] sm:$0xf] %vm2424, %v2330
  %2432 = vst.msk [vmem:[%s3 + $0x1c] sm:$0xf] %vm2424, %v2331
  %2433 = vst.msk [vmem:[%s3 + $0x20] sm:$0xf] %vm2424, %v2332
  %2434 = vst.msk [vmem:[%s3 + $0x24] sm:$0xf] %vm2424, %v2333
  %2435 = vst.msk [vmem:[%s3 + $0x28] sm:$0xf] %vm2424, %v2334
  %2436 = vst.msk [vmem:[%s3 + $0x2c] sm:$0xf] %vm2424, %v2335
  %2437 = vst.msk [vmem:[%s3 + $0x30] sm:$0xf] %vm2424, %v2336
  %2438 = vst.msk [vmem:[%s3 + $0x34] sm:$0xf] %vm2424, %v2337
  %2439 = vst.msk [vmem:[%s3 + $0x38] sm:$0xf] %vm2424, %v2338
  %2440 = vst.msk [vmem:[%s3 + $0x3c] sm:$0xf] %vm2424, %v2339
  %2441 = vst.msk [vmem:[%s3 + $0x40] sm:$0xf] %vm2424, %v2340
  %2442 = vst.msk [vmem:[%s3 + $0x44] sm:$0xf] %vm2424, %v2341
  %2443 = vst.msk [vmem:[%s3 + $0x48] sm:$0xf] %vm2424, %v2342
  %2444 = vst.msk [vmem:[%s3 + $0x4c] sm:$0xf] %vm2424, %v2343
  %2445 = vst.msk [vmem:[%s3 + $0x50] sm:$0xf] %vm2424, %v2344
  %2446 = vst.msk [vmem:[%s3 + $0x54] sm:$0xf] %vm2424, %v2345
  %2447 = vst.msk [vmem:[%s3 + $0x58] sm:$0xf] %vm2424, %v2346
  %2448 = vst.msk [vmem:[%s3 + $0x5c] sm:$0xf] %vm2424, %v2347
  %2449 = vst.msk [vmem:[%s3 + $0x60] sm:$0xf] %vm2424, %v2348
  %2450 = vst.msk [vmem:[%s3 + $0x64] sm:$0xf] %vm2424, %v2349
  %2451 = vst.msk [vmem:[%s3 + $0x68] sm:$0xf] %vm2424, %v2350
  %2452 = vst.msk [vmem:[%s3 + $0x6c] sm:$0xf] %vm2424, %v2351
  %2453 = vst.msk [vmem:[%s3 + $0x70] sm:$0xf] %vm2424, %v2352
  %2454 = vst.msk [vmem:[%s3 + $0x74] sm:$0xf] %vm2424, %v2353
  %2455 = vst.msk [vmem:[%s3 + $0x78] sm:$0xf] %vm2424, %v2354
  %2456 = vst.msk [vmem:[%s3 + $0x7c] sm:$0xf] %vm2424, %v2355
  %2457 = vst.msk [vmem:[%s3 + $0x80] sm:$0xf] %vm2424, %v2356
  %2458 = vst.msk [vmem:[%s3 + $0x84] sm:$0xf] %vm2424, %v2357
  %2459 = vst.msk [vmem:[%s3 + $0x88] sm:$0xf] %vm2424, %v2358
  %2460 = vst.msk [vmem:[%s3 + $0x8c] sm:$0xf] %vm2424, %v2359
  %2461 = vst.msk [vmem:[%s3 + $0x90] sm:$0xf] %vm2424, %v2360
  %2462 = vst.msk [vmem:[%s3 + $0x94] sm:$0xf] %vm2424, %v2361
  %2463 = vst.msk [vmem:[%s3 + $0x98] sm:$0xf] %vm2424, %v2362
  %2464 = vst.msk [vmem:[%s3 + $0x9c] sm:$0xf] %vm2424, %v2363
  %2465 = vst.msk [vmem:[%s3 + $0xa0] sm:$0xf] %vm2424, %v2364
  %2466 = vst.msk [vmem:[%s3 + $0xa4] sm:$0xf] %vm2424, %v2365
  %2467 = vst.msk [vmem:[%s3 + $0xa8] sm:$0xf] %vm2424, %v2366
  %2468 = vst.msk [vmem:[%s3 + $0xac] sm:$0xf] %vm2424, %v2367
  %2469 = vst.msk [vmem:[%s3 + $0xb0] sm:$0xf] %vm2424, %v2368
  %2470 = vst.msk [vmem:[%s3 + $0xb4] sm:$0xf] %vm2424, %v2369
  %2471 = vst.msk [vmem:[%s3 + $0xb8] sm:$0xf] %vm2424, %v2370
  %2472 = vst.msk [vmem:[%s3 + $0xbc] sm:$0xf] %vm2424, %v2371
  %2473 = vst.msk [vmem:[%s3 + $0xc0] sm:$0xf] %vm2424, %v2372
  %2474 = vst.msk [vmem:[%s3 + $0xc4] sm:$0xf] %vm2424, %v2373
  // Predicated region
  $region14: #{lenet5_forward.2} parent=0 // pred_check
    _
  $region15: #{lenet5_forward.2} parent=0 // pred_check_branch
    %2476 = sbr.rel (0) target = $region17
  $region16: #{lenet5_forward.2} parent=0 // pred_region
    _
  $region17: #{lenet5_forward.2} parent=0 // pred_fallthru
    _
  // Predicated region
  $region18: #{lenet5_forward.2} parent=0 // pred_check
    _
  $region19: #{lenet5_forward.2} parent=0 // pred_check_branch
    %2478 = sbr.rel (0) target = $region21
  $region20: #{lenet5_forward.2} parent=0 // pred_region
    _
  $region21: #{lenet5_forward.2} parent=0 // pred_fallthru
    _

// kernel: lenet5_forward.3
$region0: #{lenet5_forward.3}
  #allocation0 [shape = 'u32[]', space=smem, size = 0x4, offset = 0x4, fixed_abs, tag = 'smem constant byte address 0x4 - core index']
  #allocation1 [shape = 'u32[144,128]{1,0:T(1,128)}', space=vmem, size = 0x12000, scoped, tag = 'internal scratch']
  %s0 = inlined_call_operand.vmem [shape: bf16[4,25,16,160], index: 0, kind: input, shape index: {}]
  %s1 = inlined_call_operand.vmem [shape: bf16[160,128], index: 1, kind: input, shape index: {}]
  %s2 = inlined_call_operand.vmem [shape: f32[1,128], index: 2, kind: input, shape index: {}]
  %s3 = inlined_call_operand.vmem [shape: bf16[25,16,128], index: 3, kind: input, shape index: {}]
  %s4 = inlined_call_operand.vmem [shape: f32[1,128], index: 4, kind: input, shape index: {}]
  %s5 = inlined_call_operand.vmem [shape: bf16[128,128], index: 5, kind: input, shape index: {}]
  %s6 = inlined_call_operand.vmem [shape: f32[1,128], index: 6, kind: input, shape index: {}]
  %s7 = inlined_call_operand.vmem [shape: bf16[128,128], index: 7, kind: input, shape index: {}]
  %s8 = inlined_call_operand.vmem [shape: f32[1,128], index: 8, kind: input, shape index: {}]
  %s9 = inlined_call_operand.vmem [shape: bf16[128,128], index: 9, kind: input, shape index: {}]
  %s10 = inlined_call_operand.vmem [shape: f32[1,128], index: 10, kind: input, shape index: {}]
  %s11 = inlined_call_operand.vmem [shape: f32[16,8], index: 11, kind: output, shape index: {}]
  %s12 = sld [smem:[#allocation0]]
  $region54: #{lenet5_forward.3} parent=0
    _
  %s14 = ssub.s32 1, %s12
  %s15 = scalar_select 0, %s14, %s12
  // Predicated region
  $region2: #{lenet5_forward.3} parent=0 // pred_check
    _
  $region3: #{lenet5_forward.3} parent=0 // pred_check_branch
    %17 = sbr.rel (0) target = $region5
  $region4: #{lenet5_forward.3} parent=0 // pred_region
    _
  $region5: #{lenet5_forward.3} parent=0 // pred_fallthru
    _
  // Predicated region
  $region6: #{lenet5_forward.3} parent=0 // pred_check
    _
  $region7: #{lenet5_forward.3} parent=0 // pred_check_branch
    %19 = sbr.rel (0) target = $region9
  $region8: #{lenet5_forward.3} parent=0 // pred_region
    _
  $region9: #{lenet5_forward.3} parent=0 // pred_fallthru
    _
  // Predicated region
  $region10: #{lenet5_forward.3} parent=0 // pred_check
    _
  $region11: #{lenet5_forward.3} parent=0 // pred_check_branch
    %21 = sbr.rel (0) target = $region13
  $region12: #{lenet5_forward.3} parent=0 // pred_region
    _
  $region13: #{lenet5_forward.3} parent=0 // pred_fallthru
    _
  // Predicated region
  $region14: #{lenet5_forward.3} parent=0 // pred_check
    _
  $region15: #{lenet5_forward.3} parent=0 // pred_check_branch
    %23 = sbr.rel (0) target = $region17
  $region16: #{lenet5_forward.3} parent=0 // pred_region
    _
  $region17: #{lenet5_forward.3} parent=0 // pred_fallthru
    _
  // Predicated region
  $region18: #{lenet5_forward.3} parent=0 // pred_check
    _
  $region19: #{lenet5_forward.3} parent=0 // pred_check_branch
    %25 = sbr.rel (0) target = $region21
  $region20: #{lenet5_forward.3} parent=0 // pred_region
    _
  $region21: #{lenet5_forward.3} parent=0 // pred_fallthru
    _
  // Predicated region
  $region22: #{lenet5_forward.3} parent=0 // pred_check
    _
  $region23: #{lenet5_forward.3} parent=0 // pred_check_branch
    %27 = sbr.rel (0) target = $region25
  $region24: #{lenet5_forward.3} parent=0 // pred_region
    _
  $region25: #{lenet5_forward.3} parent=0 // pred_fallthru
    _
  // Predicated region
  $region26: #{lenet5_forward.3} parent=0 // pred_check
    _
  $region27: #{lenet5_forward.3} parent=0 // pred_check_branch
    %29 = sbr.rel (0) target = $region29
  $region28: #{lenet5_forward.3} parent=0 // pred_region
    _
  $region29: #{lenet5_forward.3} parent=0 // pred_fallthru
    _
  // Predicated region
  $region30: #{lenet5_forward.3} parent=0 // pred_check
    _
  $region31: #{lenet5_forward.3} parent=0 // pred_check_branch
    %31 = sbr.rel (0) target = $region33
  $region32: #{lenet5_forward.3} parent=0 // pred_region
    _
  $region33: #{lenet5_forward.3} parent=0 // pred_fallthru
    _
  // Predicated region
  $region34: #{lenet5_forward.3} parent=0 // pred_check
    _
  $region35: #{lenet5_forward.3} parent=0 // pred_check_branch
    %33 = sbr.rel (0) target = $region37
  $region36: #{lenet5_forward.3} parent=0 // pred_region
    _
  $region37: #{lenet5_forward.3} parent=0 // pred_fallthru
    _
  // Predicated region
  $region38: #{lenet5_forward.3} parent=0 // pred_check
    _
  $region39: #{lenet5_forward.3} parent=0 // pred_check_branch
    %35 = sbr.rel (0) target = $region41
  $region40: #{lenet5_forward.3} parent=0 // pred_region
    _
  $region41: #{lenet5_forward.3} parent=0 // pred_fallthru
    _
  // Predicated region
  $region42: #{lenet5_forward.3} parent=0 // pred_check
    _
  $region43: #{lenet5_forward.3} parent=0 // pred_check_branch
    %37 = sbr.rel (0) target = $region45
  $region44: #{lenet5_forward.3} parent=0 // pred_region
    _
  $region45: #{lenet5_forward.3} parent=0 // pred_fallthru
    _
  %v39 = vld [vmem:[%s1] sm:$0xf]
  %v40 = vld [vmem:[%s1 + $0x4] sm:$0xf]
  %v41 = vld [vmem:[%s1 + $0x8] sm:$0xf]
  %v42 = vld [vmem:[%s1 + $0xc] sm:$0xf]
  %v43 = vld [vmem:[%s1 + $0x10] sm:$0xf]
  %v44 = vld [vmem:[%s1 + $0x14] sm:$0xf]
  %v45 = vld [vmem:[%s1 + $0x18] sm:$0xf]
  %v46 = vld [vmem:[%s1 + $0x1c] sm:$0xf]
  %v47 = vld [vmem:[%s1 + $0x20] sm:$0xf]
  %v48 = vld [vmem:[%s1 + $0x24] sm:$0xf]
  %v49 = vld [vmem:[%s1 + $0x28] sm:$0xf]
  %v50 = vld [vmem:[%s1 + $0x2c] sm:$0xf]
  %v51 = vld [vmem:[%s1 + $0x30] sm:$0xf]
  %v52 = vld [vmem:[%s1 + $0x34] sm:$0xf]
  %v53 = vld [vmem:[%s1 + $0x38] sm:$0xf]
  %v54 = vld [vmem:[%s1 + $0x3c] sm:$0xf]
  %v55 = vld [vmem:[%s1 + $0x40] sm:$0xf]
  %v56 = vld [vmem:[%s1 + $0x44] sm:$0xf]
  %v57 = vld [vmem:[%s1 + $0x48] sm:$0xf]
  %v58 = vld [vmem:[%s1 + $0x4c] sm:$0xf]
  %v59 = vld [vmem:[%s0] sm:$0xff]
  %v60 = vld [vmem:[%s0 + $0x8] sm:$0xff]
  %v63 = vunpack.c.l.b16 %v59
  %v64 = vunpack.c.h.b16 %v59
  %v65 = vunpack.c.l.b16 %v60
  %v66 = vunpack.c.h.b16 %v60
  %v67 = vpack.c.b16 %v65, %v63
  %v68 = vpack.c.b16 %v66, %v64
  %v90 = vunpack.c.l.b16 %v39
  %v91 = vunpack.c.l.b16 %v40
  %v92 = vunpack.c.l.b16 %v41
  %v93 = vunpack.c.l.b16 %v42
  %v94 = vunpack.c.l.b16 %v43
  %v95 = vunpack.c.l.b16 %v44
  %v96 = vunpack.c.l.b16 %v45
  %v97 = vunpack.c.l.b16 %v46
  %v98 = vunpack.c.l.b16 %v47
  %v99 = vunpack.c.l.b16 %v48
  %v100 = vunpack.c.l.b16 %v49
  %v101 = vunpack.c.l.b16 %v50
  %v102 = vunpack.c.l.b16 %v51
  %v103 = vunpack.c.l.b16 %v52
  %v104 = vunpack.c.l.b16 %v53
  %v105 = vunpack.c.l.b16 %v54
  %v106 = vunpack.c.l.b16 %v55
  %v107 = vunpack.c.l.b16 %v56
  %v108 = vunpack.c.l.b16 %v57
  %v109 = vunpack.c.l.b16 %v58
  %v110 = vpack.c.b16 %v91, %v90
  %v111 = vpack.c.b16 %v93, %v92
  %v112 = vpack.c.b16 %v95, %v94
  %v113 = vpack.c.b16 %v97, %v96
  %v114 = vpack.c.b16 %v99, %v98
  %v115 = vpack.c.b16 %v101, %v100
  %v116 = vpack.c.b16 %v103, %v102
  %v117 = vpack.c.b16 %v105, %v104
  %v118 = vpack.c.b16 %v107, %v106
  %v119 = vpack.c.b16 %v109, %v108
  %vm130 = vcmask 261120
  %v132 = vsel %vm130, %v68, 0
  %134 = vmatprep.subr.bf16.mxu0 0
  %135 = vmatpush1.bf16.msra.mxu0 %v117
  %136 = vmatprep.subr.bf16.mxu0 0
  %137 = vmatpush1.bf16.msra.mxu0 %v116
  %138 = vmatprep.subr.bf16.mxu0 0
  %139 = vmatpush1.bf16.msra.mxu0 %v115
  %140 = vmatprep.subr.bf16.mxu0 0
  %141 = vmatpush1.bf16.msra.mxu0 %v114
  %142 = vmatprep.subr.bf16.mxu0 0
  %143 = vmatpush1.bf16.msra.mxu0 %v113
  %144 = vmatprep.subr.bf16.mxu0 0
  %145 = vmatpush1.bf16.msra.mxu0 %v112
  %146 = vmatprep.subr.bf16.mxu0 0
  %147 = vmatpush1.bf16.msra.mxu0 %v111
  %148 = vmatprep.subr.bf16.mxu0 0
  %149 = vmatpush1.bf16.msra.mxu0 %v110
  %150 = vmatprep.subr.bf16.mxu0 0
  %151 = vmatpush2.bf16.msra.mxu0 0
  %152 = vmatprep.subr.bf16.mxu0 0
  %153 = vmatpush2.bf16.msra.mxu0 0
  %154 = vmatprep.subr.bf16.mxu0 0
  %155 = vmatpush2.bf16.msra.mxu0 0
  %156 = vmatprep.subr.bf16.mxu0 0
  %157 = vmatpush2.bf16.msra.mxu0 0
  %158 = vmatprep.subr.bf16.mxu0 0
  %159 = vmatpush2.bf16.msra.mxu0 0
  %160 = vmatprep.subr.bf16.mxu0 0
  %161 = vmatpush2.bf16.msra.mxu0 0
  %162 = vmatprep.subr.bf16.mxu0 0
  %163 = vmatpush2.bf16.msra.mxu0 %v119
  %164 = vmatprep.subr.bf16.mxu0 0
  %165 = vmatpush2.bf16.msra.mxu0 %v118
  %166 = vmatprep.mubr.bf16.mxu0 %v132
  %167 = vmatmul.mubr.bf16.gmra.mxu0 %v67
  %v168 = vpop.f32.mrf.mxu0
  %v169 = vadd.f32 0.0, %v168
  %v170 = vpop.f32.mrf.mxu0
  %v171 = vpop.f32.mrf.mxu0
  %v172 = vadd.f32 0.0, %v171
  %v173 = vpop.f32.mrf.mxu0
  %174 = vdwg.mxu0
  %s175 = scalar_lea.vmem %s0, 400
  %v176 = vld [vmem:[%s175] sm:$0xff]
  %v177 = vld [vmem:[%s175 + $0x8] sm:$0xff]
  %v180 = vunpack.c.l.b16 %v176
  %v181 = vunpack.c.h.b16 %v176
  %v182 = vunpack.c.l.b16 %v177
  %v183 = vunpack.c.h.b16 %v177
  %v184 = vpack.c.b16 %v182, %v180
  %v185 = vpack.c.b16 %v183, %v181
  %v188 = vsel %vm130, %v185, 0
  %190 = vmatprep.subr.bf16.mxu0 0
  %191 = vmatpush1.bf16.msra.mxu0 %v117
  %192 = vmatprep.subr.bf16.mxu0 0
  %193 = vmatpush1.bf16.msra.mxu0 %v116
  %194 = vmatprep.subr.bf16.mxu0 0
  %195 = vmatpush1.bf16.msra.mxu0 %v115
  %196 = vmatprep.subr.bf16.mxu0 0
  %197 = vmatpush1.bf16.msra.mxu0 %v114
  %198 = vmatprep.subr.bf16.mxu0 0
  %199 = vmatpush1.bf16.msra.mxu0 %v113
  %200 = vmatprep.subr.bf16.mxu0 0
  %201 = vmatpush1.bf16.msra.mxu0 %v112
  %202 = vmatprep.subr.bf16.mxu0 0
  %203 = vmatpush1.bf16.msra.mxu0 %v111
  %204 = vmatprep.subr.bf16.mxu0 0
  %205 = vmatpush1.bf16.msra.mxu0 %v110
  %206 = vmatprep.subr.bf16.mxu0 0
  %207 = vmatpush2.bf16.msra.mxu0 0
  %208 = vmatprep.subr.bf16.mxu0 0
  %209 = vmatpush2.bf16.msra.mxu0 0
  %210 = vmatprep.subr.bf16.mxu0 0
  %211 = vmatpush2.bf16.msra.mxu0 0
  %212 = vmatprep.subr.bf16.mxu0 0
  %213 = vmatpush2.bf16.msra.mxu0 0
  %214 = vmatprep.subr.bf16.mxu0 0
  %215 = vmatpush2.bf16.msra.mxu0 0
  %216 = vmatprep.subr.bf16.mxu0 0
  %217 = vmatpush2.bf16.msra.mxu0 0
  %218 = vmatprep.subr.bf16.mxu0 0
  %219 = vmatpush2.bf16.msra.mxu0 %v119
  %220 = vmatprep.subr.bf16.mxu0 0
  %221 = vmatpush2.bf16.msra.mxu0 %v118
  %222 = vmatprep.mubr.bf16.mxu0 %v188
  %223 = vmatmul.mubr.bf16.gmra.mxu0 %v184
  %v224 = vpop.f32.mrf.mxu0
  %v225 = vadd.f32 0.0, %v224
  %v226 = vpop.f32.mrf.mxu0
  %v227 = vpop.f32.mrf.mxu0
  %v228 = vadd.f32 0.0, %v227
  %v229 = vpop.f32.mrf.mxu0
  %230 = vdwg.mxu0
  %v231 = vmax.f32 %v169, %v225
  %v232 = vmax.f32 %v172, %v228
  %s233 = scalar_lea.vmem %s0, 800
  %v234 = vld [vmem:[%s233] sm:$0xff]
  %v235 = vld [vmem:[%s233 + $0x8] sm:$0xff]
  %v238 = vunpack.c.l.b16 %v234
  %v239 = vunpack.c.h.b16 %v234
  %v240 = vunpack.c.l.b16 %v235
  %v241 = vunpack.c.h.b16 %v235
  %v242 = vpack.c.b16 %v240, %v238
  %v243 = vpack.c.b16 %v241, %v239
  %v246 = vsel %vm130, %v243, 0
  %248 = vmatprep.subr.bf16.mxu0 0
  %249 = vmatpush1.bf16.msra.mxu0 %v117
  %250 = vmatprep.subr.bf16.mxu0 0
  %251 = vmatpush1.bf16.msra.mxu0 %v116
  %252 = vmatprep.subr.bf16.mxu0 0
  %253 = vmatpush1.bf16.msra.mxu0 %v115
  %254 = vmatprep.subr.bf16.mxu0 0
  %255 = vmatpush1.bf16.msra.mxu0 %v114
  %256 = vmatprep.subr.bf16.mxu0 0
  %257 = vmatpush1.bf16.msra.mxu0 %v113
  %258 = vmatprep.subr.bf16.mxu0 0
  %259 = vmatpush1.bf16.msra.mxu0 %v112
  %260 = vmatprep.subr.bf16.mxu0 0
  %261 = vmatpush1.bf16.msra.mxu0 %v111
  %262 = vmatprep.subr.bf16.mxu0 0
  %263 = vmatpush1.bf16.msra.mxu0 %v110
  %264 = vmatprep.subr.bf16.mxu0 0
  %265 = vmatpush2.bf16.msra.mxu0 0
  %266 = vmatprep.subr.bf16.mxu0 0
  %267 = vmatpush2.bf16.msra.mxu0 0
  %268 = vmatprep.subr.bf16.mxu0 0
  %269 = vmatpush2.bf16.msra.mxu0 0
  %270 = vmatprep.subr.bf16.mxu0 0
  %271 = vmatpush2.bf16.msra.mxu0 0
  %272 = vmatprep.subr.bf16.mxu0 0
  %273 = vmatpush2.bf16.msra.mxu0 0
  %274 = vmatprep.subr.bf16.mxu0 0
  %275 = vmatpush2.bf16.msra.mxu0 0
  %276 = vmatprep.subr.bf16.mxu0 0
  %277 = vmatpush2.bf16.msra.mxu0 %v119
  %278 = vmatprep.subr.bf16.mxu0 0
  %279 = vmatpush2.bf16.msra.mxu0 %v118
  %280 = vmatprep.mubr.bf16.mxu0 %v246
  %281 = vmatmul.mubr.bf16.gmra.mxu0 %v242
  %v282 = vpop.f32.mrf.mxu0
  %v283 = vadd.f32 0.0, %v282
  %v284 = vpop.f32.mrf.mxu0
  %v285 = vpop.f32.mrf.mxu0
  %v286 = vadd.f32 0.0, %v285
  %v287 = vpop.f32.mrf.mxu0
  %288 = vdwg.mxu0
  %v289 = vmax.f32 %v231, %v283
  %v290 = vmax.f32 %v232, %v286
  %s291 = scalar_lea.vmem %s0, 1200
  %v292 = vld [vmem:[%s291] sm:$0xff]
  %v293 = vld [vmem:[%s291 + $0x8] sm:$0xff]
  %v296 = vunpack.c.l.b16 %v292
  %v297 = vunpack.c.h.b16 %v292
  %v298 = vunpack.c.l.b16 %v293
  %v299 = vunpack.c.h.b16 %v293
  %v300 = vpack.c.b16 %v298, %v296
  %v301 = vpack.c.b16 %v299, %v297
  %v304 = vsel %vm130, %v301, 0
  %306 = vmatprep.subr.bf16.mxu0 0
  %307 = vmatpush1.bf16.msra.mxu0 %v117
  %308 = vmatprep.subr.bf16.mxu0 0
  %309 = vmatpush1.bf16.msra.mxu0 %v116
  %310 = vmatprep.subr.bf16.mxu0 0
  %311 = vmatpush1.bf16.msra.mxu0 %v115
  %312 = vmatprep.subr.bf16.mxu0 0
  %313 = vmatpush1.bf16.msra.mxu0 %v114
  %314 = vmatprep.subr.bf16.mxu0 0
  %315 = vmatpush1.bf16.msra.mxu0 %v113
  %316 = vmatprep.subr.bf16.mxu0 0
  %317 = vmatpush1.bf16.msra.mxu0 %v112
  %318 = vmatprep.subr.bf16.mxu0 0
  %319 = vmatpush1.bf16.msra.mxu0 %v111
  %320 = vmatprep.subr.bf16.mxu0 0
  %321 = vmatpush1.bf16.msra.mxu0 %v110
  %322 = vmatprep.subr.bf16.mxu0 0
  %323 = vmatpush2.bf16.msra.mxu0 0
  %324 = vmatprep.subr.bf16.mxu0 0
  %325 = vmatpush2.bf16.msra.mxu0 0
  %326 = vmatprep.subr.bf16.mxu0 0
  %327 = vmatpush2.bf16.msra.mxu0 0
  %328 = vmatprep.subr.bf16.mxu0 0
  %329 = vmatpush2.bf16.msra.mxu0 0
  %330 = vmatprep.subr.bf16.mxu0 0
  %331 = vmatpush2.bf16.msra.mxu0 0
  %332 = vmatprep.subr.bf16.mxu0 0
  %333 = vmatpush2.bf16.msra.mxu0 0
  %334 = vmatprep.subr.bf16.mxu0 0
  %335 = vmatpush2.bf16.msra.mxu0 %v119
  %336 = vmatprep.subr.bf16.mxu0 0
  %337 = vmatpush2.bf16.msra.mxu0 %v118
  %338 = vmatprep.mubr.bf16.mxu0 %v304
  %339 = vmatmul.mubr.bf16.gmra.mxu0 %v300
  %v340 = vpop.f32.mrf.mxu0
  %v341 = vadd.f32 0.0, %v340
  %v342 = vpop.f32.mrf.mxu0
  %v343 = vpop.f32.mrf.mxu0
  %v344 = vadd.f32 0.0, %v343
  %v345 = vpop.f32.mrf.mxu0
  %346 = vdwg.mxu0
  %v347 = vmax.f32 %v289, %v341
  %v348 = vmax.f32 %v290, %v344
  %v349 = vld [vmem:[%s2] sm:$0x1]
  %v351 = vlaneseq
  %v352 = vshrl.u32 %v351, 7
  %v353 = vsub.s32 0, %v352
  %v354 = vrot.slane %v349, %v353
  %v356 = vadd.f32 %v347, %v354
  %v357 = vadd.f32 %v348, %v354
  %v358 = vmax.f32 %v356, 0.0
  %v359 = vmax.f32 %v357, 0.0
  %v360 = vpack.c.bf16 %v359, %v358
  %v361 = vld [vmem:[%s3] sm:$0xf]
  %v362 = vld [vmem:[%s3 + $0x4] sm:$0xf]
  %s363 = scalar_lea.vmem %s0, 16
  %v364 = vld [vmem:[%s363] sm:$0xff]
  %v365 = vld [vmem:[%s363 + $0x8] sm:$0xff]
  %v368 = vunpack.c.l.b16 %v364
  %v369 = vunpack.c.h.b16 %v364
  %v370 = vunpack.c.l.b16 %v365
  %v371 = vunpack.c.h.b16 %v365
  %v372 = vpack.c.b16 %v370, %v368
  %v373 = vpack.c.b16 %v371, %v369
  %v376 = vsel %vm130, %v373, 0
  %378 = vmatprep.subr.bf16.mxu0 0
  %379 = vmatpush1.bf16.msra.mxu0 %v117
  %380 = vmatprep.subr.bf16.mxu0 0
  %381 = vmatpush1.bf16.msra.mxu0 %v116
  %382 = vmatprep.subr.bf16.mxu0 0
  %383 = vmatpush1.bf16.msra.mxu0 %v115
  %384 = vmatprep.subr.bf16.mxu0 0
  %385 = vmatpush1.bf16.msra.mxu0 %v114
  %386 = vmatprep.subr.bf16.mxu0 0
  %387 = vmatpush1.bf16.msra.mxu0 %v113
  %388 = vmatprep.subr.bf16.mxu0 0
  %389 = vmatpush1.bf16.msra.mxu0 %v112
  %390 = vmatprep.subr.bf16.mxu0 0
  %391 = vmatpush1.bf16.msra.mxu0 %v111
  %392 = vmatprep.subr.bf16.mxu0 0
  %393 = vmatpush1.bf16.msra.mxu0 %v110
  %394 = vmatprep.subr.bf16.mxu0 0
  %395 = vmatpush2.bf16.msra.mxu0 0
  %396 = vmatprep.subr.bf16.mxu0 0
  %397 = vmatpush2.bf16.msra.mxu0 0
  %398 = vmatprep.subr.bf16.mxu0 0
  %399 = vmatpush2.bf16.msra.mxu0 0
  %400 = vmatprep.subr.bf16.mxu0 0
  %401 = vmatpush2.bf16.msra.mxu0 0
  %402 = vmatprep.subr.bf16.mxu0 0
  %403 = vmatpush2.bf16.msra.mxu0 0
  %404 = vmatprep.subr.bf16.mxu0 0
  %405 = vmatpush2.bf16.msra.mxu0 0
  %406 = vmatprep.subr.bf16.mxu0 0
  %407 = vmatpush2.bf16.msra.mxu0 %v119
  %408 = vmatprep.subr.bf16.mxu0 0
  %409 = vmatpush2.bf16.msra.mxu0 %v118
  %410 = vmatprep.mubr.bf16.mxu0 %v376
  %411 = vmatmul.mubr.bf16.gmra.mxu0 %v372
  %v412 = vpop.f32.mrf.mxu0
  %v413 = vadd.f32 0.0, %v412
  %v414 = vpop.f32.mrf.mxu0
  %v415 = vpop.f32.mrf.mxu0
  %v416 = vadd.f32 0.0, %v415
  %v417 = vpop.f32.mrf.mxu0
  %418 = vdwg.mxu0
  %s419 = scalar_lea.vmem %s0, 416
  %v420 = vld [vmem:[%s419] sm:$0xff]
  %v421 = vld [vmem:[%s419 + $0x8] sm:$0xff]
  %v424 = vunpack.c.l.b16 %v420
  %v425 = vunpack.c.h.b16 %v420
  %v426 = vunpack.c.l.b16 %v421
  %v427 = vunpack.c.h.b16 %v421
  %v428 = vpack.c.b16 %v426, %v424
  %v429 = vpack.c.b16 %v427, %v425
  %v432 = vsel %vm130, %v429, 0
  %434 = vmatprep.subr.bf16.mxu0 0
  %435 = vmatpush1.bf16.msra.mxu0 %v117
  %436 = vmatprep.subr.bf16.mxu0 0
  %437 = vmatpush1.bf16.msra.mxu0 %v116
  %438 = vmatprep.subr.bf16.mxu0 0
  %439 = vmatpush1.bf16.msra.mxu0 %v115
  %440 = vmatprep.subr.bf16.mxu0 0
  %441 = vmatpush1.bf16.msra.mxu0 %v114
  %442 = vmatprep.subr.bf16.mxu0 0
  %443 = vmatpush1.bf16.msra.mxu0 %v113
  %444 = vmatprep.subr.bf16.mxu0 0
  %445 = vmatpush1.bf16.msra.mxu0 %v112
  %446 = vmatprep.subr.bf16.mxu0 0
  %447 = vmatpush1.bf16.msra.mxu0 %v111
  %448 = vmatprep.subr.bf16.mxu0 0
  %449 = vmatpush1.bf16.msra.mxu0 %v110
  %450 = vmatprep.subr.bf16.mxu0 0
  %451 = vmatpush2.bf16.msra.mxu0 0
  %452 = vmatprep.subr.bf16.mxu0 0
  %453 = vmatpush2.bf16.msra.mxu0 0
  %454 = vmatprep.subr.bf16.mxu0 0
  %455 = vmatpush2.bf16.msra.mxu0 0
  %456 = vmatprep.subr.bf16.mxu0 0
  %457 = vmatpush2.bf16.msra.mxu0 0
  %458 = vmatprep.subr.bf16.mxu0 0
  %459 = vmatpush2.bf16.msra.mxu0 0
  %460 = vmatprep.subr.bf16.mxu0 0
  %461 = vmatpush2.bf16.msra.mxu0 0
  %462 = vmatprep.subr.bf16.mxu0 0
  %463 = vmatpush2.bf16.msra.mxu0 %v119
  %464 = vmatprep.subr.bf16.mxu0 0
  %465 = vmatpush2.bf16.msra.mxu0 %v118
  %466 = vmatprep.mubr.bf16.mxu0 %v432
  %467 = vmatmul.mubr.bf16.gmra.mxu0 %v428
  %v468 = vpop.f32.mrf.mxu0
  %v469 = vadd.f32 0.0, %v468
  %v470 = vpop.f32.mrf.mxu0
  %v471 = vpop.f32.mrf.mxu0
  %v472 = vadd.f32 0.0, %v471
  %v473 = vpop.f32.mrf.mxu0
  %474 = vdwg.mxu0
  %v475 = vmax.f32 %v413, %v469
  %v476 = vmax.f32 %v416, %v472
  %s477 = scalar_lea.vmem %s0, 816
  %v478 = vld [vmem:[%s477] sm:$0xff]
  %v479 = vld [vmem:[%s477 + $0x8] sm:$0xff]
  %v482 = vunpack.c.l.b16 %v478
  %v483 = vunpack.c.h.b16 %v478
  %v484 = vunpack.c.l.b16 %v479
  %v485 = vunpack.c.h.b16 %v479
  %v486 = vpack.c.b16 %v484, %v482
  %v487 = vpack.c.b16 %v485, %v483
  %v490 = vsel %vm130, %v487, 0
  %492 = vmatprep.subr.bf16.mxu0 0
  %493 = vmatpush1.bf16.msra.mxu0 %v117
  %494 = vmatprep.subr.bf16.mxu0 0
  %495 = vmatpush1.bf16.msra.mxu0 %v116
  %496 = vmatprep.subr.bf16.mxu0 0
  %497 = vmatpush1.bf16.msra.mxu0 %v115
  %498 = vmatprep.subr.bf16.mxu0 0
  %499 = vmatpush1.bf16.msra.mxu0 %v114
  %500 = vmatprep.subr.bf16.mxu0 0
  %501 = vmatpush1.bf16.msra.mxu0 %v113
  %502 = vmatprep.subr.bf16.mxu0 0
  %503 = vmatpush1.bf16.msra.mxu0 %v112
  %504 = vmatprep.subr.bf16.mxu0 0
  %505 = vmatpush1.bf16.msra.mxu0 %v111
  %506 = vmatprep.subr.bf16.mxu0 0
  %507 = vmatpush1.bf16.msra.mxu0 %v110
  %508 = vmatprep.subr.bf16.mxu0 0
  %509 = vmatpush2.bf16.msra.mxu0 0
  %510 = vmatprep.subr.bf16.mxu0 0
  %511 = vmatpush2.bf16.msra.mxu0 0
  %512 = vmatprep.subr.bf16.mxu0 0
  %513 = vmatpush2.bf16.msra.mxu0 0
  %514 = vmatprep.subr.bf16.mxu0 0
  %515 = vmatpush2.bf16.msra.mxu0 0
  %516 = vmatprep.subr.bf16.mxu0 0
  %517 = vmatpush2.bf16.msra.mxu0 0
  %518 = vmatprep.subr.bf16.mxu0 0
  %519 = vmatpush2.bf16.msra.mxu0 0
  %520 = vmatprep.subr.bf16.mxu0 0
  %521 = vmatpush2.bf16.msra.mxu0 %v119
  %522 = vmatprep.subr.bf16.mxu0 0
  %523 = vmatpush2.bf16.msra.mxu0 %v118
  %524 = vmatprep.mubr.bf16.mxu0 %v490
  %525 = vmatmul.mubr.bf16.gmra.mxu0 %v486
  %v526 = vpop.f32.mrf.mxu0
  %v527 = vadd.f32 0.0, %v526
  %v528 = vpop.f32.mrf.mxu0
  %v529 = vpop.f32.mrf.mxu0
  %v530 = vadd.f32 0.0, %v529
  %v531 = vpop.f32.mrf.mxu0
  %532 = vdwg.mxu0
  %v533 = vmax.f32 %v475, %v527
  %v534 = vmax.f32 %v476, %v530
  %s535 = scalar_lea.vmem %s0, 1216
  %v536 = vld [vmem:[%s535] sm:$0xff]
  %v537 = vld [vmem:[%s535 + $0x8] sm:$0xff]
  %v540 = vunpack.c.l.b16 %v536
  %v541 = vunpack.c.h.b16 %v536
  %v542 = vunpack.c.l.b16 %v537
  %v543 = vunpack.c.h.b16 %v537
  %v544 = vpack.c.b16 %v542, %v540
  %v545 = vpack.c.b16 %v543, %v541
  %v548 = vsel %vm130, %v545, 0
  %550 = vmatprep.subr.bf16.mxu0 0
  %551 = vmatpush1.bf16.msra.mxu0 %v117
  %552 = vmatprep.subr.bf16.mxu0 0
  %553 = vmatpush1.bf16.msra.mxu0 %v116
  %554 = vmatprep.subr.bf16.mxu0 0
  %555 = vmatpush1.bf16.msra.mxu0 %v115
  %556 = vmatprep.subr.bf16.mxu0 0
  %557 = vmatpush1.bf16.msra.mxu0 %v114
  %558 = vmatprep.subr.bf16.mxu0 0
  %559 = vmatpush1.bf16.msra.mxu0 %v113
  %560 = vmatprep.subr.bf16.mxu0 0
  %561 = vmatpush1.bf16.msra.mxu0 %v112
  %562 = vmatprep.subr.bf16.mxu0 0
  %563 = vmatpush1.bf16.msra.mxu0 %v111
  %564 = vmatprep.subr.bf16.mxu0 0
  %565 = vmatpush1.bf16.msra.mxu0 %v110
  %566 = vmatprep.subr.bf16.mxu0 0
  %567 = vmatpush2.bf16.msra.mxu0 0
  %568 = vmatprep.subr.bf16.mxu0 0
  %569 = vmatpush2.bf16.msra.mxu0 0
  %570 = vmatprep.subr.bf16.mxu0 0
  %571 = vmatpush2.bf16.msra.mxu0 0
  %572 = vmatprep.subr.bf16.mxu0 0
  %573 = vmatpush2.bf16.msra.mxu0 0
  %574 = vmatprep.subr.bf16.mxu0 0
  %575 = vmatpush2.bf16.msra.mxu0 0
  %576 = vmatprep.subr.bf16.mxu0 0
  %577 = vmatpush2.bf16.msra.mxu0 0
  %578 = vmatprep.subr.bf16.mxu0 0
  %579 = vmatpush2.bf16.msra.mxu0 %v119
  %580 = vmatprep.subr.bf16.mxu0 0
  %581 = vmatpush2.bf16.msra.mxu0 %v118
  %582 = vmatprep.mubr.bf16.mxu0 %v548
  %583 = vmatmul.mubr.bf16.gmra.mxu0 %v544
  %v584 = vpop.f32.mrf.mxu0
  %v585 = vadd.f32 0.0, %v584
  %v586 = vpop.f32.mrf.mxu0
  %v587 = vpop.f32.mrf.mxu0
  %v588 = vadd.f32 0.0, %v587
  %v589 = vpop.f32.mrf.mxu0
  %590 = vdwg.mxu0
  %v591 = vmax.f32 %v533, %v585
  %v592 = vmax.f32 %v534, %v588
  %v593 = vadd.f32 %v591, %v354
  %v594 = vadd.f32 %v592, %v354
  %v595 = vmax.f32 %v593, 0.0
  %v596 = vmax.f32 %v594, 0.0
  %v597 = vpack.c.bf16 %v596, %v595
  %s598 = scalar_lea.vmem %s3, 8
  %v599 = vld [vmem:[%s598] sm:$0xf]
  %v600 = vld [vmem:[%s598 + $0x4] sm:$0xf]
  %v603 = vunpack.c.l.b16 %v599
  %v604 = vunpack.c.l.b16 %v600
  %v605 = vpack.c.b16 %v604, %v603
  %vm607 = vcmask 130048
  %v609 = vsel %vm607, %v597, 0
  %611 = vmatprep.subr.bf16.mxu0 0
  %612 = vmatpush1.bf16.msra.mxu0 0
  %613 = vmatprep.subr.bf16.mxu0 0
  %614 = vmatpush1.bf16.msra.mxu0 0
  %615 = vmatprep.subr.bf16.mxu0 0
  %616 = vmatpush1.bf16.msra.mxu0 0
  %617 = vmatprep.subr.bf16.mxu0 0
  %618 = vmatpush1.bf16.msra.mxu0 0
  %619 = vmatprep.subr.bf16.mxu0 0
  %620 = vmatpush1.bf16.msra.mxu0 0
  %621 = vmatprep.subr.bf16.mxu0 0
  %622 = vmatpush1.bf16.msra.mxu0 0
  %623 = vmatprep.subr.bf16.mxu0 0
  %624 = vmatpush1.bf16.msra.mxu0 0
  %625 = vmatprep.subr.bf16.mxu0 0
  %626 = vmatpush1.bf16.msra.mxu0 %v605
  %627 = vmatprep.subr.bf16.mxu0 0
  %628 = vmatpush2.bf16.msra.mxu0 0
  %629 = vmatprep.subr.bf16.mxu0 0
  %630 = vmatpush2.bf16.msra.mxu0 0
  %631 = vmatprep.subr.bf16.mxu0 0
  %632 = vmatpush2.bf16.msra.mxu0 0
  %633 = vmatprep.subr.bf16.mxu0 0
  %634 = vmatpush2.bf16.msra.mxu0 0
  %635 = vmatprep.subr.bf16.mxu0 0
  %636 = vmatpush2.bf16.msra.mxu0 0
  %637 = vmatprep.subr.bf16.mxu0 0
  %638 = vmatpush2.bf16.msra.mxu0 0
  %639 = vmatprep.subr.bf16.mxu0 0
  %640 = vmatpush2.bf16.msra.mxu0 0
  %641 = vmatprep.subr.bf16.mxu0 0
  %642 = vmatpush2.bf16.msra.mxu0 0
  %643 = vmatprep.mubr.bf16.mxu0 0
  %644 = vmatmul.mubr.bf16.gmra.mxu0 %v609
  %v645 = vpop.f32.mrf.mxu0
  %v646 = vadd.f32 0.0, %v645
  %v647 = vpop.f32.mrf.mxu0
  %v648 = vpop.f32.mrf.mxu0
  %v649 = vadd.f32 0.0, %v648
  %v650 = vpop.f32.mrf.mxu0
  %651 = vdwg.mxu0
  %v654 = vunpack.c.l.b16 %v361
  %v655 = vunpack.c.l.b16 %v362
  %v656 = vpack.c.b16 %v655, %v654
  %v659 = vsel %vm607, %v360, 0
  %661 = vmatprep.subr.bf16.mxu0 0
  %662 = vmatpush1.bf16.msra.mxu0 0
  %663 = vmatprep.subr.bf16.mxu0 0
  %664 = vmatpush1.bf16.msra.mxu0 0
  %665 = vmatprep.subr.bf16.mxu0 0
  %666 = vmatpush1.bf16.msra.mxu0 0
  %667 = vmatprep.subr.bf16.mxu0 0
  %668 = vmatpush1.bf16.msra.mxu0 0
  %669 = vmatprep.subr.bf16.mxu0 0
  %670 = vmatpush1.bf16.msra.mxu0 0
  %671 = vmatprep.subr.bf16.mxu0 0
  %672 = vmatpush1.bf16.msra.mxu0 0
  %673 = vmatprep.subr.bf16.mxu0 0
  %674 = vmatpush1.bf16.msra.mxu0 0
  %675 = vmatprep.subr.bf16.mxu0 0
  %676 = vmatpush1.bf16.msra.mxu0 %v656
  %677 = vmatprep.subr.bf16.mxu0 0
  %678 = vmatpush2.bf16.msra.mxu0 0
  %679 = vmatprep.subr.bf16.mxu0 0
  %680 = vmatpush2.bf16.msra.mxu0 0
  %681 = vmatprep.subr.bf16.mxu0 0
  %682 = vmatpush2.bf16.msra.mxu0 0
  %683 = vmatprep.subr.bf16.mxu0 0
  %684 = vmatpush2.bf16.msra.mxu0 0
  %685 = vmatprep.subr.bf16.mxu0 0
  %686 = vmatpush2.bf16.msra.mxu0 0
  %687 = vmatprep.subr.bf16.mxu0 0
  %688 = vmatpush2.bf16.msra.mxu0 0
  %689 = vmatprep.subr.bf16.mxu0 0
  %690 = vmatpush2.bf16.msra.mxu0 0
  %691 = vmatprep.subr.bf16.mxu0 0
  %692 = vmatpush2.bf16.msra.mxu0 0
  %693 = vmatprep.mubr.bf16.mxu0 0
  %694 = vmatmul.mubr.bf16.gmra.mxu0 %v659
  %v695 = vpop.f32.mrf.mxu0
  %v696 = vadd.f32 %v646, %v695
  %v697 = vpop.f32.mrf.mxu0
  %v698 = vpop.f32.mrf.mxu0
  %v699 = vadd.f32 %v649, %v698
  %v700 = vpop.f32.mrf.mxu0
  %701 = vdwg.mxu0
  %s702 = scalar_lea.vmem %s0, 32
  %v703 = vld [vmem:[%s702] sm:$0xff]
  %v704 = vld [vmem:[%s702 + $0x8] sm:$0xff]
  %v707 = vunpack.c.l.b16 %v703
  %v708 = vunpack.c.h.b16 %v703
  %v709 = vunpack.c.l.b16 %v704
  %v710 = vunpack.c.h.b16 %v704
  %v711 = vpack.c.b16 %v709, %v707
  %v712 = vpack.c.b16 %v710, %v708
  %v715 = vsel %vm130, %v712, 0
  %717 = vmatprep.subr.bf16.mxu0 0
  %718 = vmatpush1.bf16.msra.mxu0 %v117
  %719 = vmatprep.subr.bf16.mxu0 0
  %720 = vmatpush1.bf16.msra.mxu0 %v116
  %721 = vmatprep.subr.bf16.mxu0 0
  %722 = vmatpush1.bf16.msra.mxu0 %v115
  %723 = vmatprep.subr.bf16.mxu0 0
  %724 = vmatpush1.bf16.msra.mxu0 %v114
  %725 = vmatprep.subr.bf16.mxu0 0
  %726 = vmatpush1.bf16.msra.mxu0 %v113
  %727 = vmatprep.subr.bf16.mxu0 0
  %728 = vmatpush1.bf16.msra.mxu0 %v112
  %729 = vmatprep.subr.bf16.mxu0 0
  %730 = vmatpush1.bf16.msra.mxu0 %v111
  %731 = vmatprep.subr.bf16.mxu0 0
  %732 = vmatpush1.bf16.msra.mxu0 %v110
  %733 = vmatprep.subr.bf16.mxu0 0
  %734 = vmatpush2.bf16.msra.mxu0 0
  %735 = vmatprep.subr.bf16.mxu0 0
  %736 = vmatpush2.bf16.msra.mxu0 0
  %737 = vmatprep.subr.bf16.mxu0 0
  %738 = vmatpush2.bf16.msra.mxu0 0
  %739 = vmatprep.subr.bf16.mxu0 0
  %740 = vmatpush2.bf16.msra.mxu0 0
  %741 = vmatprep.subr.bf16.mxu0 0
  %742 = vmatpush2.bf16.msra.mxu0 0
  %743 = vmatprep.subr.bf16.mxu0 0
  %744 = vmatpush2.bf16.msra.mxu0 0
  %745 = vmatprep.subr.bf16.mxu0 0
  %746 = vmatpush2.bf16.msra.mxu0 %v119
  %747 = vmatprep.subr.bf16.mxu0 0
  %748 = vmatpush2.bf16.msra.mxu0 %v118
  %749 = vmatprep.mubr.bf16.mxu0 %v715
  %750 = vmatmul.mubr.bf16.gmra.mxu0 %v711
  %v751 = vpop.f32.mrf.mxu0
  %v752 = vadd.f32 0.0, %v751
  %v753 = vpop.f32.mrf.mxu0
  %v754 = vpop.f32.mrf.mxu0
  %v755 = vadd.f32 0.0, %v754
  %v756 = vpop.f32.mrf.mxu0
  %757 = vdwg.mxu0
  %s758 = scalar_lea.vmem %s0, 432
  %v759 = vld [vmem:[%s758] sm:$0xff]
  %v760 = vld [vmem:[%s758 + $0x8] sm:$0xff]
  %v763 = vunpack.c.l.b16 %v759
  %v764 = vunpack.c.h.b16 %v759
  %v765 = vunpack.c.l.b16 %v760
  %v766 = vunpack.c.h.b16 %v760
  %v767 = vpack.c.b16 %v765, %v763
  %v768 = vpack.c.b16 %v766, %v764
  %v771 = vsel %vm130, %v768, 0
  %773 = vmatprep.subr.bf16.mxu0 0
  %774 = vmatpush1.bf16.msra.mxu0 %v117
  %775 = vmatprep.subr.bf16.mxu0 0
  %776 = vmatpush1.bf16.msra.mxu0 %v116
  %777 = vmatprep.subr.bf16.mxu0 0
  %778 = vmatpush1.bf16.msra.mxu0 %v115
  %779 = vmatprep.subr.bf16.mxu0 0
  %780 = vmatpush1.bf16.msra.mxu0 %v114
  %781 = vmatprep.subr.bf16.mxu0 0
  %782 = vmatpush1.bf16.msra.mxu0 %v113
  %783 = vmatprep.subr.bf16.mxu0 0
  %784 = vmatpush1.bf16.msra.mxu0 %v112
  %785 = vmatprep.subr.bf16.mxu0 0
  %786 = vmatpush1.bf16.msra.mxu0 %v111
  %787 = vmatprep.subr.bf16.mxu0 0
  %788 = vmatpush1.bf16.msra.mxu0 %v110
  %789 = vmatprep.subr.bf16.mxu0 0
  %790 = vmatpush2.bf16.msra.mxu0 0
  %791 = vmatprep.subr.bf16.mxu0 0
  %792 = vmatpush2.bf16.msra.mxu0 0
  %793 = vmatprep.subr.bf16.mxu0 0
  %794 = vmatpush2.bf16.msra.mxu0 0
  %795 = vmatprep.subr.bf16.mxu0 0
  %796 = vmatpush2.bf16.msra.mxu0 0
  %797 = vmatprep.subr.bf16.mxu0 0
  %798 = vmatpush2.bf16.msra.mxu0 0
  %799 = vmatprep.subr.bf16.mxu0 0
  %800 = vmatpush2.bf16.msra.mxu0 0
  %801 = vmatprep.subr.bf16.mxu0 0
  %802 = vmatpush2.bf16.msra.mxu0 %v119
  %803 = vmatprep.subr.bf16.mxu0 0
  %804 = vmatpush2.bf16.msra.mxu0 %v118
  %805 = vmatprep.mubr.bf16.mxu0 %v771
  %806 = vmatmul.mubr.bf16.gmra.mxu0 %v767
  %v807 = vpop.f32.mrf.mxu0
  %v808 = vadd.f32 0.0, %v807
  %v809 = vpop.f32.mrf.mxu0
  %v810 = vpop.f32.mrf.mxu0
  %v811 = vadd.f32 0.0, %v810
  %v812 = vpop.f32.mrf.mxu0
  %813 = vdwg.mxu0
  %v814 = vmax.f32 %v752, %v808
  %v815 = vmax.f32 %v755, %v811
  %s816 = scalar_lea.vmem %s0, 832
  %v817 = vld [vmem:[%s816] sm:$0xff]
  %v818 = vld [vmem:[%s816 + $0x8] sm:$0xff]
  %v821 = vunpack.c.l.b16 %v817
  %v822 = vunpack.c.h.b16 %v817
  %v823 = vunpack.c.l.b16 %v818
  %v824 = vunpack.c.h.b16 %v818
  %v825 = vpack.c.b16 %v823, %v821
  %v826 = vpack.c.b16 %v824, %v822
  %v829 = vsel %vm130, %v826, 0
  %831 = vmatprep.subr.bf16.mxu0 0
  %832 = vmatpush1.bf16.msra.mxu0 %v117
  %833 = vmatprep.subr.bf16.mxu0 0
  %834 = vmatpush1.bf16.msra.mxu0 %v116
  %835 = vmatprep.subr.bf16.mxu0 0
  %836 = vmatpush1.bf16.msra.mxu0 %v115
  %837 = vmatprep.subr.bf16.mxu0 0
  %838 = vmatpush1.bf16.msra.mxu0 %v114
  %839 = vmatprep.subr.bf16.mxu0 0
  %840 = vmatpush1.bf16.msra.mxu0 %v113
  %841 = vmatprep.subr.bf16.mxu0 0
  %842 = vmatpush1.bf16.msra.mxu0 %v112
  %843 = vmatprep.subr.bf16.mxu0 0
  %844 = vmatpush1.bf16.msra.mxu0 %v111
  %845 = vmatprep.subr.bf16.mxu0 0
  %846 = vmatpush1.bf16.msra.mxu0 %v110
  %847 = vmatprep.subr.bf16.mxu0 0
  %848 = vmatpush2.bf16.msra.mxu0 0
  %849 = vmatprep.subr.bf16.mxu0 0
  %850 = vmatpush2.bf16.msra.mxu0 0
  %851 = vmatprep.subr.bf16.mxu0 0
  %852 = vmatpush2.bf16.msra.mxu0 0
  %853 = vmatprep.subr.bf16.mxu0 0
  %854 = vmatpush2.bf16.msra.mxu0 0
  %855 = vmatprep.subr.bf16.mxu0 0
  %856 = vmatpush2.bf16.msra.mxu0 0
  %857 = vmatprep.subr.bf16.mxu0 0
  %858 = vmatpush2.bf16.msra.mxu0 0
  %859 = vmatprep.subr.bf16.mxu0 0
  %860 = vmatpush2.bf16.msra.mxu0 %v119
  %861 = vmatprep.subr.bf16.mxu0 0
  %862 = vmatpush2.bf16.msra.mxu0 %v118
  %863 = vmatprep.mubr.bf16.mxu0 %v829
  %864 = vmatmul.mubr.bf16.gmra.mxu0 %v825
  %v865 = vpop.f32.mrf.mxu0
  %v866 = vadd.f32 0.0, %v865
  %v867 = vpop.f32.mrf.mxu0
  %v868 = vpop.f32.mrf.mxu0
  %v869 = vadd.f32 0.0, %v868
  %v870 = vpop.f32.mrf.mxu0
  %871 = vdwg.mxu0
  %v872 = vmax.f32 %v814, %v866
  %v873 = vmax.f32 %v815, %v869
  %s874 = scalar_lea.vmem %s0, 1232
  %v875 = vld [vmem:[%s874] sm:$0xff]
  %v876 = vld [vmem:[%s874 + $0x8] sm:$0xff]
  %v879 = vunpack.c.l.b16 %v875
  %v880 = vunpack.c.h.b16 %v875
  %v881 = vunpack.c.l.b16 %v876
  %v882 = vunpack.c.h.b16 %v876
  %v883 = vpack.c.b16 %v881, %v879
  %v884 = vpack.c.b16 %v882, %v880
  %v887 = vsel %vm130, %v884, 0
  %889 = vmatprep.subr.bf16.mxu0 0
  %890 = vmatpush1.bf16.msra.mxu0 %v117
  %891 = vmatprep.subr.bf16.mxu0 0
  %892 = vmatpush1.bf16.msra.mxu0 %v116
  %893 = vmatprep.subr.bf16.mxu0 0
  %894 = vmatpush1.bf16.msra.mxu0 %v115
  %895 = vmatprep.subr.bf16.mxu0 0
  %896 = vmatpush1.bf16.msra.mxu0 %v114
  %897 = vmatprep.subr.bf16.mxu0 0
  %898 = vmatpush1.bf16.msra.mxu0 %v113
  %899 = vmatprep.subr.bf16.mxu0 0
  %900 = vmatpush1.bf16.msra.mxu0 %v112
  %901 = vmatprep.subr.bf16.mxu0 0
  %902 = vmatpush1.bf16.msra.mxu0 %v111
  %903 = vmatprep.subr.bf16.mxu0 0
  %904 = vmatpush1.bf16.msra.mxu0 %v110
  %905 = vmatprep.subr.bf16.mxu0 0
  %906 = vmatpush2.bf16.msra.mxu0 0
  %907 = vmatprep.subr.bf16.mxu0 0
  %908 = vmatpush2.bf16.msra.mxu0 0
  %909 = vmatprep.subr.bf16.mxu0 0
  %910 = vmatpush2.bf16.msra.mxu0 0
  %911 = vmatprep.subr.bf16.mxu0 0
  %912 = vmatpush2.bf16.msra.mxu0 0
  %913 = vmatprep.subr.bf16.mxu0 0
  %914 = vmatpush2.bf16.msra.mxu0 0
  %915 = vmatprep.subr.bf16.mxu0 0
  %916 = vmatpush2.bf16.msra.mxu0 0
  %917 = vmatprep.subr.bf16.mxu0 0
  %918 = vmatpush2.bf16.msra.mxu0 %v119
  %919 = vmatprep.subr.bf16.mxu0 0
  %920 = vmatpush2.bf16.msra.mxu0 %v118
  %921 = vmatprep.mubr.bf16.mxu0 %v887
  %922 = vmatmul.mubr.bf16.gmra.mxu0 %v883
  %v923 = vpop.f32.mrf.mxu0
  %v924 = vadd.f32 0.0, %v923
  %v925 = vpop.f32.mrf.mxu0
  %v926 = vpop.f32.mrf.mxu0
  %v927 = vadd.f32 0.0, %v926
  %v928 = vpop.f32.mrf.mxu0
  %929 = vdwg.mxu0
  %v930 = vmax.f32 %v872, %v924
  %v931 = vmax.f32 %v873, %v927
  %v932 = vadd.f32 %v930, %v354
  %v933 = vadd.f32 %v931, %v354
  %v934 = vmax.f32 %v932, 0.0
  %v935 = vmax.f32 %v933, 0.0
  %v936 = vpack.c.bf16 %v935, %v934
  %s937 = scalar_lea.vmem %s3, 16
  %v938 = vld [vmem:[%s937] sm:$0xf]
  %v939 = vld [vmem:[%s937 + $0x4] sm:$0xf]
  %v942 = vunpack.c.l.b16 %v938
  %v943 = vunpack.c.l.b16 %v939
  %v944 = vpack.c.b16 %v943, %v942
  %v947 = vsel %vm607, %v936, 0
  %949 = vmatprep.subr.bf16.mxu0 0
  %950 = vmatpush1.bf16.msra.mxu0 0
  %951 = vmatprep.subr.bf16.mxu0 0
  %952 = vmatpush1.bf16.msra.mxu0 0
  %953 = vmatprep.subr.bf16.mxu0 0
  %954 = vmatpush1.bf16.msra.mxu0 0
  %955 = vmatprep.subr.bf16.mxu0 0
  %956 = vmatpush1.bf16.msra.mxu0 0
  %957 = vmatprep.subr.bf16.mxu0 0
  %958 = vmatpush1.bf16.msra.mxu0 0
  %959 = vmatprep.subr.bf16.mxu0 0
  %960 = vmatpush1.bf16.msra.mxu0 0
  %961 = vmatprep.subr.bf16.mxu0 0
  %962 = vmatpush1.bf16.msra.mxu0 0
  %963 = vmatprep.subr.bf16.mxu0 0
  %964 = vmatpush1.bf16.msra.mxu0 %v944
  %965 = vmatprep.subr.bf16.mxu0 0
  %966 = vmatpush2.bf16.msra.mxu0 0
  %967 = vmatprep.subr.bf16.mxu0 0
  %968 = vmatpush2.bf16.msra.mxu0 0
  %969 = vmatprep.subr.bf16.mxu0 0
  %970 = vmatpush2.bf16.msra.mxu0 0
  %971 = vmatprep.subr.bf16.mxu0 0
  %972 = vmatpush2.bf16.msra.mxu0 0
  %973 = vmatprep.subr.bf16.mxu0 0
  %974 = vmatpush2.bf16.msra.mxu0 0
  %975 = vmatprep.subr.bf16.mxu0 0
  %976 = vmatpush2.bf16.msra.mxu0 0
  %977 = vmatprep.subr.bf16.mxu0 0
  %978 = vmatpush2.bf16.msra.mxu0 0
  %979 = vmatprep.subr.bf16.mxu0 0
  %980 = vmatpush2.bf16.msra.mxu0 0
  %981 = vmatprep.mubr.bf16.mxu0 0
  %982 = vmatmul.mubr.bf16.gmra.mxu0 %v947
  %v983 = vpop.f32.mrf.mxu0
  %v984 = vadd.f32 0.0, %v983
  %v985 = vpop.f32.mrf.mxu0
  %v986 = vpop.f32.mrf.mxu0
  %v987 = vadd.f32 0.0, %v986
  %v988 = vpop.f32.mrf.mxu0
  %989 = vdwg.mxu0
  %v990 = vadd.f32 %v696, %v984
  %v991 = vadd.f32 %v699, %v987
  %s992 = scalar_lea.vmem %s0, 48
  %v993 = vld [vmem:[%s992] sm:$0xff]
  %v994 = vld [vmem:[%s992 + $0x8] sm:$0xff]
  %v997 = vunpack.c.l.b16 %v993
  %v998 = vunpack.c.h.b16 %v993
  %v999 = vunpack.c.l.b16 %v994
  %v1000 = vunpack.c.h.b16 %v994
  %v1001 = vpack.c.b16 %v999, %v997
  %v1002 = vpack.c.b16 %v1000, %v998
  %v1005 = vsel %vm130, %v1002, 0
  %1007 = vmatprep.subr.bf16.mxu0 0
  %1008 = vmatpush1.bf16.msra.mxu0 %v117
  %1009 = vmatprep.subr.bf16.mxu0 0
  %1010 = vmatpush1.bf16.msra.mxu0 %v116
  %1011 = vmatprep.subr.bf16.mxu0 0
  %1012 = vmatpush1.bf16.msra.mxu0 %v115
  %1013 = vmatprep.subr.bf16.mxu0 0
  %1014 = vmatpush1.bf16.msra.mxu0 %v114
  %1015 = vmatprep.subr.bf16.mxu0 0
  %1016 = vmatpush1.bf16.msra.mxu0 %v113
  %1017 = vmatprep.subr.bf16.mxu0 0
  %1018 = vmatpush1.bf16.msra.mxu0 %v112
  %1019 = vmatprep.subr.bf16.mxu0 0
  %1020 = vmatpush1.bf16.msra.mxu0 %v111
  %1021 = vmatprep.subr.bf16.mxu0 0
  %1022 = vmatpush1.bf16.msra.mxu0 %v110
  %1023 = vmatprep.subr.bf16.mxu0 0
  %1024 = vmatpush2.bf16.msra.mxu0 0
  %1025 = vmatprep.subr.bf16.mxu0 0
  %1026 = vmatpush2.bf16.msra.mxu0 0
  %1027 = vmatprep.subr.bf16.mxu0 0
  %1028 = vmatpush2.bf16.msra.mxu0 0
  %1029 = vmatprep.subr.bf16.mxu0 0
  %1030 = vmatpush2.bf16.msra.mxu0 0
  %1031 = vmatprep.subr.bf16.mxu0 0
  %1032 = vmatpush2.bf16.msra.mxu0 0
  %1033 = vmatprep.subr.bf16.mxu0 0
  %1034 = vmatpush2.bf16.msra.mxu0 0
  %1035 = vmatprep.subr.bf16.mxu0 0
  %1036 = vmatpush2.bf16.msra.mxu0 %v119
  %1037 = vmatprep.subr.bf16.mxu0 0
  %1038 = vmatpush2.bf16.msra.mxu0 %v118
  %1039 = vmatprep.mubr.bf16.mxu0 %v1005
  %1040 = vmatmul.mubr.bf16.gmra.mxu0 %v1001
  %v1041 = vpop.f32.mrf.mxu0
  %v1042 = vadd.f32 0.0, %v1041
  %v1043 = vpop.f32.mrf.mxu0
  %v1044 = vpop.f32.mrf.mxu0
  %v1045 = vadd.f32 0.0, %v1044
  %v1046 = vpop.f32.mrf.mxu0
  %1047 = vdwg.mxu0
  %s1048 = scalar_lea.vmem %s0, 448
  %v1049 = vld [vmem:[%s1048] sm:$0xff]
  %v1050 = vld [vmem:[%s1048 + $0x8] sm:$0xff]
  %v1053 = vunpack.c.l.b16 %v1049
  %v1054 = vunpack.c.h.b16 %v1049
  %v1055 = vunpack.c.l.b16 %v1050
  %v1056 = vunpack.c.h.b16 %v1050
  %v1057 = vpack.c.b16 %v1055, %v1053
  %v1058 = vpack.c.b16 %v1056, %v1054
  %v1061 = vsel %vm130, %v1058, 0
  %1063 = vmatprep.subr.bf16.mxu0 0
  %1064 = vmatpush1.bf16.msra.mxu0 %v117
  %1065 = vmatprep.subr.bf16.mxu0 0
  %1066 = vmatpush1.bf16.msra.mxu0 %v116
  %1067 = vmatprep.subr.bf16.mxu0 0
  %1068 = vmatpush1.bf16.msra.mxu0 %v115
  %1069 = vmatprep.subr.bf16.mxu0 0
  %1070 = vmatpush1.bf16.msra.mxu0 %v114
  %1071 = vmatprep.subr.bf16.mxu0 0
  %1072 = vmatpush1.bf16.msra.mxu0 %v113
  %1073 = vmatprep.subr.bf16.mxu0 0
  %1074 = vmatpush1.bf16.msra.mxu0 %v112
  %1075 = vmatprep.subr.bf16.mxu0 0
  %1076 = vmatpush1.bf16.msra.mxu0 %v111
  %1077 = vmatprep.subr.bf16.mxu0 0
  %1078 = vmatpush1.bf16.msra.mxu0 %v110
  %1079 = vmatprep.subr.bf16.mxu0 0
  %1080 = vmatpush2.bf16.msra.mxu0 0
  %1081 = vmatprep.subr.bf16.mxu0 0
  %1082 = vmatpush2.bf16.msra.mxu0 0
  %1083 = vmatprep.subr.bf16.mxu0 0
  %1084 = vmatpush2.bf16.msra.mxu0 0
  %1085 = vmatprep.subr.bf16.mxu0 0
  %1086 = vmatpush2.bf16.msra.mxu0 0
  %1087 = vmatprep.subr.bf16.mxu0 0
  %1088 = vmatpush2.bf16.msra.mxu0 0
  %1089 = vmatprep.subr.bf16.mxu0 0
  %1090 = vmatpush2.bf16.msra.mxu0 0
  %1091 = vmatprep.subr.bf16.mxu0 0
  %1092 = vmatpush2.bf16.msra.mxu0 %v119
  %1093 = vmatprep.subr.bf16.mxu0 0
  %1094 = vmatpush2.bf16.msra.mxu0 %v118
  %1095 = vmatprep.mubr.bf16.mxu0 %v1061
  %1096 = vmatmul.mubr.bf16.gmra.mxu0 %v1057
  %v1097 = vpop.f32.mrf.mxu0
  %v1098 = vadd.f32 0.0, %v1097
  %v1099 = vpop.f32.mrf.mxu0
  %v1100 = vpop.f32.mrf.mxu0
  %v1101 = vadd.f32 0.0, %v1100
  %v1102 = vpop.f32.mrf.mxu0
  %1103 = vdwg.mxu0
  %v1104 = vmax.f32 %v1042, %v1098
  %v1105 = vmax.f32 %v1045, %v1101
  %s1106 = scalar_lea.vmem %s0, 848
  %v1107 = vld [vmem:[%s1106] sm:$0xff]
  %v1108 = vld [vmem:[%s1106 + $0x8] sm:$0xff]
  %v1111 = vunpack.c.l.b16 %v1107
  %v1112 = vunpack.c.h.b16 %v1107
  %v1113 = vunpack.c.l.b16 %v1108
  %v1114 = vunpack.c.h.b16 %v1108
  %v1115 = vpack.c.b16 %v1113, %v1111
  %v1116 = vpack.c.b16 %v1114, %v1112
  %v1119 = vsel %vm130, %v1116, 0
  %1121 = vmatprep.subr.bf16.mxu0 0
  %1122 = vmatpush1.bf16.msra.mxu0 %v117
  %1123 = vmatprep.subr.bf16.mxu0 0
  %1124 = vmatpush1.bf16.msra.mxu0 %v116
  %1125 = vmatprep.subr.bf16.mxu0 0
  %1126 = vmatpush1.bf16.msra.mxu0 %v115
  %1127 = vmatprep.subr.bf16.mxu0 0
  %1128 = vmatpush1.bf16.msra.mxu0 %v114
  %1129 = vmatprep.subr.bf16.mxu0 0
  %1130 = vmatpush1.bf16.msra.mxu0 %v113
  %1131 = vmatprep.subr.bf16.mxu0 0
  %1132 = vmatpush1.bf16.msra.mxu0 %v112
  %1133 = vmatprep.subr.bf16.mxu0 0
  %1134 = vmatpush1.bf16.msra.mxu0 %v111
  %1135 = vmatprep.subr.bf16.mxu0 0
  %1136 = vmatpush1.bf16.msra.mxu0 %v110
  %1137 = vmatprep.subr.bf16.mxu0 0
  %1138 = vmatpush2.bf16.msra.mxu0 0
  %1139 = vmatprep.subr.bf16.mxu0 0
  %1140 = vmatpush2.bf16.msra.mxu0 0
  %1141 = vmatprep.subr.bf16.mxu0 0
  %1142 = vmatpush2.bf16.msra.mxu0 0
  %1143 = vmatprep.subr.bf16.mxu0 0
  %1144 = vmatpush2.bf16.msra.mxu0 0
  %1145 = vmatprep.subr.bf16.mxu0 0
  %1146 = vmatpush2.bf16.msra.mxu0 0
  %1147 = vmatprep.subr.bf16.mxu0 0
  %1148 = vmatpush2.bf16.msra.mxu0 0
  %1149 = vmatprep.subr.bf16.mxu0 0
  %1150 = vmatpush2.bf16.msra.mxu0 %v119
  %1151 = vmatprep.subr.bf16.mxu0 0
  %1152 = vmatpush2.bf16.msra.mxu0 %v118
  %1153 = vmatprep.mubr.bf16.mxu0 %v1119
  %1154 = vmatmul.mubr.bf16.gmra.mxu0 %v1115
  %v1155 = vpop.f32.mrf.mxu0
  %v1156 = vadd.f32 0.0, %v1155
  %v1157 = vpop.f32.mrf.mxu0
  %v1158 = vpop.f32.mrf.mxu0
  %v1159 = vadd.f32 0.0, %v1158
  %v1160 = vpop.f32.mrf.mxu0
  %1161 = vdwg.mxu0
  %v1162 = vmax.f32 %v1104, %v1156
  %v1163 = vmax.f32 %v1105, %v1159
  %s1164 = scalar_lea.vmem %s0, 1248
  %v1165 = vld [vmem:[%s1164] sm:$0xff]
  %v1166 = vld [vmem:[%s1164 + $0x8] sm:$0xff]
  %v1169 = vunpack.c.l.b16 %v1165
  %v1170 = vunpack.c.h.b16 %v1165
  %v1171 = vunpack.c.l.b16 %v1166
  %v1172 = vunpack.c.h.b16 %v1166
  %v1173 = vpack.c.b16 %v1171, %v1169
  %v1174 = vpack.c.b16 %v1172, %v1170
  %v1177 = vsel %vm130, %v1174, 0
  %1179 = vmatprep.subr.bf16.mxu0 0
  %1180 = vmatpush1.bf16.msra.mxu0 %v117
  %1181 = vmatprep.subr.bf16.mxu0 0
  %1182 = vmatpush1.bf16.msra.mxu0 %v116
  %1183 = vmatprep.subr.bf16.mxu0 0
  %1184 = vmatpush1.bf16.msra.mxu0 %v115
  %1185 = vmatprep.subr.bf16.mxu0 0
  %1186 = vmatpush1.bf16.msra.mxu0 %v114
  %1187 = vmatprep.subr.bf16.mxu0 0
  %1188 = vmatpush1.bf16.msra.mxu0 %v113
  %1189 = vmatprep.subr.bf16.mxu0 0
  %1190 = vmatpush1.bf16.msra.mxu0 %v112
  %1191 = vmatprep.subr.bf16.mxu0 0
  %1192 = vmatpush1.bf16.msra.mxu0 %v111
  %1193 = vmatprep.subr.bf16.mxu0 0
  %1194 = vmatpush1.bf16.msra.mxu0 %v110
  %1195 = vmatprep.subr.bf16.mxu0 0
  %1196 = vmatpush2.bf16.msra.mxu0 0
  %1197 = vmatprep.subr.bf16.mxu0 0
  %1198 = vmatpush2.bf16.msra.mxu0 0
  %1199 = vmatprep.subr.bf16.mxu0 0
  %1200 = vmatpush2.bf16.msra.mxu0 0
  %1201 = vmatprep.subr.bf16.mxu0 0
  %1202 = vmatpush2.bf16.msra.mxu0 0
  %1203 = vmatprep.subr.bf16.mxu0 0
  %1204 = vmatpush2.bf16.msra.mxu0 0
  %1205 = vmatprep.subr.bf16.mxu0 0
  %1206 = vmatpush2.bf16.msra.mxu0 0
  %1207 = vmatprep.subr.bf16.mxu0 0
  %1208 = vmatpush2.bf16.msra.mxu0 %v119
  %1209 = vmatprep.subr.bf16.mxu0 0
  %1210 = vmatpush2.bf16.msra.mxu0 %v118
  %1211 = vmatprep.mubr.bf16.mxu0 %v1177
  %1212 = vmatmul.mubr.bf16.gmra.mxu0 %v1173
  %v1213 = vpop.f32.mrf.mxu0
  %v1214 = vadd.f32 0.0, %v1213
  %v1215 = vpop.f32.mrf.mxu0
  %v1216 = vpop.f32.mrf.mxu0
  %v1217 = vadd.f32 0.0, %v1216
  %v1218 = vpop.f32.mrf.mxu0
  %1219 = vdwg.mxu0
  %v1220 = vmax.f32 %v1162, %v1214
  %v1221 = vmax.f32 %v1163, %v1217
  %v1222 = vadd.f32 %v1220, %v354
  %v1223 = vadd.f32 %v1221, %v354
  %v1224 = vmax.f32 %v1222, 0.0
  %v1225 = vmax.f32 %v1223, 0.0
  %v1226 = vpack.c.bf16 %v1225, %v1224
  %s1227 = scalar_lea.vmem %s3, 24
  %v1228 = vld [vmem:[%s1227] sm:$0xf]
  %v1229 = vld [vmem:[%s1227 + $0x4] sm:$0xf]
  %v1232 = vunpack.c.l.b16 %v1228
  %v1233 = vunpack.c.l.b16 %v1229
  %v1234 = vpack.c.b16 %v1233, %v1232
  %v1237 = vsel %vm607, %v1226, 0
  %1239 = vmatprep.subr.bf16.mxu0 0
  %1240 = vmatpush1.bf16.msra.mxu0 0
  %1241 = vmatprep.subr.bf16.mxu0 0
  %1242 = vmatpush1.bf16.msra.mxu0 0
  %1243 = vmatprep.subr.bf16.mxu0 0
  %1244 = vmatpush1.bf16.msra.mxu0 0
  %1245 = vmatprep.subr.bf16.mxu0 0
  %1246 = vmatpush1.bf16.msra.mxu0 0
  %1247 = vmatprep.subr.bf16.mxu0 0
  %1248 = vmatpush1.bf16.msra.mxu0 0
  %1249 = vmatprep.subr.bf16.mxu0 0
  %1250 = vmatpush1.bf16.msra.mxu0 0
  %1251 = vmatprep.subr.bf16.mxu0 0
  %1252 = vmatpush1.bf16.msra.mxu0 0
  %1253 = vmatprep.subr.bf16.mxu0 0
  %1254 = vmatpush1.bf16.msra.mxu0 %v1234
  %1255 = vmatprep.subr.bf16.mxu0 0
  %1256 = vmatpush2.bf16.msra.mxu0 0
  %1257 = vmatprep.subr.bf16.mxu0 0
  %1258 = vmatpush2.bf16.msra.mxu0 0
  %1259 = vmatprep.subr.bf16.mxu0 0
  %1260 = vmatpush2.bf16.msra.mxu0 0
  %1261 = vmatprep.subr.bf16.mxu0 0
  %1262 = vmatpush2.bf16.msra.mxu0 0
  %1263 = vmatprep.subr.bf16.mxu0 0
  %1264 = vmatpush2.bf16.msra.mxu0 0
  %1265 = vmatprep.subr.bf16.mxu0 0
  %1266 = vmatpush2.bf16.msra.mxu0 0
  %1267 = vmatprep.subr.bf16.mxu0 0
  %1268 = vmatpush2.bf16.msra.mxu0 0
  %1269 = vmatprep.subr.bf16.mxu0 0
  %1270 = vmatpush2.bf16.msra.mxu0 0
  %1271 = vmatprep.mubr.bf16.mxu0 0
  %1272 = vmatmul.mubr.bf16.gmra.mxu0 %v1237
  %v1273 = vpop.f32.mrf.mxu0
  %v1274 = vadd.f32 0.0, %v1273
  %v1275 = vpop.f32.mrf.mxu0
  %v1276 = vpop.f32.mrf.mxu0
  %v1277 = vadd.f32 0.0, %v1276
  %v1278 = vpop.f32.mrf.mxu0
  %1279 = vdwg.mxu0
  %v1280 = vadd.f32 %v990, %v1274
  %v1281 = vadd.f32 %v991, %v1277
  %s1282 = scalar_lea.vmem %s0, 64
  %v1283 = vld [vmem:[%s1282] sm:$0xff]
  %v1284 = vld [vmem:[%s1282 + $0x8] sm:$0xff]
  %v1287 = vunpack.c.l.b16 %v1283
  %v1288 = vunpack.c.h.b16 %v1283
  %v1289 = vunpack.c.l.b16 %v1284
  %v1290 = vunpack.c.h.b16 %v1284
  %v1291 = vpack.c.b16 %v1289, %v1287
  %v1292 = vpack.c.b16 %v1290, %v1288
  %v1295 = vsel %vm130, %v1292, 0
  %1297 = vmatprep.subr.bf16.mxu0 0
  %1298 = vmatpush1.bf16.msra.mxu0 %v117
  %1299 = vmatprep.subr.bf16.mxu0 0
  %1300 = vmatpush1.bf16.msra.mxu0 %v116
  %1301 = vmatprep.subr.bf16.mxu0 0
  %1302 = vmatpush1.bf16.msra.mxu0 %v115
  %1303 = vmatprep.subr.bf16.mxu0 0
  %1304 = vmatpush1.bf16.msra.mxu0 %v114
  %1305 = vmatprep.subr.bf16.mxu0 0
  %1306 = vmatpush1.bf16.msra.mxu0 %v113
  %1307 = vmatprep.subr.bf16.mxu0 0
  %1308 = vmatpush1.bf16.msra.mxu0 %v112
  %1309 = vmatprep.subr.bf16.mxu0 0
  %1310 = vmatpush1.bf16.msra.mxu0 %v111
  %1311 = vmatprep.subr.bf16.mxu0 0
  %1312 = vmatpush1.bf16.msra.mxu0 %v110
  %1313 = vmatprep.subr.bf16.mxu0 0
  %1314 = vmatpush2.bf16.msra.mxu0 0
  %1315 = vmatprep.subr.bf16.mxu0 0
  %1316 = vmatpush2.bf16.msra.mxu0 0
  %1317 = vmatprep.subr.bf16.mxu0 0
  %1318 = vmatpush2.bf16.msra.mxu0 0
  %1319 = vmatprep.subr.bf16.mxu0 0
  %1320 = vmatpush2.bf16.msra.mxu0 0
  %1321 = vmatprep.subr.bf16.mxu0 0
  %1322 = vmatpush2.bf16.msra.mxu0 0
  %1323 = vmatprep.subr.bf16.mxu0 0
  %1324 = vmatpush2.bf16.msra.mxu0 0
  %1325 = vmatprep.subr.bf16.mxu0 0
  %1326 = vmatpush2.bf16.msra.mxu0 %v119
  %1327 = vmatprep.subr.bf16.mxu0 0
  %1328 = vmatpush2.bf16.msra.mxu0 %v118
  %1329 = vmatprep.mubr.bf16.mxu0 %v1295
  %1330 = vmatmul.mubr.bf16.gmra.mxu0 %v1291
  %v1331 = vpop.f32.mrf.mxu0
  %v1332 = vadd.f32 0.0, %v1331
  %v1333 = vpop.f32.mrf.mxu0
  %v1334 = vpop.f32.mrf.mxu0
  %v1335 = vadd.f32 0.0, %v1334
  %v1336 = vpop.f32.mrf.mxu0
  %1337 = vdwg.mxu0
  %s1338 = scalar_lea.vmem %s0, 464
  %v1339 = vld [vmem:[%s1338] sm:$0xff]
  %v1340 = vld [vmem:[%s1338 + $0x8] sm:$0xff]
  %v1343 = vunpack.c.l.b16 %v1339
  %v1344 = vunpack.c.h.b16 %v1339
  %v1345 = vunpack.c.l.b16 %v1340
  %v1346 = vunpack.c.h.b16 %v1340
  %v1347 = vpack.c.b16 %v1345, %v1343
  %v1348 = vpack.c.b16 %v1346, %v1344
  %v1351 = vsel %vm130, %v1348, 0
  %1353 = vmatprep.subr.bf16.mxu0 0
  %1354 = vmatpush1.bf16.msra.mxu0 %v117
  %1355 = vmatprep.subr.bf16.mxu0 0
  %1356 = vmatpush1.bf16.msra.mxu0 %v116
  %1357 = vmatprep.subr.bf16.mxu0 0
  %1358 = vmatpush1.bf16.msra.mxu0 %v115
  %1359 = vmatprep.subr.bf16.mxu0 0
  %1360 = vmatpush1.bf16.msra.mxu0 %v114
  %1361 = vmatprep.subr.bf16.mxu0 0
  %1362 = vmatpush1.bf16.msra.mxu0 %v113
  %1363 = vmatprep.subr.bf16.mxu0 0
  %1364 = vmatpush1.bf16.msra.mxu0 %v112
  %1365 = vmatprep.subr.bf16.mxu0 0
  %1366 = vmatpush1.bf16.msra.mxu0 %v111
  %1367 = vmatprep.subr.bf16.mxu0 0
  %1368 = vmatpush1.bf16.msra.mxu0 %v110
  %1369 = vmatprep.subr.bf16.mxu0 0
  %1370 = vmatpush2.bf16.msra.mxu0 0
  %1371 = vmatprep.subr.bf16.mxu0 0
  %1372 = vmatpush2.bf16.msra.mxu0 0
  %1373 = vmatprep.subr.bf16.mxu0 0
  %1374 = vmatpush2.bf16.msra.mxu0 0
  %1375 = vmatprep.subr.bf16.mxu0 0
  %1376 = vmatpush2.bf16.msra.mxu0 0
  %1377 = vmatprep.subr.bf16.mxu0 0
  %1378 = vmatpush2.bf16.msra.mxu0 0
  %1379 = vmatprep.subr.bf16.mxu0 0
  %1380 = vmatpush2.bf16.msra.mxu0 0
  %1381 = vmatprep.subr.bf16.mxu0 0
  %1382 = vmatpush2.bf16.msra.mxu0 %v119
  %1383 = vmatprep.subr.bf16.mxu0 0
  %1384 = vmatpush2.bf16.msra.mxu0 %v118
  %1385 = vmatprep.mubr.bf16.mxu0 %v1351
  %1386 = vmatmul.mubr.bf16.gmra.mxu0 %v1347
  %v1387 = vpop.f32.mrf.mxu0
  %v1388 = vadd.f32 0.0, %v1387
  %v1389 = vpop.f32.mrf.mxu0
  %v1390 = vpop.f32.mrf.mxu0
  %v1391 = vadd.f32 0.0, %v1390
  %v1392 = vpop.f32.mrf.mxu0
  %1393 = vdwg.mxu0
  %v1394 = vmax.f32 %v1332, %v1388
  %v1395 = vmax.f32 %v1335, %v1391
  %s1396 = scalar_lea.vmem %s0, 864
  %v1397 = vld [vmem:[%s1396] sm:$0xff]
  %v1398 = vld [vmem:[%s1396 + $0x8] sm:$0xff]
  %v1401 = vunpack.c.l.b16 %v1397
  %v1402 = vunpack.c.h.b16 %v1397
  %v1403 = vunpack.c.l.b16 %v1398
  %v1404 = vunpack.c.h.b16 %v1398
  %v1405 = vpack.c.b16 %v1403, %v1401
  %v1406 = vpack.c.b16 %v1404, %v1402
  %v1409 = vsel %vm130, %v1406, 0
  %1411 = vmatprep.subr.bf16.mxu0 0
  %1412 = vmatpush1.bf16.msra.mxu0 %v117
  %1413 = vmatprep.subr.bf16.mxu0 0
  %1414 = vmatpush1.bf16.msra.mxu0 %v116
  %1415 = vmatprep.subr.bf16.mxu0 0
  %1416 = vmatpush1.bf16.msra.mxu0 %v115
  %1417 = vmatprep.subr.bf16.mxu0 0
  %1418 = vmatpush1.bf16.msra.mxu0 %v114
  %1419 = vmatprep.subr.bf16.mxu0 0
  %1420 = vmatpush1.bf16.msra.mxu0 %v113
  %1421 = vmatprep.subr.bf16.mxu0 0
  %1422 = vmatpush1.bf16.msra.mxu0 %v112
  %1423 = vmatprep.subr.bf16.mxu0 0
  %1424 = vmatpush1.bf16.msra.mxu0 %v111
  %1425 = vmatprep.subr.bf16.mxu0 0
  %1426 = vmatpush1.bf16.msra.mxu0 %v110
  %1427 = vmatprep.subr.bf16.mxu0 0
  %1428 = vmatpush2.bf16.msra.mxu0 0
  %1429 = vmatprep.subr.bf16.mxu0 0
  %1430 = vmatpush2.bf16.msra.mxu0 0
  %1431 = vmatprep.subr.bf16.mxu0 0
  %1432 = vmatpush2.bf16.msra.mxu0 0
  %1433 = vmatprep.subr.bf16.mxu0 0
  %1434 = vmatpush2.bf16.msra.mxu0 0
  %1435 = vmatprep.subr.bf16.mxu0 0
  %1436 = vmatpush2.bf16.msra.mxu0 0
  %1437 = vmatprep.subr.bf16.mxu0 0
  %1438 = vmatpush2.bf16.msra.mxu0 0
  %1439 = vmatprep.subr.bf16.mxu0 0
  %1440 = vmatpush2.bf16.msra.mxu0 %v119
  %1441 = vmatprep.subr.bf16.mxu0 0
  %1442 = vmatpush2.bf16.msra.mxu0 %v118
  %1443 = vmatprep.mubr.bf16.mxu0 %v1409
  %1444 = vmatmul.mubr.bf16.gmra.mxu0 %v1405
  %v1445 = vpop.f32.mrf.mxu0
  %v1446 = vadd.f32 0.0, %v1445
  %v1447 = vpop.f32.mrf.mxu0
  %v1448 = vpop.f32.mrf.mxu0
  %v1449 = vadd.f32 0.0, %v1448
  %v1450 = vpop.f32.mrf.mxu0
  %1451 = vdwg.mxu0
  %v1452 = vmax.f32 %v1394, %v1446
  %v1453 = vmax.f32 %v1395, %v1449
  %s1454 = scalar_lea.vmem %s0, 1264
  %v1455 = vld [vmem:[%s1454] sm:$0xff]
  %v1456 = vld [vmem:[%s1454 + $0x8] sm:$0xff]
  %v1459 = vunpack.c.l.b16 %v1455
  %v1460 = vunpack.c.h.b16 %v1455
  %v1461 = vunpack.c.l.b16 %v1456
  %v1462 = vunpack.c.h.b16 %v1456
  %v1463 = vpack.c.b16 %v1461, %v1459
  %v1464 = vpack.c.b16 %v1462, %v1460
  %v1467 = vsel %vm130, %v1464, 0
  %1469 = vmatprep.subr.bf16.mxu0 0
  %1470 = vmatpush1.bf16.msra.mxu0 %v117
  %1471 = vmatprep.subr.bf16.mxu0 0
  %1472 = vmatpush1.bf16.msra.mxu0 %v116
  %1473 = vmatprep.subr.bf16.mxu0 0
  %1474 = vmatpush1.bf16.msra.mxu0 %v115
  %1475 = vmatprep.subr.bf16.mxu0 0
  %1476 = vmatpush1.bf16.msra.mxu0 %v114
  %1477 = vmatprep.subr.bf16.mxu0 0
  %1478 = vmatpush1.bf16.msra.mxu0 %v113
  %1479 = vmatprep.subr.bf16.mxu0 0
  %1480 = vmatpush1.bf16.msra.mxu0 %v112
  %1481 = vmatprep.subr.bf16.mxu0 0
  %1482 = vmatpush1.bf16.msra.mxu0 %v111
  %1483 = vmatprep.subr.bf16.mxu0 0
  %1484 = vmatpush1.bf16.msra.mxu0 %v110
  %1485 = vmatprep.subr.bf16.mxu0 0
  %1486 = vmatpush2.bf16.msra.mxu0 0
  %1487 = vmatprep.subr.bf16.mxu0 0
  %1488 = vmatpush2.bf16.msra.mxu0 0
  %1489 = vmatprep.subr.bf16.mxu0 0
  %1490 = vmatpush2.bf16.msra.mxu0 0
  %1491 = vmatprep.subr.bf16.mxu0 0
  %1492 = vmatpush2.bf16.msra.mxu0 0
  %1493 = vmatprep.subr.bf16.mxu0 0
  %1494 = vmatpush2.bf16.msra.mxu0 0
  %1495 = vmatprep.subr.bf16.mxu0 0
  %1496 = vmatpush2.bf16.msra.mxu0 0
  %1497 = vmatprep.subr.bf16.mxu0 0
  %1498 = vmatpush2.bf16.msra.mxu0 %v119
  %1499 = vmatprep.subr.bf16.mxu0 0
  %1500 = vmatpush2.bf16.msra.mxu0 %v118
  %1501 = vmatprep.mubr.bf16.mxu0 %v1467
  %1502 = vmatmul.mubr.bf16.gmra.mxu0 %v1463
  %v1503 = vpop.f32.mrf.mxu0
  %v1504 = vadd.f32 0.0, %v1503
  %v1505 = vpop.f32.mrf.mxu0
  %v1506 = vpop.f32.mrf.mxu0
  %v1507 = vadd.f32 0.0, %v1506
  %v1508 = vpop.f32.mrf.mxu0
  %1509 = vdwg.mxu0
  %v1510 = vmax.f32 %v1452, %v1504
  %v1511 = vmax.f32 %v1453, %v1507
  %v1512 = vadd.f32 %v1510, %v354
  %v1513 = vadd.f32 %v1511, %v354
  %v1514 = vmax.f32 %v1512, 0.0
  %v1515 = vmax.f32 %v1513, 0.0
  %v1516 = vpack.c.bf16 %v1515, %v1514
  %s1517 = scalar_lea.vmem %s3, 32
  %v1518 = vld [vmem:[%s1517] sm:$0xf]
  %v1519 = vld [vmem:[%s1517 + $0x4] sm:$0xf]
  %v1522 = vunpack.c.l.b16 %v1518
  %v1523 = vunpack.c.l.b16 %v1519
  %v1524 = vpack.c.b16 %v1523, %v1522
  %v1527 = vsel %vm607, %v1516, 0
  %1529 = vmatprep.subr.bf16.mxu0 0
  %1530 = vmatpush1.bf16.msra.mxu0 0
  %1531 = vmatprep.subr.bf16.mxu0 0
  %1532 = vmatpush1.bf16.msra.mxu0 0
  %1533 = vmatprep.subr.bf16.mxu0 0
  %1534 = vmatpush1.bf16.msra.mxu0 0
  %1535 = vmatprep.subr.bf16.mxu0 0
  %1536 = vmatpush1.bf16.msra.mxu0 0
  %1537 = vmatprep.subr.bf16.mxu0 0
  %1538 = vmatpush1.bf16.msra.mxu0 0
  %1539 = vmatprep.subr.bf16.mxu0 0
  %1540 = vmatpush1.bf16.msra.mxu0 0
  %1541 = vmatprep.subr.bf16.mxu0 0
  %1542 = vmatpush1.bf16.msra.mxu0 0
  %1543 = vmatprep.subr.bf16.mxu0 0
  %1544 = vmatpush1.bf16.msra.mxu0 %v1524
  %1545 = vmatprep.subr.bf16.mxu0 0
  %1546 = vmatpush2.bf16.msra.mxu0 0
  %1547 = vmatprep.subr.bf16.mxu0 0
  %1548 = vmatpush2.bf16.msra.mxu0 0
  %1549 = vmatprep.subr.bf16.mxu0 0
  %1550 = vmatpush2.bf16.msra.mxu0 0
  %1551 = vmatprep.subr.bf16.mxu0 0
  %1552 = vmatpush2.bf16.msra.mxu0 0
  %1553 = vmatprep.subr.bf16.mxu0 0
  %1554 = vmatpush2.bf16.msra.mxu0 0
  %1555 = vmatprep.subr.bf16.mxu0 0
  %1556 = vmatpush2.bf16.msra.mxu0 0
  %1557 = vmatprep.subr.bf16.mxu0 0
  %1558 = vmatpush2.bf16.msra.mxu0 0
  %1559 = vmatprep.subr.bf16.mxu0 0
  %1560 = vmatpush2.bf16.msra.mxu0 0
  %1561 = vmatprep.mubr.bf16.mxu0 0
  %1562 = vmatmul.mubr.bf16.gmra.mxu0 %v1527
  %v1563 = vpop.f32.mrf.mxu0
  %v1564 = vadd.f32 0.0, %v1563
  %v1565 = vpop.f32.mrf.mxu0
  %v1566 = vpop.f32.mrf.mxu0
  %v1567 = vadd.f32 0.0, %v1566
  %v1568 = vpop.f32.mrf.mxu0
  %1569 = vdwg.mxu0
  %v1570 = vadd.f32 %v1280, %v1564
  %v1571 = vadd.f32 %v1281, %v1567
  %s1572 = scalar_lea.vmem %s0, 80
  %v1573 = vld [vmem:[%s1572] sm:$0xff]
  %v1574 = vld [vmem:[%s1572 + $0x8] sm:$0xff]
  %v1577 = vunpack.c.l.b16 %v1573
  %v1578 = vunpack.c.h.b16 %v1573
  %v1579 = vunpack.c.l.b16 %v1574
  %v1580 = vunpack.c.h.b16 %v1574
  %v1581 = vpack.c.b16 %v1579, %v1577
  %v1582 = vpack.c.b16 %v1580, %v1578
  %v1585 = vsel %vm130, %v1582, 0
  %1587 = vmatprep.subr.bf16.mxu0 0
  %1588 = vmatpush1.bf16.msra.mxu0 %v117
  %1589 = vmatprep.subr.bf16.mxu0 0
  %1590 = vmatpush1.bf16.msra.mxu0 %v116
  %1591 = vmatprep.subr.bf16.mxu0 0
  %1592 = vmatpush1.bf16.msra.mxu0 %v115
  %1593 = vmatprep.subr.bf16.mxu0 0
  %1594 = vmatpush1.bf16.msra.mxu0 %v114
  %1595 = vmatprep.subr.bf16.mxu0 0
  %1596 = vmatpush1.bf16.msra.mxu0 %v113
  %1597 = vmatprep.subr.bf16.mxu0 0
  %1598 = vmatpush1.bf16.msra.mxu0 %v112
  %1599 = vmatprep.subr.bf16.mxu0 0
  %1600 = vmatpush1.bf16.msra.mxu0 %v111
  %1601 = vmatprep.subr.bf16.mxu0 0
  %1602 = vmatpush1.bf16.msra.mxu0 %v110
  %1603 = vmatprep.subr.bf16.mxu0 0
  %1604 = vmatpush2.bf16.msra.mxu0 0
  %1605 = vmatprep.subr.bf16.mxu0 0
  %1606 = vmatpush2.bf16.msra.mxu0 0
  %1607 = vmatprep.subr.bf16.mxu0 0
  %1608 = vmatpush2.bf16.msra.mxu0 0
  %1609 = vmatprep.subr.bf16.mxu0 0
  %1610 = vmatpush2.bf16.msra.mxu0 0
  %1611 = vmatprep.subr.bf16.mxu0 0
  %1612 = vmatpush2.bf16.msra.mxu0 0
  %1613 = vmatprep.subr.bf16.mxu0 0
  %1614 = vmatpush2.bf16.msra.mxu0 0
  %1615 = vmatprep.subr.bf16.mxu0 0
  %1616 = vmatpush2.bf16.msra.mxu0 %v119
  %1617 = vmatprep.subr.bf16.mxu0 0
  %1618 = vmatpush2.bf16.msra.mxu0 %v118
  %1619 = vmatprep.mubr.bf16.mxu0 %v1585
  %1620 = vmatmul.mubr.bf16.gmra.mxu0 %v1581
  %v1621 = vpop.f32.mrf.mxu0
  %v1622 = vadd.f32 0.0, %v1621
  %v1623 = vpop.f32.mrf.mxu0
  %v1624 = vpop.f32.mrf.mxu0
  %v1625 = vadd.f32 0.0, %v1624
  %v1626 = vpop.f32.mrf.mxu0
  %1627 = vdwg.mxu0
  %s1628 = scalar_lea.vmem %s0, 480
  %v1629 = vld [vmem:[%s1628] sm:$0xff]
  %v1630 = vld [vmem:[%s1628 + $0x8] sm:$0xff]
  %v1633 = vunpack.c.l.b16 %v1629
  %v1634 = vunpack.c.h.b16 %v1629
  %v1635 = vunpack.c.l.b16 %v1630
  %v1636 = vunpack.c.h.b16 %v1630
  %v1637 = vpack.c.b16 %v1635, %v1633
  %v1638 = vpack.c.b16 %v1636, %v1634
  %v1641 = vsel %vm130, %v1638, 0
  %1643 = vmatprep.subr.bf16.mxu0 0
  %1644 = vmatpush1.bf16.msra.mxu0 %v117
  %1645 = vmatprep.subr.bf16.mxu0 0
  %1646 = vmatpush1.bf16.msra.mxu0 %v116
  %1647 = vmatprep.subr.bf16.mxu0 0
  %1648 = vmatpush1.bf16.msra.mxu0 %v115
  %1649 = vmatprep.subr.bf16.mxu0 0
  %1650 = vmatpush1.bf16.msra.mxu0 %v114
  %1651 = vmatprep.subr.bf16.mxu0 0
  %1652 = vmatpush1.bf16.msra.mxu0 %v113
  %1653 = vmatprep.subr.bf16.mxu0 0
  %1654 = vmatpush1.bf16.msra.mxu0 %v112
  %1655 = vmatprep.subr.bf16.mxu0 0
  %1656 = vmatpush1.bf16.msra.mxu0 %v111
  %1657 = vmatprep.subr.bf16.mxu0 0
  %1658 = vmatpush1.bf16.msra.mxu0 %v110
  %1659 = vmatprep.subr.bf16.mxu0 0
  %1660 = vmatpush2.bf16.msra.mxu0 0
  %1661 = vmatprep.subr.bf16.mxu0 0
  %1662 = vmatpush2.bf16.msra.mxu0 0
  %1663 = vmatprep.subr.bf16.mxu0 0
  %1664 = vmatpush2.bf16.msra.mxu0 0
  %1665 = vmatprep.subr.bf16.mxu0 0
  %1666 = vmatpush2.bf16.msra.mxu0 0
  %1667 = vmatprep.subr.bf16.mxu0 0
  %1668 = vmatpush2.bf16.msra.mxu0 0
  %1669 = vmatprep.subr.bf16.mxu0 0
  %1670 = vmatpush2.bf16.msra.mxu0 0
  %1671 = vmatprep.subr.bf16.mxu0 0
  %1672 = vmatpush2.bf16.msra.mxu0 %v119
  %1673 = vmatprep.subr.bf16.mxu0 0
  %1674 = vmatpush2.bf16.msra.mxu0 %v118
  %1675 = vmatprep.mubr.bf16.mxu0 %v1641
  %1676 = vmatmul.mubr.bf16.gmra.mxu0 %v1637
  %v1677 = vpop.f32.mrf.mxu0
  %v1678 = vadd.f32 0.0, %v1677
  %v1679 = vpop.f32.mrf.mxu0
  %v1680 = vpop.f32.mrf.mxu0
  %v1681 = vadd.f32 0.0, %v1680
  %v1682 = vpop.f32.mrf.mxu0
  %1683 = vdwg.mxu0
  %v1684 = vmax.f32 %v1622, %v1678
  %v1685 = vmax.f32 %v1625, %v1681
  %s1686 = scalar_lea.vmem %s0, 880
  %v1687 = vld [vmem:[%s1686] sm:$0xff]
  %v1688 = vld [vmem:[%s1686 + $0x8] sm:$0xff]
  %v1691 = vunpack.c.l.b16 %v1687
  %v1692 = vunpack.c.h.b16 %v1687
  %v1693 = vunpack.c.l.b16 %v1688
  %v1694 = vunpack.c.h.b16 %v1688
  %v1695 = vpack.c.b16 %v1693, %v1691
  %v1696 = vpack.c.b16 %v1694, %v1692
  %v1699 = vsel %vm130, %v1696, 0
  %1701 = vmatprep.subr.bf16.mxu0 0
  %1702 = vmatpush1.bf16.msra.mxu0 %v117
  %1703 = vmatprep.subr.bf16.mxu0 0
  %1704 = vmatpush1.bf16.msra.mxu0 %v116
  %1705 = vmatprep.subr.bf16.mxu0 0
  %1706 = vmatpush1.bf16.msra.mxu0 %v115
  %1707 = vmatprep.subr.bf16.mxu0 0
  %1708 = vmatpush1.bf16.msra.mxu0 %v114
  %1709 = vmatprep.subr.bf16.mxu0 0
  %1710 = vmatpush1.bf16.msra.mxu0 %v113
  %1711 = vmatprep.subr.bf16.mxu0 0
  %1712 = vmatpush1.bf16.msra.mxu0 %v112
  %1713 = vmatprep.subr.bf16.mxu0 0
  %1714 = vmatpush1.bf16.msra.mxu0 %v111
  %1715 = vmatprep.subr.bf16.mxu0 0
  %1716 = vmatpush1.bf16.msra.mxu0 %v110
  %1717 = vmatprep.subr.bf16.mxu0 0
  %1718 = vmatpush2.bf16.msra.mxu0 0
  %1719 = vmatprep.subr.bf16.mxu0 0
  %1720 = vmatpush2.bf16.msra.mxu0 0
  %1721 = vmatprep.subr.bf16.mxu0 0
  %1722 = vmatpush2.bf16.msra.mxu0 0
  %1723 = vmatprep.subr.bf16.mxu0 0
  %1724 = vmatpush2.bf16.msra.mxu0 0
  %1725 = vmatprep.subr.bf16.mxu0 0
  %1726 = vmatpush2.bf16.msra.mxu0 0
  %1727 = vmatprep.subr.bf16.mxu0 0
  %1728 = vmatpush2.bf16.msra.mxu0 0
  %1729 = vmatprep.subr.bf16.mxu0 0
  %1730 = vmatpush2.bf16.msra.mxu0 %v119
  %1731 = vmatprep.subr.bf16.mxu0 0
  %1732 = vmatpush2.bf16.msra.mxu0 %v118
  %1733 = vmatprep.mubr.bf16.mxu0 %v1699
  %1734 = vmatmul.mubr.bf16.gmra.mxu0 %v1695
  %v1735 = vpop.f32.mrf.mxu0
  %v1736 = vadd.f32 0.0, %v1735
  %v1737 = vpop.f32.mrf.mxu0
  %v1738 = vpop.f32.mrf.mxu0
  %v1739 = vadd.f32 0.0, %v1738
  %v1740 = vpop.f32.mrf.mxu0
  %1741 = vdwg.mxu0
  %v1742 = vmax.f32 %v1684, %v1736
  %v1743 = vmax.f32 %v1685, %v1739
  %s1744 = scalar_lea.vmem %s0, 1280
  %v1745 = vld [vmem:[%s1744] sm:$0xff]
  %v1746 = vld [vmem:[%s1744 + $0x8] sm:$0xff]
  %v1749 = vunpack.c.l.b16 %v1745
  %v1750 = vunpack.c.h.b16 %v1745
  %v1751 = vunpack.c.l.b16 %v1746
  %v1752 = vunpack.c.h.b16 %v1746
  %v1753 = vpack.c.b16 %v1751, %v1749
  %v1754 = vpack.c.b16 %v1752, %v1750
  %v1757 = vsel %vm130, %v1754, 0
  %1759 = vmatprep.subr.bf16.mxu0 0
  %1760 = vmatpush1.bf16.msra.mxu0 %v117
  %1761 = vmatprep.subr.bf16.mxu0 0
  %1762 = vmatpush1.bf16.msra.mxu0 %v116
  %1763 = vmatprep.subr.bf16.mxu0 0
  %1764 = vmatpush1.bf16.msra.mxu0 %v115
  %1765 = vmatprep.subr.bf16.mxu0 0
  %1766 = vmatpush1.bf16.msra.mxu0 %v114
  %1767 = vmatprep.subr.bf16.mxu0 0
  %1768 = vmatpush1.bf16.msra.mxu0 %v113
  %1769 = vmatprep.subr.bf16.mxu0 0
  %1770 = vmatpush1.bf16.msra.mxu0 %v112
  %1771 = vmatprep.subr.bf16.mxu0 0
  %1772 = vmatpush1.bf16.msra.mxu0 %v111
  %1773 = vmatprep.subr.bf16.mxu0 0
  %1774 = vmatpush1.bf16.msra.mxu0 %v110
  %1775 = vmatprep.subr.bf16.mxu0 0
  %1776 = vmatpush2.bf16.msra.mxu0 0
  %1777 = vmatprep.subr.bf16.mxu0 0
  %1778 = vmatpush2.bf16.msra.mxu0 0
  %1779 = vmatprep.subr.bf16.mxu0 0
  %1780 = vmatpush2.bf16.msra.mxu0 0
  %1781 = vmatprep.subr.bf16.mxu0 0
  %1782 = vmatpush2.bf16.msra.mxu0 0
  %1783 = vmatprep.subr.bf16.mxu0 0
  %1784 = vmatpush2.bf16.msra.mxu0 0
  %1785 = vmatprep.subr.bf16.mxu0 0
  %1786 = vmatpush2.bf16.msra.mxu0 0
  %1787 = vmatprep.subr.bf16.mxu0 0
  %1788 = vmatpush2.bf16.msra.mxu0 %v119
  %1789 = vmatprep.subr.bf16.mxu0 0
  %1790 = vmatpush2.bf16.msra.mxu0 %v118
  %1791 = vmatprep.mubr.bf16.mxu0 %v1757
  %1792 = vmatmul.mubr.bf16.gmra.mxu0 %v1753
  %v1793 = vpop.f32.mrf.mxu0
  %v1794 = vadd.f32 0.0, %v1793
  %v1795 = vpop.f32.mrf.mxu0
  %v1796 = vpop.f32.mrf.mxu0
  %v1797 = vadd.f32 0.0, %v1796
  %v1798 = vpop.f32.mrf.mxu0
  %1799 = vdwg.mxu0
  %v1800 = vmax.f32 %v1742, %v1794
  %v1801 = vmax.f32 %v1743, %v1797
  %v1802 = vadd.f32 %v1800, %v354
  %v1803 = vadd.f32 %v1801, %v354
  %v1804 = vmax.f32 %v1802, 0.0
  %v1805 = vmax.f32 %v1803, 0.0
  %v1806 = vpack.c.bf16 %v1805, %v1804
  %s1807 = scalar_lea.vmem %s3, 40
  %v1808 = vld [vmem:[%s1807] sm:$0xf]
  %v1809 = vld [vmem:[%s1807 + $0x4] sm:$0xf]
  %v1812 = vunpack.c.l.b16 %v1808
  %v1813 = vunpack.c.l.b16 %v1809
  %v1814 = vpack.c.b16 %v1813, %v1812
  %v1817 = vsel %vm607, %v1806, 0
  %1819 = vmatprep.subr.bf16.mxu0 0
  %1820 = vmatpush1.bf16.msra.mxu0 0
  %1821 = vmatprep.subr.bf16.mxu0 0
  %1822 = vmatpush1.bf16.msra.mxu0 0
  %1823 = vmatprep.subr.bf16.mxu0 0
  %1824 = vmatpush1.bf16.msra.mxu0 0
  %1825 = vmatprep.subr.bf16.mxu0 0
  %1826 = vmatpush1.bf16.msra.mxu0 0
  %1827 = vmatprep.subr.bf16.mxu0 0
  %1828 = vmatpush1.bf16.msra.mxu0 0
  %1829 = vmatprep.subr.bf16.mxu0 0
  %1830 = vmatpush1.bf16.msra.mxu0 0
  %1831 = vmatprep.subr.bf16.mxu0 0
  %1832 = vmatpush1.bf16.msra.mxu0 0
  %1833 = vmatprep.subr.bf16.mxu0 0
  %1834 = vmatpush1.bf16.msra.mxu0 %v1814
  %1835 = vmatprep.subr.bf16.mxu0 0
  %1836 = vmatpush2.bf16.msra.mxu0 0
  %1837 = vmatprep.subr.bf16.mxu0 0
  %1838 = vmatpush2.bf16.msra.mxu0 0
  %1839 = vmatprep.subr.bf16.mxu0 0
  %1840 = vmatpush2.bf16.msra.mxu0 0
  %1841 = vmatprep.subr.bf16.mxu0 0
  %1842 = vmatpush2.bf16.msra.mxu0 0
  %1843 = vmatprep.subr.bf16.mxu0 0
  %1844 = vmatpush2.bf16.msra.mxu0 0
  %1845 = vmatprep.subr.bf16.mxu0 0
  %1846 = vmatpush2.bf16.msra.mxu0 0
  %1847 = vmatprep.subr.bf16.mxu0 0
  %1848 = vmatpush2.bf16.msra.mxu0 0
  %1849 = vmatprep.subr.bf16.mxu0 0
  %1850 = vmatpush2.bf16.msra.mxu0 0
  %1851 = vmatprep.mubr.bf16.mxu0 0
  %1852 = vmatmul.mubr.bf16.gmra.mxu0 %v1817
  %v1853 = vpop.f32.mrf.mxu0
  %v1854 = vadd.f32 0.0, %v1853
  %v1855 = vpop.f32.mrf.mxu0
  %v1856 = vpop.f32.mrf.mxu0
  %v1857 = vadd.f32 0.0, %v1856
  %v1858 = vpop.f32.mrf.mxu0
  %1859 = vdwg.mxu0
  %v1860 = vadd.f32 %v1570, %v1854
  %v1861 = vadd.f32 %v1571, %v1857
  %s1862 = scalar_lea.vmem %s0, 96
  %v1863 = vld [vmem:[%s1862] sm:$0xff]
  %v1864 = vld [vmem:[%s1862 + $0x8] sm:$0xff]
  %v1867 = vunpack.c.l.b16 %v1863
  %v1868 = vunpack.c.h.b16 %v1863
  %v1869 = vunpack.c.l.b16 %v1864
  %v1870 = vunpack.c.h.b16 %v1864
  %v1871 = vpack.c.b16 %v1869, %v1867
  %v1872 = vpack.c.b16 %v1870, %v1868
  %v1875 = vsel %vm130, %v1872, 0
  %1877 = vmatprep.subr.bf16.mxu0 0
  %1878 = vmatpush1.bf16.msra.mxu0 %v117
  %1879 = vmatprep.subr.bf16.mxu0 0
  %1880 = vmatpush1.bf16.msra.mxu0 %v116
  %1881 = vmatprep.subr.bf16.mxu0 0
  %1882 = vmatpush1.bf16.msra.mxu0 %v115
  %1883 = vmatprep.subr.bf16.mxu0 0
  %1884 = vmatpush1.bf16.msra.mxu0 %v114
  %1885 = vmatprep.subr.bf16.mxu0 0
  %1886 = vmatpush1.bf16.msra.mxu0 %v113
  %1887 = vmatprep.subr.bf16.mxu0 0
  %1888 = vmatpush1.bf16.msra.mxu0 %v112
  %1889 = vmatprep.subr.bf16.mxu0 0
  %1890 = vmatpush1.bf16.msra.mxu0 %v111
  %1891 = vmatprep.subr.bf16.mxu0 0
  %1892 = vmatpush1.bf16.msra.mxu0 %v110
  %1893 = vmatprep.subr.bf16.mxu0 0
  %1894 = vmatpush2.bf16.msra.mxu0 0
  %1895 = vmatprep.subr.bf16.mxu0 0
  %1896 = vmatpush2.bf16.msra.mxu0 0
  %1897 = vmatprep.subr.bf16.mxu0 0
  %1898 = vmatpush2.bf16.msra.mxu0 0
  %1899 = vmatprep.subr.bf16.mxu0 0
  %1900 = vmatpush2.bf16.msra.mxu0 0
  %1901 = vmatprep.subr.bf16.mxu0 0
  %1902 = vmatpush2.bf16.msra.mxu0 0
  %1903 = vmatprep.subr.bf16.mxu0 0
  %1904 = vmatpush2.bf16.msra.mxu0 0
  %1905 = vmatprep.subr.bf16.mxu0 0
  %1906 = vmatpush2.bf16.msra.mxu0 %v119
  %1907 = vmatprep.subr.bf16.mxu0 0
  %1908 = vmatpush2.bf16.msra.mxu0 %v118
  %1909 = vmatprep.mubr.bf16.mxu0 %v1875
  %1910 = vmatmul.mubr.bf16.gmra.mxu0 %v1871
  %v1911 = vpop.f32.mrf.mxu0
  %v1912 = vadd.f32 0.0, %v1911
  %v1913 = vpop.f32.mrf.mxu0
  %v1914 = vpop.f32.mrf.mxu0
  %v1915 = vadd.f32 0.0, %v1914
  %v1916 = vpop.f32.mrf.mxu0
  %1917 = vdwg.mxu0
  %s1918 = scalar_lea.vmem %s0, 496
  %v1919 = vld [vmem:[%s1918] sm:$0xff]
  %v1920 = vld [vmem:[%s1918 + $0x8] sm:$0xff]
  %v1923 = vunpack.c.l.b16 %v1919
  %v1924 = vunpack.c.h.b16 %v1919
  %v1925 = vunpack.c.l.b16 %v1920
  %v1926 = vunpack.c.h.b16 %v1920
  %v1927 = vpack.c.b16 %v1925, %v1923
  %v1928 = vpack.c.b16 %v1926, %v1924
  %v1931 = vsel %vm130, %v1928, 0
  %1933 = vmatprep.subr.bf16.mxu0 0
  %1934 = vmatpush1.bf16.msra.mxu0 %v117
  %1935 = vmatprep.subr.bf16.mxu0 0
  %1936 = vmatpush1.bf16.msra.mxu0 %v116
  %1937 = vmatprep.subr.bf16.mxu0 0
  %1938 = vmatpush1.bf16.msra.mxu0 %v115
  %1939 = vmatprep.subr.bf16.mxu0 0
  %1940 = vmatpush1.bf16.msra.mxu0 %v114
  %1941 = vmatprep.subr.bf16.mxu0 0
  %1942 = vmatpush1.bf16.msra.mxu0 %v113
  %1943 = vmatprep.subr.bf16.mxu0 0
  %1944 = vmatpush1.bf16.msra.mxu0 %v112
  %1945 = vmatprep.subr.bf16.mxu0 0
  %1946 = vmatpush1.bf16.msra.mxu0 %v111
  %1947 = vmatprep.subr.bf16.mxu0 0
  %1948 = vmatpush1.bf16.msra.mxu0 %v110
  %1949 = vmatprep.subr.bf16.mxu0 0
  %1950 = vmatpush2.bf16.msra.mxu0 0
  %1951 = vmatprep.subr.bf16.mxu0 0
  %1952 = vmatpush2.bf16.msra.mxu0 0
  %1953 = vmatprep.subr.bf16.mxu0 0
  %1954 = vmatpush2.bf16.msra.mxu0 0
  %1955 = vmatprep.subr.bf16.mxu0 0
  %1956 = vmatpush2.bf16.msra.mxu0 0
  %1957 = vmatprep.subr.bf16.mxu0 0
  %1958 = vmatpush2.bf16.msra.mxu0 0
  %1959 = vmatprep.subr.bf16.mxu0 0
  %1960 = vmatpush2.bf16.msra.mxu0 0
  %1961 = vmatprep.subr.bf16.mxu0 0
  %1962 = vmatpush2.bf16.msra.mxu0 %v119
  %1963 = vmatprep.subr.bf16.mxu0 0
  %1964 = vmatpush2.bf16.msra.mxu0 %v118
  %1965 = vmatprep.mubr.bf16.mxu0 %v1931
  %1966 = vmatmul.mubr.bf16.gmra.mxu0 %v1927
  %v1967 = vpop.f32.mrf.mxu0
  %v1968 = vadd.f32 0.0, %v1967
  %v1969 = vpop.f32.mrf.mxu0
  %v1970 = vpop.f32.mrf.mxu0
  %v1971 = vadd.f32 0.0, %v1970
  %v1972 = vpop.f32.mrf.mxu0
  %1973 = vdwg.mxu0
  %v1974 = vmax.f32 %v1912, %v1968
  %v1975 = vmax.f32 %v1915, %v1971
  %s1976 = scalar_lea.vmem %s0, 896
  %v1977 = vld [vmem:[%s1976] sm:$0xff]
  %v1978 = vld [vmem:[%s1976 + $0x8] sm:$0xff]
  %v1981 = vunpack.c.l.b16 %v1977
  %v1982 = vunpack.c.h.b16 %v1977
  %v1983 = vunpack.c.l.b16 %v1978
  %v1984 = vunpack.c.h.b16 %v1978
  %v1985 = vpack.c.b16 %v1983, %v1981
  %v1986 = vpack.c.b16 %v1984, %v1982
  %v1989 = vsel %vm130, %v1986, 0
  %1991 = vmatprep.subr.bf16.mxu0 0
  %1992 = vmatpush1.bf16.msra.mxu0 %v117
  %1993 = vmatprep.subr.bf16.mxu0 0
  %1994 = vmatpush1.bf16.msra.mxu0 %v116
  %1995 = vmatprep.subr.bf16.mxu0 0
  %1996 = vmatpush1.bf16.msra.mxu0 %v115
  %1997 = vmatprep.subr.bf16.mxu0 0
  %1998 = vmatpush1.bf16.msra.mxu0 %v114
  %1999 = vmatprep.subr.bf16.mxu0 0
  %2000 = vmatpush1.bf16.msra.mxu0 %v113
  %2001 = vmatprep.subr.bf16.mxu0 0
  %2002 = vmatpush1.bf16.msra.mxu0 %v112
  %2003 = vmatprep.subr.bf16.mxu0 0
  %2004 = vmatpush1.bf16.msra.mxu0 %v111
  %2005 = vmatprep.subr.bf16.mxu0 0
  %2006 = vmatpush1.bf16.msra.mxu0 %v110
  %2007 = vmatprep.subr.bf16.mxu0 0
  %2008 = vmatpush2.bf16.msra.mxu0 0
  %2009 = vmatprep.subr.bf16.mxu0 0
  %2010 = vmatpush2.bf16.msra.mxu0 0
  %2011 = vmatprep.subr.bf16.mxu0 0
  %2012 = vmatpush2.bf16.msra.mxu0 0
  %2013 = vmatprep.subr.bf16.mxu0 0
  %2014 = vmatpush2.bf16.msra.mxu0 0
  %2015 = vmatprep.subr.bf16.mxu0 0
  %2016 = vmatpush2.bf16.msra.mxu0 0
  %2017 = vmatprep.subr.bf16.mxu0 0
  %2018 = vmatpush2.bf16.msra.mxu0 0
  %2019 = vmatprep.subr.bf16.mxu0 0
  %2020 = vmatpush2.bf16.msra.mxu0 %v119
  %2021 = vmatprep.subr.bf16.mxu0 0
  %2022 = vmatpush2.bf16.msra.mxu0 %v118
  %2023 = vmatprep.mubr.bf16.mxu0 %v1989
  %2024 = vmatmul.mubr.bf16.gmra.mxu0 %v1985
  %v2025 = vpop.f32.mrf.mxu0
  %v2026 = vadd.f32 0.0, %v2025
  %v2027 = vpop.f32.mrf.mxu0
  %v2028 = vpop.f32.mrf.mxu0
  %v2029 = vadd.f32 0.0, %v2028
  %v2030 = vpop.f32.mrf.mxu0
  %2031 = vdwg.mxu0
  %v2032 = vmax.f32 %v1974, %v2026
  %v2033 = vmax.f32 %v1975, %v2029
  %s2034 = scalar_lea.vmem %s0, 1296
  %v2035 = vld [vmem:[%s2034] sm:$0xff]
  %v2036 = vld [vmem:[%s2034 + $0x8] sm:$0xff]
  %v2039 = vunpack.c.l.b16 %v2035
  %v2040 = vunpack.c.h.b16 %v2035
  %v2041 = vunpack.c.l.b16 %v2036
  %v2042 = vunpack.c.h.b16 %v2036
  %v2043 = vpack.c.b16 %v2041, %v2039
  %v2044 = vpack.c.b16 %v2042, %v2040
  %v2047 = vsel %vm130, %v2044, 0
  %2049 = vmatprep.subr.bf16.mxu0 0
  %2050 = vmatpush1.bf16.msra.mxu0 %v117
  %2051 = vmatprep.subr.bf16.mxu0 0
  %2052 = vmatpush1.bf16.msra.mxu0 %v116
  %2053 = vmatprep.subr.bf16.mxu0 0
  %2054 = vmatpush1.bf16.msra.mxu0 %v115
  %2055 = vmatprep.subr.bf16.mxu0 0
  %2056 = vmatpush1.bf16.msra.mxu0 %v114
  %2057 = vmatprep.subr.bf16.mxu0 0
  %2058 = vmatpush1.bf16.msra.mxu0 %v113
  %2059 = vmatprep.subr.bf16.mxu0 0
  %2060 = vmatpush1.bf16.msra.mxu0 %v112
  %2061 = vmatprep.subr.bf16.mxu0 0
  %2062 = vmatpush1.bf16.msra.mxu0 %v111
  %2063 = vmatprep.subr.bf16.mxu0 0
  %2064 = vmatpush1.bf16.msra.mxu0 %v110
  %2065 = vmatprep.subr.bf16.mxu0 0
  %2066 = vmatpush2.bf16.msra.mxu0 0
  %2067 = vmatprep.subr.bf16.mxu0 0
  %2068 = vmatpush2.bf16.msra.mxu0 0
  %2069 = vmatprep.subr.bf16.mxu0 0
  %2070 = vmatpush2.bf16.msra.mxu0 0
  %2071 = vmatprep.subr.bf16.mxu0 0
  %2072 = vmatpush2.bf16.msra.mxu0 0
  %2073 = vmatprep.subr.bf16.mxu0 0
  %2074 = vmatpush2.bf16.msra.mxu0 0
  %2075 = vmatprep.subr.bf16.mxu0 0
  %2076 = vmatpush2.bf16.msra.mxu0 0
  %2077 = vmatprep.subr.bf16.mxu0 0
  %2078 = vmatpush2.bf16.msra.mxu0 %v119
  %2079 = vmatprep.subr.bf16.mxu0 0
  %2080 = vmatpush2.bf16.msra.mxu0 %v118
  %2081 = vmatprep.mubr.bf16.mxu0 %v2047
  %2082 = vmatmul.mubr.bf16.gmra.mxu0 %v2043
  %v2083 = vpop.f32.mrf.mxu0
  %v2084 = vadd.f32 0.0, %v2083
  %v2085 = vpop.f32.mrf.mxu0
  %v2086 = vpop.f32.mrf.mxu0
  %v2087 = vadd.f32 0.0, %v2086
  %v2088 = vpop.f32.mrf.mxu0
  %2089 = vdwg.mxu0
  %v2090 = vmax.f32 %v2032, %v2084
  %v2091 = vmax.f32 %v2033, %v2087
  %v2092 = vadd.f32 %v2090, %v354
  %v2093 = vadd.f32 %v2091, %v354
  %v2094 = vmax.f32 %v2092, 0.0
  %v2095 = vmax.f32 %v2093, 0.0
  %v2096 = vpack.c.bf16 %v2095, %v2094
  %s2097 = scalar_lea.vmem %s3, 48
  %v2098 = vld [vmem:[%s2097] sm:$0xf]
  %v2099 = vld [vmem:[%s2097 + $0x4] sm:$0xf]
  %v2102 = vunpack.c.l.b16 %v2098
  %v2103 = vunpack.c.l.b16 %v2099
  %v2104 = vpack.c.b16 %v2103, %v2102
  %v2107 = vsel %vm607, %v2096, 0
  %2109 = vmatprep.subr.bf16.mxu0 0
  %2110 = vmatpush1.bf16.msra.mxu0 0
  %2111 = vmatprep.subr.bf16.mxu0 0
  %2112 = vmatpush1.bf16.msra.mxu0 0
  %2113 = vmatprep.subr.bf16.mxu0 0
  %2114 = vmatpush1.bf16.msra.mxu0 0
  %2115 = vmatprep.subr.bf16.mxu0 0
  %2116 = vmatpush1.bf16.msra.mxu0 0
  %2117 = vmatprep.subr.bf16.mxu0 0
  %2118 = vmatpush1.bf16.msra.mxu0 0
  %2119 = vmatprep.subr.bf16.mxu0 0
  %2120 = vmatpush1.bf16.msra.mxu0 0
  %2121 = vmatprep.subr.bf16.mxu0 0
  %2122 = vmatpush1.bf16.msra.mxu0 0
  %2123 = vmatprep.subr.bf16.mxu0 0
  %2124 = vmatpush1.bf16.msra.mxu0 %v2104
  %2125 = vmatprep.subr.bf16.mxu0 0
  %2126 = vmatpush2.bf16.msra.mxu0 0
  %2127 = vmatprep.subr.bf16.mxu0 0
  %2128 = vmatpush2.bf16.msra.mxu0 0
  %2129 = vmatprep.subr.bf16.mxu0 0
  %2130 = vmatpush2.bf16.msra.mxu0 0
  %2131 = vmatprep.subr.bf16.mxu0 0
  %2132 = vmatpush2.bf16.msra.mxu0 0
  %2133 = vmatprep.subr.bf16.mxu0 0
  %2134 = vmatpush2.bf16.msra.mxu0 0
  %2135 = vmatprep.subr.bf16.mxu0 0
  %2136 = vmatpush2.bf16.msra.mxu0 0
  %2137 = vmatprep.subr.bf16.mxu0 0
  %2138 = vmatpush2.bf16.msra.mxu0 0
  %2139 = vmatprep.subr.bf16.mxu0 0
  %2140 = vmatpush2.bf16.msra.mxu0 0
  %2141 = vmatprep.mubr.bf16.mxu0 0
  %2142 = vmatmul.mubr.bf16.gmra.mxu0 %v2107
  %v2143 = vpop.f32.mrf.mxu0
  %v2144 = vadd.f32 0.0, %v2143
  %v2145 = vpop.f32.mrf.mxu0
  %v2146 = vpop.f32.mrf.mxu0
  %v2147 = vadd.f32 0.0, %v2146
  %v2148 = vpop.f32.mrf.mxu0
  %2149 = vdwg.mxu0
  %v2150 = vadd.f32 %v1860, %v2144
  %v2151 = vadd.f32 %v1861, %v2147
  %s2152 = scalar_lea.vmem %s0, 112
  %v2153 = vld [vmem:[%s2152] sm:$0xff]
  %v2154 = vld [vmem:[%s2152 + $0x8] sm:$0xff]
  %v2157 = vunpack.c.l.b16 %v2153
  %v2158 = vunpack.c.h.b16 %v2153
  %v2159 = vunpack.c.l.b16 %v2154
  %v2160 = vunpack.c.h.b16 %v2154
  %v2161 = vpack.c.b16 %v2159, %v2157
  %v2162 = vpack.c.b16 %v2160, %v2158
  %v2165 = vsel %vm130, %v2162, 0
  %2167 = vmatprep.subr.bf16.mxu0 0
  %2168 = vmatpush1.bf16.msra.mxu0 %v117
  %2169 = vmatprep.subr.bf16.mxu0 0
  %2170 = vmatpush1.bf16.msra.mxu0 %v116
  %2171 = vmatprep.subr.bf16.mxu0 0
  %2172 = vmatpush1.bf16.msra.mxu0 %v115
  %2173 = vmatprep.subr.bf16.mxu0 0
  %2174 = vmatpush1.bf16.msra.mxu0 %v114
  %2175 = vmatprep.subr.bf16.mxu0 0
  %2176 = vmatpush1.bf16.msra.mxu0 %v113
  %2177 = vmatprep.subr.bf16.mxu0 0
  %2178 = vmatpush1.bf16.msra.mxu0 %v112
  %2179 = vmatprep.subr.bf16.mxu0 0
  %2180 = vmatpush1.bf16.msra.mxu0 %v111
  %2181 = vmatprep.subr.bf16.mxu0 0
  %2182 = vmatpush1.bf16.msra.mxu0 %v110
  %2183 = vmatprep.subr.bf16.mxu0 0
  %2184 = vmatpush2.bf16.msra.mxu0 0
  %2185 = vmatprep.subr.bf16.mxu0 0
  %2186 = vmatpush2.bf16.msra.mxu0 0
  %2187 = vmatprep.subr.bf16.mxu0 0
  %2188 = vmatpush2.bf16.msra.mxu0 0
  %2189 = vmatprep.subr.bf16.mxu0 0
  %2190 = vmatpush2.bf16.msra.mxu0 0
  %2191 = vmatprep.subr.bf16.mxu0 0
  %2192 = vmatpush2.bf16.msra.mxu0 0
  %2193 = vmatprep.subr.bf16.mxu0 0
  %2194 = vmatpush2.bf16.msra.mxu0 0
  %2195 = vmatprep.subr.bf16.mxu0 0
  %2196 = vmatpush2.bf16.msra.mxu0 %v119
  %2197 = vmatprep.subr.bf16.mxu0 0
  %2198 = vmatpush2.bf16.msra.mxu0 %v118
  %2199 = vmatprep.mubr.bf16.mxu0 %v2165
  %2200 = vmatmul.mubr.bf16.gmra.mxu0 %v2161
  %v2201 = vpop.f32.mrf.mxu0
  %v2202 = vadd.f32 0.0, %v2201
  %v2203 = vpop.f32.mrf.mxu0
  %v2204 = vpop.f32.mrf.mxu0
  %v2205 = vadd.f32 0.0, %v2204
  %v2206 = vpop.f32.mrf.mxu0
  %2207 = vdwg.mxu0
  %s2208 = scalar_lea.vmem %s0, 512
  %v2209 = vld [vmem:[%s2208] sm:$0xff]
  %v2210 = vld [vmem:[%s2208 + $0x8] sm:$0xff]
  %v2213 = vunpack.c.l.b16 %v2209
  %v2214 = vunpack.c.h.b16 %v2209
  %v2215 = vunpack.c.l.b16 %v2210
  %v2216 = vunpack.c.h.b16 %v2210
  %v2217 = vpack.c.b16 %v2215, %v2213
  %v2218 = vpack.c.b16 %v2216, %v2214
  %v2221 = vsel %vm130, %v2218, 0
  %2223 = vmatprep.subr.bf16.mxu0 0
  %2224 = vmatpush1.bf16.msra.mxu0 %v117
  %2225 = vmatprep.subr.bf16.mxu0 0
  %2226 = vmatpush1.bf16.msra.mxu0 %v116
  %2227 = vmatprep.subr.bf16.mxu0 0
  %2228 = vmatpush1.bf16.msra.mxu0 %v115
  %2229 = vmatprep.subr.bf16.mxu0 0
  %2230 = vmatpush1.bf16.msra.mxu0 %v114
  %2231 = vmatprep.subr.bf16.mxu0 0
  %2232 = vmatpush1.bf16.msra.mxu0 %v113
  %2233 = vmatprep.subr.bf16.mxu0 0
  %2234 = vmatpush1.bf16.msra.mxu0 %v112
  %2235 = vmatprep.subr.bf16.mxu0 0
  %2236 = vmatpush1.bf16.msra.mxu0 %v111
  %2237 = vmatprep.subr.bf16.mxu0 0
  %2238 = vmatpush1.bf16.msra.mxu0 %v110
  %2239 = vmatprep.subr.bf16.mxu0 0
  %2240 = vmatpush2.bf16.msra.mxu0 0
  %2241 = vmatprep.subr.bf16.mxu0 0
  %2242 = vmatpush2.bf16.msra.mxu0 0
  %2243 = vmatprep.subr.bf16.mxu0 0
  %2244 = vmatpush2.bf16.msra.mxu0 0
  %2245 = vmatprep.subr.bf16.mxu0 0
  %2246 = vmatpush2.bf16.msra.mxu0 0
  %2247 = vmatprep.subr.bf16.mxu0 0
  %2248 = vmatpush2.bf16.msra.mxu0 0
  %2249 = vmatprep.subr.bf16.mxu0 0
  %2250 = vmatpush2.bf16.msra.mxu0 0
  %2251 = vmatprep.subr.bf16.mxu0 0
  %2252 = vmatpush2.bf16.msra.mxu0 %v119
  %2253 = vmatprep.subr.bf16.mxu0 0
  %2254 = vmatpush2.bf16.msra.mxu0 %v118
  %2255 = vmatprep.mubr.bf16.mxu0 %v2221
  %2256 = vmatmul.mubr.bf16.gmra.mxu0 %v2217
  %v2257 = vpop.f32.mrf.mxu0
  %v2258 = vadd.f32 0.0, %v2257
  %v2259 = vpop.f32.mrf.mxu0
  %v2260 = vpop.f32.mrf.mxu0
  %v2261 = vadd.f32 0.0, %v2260
  %v2262 = vpop.f32.mrf.mxu0
  %2263 = vdwg.mxu0
  %v2264 = vmax.f32 %v2202, %v2258
  %v2265 = vmax.f32 %v2205, %v2261
  %s2266 = scalar_lea.vmem %s0, 912
  %v2267 = vld [vmem:[%s2266] sm:$0xff]
  %v2268 = vld [vmem:[%s2266 + $0x8] sm:$0xff]
  %v2271 = vunpack.c.l.b16 %v2267
  %v2272 = vunpack.c.h.b16 %v2267
  %v2273 = vunpack.c.l.b16 %v2268
  %v2274 = vunpack.c.h.b16 %v2268
  %v2275 = vpack.c.b16 %v2273, %v2271
  %v2276 = vpack.c.b16 %v2274, %v2272
  %v2279 = vsel %vm130, %v2276, 0
  %2281 = vmatprep.subr.bf16.mxu0 0
  %2282 = vmatpush1.bf16.msra.mxu0 %v117
  %2283 = vmatprep.subr.bf16.mxu0 0
  %2284 = vmatpush1.bf16.msra.mxu0 %v116
  %2285 = vmatprep.subr.bf16.mxu0 0
  %2286 = vmatpush1.bf16.msra.mxu0 %v115
  %2287 = vmatprep.subr.bf16.mxu0 0
  %2288 = vmatpush1.bf16.msra.mxu0 %v114
  %2289 = vmatprep.subr.bf16.mxu0 0
  %2290 = vmatpush1.bf16.msra.mxu0 %v113
  %2291 = vmatprep.subr.bf16.mxu0 0
  %2292 = vmatpush1.bf16.msra.mxu0 %v112
  %2293 = vmatprep.subr.bf16.mxu0 0
  %2294 = vmatpush1.bf16.msra.mxu0 %v111
  %2295 = vmatprep.subr.bf16.mxu0 0
  %2296 = vmatpush1.bf16.msra.mxu0 %v110
  %2297 = vmatprep.subr.bf16.mxu0 0
  %2298 = vmatpush2.bf16.msra.mxu0 0
  %2299 = vmatprep.subr.bf16.mxu0 0
  %2300 = vmatpush2.bf16.msra.mxu0 0
  %2301 = vmatprep.subr.bf16.mxu0 0
  %2302 = vmatpush2.bf16.msra.mxu0 0
  %2303 = vmatprep.subr.bf16.mxu0 0
  %2304 = vmatpush2.bf16.msra.mxu0 0
  %2305 = vmatprep.subr.bf16.mxu0 0
  %2306 = vmatpush2.bf16.msra.mxu0 0
  %2307 = vmatprep.subr.bf16.mxu0 0
  %2308 = vmatpush2.bf16.msra.mxu0 0
  %2309 = vmatprep.subr.bf16.mxu0 0
  %2310 = vmatpush2.bf16.msra.mxu0 %v119
  %2311 = vmatprep.subr.bf16.mxu0 0
  %2312 = vmatpush2.bf16.msra.mxu0 %v118
  %2313 = vmatprep.mubr.bf16.mxu0 %v2279
  %2314 = vmatmul.mubr.bf16.gmra.mxu0 %v2275
  %v2315 = vpop.f32.mrf.mxu0
  %v2316 = vadd.f32 0.0, %v2315
  %v2317 = vpop.f32.mrf.mxu0
  %v2318 = vpop.f32.mrf.mxu0
  %v2319 = vadd.f32 0.0, %v2318
  %v2320 = vpop.f32.mrf.mxu0
  %2321 = vdwg.mxu0
  %v2322 = vmax.f32 %v2264, %v2316
  %v2323 = vmax.f32 %v2265, %v2319
  %s2324 = scalar_lea.vmem %s0, 1312
  %v2325 = vld [vmem:[%s2324] sm:$0xff]
  %v2326 = vld [vmem:[%s2324 + $0x8] sm:$0xff]
  %v2329 = vunpack.c.l.b16 %v2325
  %v2330 = vunpack.c.h.b16 %v2325
  %v2331 = vunpack.c.l.b16 %v2326
  %v2332 = vunpack.c.h.b16 %v2326
  %v2333 = vpack.c.b16 %v2331, %v2329
  %v2334 = vpack.c.b16 %v2332, %v2330
  %v2337 = vsel %vm130, %v2334, 0
  %2339 = vmatprep.subr.bf16.mxu0 0
  %2340 = vmatpush1.bf16.msra.mxu0 %v117
  %2341 = vmatprep.subr.bf16.mxu0 0
  %2342 = vmatpush1.bf16.msra.mxu0 %v116
  %2343 = vmatprep.subr.bf16.mxu0 0
  %2344 = vmatpush1.bf16.msra.mxu0 %v115
  %2345 = vmatprep.subr.bf16.mxu0 0
  %2346 = vmatpush1.bf16.msra.mxu0 %v114
  %2347 = vmatprep.subr.bf16.mxu0 0
  %2348 = vmatpush1.bf16.msra.mxu0 %v113
  %2349 = vmatprep.subr.bf16.mxu0 0
  %2350 = vmatpush1.bf16.msra.mxu0 %v112
  %2351 = vmatprep.subr.bf16.mxu0 0
  %2352 = vmatpush1.bf16.msra.mxu0 %v111
  %2353 = vmatprep.subr.bf16.mxu0 0
  %2354 = vmatpush1.bf16.msra.mxu0 %v110
  %2355 = vmatprep.subr.bf16.mxu0 0
  %2356 = vmatpush2.bf16.msra.mxu0 0
  %2357 = vmatprep.subr.bf16.mxu0 0
  %2358 = vmatpush2.bf16.msra.mxu0 0
  %2359 = vmatprep.subr.bf16.mxu0 0
  %2360 = vmatpush2.bf16.msra.mxu0 0
  %2361 = vmatprep.subr.bf16.mxu0 0
  %2362 = vmatpush2.bf16.msra.mxu0 0
  %2363 = vmatprep.subr.bf16.mxu0 0
  %2364 = vmatpush2.bf16.msra.mxu0 0
  %2365 = vmatprep.subr.bf16.mxu0 0
  %2366 = vmatpush2.bf16.msra.mxu0 0
  %2367 = vmatprep.subr.bf16.mxu0 0
  %2368 = vmatpush2.bf16.msra.mxu0 %v119
  %2369 = vmatprep.subr.bf16.mxu0 0
  %2370 = vmatpush2.bf16.msra.mxu0 %v118
  %2371 = vmatprep.mubr.bf16.mxu0 %v2337
  %2372 = vmatmul.mubr.bf16.gmra.mxu0 %v2333
  %v2373 = vpop.f32.mrf.mxu0
  %v2374 = vadd.f32 0.0, %v2373
  %v2375 = vpop.f32.mrf.mxu0
  %v2376 = vpop.f32.mrf.mxu0
  %v2377 = vadd.f32 0.0, %v2376
  %v2378 = vpop.f32.mrf.mxu0
  %2379 = vdwg.mxu0
  %v2380 = vmax.f32 %v2322, %v2374
  %v2381 = vmax.f32 %v2323, %v2377
  %v2382 = vadd.f32 %v2380, %v354
  %v2383 = vadd.f32 %v2381, %v354
  %v2384 = vmax.f32 %v2382, 0.0
  %v2385 = vmax.f32 %v2383, 0.0
  %v2386 = vpack.c.bf16 %v2385, %v2384
  %s2387 = scalar_lea.vmem %s3, 56
  %v2388 = vld [vmem:[%s2387] sm:$0xf]
  %v2389 = vld [vmem:[%s2387 + $0x4] sm:$0xf]
  %v2392 = vunpack.c.l.b16 %v2388
  %v2393 = vunpack.c.l.b16 %v2389
  %v2394 = vpack.c.b16 %v2393, %v2392
  %v2397 = vsel %vm607, %v2386, 0
  %2399 = vmatprep.subr.bf16.mxu0 0
  %2400 = vmatpush1.bf16.msra.mxu0 0
  %2401 = vmatprep.subr.bf16.mxu0 0
  %2402 = vmatpush1.bf16.msra.mxu0 0
  %2403 = vmatprep.subr.bf16.mxu0 0
  %2404 = vmatpush1.bf16.msra.mxu0 0
  %2405 = vmatprep.subr.bf16.mxu0 0
  %2406 = vmatpush1.bf16.msra.mxu0 0
  %2407 = vmatprep.subr.bf16.mxu0 0
  %2408 = vmatpush1.bf16.msra.mxu0 0
  %2409 = vmatprep.subr.bf16.mxu0 0
  %2410 = vmatpush1.bf16.msra.mxu0 0
  %2411 = vmatprep.subr.bf16.mxu0 0
  %2412 = vmatpush1.bf16.msra.mxu0 0
  %2413 = vmatprep.subr.bf16.mxu0 0
  %2414 = vmatpush1.bf16.msra.mxu0 %v2394
  %2415 = vmatprep.subr.bf16.mxu0 0
  %2416 = vmatpush2.bf16.msra.mxu0 0
  %2417 = vmatprep.subr.bf16.mxu0 0
  %2418 = vmatpush2.bf16.msra.mxu0 0
  %2419 = vmatprep.subr.bf16.mxu0 0
  %2420 = vmatpush2.bf16.msra.mxu0 0
  %2421 = vmatprep.subr.bf16.mxu0 0
  %2422 = vmatpush2.bf16.msra.mxu0 0
  %2423 = vmatprep.subr.bf16.mxu0 0
  %2424 = vmatpush2.bf16.msra.mxu0 0
  %2425 = vmatprep.subr.bf16.mxu0 0
  %2426 = vmatpush2.bf16.msra.mxu0 0
  %2427 = vmatprep.subr.bf16.mxu0 0
  %2428 = vmatpush2.bf16.msra.mxu0 0
  %2429 = vmatprep.subr.bf16.mxu0 0
  %2430 = vmatpush2.bf16.msra.mxu0 0
  %2431 = vmatprep.mubr.bf16.mxu0 0
  %2432 = vmatmul.mubr.bf16.gmra.mxu0 %v2397
  %v2433 = vpop.f32.mrf.mxu0
  %v2434 = vadd.f32 0.0, %v2433
  %v2435 = vpop.f32.mrf.mxu0
  %v2436 = vpop.f32.mrf.mxu0
  %v2437 = vadd.f32 0.0, %v2436
  %v2438 = vpop.f32.mrf.mxu0
  %2439 = vdwg.mxu0
  %v2440 = vadd.f32 %v2150, %v2434
  %v2441 = vadd.f32 %v2151, %v2437
  %s2442 = scalar_lea.vmem %s0, 128
  %v2443 = vld [vmem:[%s2442] sm:$0xff]
  %v2444 = vld [vmem:[%s2442 + $0x8] sm:$0xff]
  %v2447 = vunpack.c.l.b16 %v2443
  %v2448 = vunpack.c.h.b16 %v2443
  %v2449 = vunpack.c.l.b16 %v2444
  %v2450 = vunpack.c.h.b16 %v2444
  %v2451 = vpack.c.b16 %v2449, %v2447
  %v2452 = vpack.c.b16 %v2450, %v2448
  %v2455 = vsel %vm130, %v2452, 0
  %2457 = vmatprep.subr.bf16.mxu0 0
  %2458 = vmatpush1.bf16.msra.mxu0 %v117
  %2459 = vmatprep.subr.bf16.mxu0 0
  %2460 = vmatpush1.bf16.msra.mxu0 %v116
  %2461 = vmatprep.subr.bf16.mxu0 0
  %2462 = vmatpush1.bf16.msra.mxu0 %v115
  %2463 = vmatprep.subr.bf16.mxu0 0
  %2464 = vmatpush1.bf16.msra.mxu0 %v114
  %2465 = vmatprep.subr.bf16.mxu0 0
  %2466 = vmatpush1.bf16.msra.mxu0 %v113
  %2467 = vmatprep.subr.bf16.mxu0 0
  %2468 = vmatpush1.bf16.msra.mxu0 %v112
  %2469 = vmatprep.subr.bf16.mxu0 0
  %2470 = vmatpush1.bf16.msra.mxu0 %v111
  %2471 = vmatprep.subr.bf16.mxu0 0
  %2472 = vmatpush1.bf16.msra.mxu0 %v110
  %2473 = vmatprep.subr.bf16.mxu0 0
  %2474 = vmatpush2.bf16.msra.mxu0 0
  %2475 = vmatprep.subr.bf16.mxu0 0
  %2476 = vmatpush2.bf16.msra.mxu0 0
  %2477 = vmatprep.subr.bf16.mxu0 0
  %2478 = vmatpush2.bf16.msra.mxu0 0
  %2479 = vmatprep.subr.bf16.mxu0 0
  %2480 = vmatpush2.bf16.msra.mxu0 0
  %2481 = vmatprep.subr.bf16.mxu0 0
  %2482 = vmatpush2.bf16.msra.mxu0 0
  %2483 = vmatprep.subr.bf16.mxu0 0
  %2484 = vmatpush2.bf16.msra.mxu0 0
  %2485 = vmatprep.subr.bf16.mxu0 0
  %2486 = vmatpush2.bf16.msra.mxu0 %v119
  %2487 = vmatprep.subr.bf16.mxu0 0
  %2488 = vmatpush2.bf16.msra.mxu0 %v118
  %2489 = vmatprep.mubr.bf16.mxu0 %v2455
  %2490 = vmatmul.mubr.bf16.gmra.mxu0 %v2451
  %v2491 = vpop.f32.mrf.mxu0
  %v2492 = vadd.f32 0.0, %v2491
  %v2493 = vpop.f32.mrf.mxu0
  %v2494 = vpop.f32.mrf.mxu0
  %v2495 = vadd.f32 0.0, %v2494
  %v2496 = vpop.f32.mrf.mxu0
  %2497 = vdwg.mxu0
  %s2498 = scalar_lea.vmem %s0, 528
  %v2499 = vld [vmem:[%s2498] sm:$0xff]
  %v2500 = vld [vmem:[%s2498 + $0x8] sm:$0xff]
  %v2503 = vunpack.c.l.b16 %v2499
  %v2504 = vunpack.c.h.b16 %v2499
  %v2505 = vunpack.c.l.b16 %v2500
  %v2506 = vunpack.c.h.b16 %v2500
  %v2507 = vpack.c.b16 %v2505, %v2503
  %v2508 = vpack.c.b16 %v2506, %v2504
  %v2511 = vsel %vm130, %v2508, 0
  %2513 = vmatprep.subr.bf16.mxu0 0
  %2514 = vmatpush1.bf16.msra.mxu0 %v117
  %2515 = vmatprep.subr.bf16.mxu0 0
  %2516 = vmatpush1.bf16.msra.mxu0 %v116
  %2517 = vmatprep.subr.bf16.mxu0 0
  %2518 = vmatpush1.bf16.msra.mxu0 %v115
  %2519 = vmatprep.subr.bf16.mxu0 0
  %2520 = vmatpush1.bf16.msra.mxu0 %v114
  %2521 = vmatprep.subr.bf16.mxu0 0
  %2522 = vmatpush1.bf16.msra.mxu0 %v113
  %2523 = vmatprep.subr.bf16.mxu0 0
  %2524 = vmatpush1.bf16.msra.mxu0 %v112
  %2525 = vmatprep.subr.bf16.mxu0 0
  %2526 = vmatpush1.bf16.msra.mxu0 %v111
  %2527 = vmatprep.subr.bf16.mxu0 0
  %2528 = vmatpush1.bf16.msra.mxu0 %v110
  %2529 = vmatprep.subr.bf16.mxu0 0
  %2530 = vmatpush2.bf16.msra.mxu0 0
  %2531 = vmatprep.subr.bf16.mxu0 0
  %2532 = vmatpush2.bf16.msra.mxu0 0
  %2533 = vmatprep.subr.bf16.mxu0 0
  %2534 = vmatpush2.bf16.msra.mxu0 0
  %2535 = vmatprep.subr.bf16.mxu0 0
  %2536 = vmatpush2.bf16.msra.mxu0 0
  %2537 = vmatprep.subr.bf16.mxu0 0
  %2538 = vmatpush2.bf16.msra.mxu0 0
  %2539 = vmatprep.subr.bf16.mxu0 0
  %2540 = vmatpush2.bf16.msra.mxu0 0
  %2541 = vmatprep.subr.bf16.mxu0 0
  %2542 = vmatpush2.bf16.msra.mxu0 %v119
  %2543 = vmatprep.subr.bf16.mxu0 0
  %2544 = vmatpush2.bf16.msra.mxu0 %v118
  %2545 = vmatprep.mubr.bf16.mxu0 %v2511
  %2546 = vmatmul.mubr.bf16.gmra.mxu0 %v2507
  %v2547 = vpop.f32.mrf.mxu0
  %v2548 = vadd.f32 0.0, %v2547
  %v2549 = vpop.f32.mrf.mxu0
  %v2550 = vpop.f32.mrf.mxu0
  %v2551 = vadd.f32 0.0, %v2550
  %v2552 = vpop.f32.mrf.mxu0
  %2553 = vdwg.mxu0
  %v2554 = vmax.f32 %v2492, %v2548
  %v2555 = vmax.f32 %v2495, %v2551
  %s2556 = scalar_lea.vmem %s0, 928
  %v2557 = vld [vmem:[%s2556] sm:$0xff]
  %v2558 = vld [vmem:[%s2556 + $0x8] sm:$0xff]
  %v2561 = vunpack.c.l.b16 %v2557
  %v2562 = vunpack.c.h.b16 %v2557
  %v2563 = vunpack.c.l.b16 %v2558
  %v2564 = vunpack.c.h.b16 %v2558
  %v2565 = vpack.c.b16 %v2563, %v2561
  %v2566 = vpack.c.b16 %v2564, %v2562
  %v2569 = vsel %vm130, %v2566, 0
  %2571 = vmatprep.subr.bf16.mxu0 0
  %2572 = vmatpush1.bf16.msra.mxu0 %v117
  %2573 = vmatprep.subr.bf16.mxu0 0
  %2574 = vmatpush1.bf16.msra.mxu0 %v116
  %2575 = vmatprep.subr.bf16.mxu0 0
  %2576 = vmatpush1.bf16.msra.mxu0 %v115
  %2577 = vmatprep.subr.bf16.mxu0 0
  %2578 = vmatpush1.bf16.msra.mxu0 %v114
  %2579 = vmatprep.subr.bf16.mxu0 0
  %2580 = vmatpush1.bf16.msra.mxu0 %v113
  %2581 = vmatprep.subr.bf16.mxu0 0
  %2582 = vmatpush1.bf16.msra.mxu0 %v112
  %2583 = vmatprep.subr.bf16.mxu0 0
  %2584 = vmatpush1.bf16.msra.mxu0 %v111
  %2585 = vmatprep.subr.bf16.mxu0 0
  %2586 = vmatpush1.bf16.msra.mxu0 %v110
  %2587 = vmatprep.subr.bf16.mxu0 0
  %2588 = vmatpush2.bf16.msra.mxu0 0
  %2589 = vmatprep.subr.bf16.mxu0 0
  %2590 = vmatpush2.bf16.msra.mxu0 0
  %2591 = vmatprep.subr.bf16.mxu0 0
  %2592 = vmatpush2.bf16.msra.mxu0 0
  %2593 = vmatprep.subr.bf16.mxu0 0
  %2594 = vmatpush2.bf16.msra.mxu0 0
  %2595 = vmatprep.subr.bf16.mxu0 0
  %2596 = vmatpush2.bf16.msra.mxu0 0
  %2597 = vmatprep.subr.bf16.mxu0 0
  %2598 = vmatpush2.bf16.msra.mxu0 0
  %2599 = vmatprep.subr.bf16.mxu0 0
  %2600 = vmatpush2.bf16.msra.mxu0 %v119
  %2601 = vmatprep.subr.bf16.mxu0 0
  %2602 = vmatpush2.bf16.msra.mxu0 %v118
  %2603 = vmatprep.mubr.bf16.mxu0 %v2569
  %2604 = vmatmul.mubr.bf16.gmra.mxu0 %v2565
  %v2605 = vpop.f32.mrf.mxu0
  %v2606 = vadd.f32 0.0, %v2605
  %v2607 = vpop.f32.mrf.mxu0
  %v2608 = vpop.f32.mrf.mxu0
  %v2609 = vadd.f32 0.0, %v2608
  %v2610 = vpop.f32.mrf.mxu0
  %2611 = vdwg.mxu0
  %v2612 = vmax.f32 %v2554, %v2606
  %v2613 = vmax.f32 %v2555, %v2609
  %s2614 = scalar_lea.vmem %s0, 1328
  %v2615 = vld [vmem:[%s2614] sm:$0xff]
  %v2616 = vld [vmem:[%s2614 + $0x8] sm:$0xff]
  %v2619 = vunpack.c.l.b16 %v2615
  %v2620 = vunpack.c.h.b16 %v2615
  %v2621 = vunpack.c.l.b16 %v2616
  %v2622 = vunpack.c.h.b16 %v2616
  %v2623 = vpack.c.b16 %v2621, %v2619
  %v2624 = vpack.c.b16 %v2622, %v2620
  %v2627 = vsel %vm130, %v2624, 0
  %2629 = vmatprep.subr.bf16.mxu0 0
  %2630 = vmatpush1.bf16.msra.mxu0 %v117
  %2631 = vmatprep.subr.bf16.mxu0 0
  %2632 = vmatpush1.bf16.msra.mxu0 %v116
  %2633 = vmatprep.subr.bf16.mxu0 0
  %2634 = vmatpush1.bf16.msra.mxu0 %v115
  %2635 = vmatprep.subr.bf16.mxu0 0
  %2636 = vmatpush1.bf16.msra.mxu0 %v114
  %2637 = vmatprep.subr.bf16.mxu0 0
  %2638 = vmatpush1.bf16.msra.mxu0 %v113
  %2639 = vmatprep.subr.bf16.mxu0 0
  %2640 = vmatpush1.bf16.msra.mxu0 %v112
  %2641 = vmatprep.subr.bf16.mxu0 0
  %2642 = vmatpush1.bf16.msra.mxu0 %v111
  %2643 = vmatprep.subr.bf16.mxu0 0
  %2644 = vmatpush1.bf16.msra.mxu0 %v110
  %2645 = vmatprep.subr.bf16.mxu0 0
  %2646 = vmatpush2.bf16.msra.mxu0 0
  %2647 = vmatprep.subr.bf16.mxu0 0
  %2648 = vmatpush2.bf16.msra.mxu0 0
  %2649 = vmatprep.subr.bf16.mxu0 0
  %2650 = vmatpush2.bf16.msra.mxu0 0
  %2651 = vmatprep.subr.bf16.mxu0 0
  %2652 = vmatpush2.bf16.msra.mxu0 0
  %2653 = vmatprep.subr.bf16.mxu0 0
  %2654 = vmatpush2.bf16.msra.mxu0 0
  %2655 = vmatprep.subr.bf16.mxu0 0
  %2656 = vmatpush2.bf16.msra.mxu0 0
  %2657 = vmatprep.subr.bf16.mxu0 0
  %2658 = vmatpush2.bf16.msra.mxu0 %v119
  %2659 = vmatprep.subr.bf16.mxu0 0
  %2660 = vmatpush2.bf16.msra.mxu0 %v118
  %2661 = vmatprep.mubr.bf16.mxu0 %v2627
  %2662 = vmatmul.mubr.bf16.gmra.mxu0 %v2623
  %v2663 = vpop.f32.mrf.mxu0
  %v2664 = vadd.f32 0.0, %v2663
  %v2665 = vpop.f32.mrf.mxu0
  %v2666 = vpop.f32.mrf.mxu0
  %v2667 = vadd.f32 0.0, %v2666
  %v2668 = vpop.f32.mrf.mxu0
  %2669 = vdwg.mxu0
  %v2670 = vmax.f32 %v2612, %v2664
  %v2671 = vmax.f32 %v2613, %v2667
  %v2672 = vadd.f32 %v2670, %v354
  %v2673 = vadd.f32 %v2671, %v354
  %v2674 = vmax.f32 %v2672, 0.0
  %v2675 = vmax.f32 %v2673, 0.0
  %v2676 = vpack.c.bf16 %v2675, %v2674
  %s2677 = scalar_lea.vmem %s3, 64
  %v2678 = vld [vmem:[%s2677] sm:$0xf]
  %v2679 = vld [vmem:[%s2677 + $0x4] sm:$0xf]
  %v2682 = vunpack.c.l.b16 %v2678
  %v2683 = vunpack.c.l.b16 %v2679
  %v2684 = vpack.c.b16 %v2683, %v2682
  %v2687 = vsel %vm607, %v2676, 0
  %2689 = vmatprep.subr.bf16.mxu0 0
  %2690 = vmatpush1.bf16.msra.mxu0 0
  %2691 = vmatprep.subr.bf16.mxu0 0
  %2692 = vmatpush1.bf16.msra.mxu0 0
  %2693 = vmatprep.subr.bf16.mxu0 0
  %2694 = vmatpush1.bf16.msra.mxu0 0
  %2695 = vmatprep.subr.bf16.mxu0 0
  %2696 = vmatpush1.bf16.msra.mxu0 0
  %2697 = vmatprep.subr.bf16.mxu0 0
  %2698 = vmatpush1.bf16.msra.mxu0 0
  %2699 = vmatprep.subr.bf16.mxu0 0
  %2700 = vmatpush1.bf16.msra.mxu0 0
  %2701 = vmatprep.subr.bf16.mxu0 0
  %2702 = vmatpush1.bf16.msra.mxu0 0
  %2703 = vmatprep.subr.bf16.mxu0 0
  %2704 = vmatpush1.bf16.msra.mxu0 %v2684
  %2705 = vmatprep.subr.bf16.mxu0 0
  %2706 = vmatpush2.bf16.msra.mxu0 0
  %2707 = vmatprep.subr.bf16.mxu0 0
  %2708 = vmatpush2.bf16.msra.mxu0 0
  %2709 = vmatprep.subr.bf16.mxu0 0
  %2710 = vmatpush2.bf16.msra.mxu0 0
  %2711 = vmatprep.subr.bf16.mxu0 0
  %2712 = vmatpush2.bf16.msra.mxu0 0
  %2713 = vmatprep.subr.bf16.mxu0 0
  %2714 = vmatpush2.bf16.msra.mxu0 0
  %2715 = vmatprep.subr.bf16.mxu0 0
  %2716 = vmatpush2.bf16.msra.mxu0 0
  %2717 = vmatprep.subr.bf16.mxu0 0
  %2718 = vmatpush2.bf16.msra.mxu0 0
  %2719 = vmatprep.subr.bf16.mxu0 0
  %2720 = vmatpush2.bf16.msra.mxu0 0
  %2721 = vmatprep.mubr.bf16.mxu0 0
  %2722 = vmatmul.mubr.bf16.gmra.mxu0 %v2687
  %v2723 = vpop.f32.mrf.mxu0
  %v2724 = vadd.f32 0.0, %v2723
  %v2725 = vpop.f32.mrf.mxu0
  %v2726 = vpop.f32.mrf.mxu0
  %v2727 = vadd.f32 0.0, %v2726
  %v2728 = vpop.f32.mrf.mxu0
  %2729 = vdwg.mxu0
  %v2730 = vadd.f32 %v2440, %v2724
  %v2731 = vadd.f32 %v2441, %v2727
  %s2732 = scalar_lea.vmem %s0, 144
  %v2733 = vld [vmem:[%s2732] sm:$0xff]
  %v2734 = vld [vmem:[%s2732 + $0x8] sm:$0xff]
  %v2737 = vunpack.c.l.b16 %v2733
  %v2738 = vunpack.c.h.b16 %v2733
  %v2739 = vunpack.c.l.b16 %v2734
  %v2740 = vunpack.c.h.b16 %v2734
  %v2741 = vpack.c.b16 %v2739, %v2737
  %v2742 = vpack.c.b16 %v2740, %v2738
  %v2745 = vsel %vm130, %v2742, 0
  %2747 = vmatprep.subr.bf16.mxu0 0
  %2748 = vmatpush1.bf16.msra.mxu0 %v117
  %2749 = vmatprep.subr.bf16.mxu0 0
  %2750 = vmatpush1.bf16.msra.mxu0 %v116
  %2751 = vmatprep.subr.bf16.mxu0 0
  %2752 = vmatpush1.bf16.msra.mxu0 %v115
  %2753 = vmatprep.subr.bf16.mxu0 0
  %2754 = vmatpush1.bf16.msra.mxu0 %v114
  %2755 = vmatprep.subr.bf16.mxu0 0
  %2756 = vmatpush1.bf16.msra.mxu0 %v113
  %2757 = vmatprep.subr.bf16.mxu0 0
  %2758 = vmatpush1.bf16.msra.mxu0 %v112
  %2759 = vmatprep.subr.bf16.mxu0 0
  %2760 = vmatpush1.bf16.msra.mxu0 %v111
  %2761 = vmatprep.subr.bf16.mxu0 0
  %2762 = vmatpush1.bf16.msra.mxu0 %v110
  %2763 = vmatprep.subr.bf16.mxu0 0
  %2764 = vmatpush2.bf16.msra.mxu0 0
  %2765 = vmatprep.subr.bf16.mxu0 0
  %2766 = vmatpush2.bf16.msra.mxu0 0
  %2767 = vmatprep.subr.bf16.mxu0 0
  %2768 = vmatpush2.bf16.msra.mxu0 0
  %2769 = vmatprep.subr.bf16.mxu0 0
  %2770 = vmatpush2.bf16.msra.mxu0 0
  %2771 = vmatprep.subr.bf16.mxu0 0
  %2772 = vmatpush2.bf16.msra.mxu0 0
  %2773 = vmatprep.subr.bf16.mxu0 0
  %2774 = vmatpush2.bf16.msra.mxu0 0
  %2775 = vmatprep.subr.bf16.mxu0 0
  %2776 = vmatpush2.bf16.msra.mxu0 %v119
  %2777 = vmatprep.subr.bf16.mxu0 0
  %2778 = vmatpush2.bf16.msra.mxu0 %v118
  %2779 = vmatprep.mubr.bf16.mxu0 %v2745
  %2780 = vmatmul.mubr.bf16.gmra.mxu0 %v2741
  %v2781 = vpop.f32.mrf.mxu0
  %v2782 = vadd.f32 0.0, %v2781
  %v2783 = vpop.f32.mrf.mxu0
  %v2784 = vpop.f32.mrf.mxu0
  %v2785 = vadd.f32 0.0, %v2784
  %v2786 = vpop.f32.mrf.mxu0
  %2787 = vdwg.mxu0
  %s2788 = scalar_lea.vmem %s0, 544
  %v2789 = vld [vmem:[%s2788] sm:$0xff]
  %v2790 = vld [vmem:[%s2788 + $0x8] sm:$0xff]
  %v2793 = vunpack.c.l.b16 %v2789
  %v2794 = vunpack.c.h.b16 %v2789
  %v2795 = vunpack.c.l.b16 %v2790
  %v2796 = vunpack.c.h.b16 %v2790
  %v2797 = vpack.c.b16 %v2795, %v2793
  %v2798 = vpack.c.b16 %v2796, %v2794
  %v2801 = vsel %vm130, %v2798, 0
  %2803 = vmatprep.subr.bf16.mxu0 0
  %2804 = vmatpush1.bf16.msra.mxu0 %v117
  %2805 = vmatprep.subr.bf16.mxu0 0
  %2806 = vmatpush1.bf16.msra.mxu0 %v116
  %2807 = vmatprep.subr.bf16.mxu0 0
  %2808 = vmatpush1.bf16.msra.mxu0 %v115
  %2809 = vmatprep.subr.bf16.mxu0 0
  %2810 = vmatpush1.bf16.msra.mxu0 %v114
  %2811 = vmatprep.subr.bf16.mxu0 0
  %2812 = vmatpush1.bf16.msra.mxu0 %v113
  %2813 = vmatprep.subr.bf16.mxu0 0
  %2814 = vmatpush1.bf16.msra.mxu0 %v112
  %2815 = vmatprep.subr.bf16.mxu0 0
  %2816 = vmatpush1.bf16.msra.mxu0 %v111
  %2817 = vmatprep.subr.bf16.mxu0 0
  %2818 = vmatpush1.bf16.msra.mxu0 %v110
  %2819 = vmatprep.subr.bf16.mxu0 0
  %2820 = vmatpush2.bf16.msra.mxu0 0
  %2821 = vmatprep.subr.bf16.mxu0 0
  %2822 = vmatpush2.bf16.msra.mxu0 0
  %2823 = vmatprep.subr.bf16.mxu0 0
  %2824 = vmatpush2.bf16.msra.mxu0 0
  %2825 = vmatprep.subr.bf16.mxu0 0
  %2826 = vmatpush2.bf16.msra.mxu0 0
  %2827 = vmatprep.subr.bf16.mxu0 0
  %2828 = vmatpush2.bf16.msra.mxu0 0
  %2829 = vmatprep.subr.bf16.mxu0 0
  %2830 = vmatpush2.bf16.msra.mxu0 0
  %2831 = vmatprep.subr.bf16.mxu0 0
  %2832 = vmatpush2.bf16.msra.mxu0 %v119
  %2833 = vmatprep.subr.bf16.mxu0 0
  %2834 = vmatpush2.bf16.msra.mxu0 %v118
  %2835 = vmatprep.mubr.bf16.mxu0 %v2801
  %2836 = vmatmul.mubr.bf16.gmra.mxu0 %v2797
  %v2837 = vpop.f32.mrf.mxu0
  %v2838 = vadd.f32 0.0, %v2837
  %v2839 = vpop.f32.mrf.mxu0
  %v2840 = vpop.f32.mrf.mxu0
  %v2841 = vadd.f32 0.0, %v2840
  %v2842 = vpop.f32.mrf.mxu0
  %2843 = vdwg.mxu0
  %v2844 = vmax.f32 %v2782, %v2838
  %v2845 = vmax.f32 %v2785, %v2841
  %s2846 = scalar_lea.vmem %s0, 944
  %v2847 = vld [vmem:[%s2846] sm:$0xff]
  %v2848 = vld [vmem:[%s2846 + $0x8] sm:$0xff]
  %v2851 = vunpack.c.l.b16 %v2847
  %v2852 = vunpack.c.h.b16 %v2847
  %v2853 = vunpack.c.l.b16 %v2848
  %v2854 = vunpack.c.h.b16 %v2848
  %v2855 = vpack.c.b16 %v2853, %v2851
  %v2856 = vpack.c.b16 %v2854, %v2852
  %v2859 = vsel %vm130, %v2856, 0
  %2861 = vmatprep.subr.bf16.mxu0 0
  %2862 = vmatpush1.bf16.msra.mxu0 %v117
  %2863 = vmatprep.subr.bf16.mxu0 0
  %2864 = vmatpush1.bf16.msra.mxu0 %v116
  %2865 = vmatprep.subr.bf16.mxu0 0
  %2866 = vmatpush1.bf16.msra.mxu0 %v115
  %2867 = vmatprep.subr.bf16.mxu0 0
  %2868 = vmatpush1.bf16.msra.mxu0 %v114
  %2869 = vmatprep.subr.bf16.mxu0 0
  %2870 = vmatpush1.bf16.msra.mxu0 %v113
  %2871 = vmatprep.subr.bf16.mxu0 0
  %2872 = vmatpush1.bf16.msra.mxu0 %v112
  %2873 = vmatprep.subr.bf16.mxu0 0
  %2874 = vmatpush1.bf16.msra.mxu0 %v111
  %2875 = vmatprep.subr.bf16.mxu0 0
  %2876 = vmatpush1.bf16.msra.mxu0 %v110
  %2877 = vmatprep.subr.bf16.mxu0 0
  %2878 = vmatpush2.bf16.msra.mxu0 0
  %2879 = vmatprep.subr.bf16.mxu0 0
  %2880 = vmatpush2.bf16.msra.mxu0 0
  %2881 = vmatprep.subr.bf16.mxu0 0
  %2882 = vmatpush2.bf16.msra.mxu0 0
  %2883 = vmatprep.subr.bf16.mxu0 0
  %2884 = vmatpush2.bf16.msra.mxu0 0
  %2885 = vmatprep.subr.bf16.mxu0 0
  %2886 = vmatpush2.bf16.msra.mxu0 0
  %2887 = vmatprep.subr.bf16.mxu0 0
  %2888 = vmatpush2.bf16.msra.mxu0 0
  %2889 = vmatprep.subr.bf16.mxu0 0
  %2890 = vmatpush2.bf16.msra.mxu0 %v119
  %2891 = vmatprep.subr.bf16.mxu0 0
  %2892 = vmatpush2.bf16.msra.mxu0 %v118
  %2893 = vmatprep.mubr.bf16.mxu0 %v2859
  %2894 = vmatmul.mubr.bf16.gmra.mxu0 %v2855
  %v2895 = vpop.f32.mrf.mxu0
  %v2896 = vadd.f32 0.0, %v2895
  %v2897 = vpop.f32.mrf.mxu0
  %v2898 = vpop.f32.mrf.mxu0
  %v2899 = vadd.f32 0.0, %v2898
  %v2900 = vpop.f32.mrf.mxu0
  %2901 = vdwg.mxu0
  %v2902 = vmax.f32 %v2844, %v2896
  %v2903 = vmax.f32 %v2845, %v2899
  %s2904 = scalar_lea.vmem %s0, 1344
  %v2905 = vld [vmem:[%s2904] sm:$0xff]
  %v2906 = vld [vmem:[%s2904 + $0x8] sm:$0xff]
  %v2909 = vunpack.c.l.b16 %v2905
  %v2910 = vunpack.c.h.b16 %v2905
  %v2911 = vunpack.c.l.b16 %v2906
  %v2912 = vunpack.c.h.b16 %v2906
  %v2913 = vpack.c.b16 %v2911, %v2909
  %v2914 = vpack.c.b16 %v2912, %v2910
  %v2917 = vsel %vm130, %v2914, 0
  %2919 = vmatprep.subr.bf16.mxu0 0
  %2920 = vmatpush1.bf16.msra.mxu0 %v117
  %2921 = vmatprep.subr.bf16.mxu0 0
  %2922 = vmatpush1.bf16.msra.mxu0 %v116
  %2923 = vmatprep.subr.bf16.mxu0 0
  %2924 = vmatpush1.bf16.msra.mxu0 %v115
  %2925 = vmatprep.subr.bf16.mxu0 0
  %2926 = vmatpush1.bf16.msra.mxu0 %v114
  %2927 = vmatprep.subr.bf16.mxu0 0
  %2928 = vmatpush1.bf16.msra.mxu0 %v113
  %2929 = vmatprep.subr.bf16.mxu0 0
  %2930 = vmatpush1.bf16.msra.mxu0 %v112
  %2931 = vmatprep.subr.bf16.mxu0 0
  %2932 = vmatpush1.bf16.msra.mxu0 %v111
  %2933 = vmatprep.subr.bf16.mxu0 0
  %2934 = vmatpush1.bf16.msra.mxu0 %v110
  %2935 = vmatprep.subr.bf16.mxu0 0
  %2936 = vmatpush2.bf16.msra.mxu0 0
  %2937 = vmatprep.subr.bf16.mxu0 0
  %2938 = vmatpush2.bf16.msra.mxu0 0
  %2939 = vmatprep.subr.bf16.mxu0 0
  %2940 = vmatpush2.bf16.msra.mxu0 0
  %2941 = vmatprep.subr.bf16.mxu0 0
  %2942 = vmatpush2.bf16.msra.mxu0 0
  %2943 = vmatprep.subr.bf16.mxu0 0
  %2944 = vmatpush2.bf16.msra.mxu0 0
  %2945 = vmatprep.subr.bf16.mxu0 0
  %2946 = vmatpush2.bf16.msra.mxu0 0
  %2947 = vmatprep.subr.bf16.mxu0 0
  %2948 = vmatpush2.bf16.msra.mxu0 %v119
  %2949 = vmatprep.subr.bf16.mxu0 0
  %2950 = vmatpush2.bf16.msra.mxu0 %v118
  %2951 = vmatprep.mubr.bf16.mxu0 %v2917
  %2952 = vmatmul.mubr.bf16.gmra.mxu0 %v2913
  %v2953 = vpop.f32.mrf.mxu0
  %v2954 = vadd.f32 0.0, %v2953
  %v2955 = vpop.f32.mrf.mxu0
  %v2956 = vpop.f32.mrf.mxu0
  %v2957 = vadd.f32 0.0, %v2956
  %v2958 = vpop.f32.mrf.mxu0
  %2959 = vdwg.mxu0
  %v2960 = vmax.f32 %v2902, %v2954
  %v2961 = vmax.f32 %v2903, %v2957
  %v2962 = vadd.f32 %v2960, %v354
  %v2963 = vadd.f32 %v2961, %v354
  %v2964 = vmax.f32 %v2962, 0.0
  %v2965 = vmax.f32 %v2963, 0.0
  %v2966 = vpack.c.bf16 %v2965, %v2964
  %s2967 = scalar_lea.vmem %s3, 72
  %v2968 = vld [vmem:[%s2967] sm:$0xf]
  %v2969 = vld [vmem:[%s2967 + $0x4] sm:$0xf]
  %v2972 = vunpack.c.l.b16 %v2968
  %v2973 = vunpack.c.l.b16 %v2969
  %v2974 = vpack.c.b16 %v2973, %v2972
  %v2977 = vsel %vm607, %v2966, 0
  %2979 = vmatprep.subr.bf16.mxu0 0
  %2980 = vmatpush1.bf16.msra.mxu0 0
  %2981 = vmatprep.subr.bf16.mxu0 0
  %2982 = vmatpush1.bf16.msra.mxu0 0
  %2983 = vmatprep.subr.bf16.mxu0 0
  %2984 = vmatpush1.bf16.msra.mxu0 0
  %2985 = vmatprep.subr.bf16.mxu0 0
  %2986 = vmatpush1.bf16.msra.mxu0 0
  %2987 = vmatprep.subr.bf16.mxu0 0
  %2988 = vmatpush1.bf16.msra.mxu0 0
  %2989 = vmatprep.subr.bf16.mxu0 0
  %2990 = vmatpush1.bf16.msra.mxu0 0
  %2991 = vmatprep.subr.bf16.mxu0 0
  %2992 = vmatpush1.bf16.msra.mxu0 0
  %2993 = vmatprep.subr.bf16.mxu0 0
  %2994 = vmatpush1.bf16.msra.mxu0 %v2974
  %2995 = vmatprep.subr.bf16.mxu0 0
  %2996 = vmatpush2.bf16.msra.mxu0 0
  %2997 = vmatprep.subr.bf16.mxu0 0
  %2998 = vmatpush2.bf16.msra.mxu0 0
  %2999 = vmatprep.subr.bf16.mxu0 0
  %3000 = vmatpush2.bf16.msra.mxu0 0
  %3001 = vmatprep.subr.bf16.mxu0 0
  %3002 = vmatpush2.bf16.msra.mxu0 0
  %3003 = vmatprep.subr.bf16.mxu0 0
  %3004 = vmatpush2.bf16.msra.mxu0 0
  %3005 = vmatprep.subr.bf16.mxu0 0
  %3006 = vmatpush2.bf16.msra.mxu0 0
  %3007 = vmatprep.subr.bf16.mxu0 0
  %3008 = vmatpush2.bf16.msra.mxu0 0
  %3009 = vmatprep.subr.bf16.mxu0 0
  %3010 = vmatpush2.bf16.msra.mxu0 0
  %3011 = vmatprep.mubr.bf16.mxu0 0
  %3012 = vmatmul.mubr.bf16.gmra.mxu0 %v2977
  %v3013 = vpop.f32.mrf.mxu0
  %v3014 = vadd.f32 0.0, %v3013
  %v3015 = vpop.f32.mrf.mxu0
  %v3016 = vpop.f32.mrf.mxu0
  %v3017 = vadd.f32 0.0, %v3016
  %v3018 = vpop.f32.mrf.mxu0
  %3019 = vdwg.mxu0
  %v3020 = vadd.f32 %v2730, %v3014
  %v3021 = vadd.f32 %v2731, %v3017
  %s3022 = scalar_lea.vmem %s0, 160
  %v3023 = vld [vmem:[%s3022] sm:$0xff]
  %v3024 = vld [vmem:[%s3022 + $0x8] sm:$0xff]
  %v3027 = vunpack.c.l.b16 %v3023
  %v3028 = vunpack.c.h.b16 %v3023
  %v3029 = vunpack.c.l.b16 %v3024
  %v3030 = vunpack.c.h.b16 %v3024
  %v3031 = vpack.c.b16 %v3029, %v3027
  %v3032 = vpack.c.b16 %v3030, %v3028
  %v3035 = vsel %vm130, %v3032, 0
  %3037 = vmatprep.subr.bf16.mxu0 0
  %3038 = vmatpush1.bf16.msra.mxu0 %v117
  %3039 = vmatprep.subr.bf16.mxu0 0
  %3040 = vmatpush1.bf16.msra.mxu0 %v116
  %3041 = vmatprep.subr.bf16.mxu0 0
  %3042 = vmatpush1.bf16.msra.mxu0 %v115
  %3043 = vmatprep.subr.bf16.mxu0 0
  %3044 = vmatpush1.bf16.msra.mxu0 %v114
  %3045 = vmatprep.subr.bf16.mxu0 0
  %3046 = vmatpush1.bf16.msra.mxu0 %v113
  %3047 = vmatprep.subr.bf16.mxu0 0
  %3048 = vmatpush1.bf16.msra.mxu0 %v112
  %3049 = vmatprep.subr.bf16.mxu0 0
  %3050 = vmatpush1.bf16.msra.mxu0 %v111
  %3051 = vmatprep.subr.bf16.mxu0 0
  %3052 = vmatpush1.bf16.msra.mxu0 %v110
  %3053 = vmatprep.subr.bf16.mxu0 0
  %3054 = vmatpush2.bf16.msra.mxu0 0
  %3055 = vmatprep.subr.bf16.mxu0 0
  %3056 = vmatpush2.bf16.msra.mxu0 0
  %3057 = vmatprep.subr.bf16.mxu0 0
  %3058 = vmatpush2.bf16.msra.mxu0 0
  %3059 = vmatprep.subr.bf16.mxu0 0
  %3060 = vmatpush2.bf16.msra.mxu0 0
  %3061 = vmatprep.subr.bf16.mxu0 0
  %3062 = vmatpush2.bf16.msra.mxu0 0
  %3063 = vmatprep.subr.bf16.mxu0 0
  %3064 = vmatpush2.bf16.msra.mxu0 0
  %3065 = vmatprep.subr.bf16.mxu0 0
  %3066 = vmatpush2.bf16.msra.mxu0 %v119
  %3067 = vmatprep.subr.bf16.mxu0 0
  %3068 = vmatpush2.bf16.msra.mxu0 %v118
  %3069 = vmatprep.mubr.bf16.mxu0 %v3035
  %3070 = vmatmul.mubr.bf16.gmra.mxu0 %v3031
  %v3071 = vpop.f32.mrf.mxu0
  %v3072 = vadd.f32 0.0, %v3071
  %v3073 = vpop.f32.mrf.mxu0
  %v3074 = vpop.f32.mrf.mxu0
  %v3075 = vadd.f32 0.0, %v3074
  %v3076 = vpop.f32.mrf.mxu0
  %3077 = vdwg.mxu0
  %s3078 = scalar_lea.vmem %s0, 560
  %v3079 = vld [vmem:[%s3078] sm:$0xff]
  %v3080 = vld [vmem:[%s3078 + $0x8] sm:$0xff]
  %v3083 = vunpack.c.l.b16 %v3079
  %v3084 = vunpack.c.h.b16 %v3079
  %v3085 = vunpack.c.l.b16 %v3080
  %v3086 = vunpack.c.h.b16 %v3080
  %v3087 = vpack.c.b16 %v3085, %v3083
  %v3088 = vpack.c.b16 %v3086, %v3084
  %v3091 = vsel %vm130, %v3088, 0
  %3093 = vmatprep.subr.bf16.mxu0 0
  %3094 = vmatpush1.bf16.msra.mxu0 %v117
  %3095 = vmatprep.subr.bf16.mxu0 0
  %3096 = vmatpush1.bf16.msra.mxu0 %v116
  %3097 = vmatprep.subr.bf16.mxu0 0
  %3098 = vmatpush1.bf16.msra.mxu0 %v115
  %3099 = vmatprep.subr.bf16.mxu0 0
  %3100 = vmatpush1.bf16.msra.mxu0 %v114
  %3101 = vmatprep.subr.bf16.mxu0 0
  %3102 = vmatpush1.bf16.msra.mxu0 %v113
  %3103 = vmatprep.subr.bf16.mxu0 0
  %3104 = vmatpush1.bf16.msra.mxu0 %v112
  %3105 = vmatprep.subr.bf16.mxu0 0
  %3106 = vmatpush1.bf16.msra.mxu0 %v111
  %3107 = vmatprep.subr.bf16.mxu0 0
  %3108 = vmatpush1.bf16.msra.mxu0 %v110
  %3109 = vmatprep.subr.bf16.mxu0 0
  %3110 = vmatpush2.bf16.msra.mxu0 0
  %3111 = vmatprep.subr.bf16.mxu0 0
  %3112 = vmatpush2.bf16.msra.mxu0 0
  %3113 = vmatprep.subr.bf16.mxu0 0
  %3114 = vmatpush2.bf16.msra.mxu0 0
  %3115 = vmatprep.subr.bf16.mxu0 0
  %3116 = vmatpush2.bf16.msra.mxu0 0
  %3117 = vmatprep.subr.bf16.mxu0 0
  %3118 = vmatpush2.bf16.msra.mxu0 0
  %3119 = vmatprep.subr.bf16.mxu0 0
  %3120 = vmatpush2.bf16.msra.mxu0 0
  %3121 = vmatprep.subr.bf16.mxu0 0
  %3122 = vmatpush2.bf16.msra.mxu0 %v119
  %3123 = vmatprep.subr.bf16.mxu0 0
  %3124 = vmatpush2.bf16.msra.mxu0 %v118
  %3125 = vmatprep.mubr.bf16.mxu0 %v3091
  %3126 = vmatmul.mubr.bf16.gmra.mxu0 %v3087
  %v3127 = vpop.f32.mrf.mxu0
  %v3128 = vadd.f32 0.0, %v3127
  %v3129 = vpop.f32.mrf.mxu0
  %v3130 = vpop.f32.mrf.mxu0
  %v3131 = vadd.f32 0.0, %v3130
  %v3132 = vpop.f32.mrf.mxu0
  %3133 = vdwg.mxu0
  %v3134 = vmax.f32 %v3072, %v3128
  %v3135 = vmax.f32 %v3075, %v3131
  %s3136 = scalar_lea.vmem %s0, 960
  %v3137 = vld [vmem:[%s3136] sm:$0xff]
  %v3138 = vld [vmem:[%s3136 + $0x8] sm:$0xff]
  %v3141 = vunpack.c.l.b16 %v3137
  %v3142 = vunpack.c.h.b16 %v3137
  %v3143 = vunpack.c.l.b16 %v3138
  %v3144 = vunpack.c.h.b16 %v3138
  %v3145 = vpack.c.b16 %v3143, %v3141
  %v3146 = vpack.c.b16 %v3144, %v3142
  %v3149 = vsel %vm130, %v3146, 0
  %3151 = vmatprep.subr.bf16.mxu0 0
  %3152 = vmatpush1.bf16.msra.mxu0 %v117
  %3153 = vmatprep.subr.bf16.mxu0 0
  %3154 = vmatpush1.bf16.msra.mxu0 %v116
  %3155 = vmatprep.subr.bf16.mxu0 0
  %3156 = vmatpush1.bf16.msra.mxu0 %v115
  %3157 = vmatprep.subr.bf16.mxu0 0
  %3158 = vmatpush1.bf16.msra.mxu0 %v114
  %3159 = vmatprep.subr.bf16.mxu0 0
  %3160 = vmatpush1.bf16.msra.mxu0 %v113
  %3161 = vmatprep.subr.bf16.mxu0 0
  %3162 = vmatpush1.bf16.msra.mxu0 %v112
  %3163 = vmatprep.subr.bf16.mxu0 0
  %3164 = vmatpush1.bf16.msra.mxu0 %v111
  %3165 = vmatprep.subr.bf16.mxu0 0
  %3166 = vmatpush1.bf16.msra.mxu0 %v110
  %3167 = vmatprep.subr.bf16.mxu0 0
  %3168 = vmatpush2.bf16.msra.mxu0 0
  %3169 = vmatprep.subr.bf16.mxu0 0
  %3170 = vmatpush2.bf16.msra.mxu0 0
  %3171 = vmatprep.subr.bf16.mxu0 0
  %3172 = vmatpush2.bf16.msra.mxu0 0
  %3173 = vmatprep.subr.bf16.mxu0 0
  %3174 = vmatpush2.bf16.msra.mxu0 0
  %3175 = vmatprep.subr.bf16.mxu0 0
  %3176 = vmatpush2.bf16.msra.mxu0 0
  %3177 = vmatprep.subr.bf16.mxu0 0
  %3178 = vmatpush2.bf16.msra.mxu0 0
  %3179 = vmatprep.subr.bf16.mxu0 0
  %3180 = vmatpush2.bf16.msra.mxu0 %v119
  %3181 = vmatprep.subr.bf16.mxu0 0
  %3182 = vmatpush2.bf16.msra.mxu0 %v118
  %3183 = vmatprep.mubr.bf16.mxu0 %v3149
  %3184 = vmatmul.mubr.bf16.gmra.mxu0 %v3145
  %v3185 = vpop.f32.mrf.mxu0
  %v3186 = vadd.f32 0.0, %v3185
  %v3187 = vpop.f32.mrf.mxu0
  %v3188 = vpop.f32.mrf.mxu0
  %v3189 = vadd.f32 0.0, %v3188
  %v3190 = vpop.f32.mrf.mxu0
  %3191 = vdwg.mxu0
  %v3192 = vmax.f32 %v3134, %v3186
  %v3193 = vmax.f32 %v3135, %v3189
  %s3194 = scalar_lea.vmem %s0, 1360
  %v3195 = vld [vmem:[%s3194] sm:$0xff]
  %v3196 = vld [vmem:[%s3194 + $0x8] sm:$0xff]
  %v3199 = vunpack.c.l.b16 %v3195
  %v3200 = vunpack.c.h.b16 %v3195
  %v3201 = vunpack.c.l.b16 %v3196
  %v3202 = vunpack.c.h.b16 %v3196
  %v3203 = vpack.c.b16 %v3201, %v3199
  %v3204 = vpack.c.b16 %v3202, %v3200
  %v3207 = vsel %vm130, %v3204, 0
  %3209 = vmatprep.subr.bf16.mxu0 0
  %3210 = vmatpush1.bf16.msra.mxu0 %v117
  %3211 = vmatprep.subr.bf16.mxu0 0
  %3212 = vmatpush1.bf16.msra.mxu0 %v116
  %3213 = vmatprep.subr.bf16.mxu0 0
  %3214 = vmatpush1.bf16.msra.mxu0 %v115
  %3215 = vmatprep.subr.bf16.mxu0 0
  %3216 = vmatpush1.bf16.msra.mxu0 %v114
  %3217 = vmatprep.subr.bf16.mxu0 0
  %3218 = vmatpush1.bf16.msra.mxu0 %v113
  %3219 = vmatprep.subr.bf16.mxu0 0
  %3220 = vmatpush1.bf16.msra.mxu0 %v112
  %3221 = vmatprep.subr.bf16.mxu0 0
  %3222 = vmatpush1.bf16.msra.mxu0 %v111
  %3223 = vmatprep.subr.bf16.mxu0 0
  %3224 = vmatpush1.bf16.msra.mxu0 %v110
  %3225 = vmatprep.subr.bf16.mxu0 0
  %3226 = vmatpush2.bf16.msra.mxu0 0
  %3227 = vmatprep.subr.bf16.mxu0 0
  %3228 = vmatpush2.bf16.msra.mxu0 0
  %3229 = vmatprep.subr.bf16.mxu0 0
  %3230 = vmatpush2.bf16.msra.mxu0 0
  %3231 = vmatprep.subr.bf16.mxu0 0
  %3232 = vmatpush2.bf16.msra.mxu0 0
  %3233 = vmatprep.subr.bf16.mxu0 0
  %3234 = vmatpush2.bf16.msra.mxu0 0
  %3235 = vmatprep.subr.bf16.mxu0 0
  %3236 = vmatpush2.bf16.msra.mxu0 0
  %3237 = vmatprep.subr.bf16.mxu0 0
  %3238 = vmatpush2.bf16.msra.mxu0 %v119
  %3239 = vmatprep.subr.bf16.mxu0 0
  %3240 = vmatpush2.bf16.msra.mxu0 %v118
  %3241 = vmatprep.mubr.bf16.mxu0 %v3207
  %3242 = vmatmul.mubr.bf16.gmra.mxu0 %v3203
  %v3243 = vpop.f32.mrf.mxu0
  %v3244 = vadd.f32 0.0, %v3243
  %v3245 = vpop.f32.mrf.mxu0
  %v3246 = vpop.f32.mrf.mxu0
  %v3247 = vadd.f32 0.0, %v3246
  %v3248 = vpop.f32.mrf.mxu0
  %3249 = vdwg.mxu0
  %v3250 = vmax.f32 %v3192, %v3244
  %v3251 = vmax.f32 %v3193, %v3247
  %v3252 = vadd.f32 %v3250, %v354
  %v3253 = vadd.f32 %v3251, %v354
  %v3254 = vmax.f32 %v3252, 0.0
  %v3255 = vmax.f32 %v3253, 0.0
  %v3256 = vpack.c.bf16 %v3255, %v3254
  %s3257 = scalar_lea.vmem %s3, 80
  %v3258 = vld [vmem:[%s3257] sm:$0xf]
  %v3259 = vld [vmem:[%s3257 + $0x4] sm:$0xf]
  %v3262 = vunpack.c.l.b16 %v3258
  %v3263 = vunpack.c.l.b16 %v3259
  %v3264 = vpack.c.b16 %v3263, %v3262
  %v3267 = vsel %vm607, %v3256, 0
  %3269 = vmatprep.subr.bf16.mxu0 0
  %3270 = vmatpush1.bf16.msra.mxu0 0
  %3271 = vmatprep.subr.bf16.mxu0 0
  %3272 = vmatpush1.bf16.msra.mxu0 0
  %3273 = vmatprep.subr.bf16.mxu0 0
  %3274 = vmatpush1.bf16.msra.mxu0 0
  %3275 = vmatprep.subr.bf16.mxu0 0
  %3276 = vmatpush1.bf16.msra.mxu0 0
  %3277 = vmatprep.subr.bf16.mxu0 0
  %3278 = vmatpush1.bf16.msra.mxu0 0
  %3279 = vmatprep.subr.bf16.mxu0 0
  %3280 = vmatpush1.bf16.msra.mxu0 0
  %3281 = vmatprep.subr.bf16.mxu0 0
  %3282 = vmatpush1.bf16.msra.mxu0 0
  %3283 = vmatprep.subr.bf16.mxu0 0
  %3284 = vmatpush1.bf16.msra.mxu0 %v3264
  %3285 = vmatprep.subr.bf16.mxu0 0
  %3286 = vmatpush2.bf16.msra.mxu0 0
  %3287 = vmatprep.subr.bf16.mxu0 0
  %3288 = vmatpush2.bf16.msra.mxu0 0
  %3289 = vmatprep.subr.bf16.mxu0 0
  %3290 = vmatpush2.bf16.msra.mxu0 0
  %3291 = vmatprep.subr.bf16.mxu0 0
  %3292 = vmatpush2.bf16.msra.mxu0 0
  %3293 = vmatprep.subr.bf16.mxu0 0
  %3294 = vmatpush2.bf16.msra.mxu0 0
  %3295 = vmatprep.subr.bf16.mxu0 0
  %3296 = vmatpush2.bf16.msra.mxu0 0
  %3297 = vmatprep.subr.bf16.mxu0 0
  %3298 = vmatpush2.bf16.msra.mxu0 0
  %3299 = vmatprep.subr.bf16.mxu0 0
  %3300 = vmatpush2.bf16.msra.mxu0 0
  %3301 = vmatprep.mubr.bf16.mxu0 0
  %3302 = vmatmul.mubr.bf16.gmra.mxu0 %v3267
  %v3303 = vpop.f32.mrf.mxu0
  %v3304 = vadd.f32 0.0, %v3303
  %v3305 = vpop.f32.mrf.mxu0
  %v3306 = vpop.f32.mrf.mxu0
  %v3307 = vadd.f32 0.0, %v3306
  %v3308 = vpop.f32.mrf.mxu0
  %3309 = vdwg.mxu0
  %v3310 = vadd.f32 %v3020, %v3304
  %v3311 = vadd.f32 %v3021, %v3307
  %s3312 = scalar_lea.vmem %s0, 176
  %v3313 = vld [vmem:[%s3312] sm:$0xff]
  %v3314 = vld [vmem:[%s3312 + $0x8] sm:$0xff]
  %v3317 = vunpack.c.l.b16 %v3313
  %v3318 = vunpack.c.h.b16 %v3313
  %v3319 = vunpack.c.l.b16 %v3314
  %v3320 = vunpack.c.h.b16 %v3314
  %v3321 = vpack.c.b16 %v3319, %v3317
  %v3322 = vpack.c.b16 %v3320, %v3318
  %v3325 = vsel %vm130, %v3322, 0
  %3327 = vmatprep.subr.bf16.mxu0 0
  %3328 = vmatpush1.bf16.msra.mxu0 %v117
  %3329 = vmatprep.subr.bf16.mxu0 0
  %3330 = vmatpush1.bf16.msra.mxu0 %v116
  %3331 = vmatprep.subr.bf16.mxu0 0
  %3332 = vmatpush1.bf16.msra.mxu0 %v115
  %3333 = vmatprep.subr.bf16.mxu0 0
  %3334 = vmatpush1.bf16.msra.mxu0 %v114
  %3335 = vmatprep.subr.bf16.mxu0 0
  %3336 = vmatpush1.bf16.msra.mxu0 %v113
  %3337 = vmatprep.subr.bf16.mxu0 0
  %3338 = vmatpush1.bf16.msra.mxu0 %v112
  %3339 = vmatprep.subr.bf16.mxu0 0
  %3340 = vmatpush1.bf16.msra.mxu0 %v111
  %3341 = vmatprep.subr.bf16.mxu0 0
  %3342 = vmatpush1.bf16.msra.mxu0 %v110
  %3343 = vmatprep.subr.bf16.mxu0 0
  %3344 = vmatpush2.bf16.msra.mxu0 0
  %3345 = vmatprep.subr.bf16.mxu0 0
  %3346 = vmatpush2.bf16.msra.mxu0 0
  %3347 = vmatprep.subr.bf16.mxu0 0
  %3348 = vmatpush2.bf16.msra.mxu0 0
  %3349 = vmatprep.subr.bf16.mxu0 0
  %3350 = vmatpush2.bf16.msra.mxu0 0
  %3351 = vmatprep.subr.bf16.mxu0 0
  %3352 = vmatpush2.bf16.msra.mxu0 0
  %3353 = vmatprep.subr.bf16.mxu0 0
  %3354 = vmatpush2.bf16.msra.mxu0 0
  %3355 = vmatprep.subr.bf16.mxu0 0
  %3356 = vmatpush2.bf16.msra.mxu0 %v119
  %3357 = vmatprep.subr.bf16.mxu0 0
  %3358 = vmatpush2.bf16.msra.mxu0 %v118
  %3359 = vmatprep.mubr.bf16.mxu0 %v3325
  %3360 = vmatmul.mubr.bf16.gmra.mxu0 %v3321
  %v3361 = vpop.f32.mrf.mxu0
  %v3362 = vadd.f32 0.0, %v3361
  %v3363 = vpop.f32.mrf.mxu0
  %v3364 = vpop.f32.mrf.mxu0
  %v3365 = vadd.f32 0.0, %v3364
  %v3366 = vpop.f32.mrf.mxu0
  %3367 = vdwg.mxu0
  %s3368 = scalar_lea.vmem %s0, 576
  %v3369 = vld [vmem:[%s3368] sm:$0xff]
  %v3370 = vld [vmem:[%s3368 + $0x8] sm:$0xff]
  %v3373 = vunpack.c.l.b16 %v3369
  %v3374 = vunpack.c.h.b16 %v3369
  %v3375 = vunpack.c.l.b16 %v3370
  %v3376 = vunpack.c.h.b16 %v3370
  %v3377 = vpack.c.b16 %v3375, %v3373
  %v3378 = vpack.c.b16 %v3376, %v3374
  %v3381 = vsel %vm130, %v3378, 0
  %3383 = vmatprep.subr.bf16.mxu0 0
  %3384 = vmatpush1.bf16.msra.mxu0 %v117
  %3385 = vmatprep.subr.bf16.mxu0 0
  %3386 = vmatpush1.bf16.msra.mxu0 %v116
  %3387 = vmatprep.subr.bf16.mxu0 0
  %3388 = vmatpush1.bf16.msra.mxu0 %v115
  %3389 = vmatprep.subr.bf16.mxu0 0
  %3390 = vmatpush1.bf16.msra.mxu0 %v114
  %3391 = vmatprep.subr.bf16.mxu0 0
  %3392 = vmatpush1.bf16.msra.mxu0 %v113
  %3393 = vmatprep.subr.bf16.mxu0 0
  %3394 = vmatpush1.bf16.msra.mxu0 %v112
  %3395 = vmatprep.subr.bf16.mxu0 0
  %3396 = vmatpush1.bf16.msra.mxu0 %v111
  %3397 = vmatprep.subr.bf16.mxu0 0
  %3398 = vmatpush1.bf16.msra.mxu0 %v110
  %3399 = vmatprep.subr.bf16.mxu0 0
  %3400 = vmatpush2.bf16.msra.mxu0 0
  %3401 = vmatprep.subr.bf16.mxu0 0
  %3402 = vmatpush2.bf16.msra.mxu0 0
  %3403 = vmatprep.subr.bf16.mxu0 0
  %3404 = vmatpush2.bf16.msra.mxu0 0
  %3405 = vmatprep.subr.bf16.mxu0 0
  %3406 = vmatpush2.bf16.msra.mxu0 0
  %3407 = vmatprep.subr.bf16.mxu0 0
  %3408 = vmatpush2.bf16.msra.mxu0 0
  %3409 = vmatprep.subr.bf16.mxu0 0
  %3410 = vmatpush2.bf16.msra.mxu0 0
  %3411 = vmatprep.subr.bf16.mxu0 0
  %3412 = vmatpush2.bf16.msra.mxu0 %v119
  %3413 = vmatprep.subr.bf16.mxu0 0
  %3414 = vmatpush2.bf16.msra.mxu0 %v118
  %3415 = vmatprep.mubr.bf16.mxu0 %v3381
  %3416 = vmatmul.mubr.bf16.gmra.mxu0 %v3377
  %v3417 = vpop.f32.mrf.mxu0
  %v3418 = vadd.f32 0.0, %v3417
  %v3419 = vpop.f32.mrf.mxu0
  %v3420 = vpop.f32.mrf.mxu0
  %v3421 = vadd.f32 0.0, %v3420
  %v3422 = vpop.f32.mrf.mxu0
  %3423 = vdwg.mxu0
  %v3424 = vmax.f32 %v3362, %v3418
  %v3425 = vmax.f32 %v3365, %v3421
  %s3426 = scalar_lea.vmem %s0, 976
  %v3427 = vld [vmem:[%s3426] sm:$0xff]
  %v3428 = vld [vmem:[%s3426 + $0x8] sm:$0xff]
  %v3431 = vunpack.c.l.b16 %v3427
  %v3432 = vunpack.c.h.b16 %v3427
  %v3433 = vunpack.c.l.b16 %v3428
  %v3434 = vunpack.c.h.b16 %v3428
  %v3435 = vpack.c.b16 %v3433, %v3431
  %v3436 = vpack.c.b16 %v3434, %v3432
  %v3439 = vsel %vm130, %v3436, 0
  %3441 = vmatprep.subr.bf16.mxu0 0
  %3442 = vmatpush1.bf16.msra.mxu0 %v117
  %3443 = vmatprep.subr.bf16.mxu0 0
  %3444 = vmatpush1.bf16.msra.mxu0 %v116
  %3445 = vmatprep.subr.bf16.mxu0 0
  %3446 = vmatpush1.bf16.msra.mxu0 %v115
  %3447 = vmatprep.subr.bf16.mxu0 0
  %3448 = vmatpush1.bf16.msra.mxu0 %v114
  %3449 = vmatprep.subr.bf16.mxu0 0
  %3450 = vmatpush1.bf16.msra.mxu0 %v113
  %3451 = vmatprep.subr.bf16.mxu0 0
  %3452 = vmatpush1.bf16.msra.mxu0 %v112
  %3453 = vmatprep.subr.bf16.mxu0 0
  %3454 = vmatpush1.bf16.msra.mxu0 %v111
  %3455 = vmatprep.subr.bf16.mxu0 0
  %3456 = vmatpush1.bf16.msra.mxu0 %v110
  %3457 = vmatprep.subr.bf16.mxu0 0
  %3458 = vmatpush2.bf16.msra.mxu0 0
  %3459 = vmatprep.subr.bf16.mxu0 0
  %3460 = vmatpush2.bf16.msra.mxu0 0
  %3461 = vmatprep.subr.bf16.mxu0 0
  %3462 = vmatpush2.bf16.msra.mxu0 0
  %3463 = vmatprep.subr.bf16.mxu0 0
  %3464 = vmatpush2.bf16.msra.mxu0 0
  %3465 = vmatprep.subr.bf16.mxu0 0
  %3466 = vmatpush2.bf16.msra.mxu0 0
  %3467 = vmatprep.subr.bf16.mxu0 0
  %3468 = vmatpush2.bf16.msra.mxu0 0
  %3469 = vmatprep.subr.bf16.mxu0 0
  %3470 = vmatpush2.bf16.msra.mxu0 %v119
  %3471 = vmatprep.subr.bf16.mxu0 0
  %3472 = vmatpush2.bf16.msra.mxu0 %v118
  %3473 = vmatprep.mubr.bf16.mxu0 %v3439
  %3474 = vmatmul.mubr.bf16.gmra.mxu0 %v3435
  %v3475 = vpop.f32.mrf.mxu0
  %v3476 = vadd.f32 0.0, %v3475
  %v3477 = vpop.f32.mrf.mxu0
  %v3478 = vpop.f32.mrf.mxu0
  %v3479 = vadd.f32 0.0, %v3478
  %v3480 = vpop.f32.mrf.mxu0
  %3481 = vdwg.mxu0
  %v3482 = vmax.f32 %v3424, %v3476
  %v3483 = vmax.f32 %v3425, %v3479
  %s3484 = scalar_lea.vmem %s0, 1376
  %v3485 = vld [vmem:[%s3484] sm:$0xff]
  %v3486 = vld [vmem:[%s3484 + $0x8] sm:$0xff]
  %v3489 = vunpack.c.l.b16 %v3485
  %v3490 = vunpack.c.h.b16 %v3485
  %v3491 = vunpack.c.l.b16 %v3486
  %v3492 = vunpack.c.h.b16 %v3486
  %v3493 = vpack.c.b16 %v3491, %v3489
  %v3494 = vpack.c.b16 %v3492, %v3490
  %v3497 = vsel %vm130, %v3494, 0
  %3499 = vmatprep.subr.bf16.mxu0 0
  %3500 = vmatpush1.bf16.msra.mxu0 %v117
  %3501 = vmatprep.subr.bf16.mxu0 0
  %3502 = vmatpush1.bf16.msra.mxu0 %v116
  %3503 = vmatprep.subr.bf16.mxu0 0
  %3504 = vmatpush1.bf16.msra.mxu0 %v115
  %3505 = vmatprep.subr.bf16.mxu0 0
  %3506 = vmatpush1.bf16.msra.mxu0 %v114
  %3507 = vmatprep.subr.bf16.mxu0 0
  %3508 = vmatpush1.bf16.msra.mxu0 %v113
  %3509 = vmatprep.subr.bf16.mxu0 0
  %3510 = vmatpush1.bf16.msra.mxu0 %v112
  %3511 = vmatprep.subr.bf16.mxu0 0
  %3512 = vmatpush1.bf16.msra.mxu0 %v111
  %3513 = vmatprep.subr.bf16.mxu0 0
  %3514 = vmatpush1.bf16.msra.mxu0 %v110
  %3515 = vmatprep.subr.bf16.mxu0 0
  %3516 = vmatpush2.bf16.msra.mxu0 0
  %3517 = vmatprep.subr.bf16.mxu0 0
  %3518 = vmatpush2.bf16.msra.mxu0 0
  %3519 = vmatprep.subr.bf16.mxu0 0
  %3520 = vmatpush2.bf16.msra.mxu0 0
  %3521 = vmatprep.subr.bf16.mxu0 0
  %3522 = vmatpush2.bf16.msra.mxu0 0
  %3523 = vmatprep.subr.bf16.mxu0 0
  %3524 = vmatpush2.bf16.msra.mxu0 0
  %3525 = vmatprep.subr.bf16.mxu0 0
  %3526 = vmatpush2.bf16.msra.mxu0 0
  %3527 = vmatprep.subr.bf16.mxu0 0
  %3528 = vmatpush2.bf16.msra.mxu0 %v119
  %3529 = vmatprep.subr.bf16.mxu0 0
  %3530 = vmatpush2.bf16.msra.mxu0 %v118
  %3531 = vmatprep.mubr.bf16.mxu0 %v3497
  %3532 = vmatmul.mubr.bf16.gmra.mxu0 %v3493
  %v3533 = vpop.f32.mrf.mxu0
  %v3534 = vadd.f32 0.0, %v3533
  %v3535 = vpop.f32.mrf.mxu0
  %v3536 = vpop.f32.mrf.mxu0
  %v3537 = vadd.f32 0.0, %v3536
  %v3538 = vpop.f32.mrf.mxu0
  %3539 = vdwg.mxu0
  %v3540 = vmax.f32 %v3482, %v3534
  %v3541 = vmax.f32 %v3483, %v3537
  %v3542 = vadd.f32 %v3540, %v354
  %v3543 = vadd.f32 %v3541, %v354
  %v3544 = vmax.f32 %v3542, 0.0
  %v3545 = vmax.f32 %v3543, 0.0
  %v3546 = vpack.c.bf16 %v3545, %v3544
  %s3547 = scalar_lea.vmem %s3, 88
  %v3548 = vld [vmem:[%s3547] sm:$0xf]
  %v3549 = vld [vmem:[%s3547 + $0x4] sm:$0xf]
  %v3552 = vunpack.c.l.b16 %v3548
  %v3553 = vunpack.c.l.b16 %v3549
  %v3554 = vpack.c.b16 %v3553, %v3552
  %v3557 = vsel %vm607, %v3546, 0
  %3559 = vmatprep.subr.bf16.mxu0 0
  %3560 = vmatpush1.bf16.msra.mxu0 0
  %3561 = vmatprep.subr.bf16.mxu0 0
  %3562 = vmatpush1.bf16.msra.mxu0 0
  %3563 = vmatprep.subr.bf16.mxu0 0
  %3564 = vmatpush1.bf16.msra.mxu0 0
  %3565 = vmatprep.subr.bf16.mxu0 0
  %3566 = vmatpush1.bf16.msra.mxu0 0
  %3567 = vmatprep.subr.bf16.mxu0 0
  %3568 = vmatpush1.bf16.msra.mxu0 0
  %3569 = vmatprep.subr.bf16.mxu0 0
  %3570 = vmatpush1.bf16.msra.mxu0 0
  %3571 = vmatprep.subr.bf16.mxu0 0
  %3572 = vmatpush1.bf16.msra.mxu0 0
  %3573 = vmatprep.subr.bf16.mxu0 0
  %3574 = vmatpush1.bf16.msra.mxu0 %v3554
  %3575 = vmatprep.subr.bf16.mxu0 0
  %3576 = vmatpush2.bf16.msra.mxu0 0
  %3577 = vmatprep.subr.bf16.mxu0 0
  %3578 = vmatpush2.bf16.msra.mxu0 0
  %3579 = vmatprep.subr.bf16.mxu0 0
  %3580 = vmatpush2.bf16.msra.mxu0 0
  %3581 = vmatprep.subr.bf16.mxu0 0
  %3582 = vmatpush2.bf16.msra.mxu0 0
  %3583 = vmatprep.subr.bf16.mxu0 0
  %3584 = vmatpush2.bf16.msra.mxu0 0
  %3585 = vmatprep.subr.bf16.mxu0 0
  %3586 = vmatpush2.bf16.msra.mxu0 0
  %3587 = vmatprep.subr.bf16.mxu0 0
  %3588 = vmatpush2.bf16.msra.mxu0 0
  %3589 = vmatprep.subr.bf16.mxu0 0
  %3590 = vmatpush2.bf16.msra.mxu0 0
  %3591 = vmatprep.mubr.bf16.mxu0 0
  %3592 = vmatmul.mubr.bf16.gmra.mxu0 %v3557
  %v3593 = vpop.f32.mrf.mxu0
  %v3594 = vadd.f32 0.0, %v3593
  %v3595 = vpop.f32.mrf.mxu0
  %v3596 = vpop.f32.mrf.mxu0
  %v3597 = vadd.f32 0.0, %v3596
  %v3598 = vpop.f32.mrf.mxu0
  %3599 = vdwg.mxu0
  %v3600 = vadd.f32 %v3310, %v3594
  %v3601 = vadd.f32 %v3311, %v3597
  %s3602 = scalar_lea.vmem %s0, 192
  %v3603 = vld [vmem:[%s3602] sm:$0xff]
  %v3604 = vld [vmem:[%s3602 + $0x8] sm:$0xff]
  %v3607 = vunpack.c.l.b16 %v3603
  %v3608 = vunpack.c.h.b16 %v3603
  %v3609 = vunpack.c.l.b16 %v3604
  %v3610 = vunpack.c.h.b16 %v3604
  %v3611 = vpack.c.b16 %v3609, %v3607
  %v3612 = vpack.c.b16 %v3610, %v3608
  %v3615 = vsel %vm130, %v3612, 0
  %3617 = vmatprep.subr.bf16.mxu0 0
  %3618 = vmatpush1.bf16.msra.mxu0 %v117
  %3619 = vmatprep.subr.bf16.mxu0 0
  %3620 = vmatpush1.bf16.msra.mxu0 %v116
  %3621 = vmatprep.subr.bf16.mxu0 0
  %3622 = vmatpush1.bf16.msra.mxu0 %v115
  %3623 = vmatprep.subr.bf16.mxu0 0
  %3624 = vmatpush1.bf16.msra.mxu0 %v114
  %3625 = vmatprep.subr.bf16.mxu0 0
  %3626 = vmatpush1.bf16.msra.mxu0 %v113
  %3627 = vmatprep.subr.bf16.mxu0 0
  %3628 = vmatpush1.bf16.msra.mxu0 %v112
  %3629 = vmatprep.subr.bf16.mxu0 0
  %3630 = vmatpush1.bf16.msra.mxu0 %v111
  %3631 = vmatprep.subr.bf16.mxu0 0
  %3632 = vmatpush1.bf16.msra.mxu0 %v110
  %3633 = vmatprep.subr.bf16.mxu0 0
  %3634 = vmatpush2.bf16.msra.mxu0 0
  %3635 = vmatprep.subr.bf16.mxu0 0
  %3636 = vmatpush2.bf16.msra.mxu0 0
  %3637 = vmatprep.subr.bf16.mxu0 0
  %3638 = vmatpush2.bf16.msra.mxu0 0
  %3639 = vmatprep.subr.bf16.mxu0 0
  %3640 = vmatpush2.bf16.msra.mxu0 0
  %3641 = vmatprep.subr.bf16.mxu0 0
  %3642 = vmatpush2.bf16.msra.mxu0 0
  %3643 = vmatprep.subr.bf16.mxu0 0
  %3644 = vmatpush2.bf16.msra.mxu0 0
  %3645 = vmatprep.subr.bf16.mxu0 0
  %3646 = vmatpush2.bf16.msra.mxu0 %v119
  %3647 = vmatprep.subr.bf16.mxu0 0
  %3648 = vmatpush2.bf16.msra.mxu0 %v118
  %3649 = vmatprep.mubr.bf16.mxu0 %v3615
  %3650 = vmatmul.mubr.bf16.gmra.mxu0 %v3611
  %v3651 = vpop.f32.mrf.mxu0
  %v3652 = vadd.f32 0.0, %v3651
  %v3653 = vpop.f32.mrf.mxu0
  %v3654 = vpop.f32.mrf.mxu0
  %v3655 = vadd.f32 0.0, %v3654
  %v3656 = vpop.f32.mrf.mxu0
  %3657 = vdwg.mxu0
  %s3658 = scalar_lea.vmem %s0, 592
  %v3659 = vld [vmem:[%s3658] sm:$0xff]
  %v3660 = vld [vmem:[%s3658 + $0x8] sm:$0xff]
  %v3663 = vunpack.c.l.b16 %v3659
  %v3664 = vunpack.c.h.b16 %v3659
  %v3665 = vunpack.c.l.b16 %v3660
  %v3666 = vunpack.c.h.b16 %v3660
  %v3667 = vpack.c.b16 %v3665, %v3663
  %v3668 = vpack.c.b16 %v3666, %v3664
  %v3671 = vsel %vm130, %v3668, 0
  %3673 = vmatprep.subr.bf16.mxu0 0
  %3674 = vmatpush1.bf16.msra.mxu0 %v117
  %3675 = vmatprep.subr.bf16.mxu0 0
  %3676 = vmatpush1.bf16.msra.mxu0 %v116
  %3677 = vmatprep.subr.bf16.mxu0 0
  %3678 = vmatpush1.bf16.msra.mxu0 %v115
  %3679 = vmatprep.subr.bf16.mxu0 0
  %3680 = vmatpush1.bf16.msra.mxu0 %v114
  %3681 = vmatprep.subr.bf16.mxu0 0
  %3682 = vmatpush1.bf16.msra.mxu0 %v113
  %3683 = vmatprep.subr.bf16.mxu0 0
  %3684 = vmatpush1.bf16.msra.mxu0 %v112
  %3685 = vmatprep.subr.bf16.mxu0 0
  %3686 = vmatpush1.bf16.msra.mxu0 %v111
  %3687 = vmatprep.subr.bf16.mxu0 0
  %3688 = vmatpush1.bf16.msra.mxu0 %v110
  %3689 = vmatprep.subr.bf16.mxu0 0
  %3690 = vmatpush2.bf16.msra.mxu0 0
  %3691 = vmatprep.subr.bf16.mxu0 0
  %3692 = vmatpush2.bf16.msra.mxu0 0
  %3693 = vmatprep.subr.bf16.mxu0 0
  %3694 = vmatpush2.bf16.msra.mxu0 0
  %3695 = vmatprep.subr.bf16.mxu0 0
  %3696 = vmatpush2.bf16.msra.mxu0 0
  %3697 = vmatprep.subr.bf16.mxu0 0
  %3698 = vmatpush2.bf16.msra.mxu0 0
  %3699 = vmatprep.subr.bf16.mxu0 0
  %3700 = vmatpush2.bf16.msra.mxu0 0
  %3701 = vmatprep.subr.bf16.mxu0 0
  %3702 = vmatpush2.bf16.msra.mxu0 %v119
  %3703 = vmatprep.subr.bf16.mxu0 0
  %3704 = vmatpush2.bf16.msra.mxu0 %v118
  %3705 = vmatprep.mubr.bf16.mxu0 %v3671
  %3706 = vmatmul.mubr.bf16.gmra.mxu0 %v3667
  %v3707 = vpop.f32.mrf.mxu0
  %v3708 = vadd.f32 0.0, %v3707
  %v3709 = vpop.f32.mrf.mxu0
  %v3710 = vpop.f32.mrf.mxu0
  %v3711 = vadd.f32 0.0, %v3710
  %v3712 = vpop.f32.mrf.mxu0
  %3713 = vdwg.mxu0
  %v3714 = vmax.f32 %v3652, %v3708
  %v3715 = vmax.f32 %v3655, %v3711
  %s3716 = scalar_lea.vmem %s0, 992
  %v3717 = vld [vmem:[%s3716] sm:$0xff]
  %v3718 = vld [vmem:[%s3716 + $0x8] sm:$0xff]
  %v3721 = vunpack.c.l.b16 %v3717
  %v3722 = vunpack.c.h.b16 %v3717
  %v3723 = vunpack.c.l.b16 %v3718
  %v3724 = vunpack.c.h.b16 %v3718
  %v3725 = vpack.c.b16 %v3723, %v3721
  %v3726 = vpack.c.b16 %v3724, %v3722
  %v3729 = vsel %vm130, %v3726, 0
  %3731 = vmatprep.subr.bf16.mxu0 0
  %3732 = vmatpush1.bf16.msra.mxu0 %v117
  %3733 = vmatprep.subr.bf16.mxu0 0
  %3734 = vmatpush1.bf16.msra.mxu0 %v116
  %3735 = vmatprep.subr.bf16.mxu0 0
  %3736 = vmatpush1.bf16.msra.mxu0 %v115
  %3737 = vmatprep.subr.bf16.mxu0 0
  %3738 = vmatpush1.bf16.msra.mxu0 %v114
  %3739 = vmatprep.subr.bf16.mxu0 0
  %3740 = vmatpush1.bf16.msra.mxu0 %v113
  %3741 = vmatprep.subr.bf16.mxu0 0
  %3742 = vmatpush1.bf16.msra.mxu0 %v112
  %3743 = vmatprep.subr.bf16.mxu0 0
  %3744 = vmatpush1.bf16.msra.mxu0 %v111
  %3745 = vmatprep.subr.bf16.mxu0 0
  %3746 = vmatpush1.bf16.msra.mxu0 %v110
  %3747 = vmatprep.subr.bf16.mxu0 0
  %3748 = vmatpush2.bf16.msra.mxu0 0
  %3749 = vmatprep.subr.bf16.mxu0 0
  %3750 = vmatpush2.bf16.msra.mxu0 0
  %3751 = vmatprep.subr.bf16.mxu0 0
  %3752 = vmatpush2.bf16.msra.mxu0 0
  %3753 = vmatprep.subr.bf16.mxu0 0
  %3754 = vmatpush2.bf16.msra.mxu0 0
  %3755 = vmatprep.subr.bf16.mxu0 0
  %3756 = vmatpush2.bf16.msra.mxu0 0
  %3757 = vmatprep.subr.bf16.mxu0 0
  %3758 = vmatpush2.bf16.msra.mxu0 0
  %3759 = vmatprep.subr.bf16.mxu0 0
  %3760 = vmatpush2.bf16.msra.mxu0 %v119
  %3761 = vmatprep.subr.bf16.mxu0 0
  %3762 = vmatpush2.bf16.msra.mxu0 %v118
  %3763 = vmatprep.mubr.bf16.mxu0 %v3729
  %3764 = vmatmul.mubr.bf16.gmra.mxu0 %v3725
  %v3765 = vpop.f32.mrf.mxu0
  %v3766 = vadd.f32 0.0, %v3765
  %v3767 = vpop.f32.mrf.mxu0
  %v3768 = vpop.f32.mrf.mxu0
  %v3769 = vadd.f32 0.0, %v3768
  %v3770 = vpop.f32.mrf.mxu0
  %3771 = vdwg.mxu0
  %v3772 = vmax.f32 %v3714, %v3766
  %v3773 = vmax.f32 %v3715, %v3769
  %s3774 = scalar_lea.vmem %s0, 1392
  %v3775 = vld [vmem:[%s3774] sm:$0xff]
  %v3776 = vld [vmem:[%s3774 + $0x8] sm:$0xff]
  %v3779 = vunpack.c.l.b16 %v3775
  %v3780 = vunpack.c.h.b16 %v3775
  %v3781 = vunpack.c.l.b16 %v3776
  %v3782 = vunpack.c.h.b16 %v3776
  %v3783 = vpack.c.b16 %v3781, %v3779
  %v3784 = vpack.c.b16 %v3782, %v3780
  %v3787 = vsel %vm130, %v3784, 0
  %3789 = vmatprep.subr.bf16.mxu0 0
  %3790 = vmatpush1.bf16.msra.mxu0 %v117
  %3791 = vmatprep.subr.bf16.mxu0 0
  %3792 = vmatpush1.bf16.msra.mxu0 %v116
  %3793 = vmatprep.subr.bf16.mxu0 0
  %3794 = vmatpush1.bf16.msra.mxu0 %v115
  %3795 = vmatprep.subr.bf16.mxu0 0
  %3796 = vmatpush1.bf16.msra.mxu0 %v114
  %3797 = vmatprep.subr.bf16.mxu0 0
  %3798 = vmatpush1.bf16.msra.mxu0 %v113
  %3799 = vmatprep.subr.bf16.mxu0 0
  %3800 = vmatpush1.bf16.msra.mxu0 %v112
  %3801 = vmatprep.subr.bf16.mxu0 0
  %3802 = vmatpush1.bf16.msra.mxu0 %v111
  %3803 = vmatprep.subr.bf16.mxu0 0
  %3804 = vmatpush1.bf16.msra.mxu0 %v110
  %3805 = vmatprep.subr.bf16.mxu0 0
  %3806 = vmatpush2.bf16.msra.mxu0 0
  %3807 = vmatprep.subr.bf16.mxu0 0
  %3808 = vmatpush2.bf16.msra.mxu0 0
  %3809 = vmatprep.subr.bf16.mxu0 0
  %3810 = vmatpush2.bf16.msra.mxu0 0
  %3811 = vmatprep.subr.bf16.mxu0 0
  %3812 = vmatpush2.bf16.msra.mxu0 0
  %3813 = vmatprep.subr.bf16.mxu0 0
  %3814 = vmatpush2.bf16.msra.mxu0 0
  %3815 = vmatprep.subr.bf16.mxu0 0
  %3816 = vmatpush2.bf16.msra.mxu0 0
  %3817 = vmatprep.subr.bf16.mxu0 0
  %3818 = vmatpush2.bf16.msra.mxu0 %v119
  %3819 = vmatprep.subr.bf16.mxu0 0
  %3820 = vmatpush2.bf16.msra.mxu0 %v118
  %3821 = vmatprep.mubr.bf16.mxu0 %v3787
  %3822 = vmatmul.mubr.bf16.gmra.mxu0 %v3783
  %v3823 = vpop.f32.mrf.mxu0
  %v3824 = vadd.f32 0.0, %v3823
  %v3825 = vpop.f32.mrf.mxu0
  %v3826 = vpop.f32.mrf.mxu0
  %v3827 = vadd.f32 0.0, %v3826
  %v3828 = vpop.f32.mrf.mxu0
  %3829 = vdwg.mxu0
  %v3830 = vmax.f32 %v3772, %v3824
  %v3831 = vmax.f32 %v3773, %v3827
  %v3832 = vadd.f32 %v3830, %v354
  %v3833 = vadd.f32 %v3831, %v354
  %v3834 = vmax.f32 %v3832, 0.0
  %v3835 = vmax.f32 %v3833, 0.0
  %v3836 = vpack.c.bf16 %v3835, %v3834
  %s3837 = scalar_lea.vmem %s3, 96
  %v3838 = vld [vmem:[%s3837] sm:$0xf]
  %v3839 = vld [vmem:[%s3837 + $0x4] sm:$0xf]
  %v3842 = vunpack.c.l.b16 %v3838
  %v3843 = vunpack.c.l.b16 %v3839
  %v3844 = vpack.c.b16 %v3843, %v3842
  %v3847 = vsel %vm607, %v3836, 0
  %3849 = vmatprep.subr.bf16.mxu0 0
  %3850 = vmatpush1.bf16.msra.mxu0 0
  %3851 = vmatprep.subr.bf16.mxu0 0
  %3852 = vmatpush1.bf16.msra.mxu0 0
  %3853 = vmatprep.subr.bf16.mxu0 0
  %3854 = vmatpush1.bf16.msra.mxu0 0
  %3855 = vmatprep.subr.bf16.mxu0 0
  %3856 = vmatpush1.bf16.msra.mxu0 0
  %3857 = vmatprep.subr.bf16.mxu0 0
  %3858 = vmatpush1.bf16.msra.mxu0 0
  %3859 = vmatprep.subr.bf16.mxu0 0
  %3860 = vmatpush1.bf16.msra.mxu0 0
  %3861 = vmatprep.subr.bf16.mxu0 0
  %3862 = vmatpush1.bf16.msra.mxu0 0
  %3863 = vmatprep.subr.bf16.mxu0 0
  %3864 = vmatpush1.bf16.msra.mxu0 %v3844
  %3865 = vmatprep.subr.bf16.mxu0 0
  %3866 = vmatpush2.bf16.msra.mxu0 0
  %3867 = vmatprep.subr.bf16.mxu0 0
  %3868 = vmatpush2.bf16.msra.mxu0 0
  %3869 = vmatprep.subr.bf16.mxu0 0
  %3870 = vmatpush2.bf16.msra.mxu0 0
  %3871 = vmatprep.subr.bf16.mxu0 0
  %3872 = vmatpush2.bf16.msra.mxu0 0
  %3873 = vmatprep.subr.bf16.mxu0 0
  %3874 = vmatpush2.bf16.msra.mxu0 0
  %3875 = vmatprep.subr.bf16.mxu0 0
  %3876 = vmatpush2.bf16.msra.mxu0 0
  %3877 = vmatprep.subr.bf16.mxu0 0
  %3878 = vmatpush2.bf16.msra.mxu0 0
  %3879 = vmatprep.subr.bf16.mxu0 0
  %3880 = vmatpush2.bf16.msra.mxu0 0
  %3881 = vmatprep.mubr.bf16.mxu0 0
  %3882 = vmatmul.mubr.bf16.gmra.mxu0 %v3847
  %v3883 = vpop.f32.mrf.mxu0
  %v3884 = vadd.f32 0.0, %v3883
  %v3885 = vpop.f32.mrf.mxu0
  %v3886 = vpop.f32.mrf.mxu0
  %v3887 = vadd.f32 0.0, %v3886
  %v3888 = vpop.f32.mrf.mxu0
  %3889 = vdwg.mxu0
  %v3890 = vadd.f32 %v3600, %v3884
  %v3891 = vadd.f32 %v3601, %v3887
  %s3892 = scalar_lea.vmem %s0, 208
  %v3893 = vld [vmem:[%s3892] sm:$0xff]
  %v3894 = vld [vmem:[%s3892 + $0x8] sm:$0xff]
  %v3897 = vunpack.c.l.b16 %v3893
  %v3898 = vunpack.c.h.b16 %v3893
  %v3899 = vunpack.c.l.b16 %v3894
  %v3900 = vunpack.c.h.b16 %v3894
  %v3901 = vpack.c.b16 %v3899, %v3897
  %v3902 = vpack.c.b16 %v3900, %v3898
  %v3905 = vsel %vm130, %v3902, 0
  %3907 = vmatprep.subr.bf16.mxu0 0
  %3908 = vmatpush1.bf16.msra.mxu0 %v117
  %3909 = vmatprep.subr.bf16.mxu0 0
  %3910 = vmatpush1.bf16.msra.mxu0 %v116
  %3911 = vmatprep.subr.bf16.mxu0 0
  %3912 = vmatpush1.bf16.msra.mxu0 %v115
  %3913 = vmatprep.subr.bf16.mxu0 0
  %3914 = vmatpush1.bf16.msra.mxu0 %v114
  %3915 = vmatprep.subr.bf16.mxu0 0
  %3916 = vmatpush1.bf16.msra.mxu0 %v113
  %3917 = vmatprep.subr.bf16.mxu0 0
  %3918 = vmatpush1.bf16.msra.mxu0 %v112
  %3919 = vmatprep.subr.bf16.mxu0 0
  %3920 = vmatpush1.bf16.msra.mxu0 %v111
  %3921 = vmatprep.subr.bf16.mxu0 0
  %3922 = vmatpush1.bf16.msra.mxu0 %v110
  %3923 = vmatprep.subr.bf16.mxu0 0
  %3924 = vmatpush2.bf16.msra.mxu0 0
  %3925 = vmatprep.subr.bf16.mxu0 0
  %3926 = vmatpush2.bf16.msra.mxu0 0
  %3927 = vmatprep.subr.bf16.mxu0 0
  %3928 = vmatpush2.bf16.msra.mxu0 0
  %3929 = vmatprep.subr.bf16.mxu0 0
  %3930 = vmatpush2.bf16.msra.mxu0 0
  %3931 = vmatprep.subr.bf16.mxu0 0
  %3932 = vmatpush2.bf16.msra.mxu0 0
  %3933 = vmatprep.subr.bf16.mxu0 0
  %3934 = vmatpush2.bf16.msra.mxu0 0
  %3935 = vmatprep.subr.bf16.mxu0 0
  %3936 = vmatpush2.bf16.msra.mxu0 %v119
  %3937 = vmatprep.subr.bf16.mxu0 0
  %3938 = vmatpush2.bf16.msra.mxu0 %v118
  %3939 = vmatprep.mubr.bf16.mxu0 %v3905
  %3940 = vmatmul.mubr.bf16.gmra.mxu0 %v3901
  %v3941 = vpop.f32.mrf.mxu0
  %v3942 = vadd.f32 0.0, %v3941
  %v3943 = vpop.f32.mrf.mxu0
  %v3944 = vpop.f32.mrf.mxu0
  %v3945 = vadd.f32 0.0, %v3944
  %v3946 = vpop.f32.mrf.mxu0
  %3947 = vdwg.mxu0
  %s3948 = scalar_lea.vmem %s0, 608
  %v3949 = vld [vmem:[%s3948] sm:$0xff]
  %v3950 = vld [vmem:[%s3948 + $0x8] sm:$0xff]
  %v3953 = vunpack.c.l.b16 %v3949
  %v3954 = vunpack.c.h.b16 %v3949
  %v3955 = vunpack.c.l.b16 %v3950
  %v3956 = vunpack.c.h.b16 %v3950
  %v3957 = vpack.c.b16 %v3955, %v3953
  %v3958 = vpack.c.b16 %v3956, %v3954
  %v3961 = vsel %vm130, %v3958, 0
  %3963 = vmatprep.subr.bf16.mxu0 0
  %3964 = vmatpush1.bf16.msra.mxu0 %v117
  %3965 = vmatprep.subr.bf16.mxu0 0
  %3966 = vmatpush1.bf16.msra.mxu0 %v116
  %3967 = vmatprep.subr.bf16.mxu0 0
  %3968 = vmatpush1.bf16.msra.mxu0 %v115
  %3969 = vmatprep.subr.bf16.mxu0 0
  %3970 = vmatpush1.bf16.msra.mxu0 %v114
  %3971 = vmatprep.subr.bf16.mxu0 0
  %3972 = vmatpush1.bf16.msra.mxu0 %v113
  %3973 = vmatprep.subr.bf16.mxu0 0
  %3974 = vmatpush1.bf16.msra.mxu0 %v112
  %3975 = vmatprep.subr.bf16.mxu0 0
  %3976 = vmatpush1.bf16.msra.mxu0 %v111
  %3977 = vmatprep.subr.bf16.mxu0 0
  %3978 = vmatpush1.bf16.msra.mxu0 %v110
  %3979 = vmatprep.subr.bf16.mxu0 0
  %3980 = vmatpush2.bf16.msra.mxu0 0
  %3981 = vmatprep.subr.bf16.mxu0 0
  %3982 = vmatpush2.bf16.msra.mxu0 0
  %3983 = vmatprep.subr.bf16.mxu0 0
  %3984 = vmatpush2.bf16.msra.mxu0 0
  %3985 = vmatprep.subr.bf16.mxu0 0
  %3986 = vmatpush2.bf16.msra.mxu0 0
  %3987 = vmatprep.subr.bf16.mxu0 0
  %3988 = vmatpush2.bf16.msra.mxu0 0
  %3989 = vmatprep.subr.bf16.mxu0 0
  %3990 = vmatpush2.bf16.msra.mxu0 0
  %3991 = vmatprep.subr.bf16.mxu0 0
  %3992 = vmatpush2.bf16.msra.mxu0 %v119
  %3993 = vmatprep.subr.bf16.mxu0 0
  %3994 = vmatpush2.bf16.msra.mxu0 %v118
  %3995 = vmatprep.mubr.bf16.mxu0 %v3961
  %3996 = vmatmul.mubr.bf16.gmra.mxu0 %v3957
  %v3997 = vpop.f32.mrf.mxu0
  %v3998 = vadd.f32 0.0, %v3997
  %v3999 = vpop.f32.mrf.mxu0
  %v4000 = vpop.f32.mrf.mxu0
  %v4001 = vadd.f32 0.0, %v4000
  %v4002 = vpop.f32.mrf.mxu0
  %4003 = vdwg.mxu0
  %v4004 = vmax.f32 %v3942, %v3998
  %v4005 = vmax.f32 %v3945, %v4001
  %s4006 = scalar_lea.vmem %s0, 1008
  %v4007 = vld [vmem:[%s4006] sm:$0xff]
  %v4008 = vld [vmem:[%s4006 + $0x8] sm:$0xff]
  %v4011 = vunpack.c.l.b16 %v4007
  %v4012 = vunpack.c.h.b16 %v4007
  %v4013 = vunpack.c.l.b16 %v4008
  %v4014 = vunpack.c.h.b16 %v4008
  %v4015 = vpack.c.b16 %v4013, %v4011
  %v4016 = vpack.c.b16 %v4014, %v4012
  %v4019 = vsel %vm130, %v4016, 0
  %4021 = vmatprep.subr.bf16.mxu0 0
  %4022 = vmatpush1.bf16.msra.mxu0 %v117
  %4023 = vmatprep.subr.bf16.mxu0 0
  %4024 = vmatpush1.bf16.msra.mxu0 %v116
  %4025 = vmatprep.subr.bf16.mxu0 0
  %4026 = vmatpush1.bf16.msra.mxu0 %v115
  %4027 = vmatprep.subr.bf16.mxu0 0
  %4028 = vmatpush1.bf16.msra.mxu0 %v114
  %4029 = vmatprep.subr.bf16.mxu0 0
  %4030 = vmatpush1.bf16.msra.mxu0 %v113
  %4031 = vmatprep.subr.bf16.mxu0 0
  %4032 = vmatpush1.bf16.msra.mxu0 %v112
  %4033 = vmatprep.subr.bf16.mxu0 0
  %4034 = vmatpush1.bf16.msra.mxu0 %v111
  %4035 = vmatprep.subr.bf16.mxu0 0
  %4036 = vmatpush1.bf16.msra.mxu0 %v110
  %4037 = vmatprep.subr.bf16.mxu0 0
  %4038 = vmatpush2.bf16.msra.mxu0 0
  %4039 = vmatprep.subr.bf16.mxu0 0
  %4040 = vmatpush2.bf16.msra.mxu0 0
  %4041 = vmatprep.subr.bf16.mxu0 0
  %4042 = vmatpush2.bf16.msra.mxu0 0
  %4043 = vmatprep.subr.bf16.mxu0 0
  %4044 = vmatpush2.bf16.msra.mxu0 0
  %4045 = vmatprep.subr.bf16.mxu0 0
  %4046 = vmatpush2.bf16.msra.mxu0 0
  %4047 = vmatprep.subr.bf16.mxu0 0
  %4048 = vmatpush2.bf16.msra.mxu0 0
  %4049 = vmatprep.subr.bf16.mxu0 0
  %4050 = vmatpush2.bf16.msra.mxu0 %v119
  %4051 = vmatprep.subr.bf16.mxu0 0
  %4052 = vmatpush2.bf16.msra.mxu0 %v118
  %4053 = vmatprep.mubr.bf16.mxu0 %v4019
  %4054 = vmatmul.mubr.bf16.gmra.mxu0 %v4015
  %v4055 = vpop.f32.mrf.mxu0
  %v4056 = vadd.f32 0.0, %v4055
  %v4057 = vpop.f32.mrf.mxu0
  %v4058 = vpop.f32.mrf.mxu0
  %v4059 = vadd.f32 0.0, %v4058
  %v4060 = vpop.f32.mrf.mxu0
  %4061 = vdwg.mxu0
  %v4062 = vmax.f32 %v4004, %v4056
  %v4063 = vmax.f32 %v4005, %v4059
  %s4064 = scalar_lea.vmem %s0, 1408
  %v4065 = vld [vmem:[%s4064] sm:$0xff]
  %v4066 = vld [vmem:[%s4064 + $0x8] sm:$0xff]
  %v4069 = vunpack.c.l.b16 %v4065
  %v4070 = vunpack.c.h.b16 %v4065
  %v4071 = vunpack.c.l.b16 %v4066
  %v4072 = vunpack.c.h.b16 %v4066
  %v4073 = vpack.c.b16 %v4071, %v4069
  %v4074 = vpack.c.b16 %v4072, %v4070
  %v4077 = vsel %vm130, %v4074, 0
  %4079 = vmatprep.subr.bf16.mxu0 0
  %4080 = vmatpush1.bf16.msra.mxu0 %v117
  %4081 = vmatprep.subr.bf16.mxu0 0
  %4082 = vmatpush1.bf16.msra.mxu0 %v116
  %4083 = vmatprep.subr.bf16.mxu0 0
  %4084 = vmatpush1.bf16.msra.mxu0 %v115
  %4085 = vmatprep.subr.bf16.mxu0 0
  %4086 = vmatpush1.bf16.msra.mxu0 %v114
  %4087 = vmatprep.subr.bf16.mxu0 0
  %4088 = vmatpush1.bf16.msra.mxu0 %v113
  %4089 = vmatprep.subr.bf16.mxu0 0
  %4090 = vmatpush1.bf16.msra.mxu0 %v112
  %4091 = vmatprep.subr.bf16.mxu0 0
  %4092 = vmatpush1.bf16.msra.mxu0 %v111
  %4093 = vmatprep.subr.bf16.mxu0 0
  %4094 = vmatpush1.bf16.msra.mxu0 %v110
  %4095 = vmatprep.subr.bf16.mxu0 0
  %4096 = vmatpush2.bf16.msra.mxu0 0
  %4097 = vmatprep.subr.bf16.mxu0 0
  %4098 = vmatpush2.bf16.msra.mxu0 0
  %4099 = vmatprep.subr.bf16.mxu0 0
  %4100 = vmatpush2.bf16.msra.mxu0 0
  %4101 = vmatprep.subr.bf16.mxu0 0
  %4102 = vmatpush2.bf16.msra.mxu0 0
  %4103 = vmatprep.subr.bf16.mxu0 0
  %4104 = vmatpush2.bf16.msra.mxu0 0
  %4105 = vmatprep.subr.bf16.mxu0 0
  %4106 = vmatpush2.bf16.msra.mxu0 0
  %4107 = vmatprep.subr.bf16.mxu0 0
  %4108 = vmatpush2.bf16.msra.mxu0 %v119
  %4109 = vmatprep.subr.bf16.mxu0 0
  %4110 = vmatpush2.bf16.msra.mxu0 %v118
  %4111 = vmatprep.mubr.bf16.mxu0 %v4077
  %4112 = vmatmul.mubr.bf16.gmra.mxu0 %v4073
  %v4113 = vpop.f32.mrf.mxu0
  %v4114 = vadd.f32 0.0, %v4113
  %v4115 = vpop.f32.mrf.mxu0
  %v4116 = vpop.f32.mrf.mxu0
  %v4117 = vadd.f32 0.0, %v4116
  %v4118 = vpop.f32.mrf.mxu0
  %4119 = vdwg.mxu0
  %v4120 = vmax.f32 %v4062, %v4114
  %v4121 = vmax.f32 %v4063, %v4117
  %v4122 = vadd.f32 %v4120, %v354
  %v4123 = vadd.f32 %v4121, %v354
  %v4124 = vmax.f32 %v4122, 0.0
  %v4125 = vmax.f32 %v4123, 0.0
  %v4126 = vpack.c.bf16 %v4125, %v4124
  %s4127 = scalar_lea.vmem %s3, 104
  %v4128 = vld [vmem:[%s4127] sm:$0xf]
  %v4129 = vld [vmem:[%s4127 + $0x4] sm:$0xf]
  %v4132 = vunpack.c.l.b16 %v4128
  %v4133 = vunpack.c.l.b16 %v4129
  %v4134 = vpack.c.b16 %v4133, %v4132
  %v4137 = vsel %vm607, %v4126, 0
  %4139 = vmatprep.subr.bf16.mxu0 0
  %4140 = vmatpush1.bf16.msra.mxu0 0
  %4141 = vmatprep.subr.bf16.mxu0 0
  %4142 = vmatpush1.bf16.msra.mxu0 0
  %4143 = vmatprep.subr.bf16.mxu0 0
  %4144 = vmatpush1.bf16.msra.mxu0 0
  %4145 = vmatprep.subr.bf16.mxu0 0
  %4146 = vmatpush1.bf16.msra.mxu0 0
  %4147 = vmatprep.subr.bf16.mxu0 0
  %4148 = vmatpush1.bf16.msra.mxu0 0
  %4149 = vmatprep.subr.bf16.mxu0 0
  %4150 = vmatpush1.bf16.msra.mxu0 0
  %4151 = vmatprep.subr.bf16.mxu0 0
  %4152 = vmatpush1.bf16.msra.mxu0 0
  %4153 = vmatprep.subr.bf16.mxu0 0
  %4154 = vmatpush1.bf16.msra.mxu0 %v4134
  %4155 = vmatprep.subr.bf16.mxu0 0
  %4156 = vmatpush2.bf16.msra.mxu0 0
  %4157 = vmatprep.subr.bf16.mxu0 0
  %4158 = vmatpush2.bf16.msra.mxu0 0
  %4159 = vmatprep.subr.bf16.mxu0 0
  %4160 = vmatpush2.bf16.msra.mxu0 0
  %4161 = vmatprep.subr.bf16.mxu0 0
  %4162 = vmatpush2.bf16.msra.mxu0 0
  %4163 = vmatprep.subr.bf16.mxu0 0
  %4164 = vmatpush2.bf16.msra.mxu0 0
  %4165 = vmatprep.subr.bf16.mxu0 0
  %4166 = vmatpush2.bf16.msra.mxu0 0
  %4167 = vmatprep.subr.bf16.mxu0 0
  %4168 = vmatpush2.bf16.msra.mxu0 0
  %4169 = vmatprep.subr.bf16.mxu0 0
  %4170 = vmatpush2.bf16.msra.mxu0 0
  %4171 = vmatprep.mubr.bf16.mxu0 0
  %4172 = vmatmul.mubr.bf16.gmra.mxu0 %v4137
  %v4173 = vpop.f32.mrf.mxu0
  %v4174 = vadd.f32 0.0, %v4173
  %v4175 = vpop.f32.mrf.mxu0
  %v4176 = vpop.f32.mrf.mxu0
  %v4177 = vadd.f32 0.0, %v4176
  %v4178 = vpop.f32.mrf.mxu0
  %4179 = vdwg.mxu0
  %v4180 = vadd.f32 %v3890, %v4174
  %v4181 = vadd.f32 %v3891, %v4177
  %s4182 = scalar_lea.vmem %s0, 224
  %v4183 = vld [vmem:[%s4182] sm:$0xff]
  %v4184 = vld [vmem:[%s4182 + $0x8] sm:$0xff]
  %v4187 = vunpack.c.l.b16 %v4183
  %v4188 = vunpack.c.h.b16 %v4183
  %v4189 = vunpack.c.l.b16 %v4184
  %v4190 = vunpack.c.h.b16 %v4184
  %v4191 = vpack.c.b16 %v4189, %v4187
  %v4192 = vpack.c.b16 %v4190, %v4188
  %v4195 = vsel %vm130, %v4192, 0
  %4197 = vmatprep.subr.bf16.mxu0 0
  %4198 = vmatpush1.bf16.msra.mxu0 %v117
  %4199 = vmatprep.subr.bf16.mxu0 0
  %4200 = vmatpush1.bf16.msra.mxu0 %v116
  %4201 = vmatprep.subr.bf16.mxu0 0
  %4202 = vmatpush1.bf16.msra.mxu0 %v115
  %4203 = vmatprep.subr.bf16.mxu0 0
  %4204 = vmatpush1.bf16.msra.mxu0 %v114
  %4205 = vmatprep.subr.bf16.mxu0 0
  %4206 = vmatpush1.bf16.msra.mxu0 %v113
  %4207 = vmatprep.subr.bf16.mxu0 0
  %4208 = vmatpush1.bf16.msra.mxu0 %v112
  %4209 = vmatprep.subr.bf16.mxu0 0
  %4210 = vmatpush1.bf16.msra.mxu0 %v111
  %4211 = vmatprep.subr.bf16.mxu0 0
  %4212 = vmatpush1.bf16.msra.mxu0 %v110
  %4213 = vmatprep.subr.bf16.mxu0 0
  %4214 = vmatpush2.bf16.msra.mxu0 0
  %4215 = vmatprep.subr.bf16.mxu0 0
  %4216 = vmatpush2.bf16.msra.mxu0 0
  %4217 = vmatprep.subr.bf16.mxu0 0
  %4218 = vmatpush2.bf16.msra.mxu0 0
  %4219 = vmatprep.subr.bf16.mxu0 0
  %4220 = vmatpush2.bf16.msra.mxu0 0
  %4221 = vmatprep.subr.bf16.mxu0 0
  %4222 = vmatpush2.bf16.msra.mxu0 0
  %4223 = vmatprep.subr.bf16.mxu0 0
  %4224 = vmatpush2.bf16.msra.mxu0 0
  %4225 = vmatprep.subr.bf16.mxu0 0
  %4226 = vmatpush2.bf16.msra.mxu0 %v119
  %4227 = vmatprep.subr.bf16.mxu0 0
  %4228 = vmatpush2.bf16.msra.mxu0 %v118
  %4229 = vmatprep.mubr.bf16.mxu0 %v4195
  %4230 = vmatmul.mubr.bf16.gmra.mxu0 %v4191
  %v4231 = vpop.f32.mrf.mxu0
  %v4232 = vadd.f32 0.0, %v4231
  %v4233 = vpop.f32.mrf.mxu0
  %v4234 = vpop.f32.mrf.mxu0
  %v4235 = vadd.f32 0.0, %v4234
  %v4236 = vpop.f32.mrf.mxu0
  %4237 = vdwg.mxu0
  %s4238 = scalar_lea.vmem %s0, 624
  %v4239 = vld [vmem:[%s4238] sm:$0xff]
  %v4240 = vld [vmem:[%s4238 + $0x8] sm:$0xff]
  %v4243 = vunpack.c.l.b16 %v4239
  %v4244 = vunpack.c.h.b16 %v4239
  %v4245 = vunpack.c.l.b16 %v4240
  %v4246 = vunpack.c.h.b16 %v4240
  %v4247 = vpack.c.b16 %v4245, %v4243
  %v4248 = vpack.c.b16 %v4246, %v4244
  %v4251 = vsel %vm130, %v4248, 0
  %4253 = vmatprep.subr.bf16.mxu0 0
  %4254 = vmatpush1.bf16.msra.mxu0 %v117
  %4255 = vmatprep.subr.bf16.mxu0 0
  %4256 = vmatpush1.bf16.msra.mxu0 %v116
  %4257 = vmatprep.subr.bf16.mxu0 0
  %4258 = vmatpush1.bf16.msra.mxu0 %v115
  %4259 = vmatprep.subr.bf16.mxu0 0
  %4260 = vmatpush1.bf16.msra.mxu0 %v114
  %4261 = vmatprep.subr.bf16.mxu0 0
  %4262 = vmatpush1.bf16.msra.mxu0 %v113
  %4263 = vmatprep.subr.bf16.mxu0 0
  %4264 = vmatpush1.bf16.msra.mxu0 %v112
  %4265 = vmatprep.subr.bf16.mxu0 0
  %4266 = vmatpush1.bf16.msra.mxu0 %v111
  %4267 = vmatprep.subr.bf16.mxu0 0
  %4268 = vmatpush1.bf16.msra.mxu0 %v110
  %4269 = vmatprep.subr.bf16.mxu0 0
  %4270 = vmatpush2.bf16.msra.mxu0 0
  %4271 = vmatprep.subr.bf16.mxu0 0
  %4272 = vmatpush2.bf16.msra.mxu0 0
  %4273 = vmatprep.subr.bf16.mxu0 0
  %4274 = vmatpush2.bf16.msra.mxu0 0
  %4275 = vmatprep.subr.bf16.mxu0 0
  %4276 = vmatpush2.bf16.msra.mxu0 0
  %4277 = vmatprep.subr.bf16.mxu0 0
  %4278 = vmatpush2.bf16.msra.mxu0 0
  %4279 = vmatprep.subr.bf16.mxu0 0
  %4280 = vmatpush2.bf16.msra.mxu0 0
  %4281 = vmatprep.subr.bf16.mxu0 0
  %4282 = vmatpush2.bf16.msra.mxu0 %v119
  %4283 = vmatprep.subr.bf16.mxu0 0
  %4284 = vmatpush2.bf16.msra.mxu0 %v118
  %4285 = vmatprep.mubr.bf16.mxu0 %v4251
  %4286 = vmatmul.mubr.bf16.gmra.mxu0 %v4247
  %v4287 = vpop.f32.mrf.mxu0
  %v4288 = vadd.f32 0.0, %v4287
  %v4289 = vpop.f32.mrf.mxu0
  %v4290 = vpop.f32.mrf.mxu0
  %v4291 = vadd.f32 0.0, %v4290
  %v4292 = vpop.f32.mrf.mxu0
  %4293 = vdwg.mxu0
  %v4294 = vmax.f32 %v4232, %v4288
  %v4295 = vmax.f32 %v4235, %v4291
  %s4296 = scalar_lea.vmem %s0, 1024
  %v4297 = vld [vmem:[%s4296] sm:$0xff]
  %v4298 = vld [vmem:[%s4296 + $0x8] sm:$0xff]
  %v4301 = vunpack.c.l.b16 %v4297
  %v4302 = vunpack.c.h.b16 %v4297
  %v4303 = vunpack.c.l.b16 %v4298
  %v4304 = vunpack.c.h.b16 %v4298
  %v4305 = vpack.c.b16 %v4303, %v4301
  %v4306 = vpack.c.b16 %v4304, %v4302
  %v4309 = vsel %vm130, %v4306, 0
  %4311 = vmatprep.subr.bf16.mxu0 0
  %4312 = vmatpush1.bf16.msra.mxu0 %v117
  %4313 = vmatprep.subr.bf16.mxu0 0
  %4314 = vmatpush1.bf16.msra.mxu0 %v116
  %4315 = vmatprep.subr.bf16.mxu0 0
  %4316 = vmatpush1.bf16.msra.mxu0 %v115
  %4317 = vmatprep.subr.bf16.mxu0 0
  %4318 = vmatpush1.bf16.msra.mxu0 %v114
  %4319 = vmatprep.subr.bf16.mxu0 0
  %4320 = vmatpush1.bf16.msra.mxu0 %v113
  %4321 = vmatprep.subr.bf16.mxu0 0
  %4322 = vmatpush1.bf16.msra.mxu0 %v112
  %4323 = vmatprep.subr.bf16.mxu0 0
  %4324 = vmatpush1.bf16.msra.mxu0 %v111
  %4325 = vmatprep.subr.bf16.mxu0 0
  %4326 = vmatpush1.bf16.msra.mxu0 %v110
  %4327 = vmatprep.subr.bf16.mxu0 0
  %4328 = vmatpush2.bf16.msra.mxu0 0
  %4329 = vmatprep.subr.bf16.mxu0 0
  %4330 = vmatpush2.bf16.msra.mxu0 0
  %4331 = vmatprep.subr.bf16.mxu0 0
  %4332 = vmatpush2.bf16.msra.mxu0 0
  %4333 = vmatprep.subr.bf16.mxu0 0
  %4334 = vmatpush2.bf16.msra.mxu0 0
  %4335 = vmatprep.subr.bf16.mxu0 0
  %4336 = vmatpush2.bf16.msra.mxu0 0
  %4337 = vmatprep.subr.bf16.mxu0 0
  %4338 = vmatpush2.bf16.msra.mxu0 0
  %4339 = vmatprep.subr.bf16.mxu0 0
  %4340 = vmatpush2.bf16.msra.mxu0 %v119
  %4341 = vmatprep.subr.bf16.mxu0 0
  %4342 = vmatpush2.bf16.msra.mxu0 %v118
  %4343 = vmatprep.mubr.bf16.mxu0 %v4309
  %4344 = vmatmul.mubr.bf16.gmra.mxu0 %v4305
  %v4345 = vpop.f32.mrf.mxu0
  %v4346 = vadd.f32 0.0, %v4345
  %v4347 = vpop.f32.mrf.mxu0
  %v4348 = vpop.f32.mrf.mxu0
  %v4349 = vadd.f32 0.0, %v4348
  %v4350 = vpop.f32.mrf.mxu0
  %4351 = vdwg.mxu0
  %v4352 = vmax.f32 %v4294, %v4346
  %v4353 = vmax.f32 %v4295, %v4349
  %s4354 = scalar_lea.vmem %s0, 1424
  %v4355 = vld [vmem:[%s4354] sm:$0xff]
  %v4356 = vld [vmem:[%s4354 + $0x8] sm:$0xff]
  %v4359 = vunpack.c.l.b16 %v4355
  %v4360 = vunpack.c.h.b16 %v4355
  %v4361 = vunpack.c.l.b16 %v4356
  %v4362 = vunpack.c.h.b16 %v4356
  %v4363 = vpack.c.b16 %v4361, %v4359
  %v4364 = vpack.c.b16 %v4362, %v4360
  %v4367 = vsel %vm130, %v4364, 0
  %4369 = vmatprep.subr.bf16.mxu0 0
  %4370 = vmatpush1.bf16.msra.mxu0 %v117
  %4371 = vmatprep.subr.bf16.mxu0 0
  %4372 = vmatpush1.bf16.msra.mxu0 %v116
  %4373 = vmatprep.subr.bf16.mxu0 0
  %4374 = vmatpush1.bf16.msra.mxu0 %v115
  %4375 = vmatprep.subr.bf16.mxu0 0
  %4376 = vmatpush1.bf16.msra.mxu0 %v114
  %4377 = vmatprep.subr.bf16.mxu0 0
  %4378 = vmatpush1.bf16.msra.mxu0 %v113
  %4379 = vmatprep.subr.bf16.mxu0 0
  %4380 = vmatpush1.bf16.msra.mxu0 %v112
  %4381 = vmatprep.subr.bf16.mxu0 0
  %4382 = vmatpush1.bf16.msra.mxu0 %v111
  %4383 = vmatprep.subr.bf16.mxu0 0
  %4384 = vmatpush1.bf16.msra.mxu0 %v110
  %4385 = vmatprep.subr.bf16.mxu0 0
  %4386 = vmatpush2.bf16.msra.mxu0 0
  %4387 = vmatprep.subr.bf16.mxu0 0
  %4388 = vmatpush2.bf16.msra.mxu0 0
  %4389 = vmatprep.subr.bf16.mxu0 0
  %4390 = vmatpush2.bf16.msra.mxu0 0
  %4391 = vmatprep.subr.bf16.mxu0 0
  %4392 = vmatpush2.bf16.msra.mxu0 0
  %4393 = vmatprep.subr.bf16.mxu0 0
  %4394 = vmatpush2.bf16.msra.mxu0 0
  %4395 = vmatprep.subr.bf16.mxu0 0
  %4396 = vmatpush2.bf16.msra.mxu0 0
  %4397 = vmatprep.subr.bf16.mxu0 0
  %4398 = vmatpush2.bf16.msra.mxu0 %v119
  %4399 = vmatprep.subr.bf16.mxu0 0
  %4400 = vmatpush2.bf16.msra.mxu0 %v118
  %4401 = vmatprep.mubr.bf16.mxu0 %v4367
  %4402 = vmatmul.mubr.bf16.gmra.mxu0 %v4363
  %v4403 = vpop.f32.mrf.mxu0
  %v4404 = vadd.f32 0.0, %v4403
  %v4405 = vpop.f32.mrf.mxu0
  %v4406 = vpop.f32.mrf.mxu0
  %v4407 = vadd.f32 0.0, %v4406
  %v4408 = vpop.f32.mrf.mxu0
  %4409 = vdwg.mxu0
  %v4410 = vmax.f32 %v4352, %v4404
  %v4411 = vmax.f32 %v4353, %v4407
  %v4412 = vadd.f32 %v4410, %v354
  %v4413 = vadd.f32 %v4411, %v354
  %v4414 = vmax.f32 %v4412, 0.0
  %v4415 = vmax.f32 %v4413, 0.0
  %v4416 = vpack.c.bf16 %v4415, %v4414
  %s4417 = scalar_lea.vmem %s3, 112
  %v4418 = vld [vmem:[%s4417] sm:$0xf]
  %v4419 = vld [vmem:[%s4417 + $0x4] sm:$0xf]
  %v4422 = vunpack.c.l.b16 %v4418
  %v4423 = vunpack.c.l.b16 %v4419
  %v4424 = vpack.c.b16 %v4423, %v4422
  %v4427 = vsel %vm607, %v4416, 0
  %4429 = vmatprep.subr.bf16.mxu0 0
  %4430 = vmatpush1.bf16.msra.mxu0 0
  %4431 = vmatprep.subr.bf16.mxu0 0
  %4432 = vmatpush1.bf16.msra.mxu0 0
  %4433 = vmatprep.subr.bf16.mxu0 0
  %4434 = vmatpush1.bf16.msra.mxu0 0
  %4435 = vmatprep.subr.bf16.mxu0 0
  %4436 = vmatpush1.bf16.msra.mxu0 0
  %4437 = vmatprep.subr.bf16.mxu0 0
  %4438 = vmatpush1.bf16.msra.mxu0 0
  %4439 = vmatprep.subr.bf16.mxu0 0
  %4440 = vmatpush1.bf16.msra.mxu0 0
  %4441 = vmatprep.subr.bf16.mxu0 0
  %4442 = vmatpush1.bf16.msra.mxu0 0
  %4443 = vmatprep.subr.bf16.mxu0 0
  %4444 = vmatpush1.bf16.msra.mxu0 %v4424
  %4445 = vmatprep.subr.bf16.mxu0 0
  %4446 = vmatpush2.bf16.msra.mxu0 0
  %4447 = vmatprep.subr.bf16.mxu0 0
  %4448 = vmatpush2.bf16.msra.mxu0 0
  %4449 = vmatprep.subr.bf16.mxu0 0
  %4450 = vmatpush2.bf16.msra.mxu0 0
  %4451 = vmatprep.subr.bf16.mxu0 0
  %4452 = vmatpush2.bf16.msra.mxu0 0
  %4453 = vmatprep.subr.bf16.mxu0 0
  %4454 = vmatpush2.bf16.msra.mxu0 0
  %4455 = vmatprep.subr.bf16.mxu0 0
  %4456 = vmatpush2.bf16.msra.mxu0 0
  %4457 = vmatprep.subr.bf16.mxu0 0
  %4458 = vmatpush2.bf16.msra.mxu0 0
  %4459 = vmatprep.subr.bf16.mxu0 0
  %4460 = vmatpush2.bf16.msra.mxu0 0
  %4461 = vmatprep.mubr.bf16.mxu0 0
  %4462 = vmatmul.mubr.bf16.gmra.mxu0 %v4427
  %v4463 = vpop.f32.mrf.mxu0
  %v4464 = vadd.f32 0.0, %v4463
  %v4465 = vpop.f32.mrf.mxu0
  %v4466 = vpop.f32.mrf.mxu0
  %v4467 = vadd.f32 0.0, %v4466
  %v4468 = vpop.f32.mrf.mxu0
  %4469 = vdwg.mxu0
  %v4470 = vadd.f32 %v4180, %v4464
  %v4471 = vadd.f32 %v4181, %v4467
  %s4472 = scalar_lea.vmem %s0, 240
  %v4473 = vld [vmem:[%s4472] sm:$0xff]
  %v4474 = vld [vmem:[%s4472 + $0x8] sm:$0xff]
  %v4477 = vunpack.c.l.b16 %v4473
  %v4478 = vunpack.c.h.b16 %v4473
  %v4479 = vunpack.c.l.b16 %v4474
  %v4480 = vunpack.c.h.b16 %v4474
  %v4481 = vpack.c.b16 %v4479, %v4477
  %v4482 = vpack.c.b16 %v4480, %v4478
  %v4485 = vsel %vm130, %v4482, 0
  %4487 = vmatprep.subr.bf16.mxu0 0
  %4488 = vmatpush1.bf16.msra.mxu0 %v117
  %4489 = vmatprep.subr.bf16.mxu0 0
  %4490 = vmatpush1.bf16.msra.mxu0 %v116
  %4491 = vmatprep.subr.bf16.mxu0 0
  %4492 = vmatpush1.bf16.msra.mxu0 %v115
  %4493 = vmatprep.subr.bf16.mxu0 0
  %4494 = vmatpush1.bf16.msra.mxu0 %v114
  %4495 = vmatprep.subr.bf16.mxu0 0
  %4496 = vmatpush1.bf16.msra.mxu0 %v113
  %4497 = vmatprep.subr.bf16.mxu0 0
  %4498 = vmatpush1.bf16.msra.mxu0 %v112
  %4499 = vmatprep.subr.bf16.mxu0 0
  %4500 = vmatpush1.bf16.msra.mxu0 %v111
  %4501 = vmatprep.subr.bf16.mxu0 0
  %4502 = vmatpush1.bf16.msra.mxu0 %v110
  %4503 = vmatprep.subr.bf16.mxu0 0
  %4504 = vmatpush2.bf16.msra.mxu0 0
  %4505 = vmatprep.subr.bf16.mxu0 0
  %4506 = vmatpush2.bf16.msra.mxu0 0
  %4507 = vmatprep.subr.bf16.mxu0 0
  %4508 = vmatpush2.bf16.msra.mxu0 0
  %4509 = vmatprep.subr.bf16.mxu0 0
  %4510 = vmatpush2.bf16.msra.mxu0 0
  %4511 = vmatprep.subr.bf16.mxu0 0
  %4512 = vmatpush2.bf16.msra.mxu0 0
  %4513 = vmatprep.subr.bf16.mxu0 0
  %4514 = vmatpush2.bf16.msra.mxu0 0
  %4515 = vmatprep.subr.bf16.mxu0 0
  %4516 = vmatpush2.bf16.msra.mxu0 %v119
  %4517 = vmatprep.subr.bf16.mxu0 0
  %4518 = vmatpush2.bf16.msra.mxu0 %v118
  %4519 = vmatprep.mubr.bf16.mxu0 %v4485
  %4520 = vmatmul.mubr.bf16.gmra.mxu0 %v4481
  %v4521 = vpop.f32.mrf.mxu0
  %v4522 = vadd.f32 0.0, %v4521
  %v4523 = vpop.f32.mrf.mxu0
  %v4524 = vpop.f32.mrf.mxu0
  %v4525 = vadd.f32 0.0, %v4524
  %v4526 = vpop.f32.mrf.mxu0
  %4527 = vdwg.mxu0
  %s4528 = scalar_lea.vmem %s0, 640
  %v4529 = vld [vmem:[%s4528] sm:$0xff]
  %v4530 = vld [vmem:[%s4528 + $0x8] sm:$0xff]
  %v4533 = vunpack.c.l.b16 %v4529
  %v4534 = vunpack.c.h.b16 %v4529
  %v4535 = vunpack.c.l.b16 %v4530
  %v4536 = vunpack.c.h.b16 %v4530
  %v4537 = vpack.c.b16 %v4535, %v4533
  %v4538 = vpack.c.b16 %v4536, %v4534
  %v4541 = vsel %vm130, %v4538, 0
  %4543 = vmatprep.subr.bf16.mxu0 0
  %4544 = vmatpush1.bf16.msra.mxu0 %v117
  %4545 = vmatprep.subr.bf16.mxu0 0
  %4546 = vmatpush1.bf16.msra.mxu0 %v116
  %4547 = vmatprep.subr.bf16.mxu0 0
  %4548 = vmatpush1.bf16.msra.mxu0 %v115
  %4549 = vmatprep.subr.bf16.mxu0 0
  %4550 = vmatpush1.bf16.msra.mxu0 %v114
  %4551 = vmatprep.subr.bf16.mxu0 0
  %4552 = vmatpush1.bf16.msra.mxu0 %v113
  %4553 = vmatprep.subr.bf16.mxu0 0
  %4554 = vmatpush1.bf16.msra.mxu0 %v112
  %4555 = vmatprep.subr.bf16.mxu0 0
  %4556 = vmatpush1.bf16.msra.mxu0 %v111
  %4557 = vmatprep.subr.bf16.mxu0 0
  %4558 = vmatpush1.bf16.msra.mxu0 %v110
  %4559 = vmatprep.subr.bf16.mxu0 0
  %4560 = vmatpush2.bf16.msra.mxu0 0
  %4561 = vmatprep.subr.bf16.mxu0 0
  %4562 = vmatpush2.bf16.msra.mxu0 0
  %4563 = vmatprep.subr.bf16.mxu0 0
  %4564 = vmatpush2.bf16.msra.mxu0 0
  %4565 = vmatprep.subr.bf16.mxu0 0
  %4566 = vmatpush2.bf16.msra.mxu0 0
  %4567 = vmatprep.subr.bf16.mxu0 0
  %4568 = vmatpush2.bf16.msra.mxu0 0
  %4569 = vmatprep.subr.bf16.mxu0 0
  %4570 = vmatpush2.bf16.msra.mxu0 0
  %4571 = vmatprep.subr.bf16.mxu0 0
  %4572 = vmatpush2.bf16.msra.mxu0 %v119
  %4573 = vmatprep.subr.bf16.mxu0 0
  %4574 = vmatpush2.bf16.msra.mxu0 %v118
  %4575 = vmatprep.mubr.bf16.mxu0 %v4541
  %4576 = vmatmul.mubr.bf16.gmra.mxu0 %v4537
  %v4577 = vpop.f32.mrf.mxu0
  %v4578 = vadd.f32 0.0, %v4577
  %v4579 = vpop.f32.mrf.mxu0
  %v4580 = vpop.f32.mrf.mxu0
  %v4581 = vadd.f32 0.0, %v4580
  %v4582 = vpop.f32.mrf.mxu0
  %4583 = vdwg.mxu0
  %v4584 = vmax.f32 %v4522, %v4578
  %v4585 = vmax.f32 %v4525, %v4581
  %s4586 = scalar_lea.vmem %s0, 1040
  %v4587 = vld [vmem:[%s4586] sm:$0xff]
  %v4588 = vld [vmem:[%s4586 + $0x8] sm:$0xff]
  %v4591 = vunpack.c.l.b16 %v4587
  %v4592 = vunpack.c.h.b16 %v4587
  %v4593 = vunpack.c.l.b16 %v4588
  %v4594 = vunpack.c.h.b16 %v4588
  %v4595 = vpack.c.b16 %v4593, %v4591
  %v4596 = vpack.c.b16 %v4594, %v4592
  %v4599 = vsel %vm130, %v4596, 0
  %4601 = vmatprep.subr.bf16.mxu0 0
  %4602 = vmatpush1.bf16.msra.mxu0 %v117
  %4603 = vmatprep.subr.bf16.mxu0 0
  %4604 = vmatpush1.bf16.msra.mxu0 %v116
  %4605 = vmatprep.subr.bf16.mxu0 0
  %4606 = vmatpush1.bf16.msra.mxu0 %v115
  %4607 = vmatprep.subr.bf16.mxu0 0
  %4608 = vmatpush1.bf16.msra.mxu0 %v114
  %4609 = vmatprep.subr.bf16.mxu0 0
  %4610 = vmatpush1.bf16.msra.mxu0 %v113
  %4611 = vmatprep.subr.bf16.mxu0 0
  %4612 = vmatpush1.bf16.msra.mxu0 %v112
  %4613 = vmatprep.subr.bf16.mxu0 0
  %4614 = vmatpush1.bf16.msra.mxu0 %v111
  %4615 = vmatprep.subr.bf16.mxu0 0
  %4616 = vmatpush1.bf16.msra.mxu0 %v110
  %4617 = vmatprep.subr.bf16.mxu0 0
  %4618 = vmatpush2.bf16.msra.mxu0 0
  %4619 = vmatprep.subr.bf16.mxu0 0
  %4620 = vmatpush2.bf16.msra.mxu0 0
  %4621 = vmatprep.subr.bf16.mxu0 0
  %4622 = vmatpush2.bf16.msra.mxu0 0
  %4623 = vmatprep.subr.bf16.mxu0 0
  %4624 = vmatpush2.bf16.msra.mxu0 0
  %4625 = vmatprep.subr.bf16.mxu0 0
  %4626 = vmatpush2.bf16.msra.mxu0 0
  %4627 = vmatprep.subr.bf16.mxu0 0
  %4628 = vmatpush2.bf16.msra.mxu0 0
  %4629 = vmatprep.subr.bf16.mxu0 0
  %4630 = vmatpush2.bf16.msra.mxu0 %v119
  %4631 = vmatprep.subr.bf16.mxu0 0
  %4632 = vmatpush2.bf16.msra.mxu0 %v118
  %4633 = vmatprep.mubr.bf16.mxu0 %v4599
  %4634 = vmatmul.mubr.bf16.gmra.mxu0 %v4595
  %v4635 = vpop.f32.mrf.mxu0
  %v4636 = vadd.f32 0.0, %v4635
  %v4637 = vpop.f32.mrf.mxu0
  %v4638 = vpop.f32.mrf.mxu0
  %v4639 = vadd.f32 0.0, %v4638
  %v4640 = vpop.f32.mrf.mxu0
  %4641 = vdwg.mxu0
  %v4642 = vmax.f32 %v4584, %v4636
  %v4643 = vmax.f32 %v4585, %v4639
  %s4644 = scalar_lea.vmem %s0, 1440
  %v4645 = vld [vmem:[%s4644] sm:$0xff]
  %v4646 = vld [vmem:[%s4644 + $0x8] sm:$0xff]
  %v4649 = vunpack.c.l.b16 %v4645
  %v4650 = vunpack.c.h.b16 %v4645
  %v4651 = vunpack.c.l.b16 %v4646
  %v4652 = vunpack.c.h.b16 %v4646
  %v4653 = vpack.c.b16 %v4651, %v4649
  %v4654 = vpack.c.b16 %v4652, %v4650
  %v4657 = vsel %vm130, %v4654, 0
  %4659 = vmatprep.subr.bf16.mxu0 0
  %4660 = vmatpush1.bf16.msra.mxu0 %v117
  %4661 = vmatprep.subr.bf16.mxu0 0
  %4662 = vmatpush1.bf16.msra.mxu0 %v116
  %4663 = vmatprep.subr.bf16.mxu0 0
  %4664 = vmatpush1.bf16.msra.mxu0 %v115
  %4665 = vmatprep.subr.bf16.mxu0 0
  %4666 = vmatpush1.bf16.msra.mxu0 %v114
  %4667 = vmatprep.subr.bf16.mxu0 0
  %4668 = vmatpush1.bf16.msra.mxu0 %v113
  %4669 = vmatprep.subr.bf16.mxu0 0
  %4670 = vmatpush1.bf16.msra.mxu0 %v112
  %4671 = vmatprep.subr.bf16.mxu0 0
  %4672 = vmatpush1.bf16.msra.mxu0 %v111
  %4673 = vmatprep.subr.bf16.mxu0 0
  %4674 = vmatpush1.bf16.msra.mxu0 %v110
  %4675 = vmatprep.subr.bf16.mxu0 0
  %4676 = vmatpush2.bf16.msra.mxu0 0
  %4677 = vmatprep.subr.bf16.mxu0 0
  %4678 = vmatpush2.bf16.msra.mxu0 0
  %4679 = vmatprep.subr.bf16.mxu0 0
  %4680 = vmatpush2.bf16.msra.mxu0 0
  %4681 = vmatprep.subr.bf16.mxu0 0
  %4682 = vmatpush2.bf16.msra.mxu0 0
  %4683 = vmatprep.subr.bf16.mxu0 0
  %4684 = vmatpush2.bf16.msra.mxu0 0
  %4685 = vmatprep.subr.bf16.mxu0 0
  %4686 = vmatpush2.bf16.msra.mxu0 0
  %4687 = vmatprep.subr.bf16.mxu0 0
  %4688 = vmatpush2.bf16.msra.mxu0 %v119
  %4689 = vmatprep.subr.bf16.mxu0 0
  %4690 = vmatpush2.bf16.msra.mxu0 %v118
  %4691 = vmatprep.mubr.bf16.mxu0 %v4657
  %4692 = vmatmul.mubr.bf16.gmra.mxu0 %v4653
  %v4693 = vpop.f32.mrf.mxu0
  %v4694 = vadd.f32 0.0, %v4693
  %v4695 = vpop.f32.mrf.mxu0
  %v4696 = vpop.f32.mrf.mxu0
  %v4697 = vadd.f32 0.0, %v4696
  %v4698 = vpop.f32.mrf.mxu0
  %4699 = vdwg.mxu0
  %v4700 = vmax.f32 %v4642, %v4694
  %v4701 = vmax.f32 %v4643, %v4697
  %v4702 = vadd.f32 %v4700, %v354
  %v4703 = vadd.f32 %v4701, %v354
  %v4704 = vmax.f32 %v4702, 0.0
  %v4705 = vmax.f32 %v4703, 0.0
  %v4706 = vpack.c.bf16 %v4705, %v4704
  %s4707 = scalar_lea.vmem %s3, 120
  %v4708 = vld [vmem:[%s4707] sm:$0xf]
  %v4709 = vld [vmem:[%s4707 + $0x4] sm:$0xf]
  %v4712 = vunpack.c.l.b16 %v4708
  %v4713 = vunpack.c.l.b16 %v4709
  %v4714 = vpack.c.b16 %v4713, %v4712
  %v4717 = vsel %vm607, %v4706, 0
  %4719 = vmatprep.subr.bf16.mxu0 0
  %4720 = vmatpush1.bf16.msra.mxu0 0
  %4721 = vmatprep.subr.bf16.mxu0 0
  %4722 = vmatpush1.bf16.msra.mxu0 0
  %4723 = vmatprep.subr.bf16.mxu0 0
  %4724 = vmatpush1.bf16.msra.mxu0 0
  %4725 = vmatprep.subr.bf16.mxu0 0
  %4726 = vmatpush1.bf16.msra.mxu0 0
  %4727 = vmatprep.subr.bf16.mxu0 0
  %4728 = vmatpush1.bf16.msra.mxu0 0
  %4729 = vmatprep.subr.bf16.mxu0 0
  %4730 = vmatpush1.bf16.msra.mxu0 0
  %4731 = vmatprep.subr.bf16.mxu0 0
  %4732 = vmatpush1.bf16.msra.mxu0 0
  %4733 = vmatprep.subr.bf16.mxu0 0
  %4734 = vmatpush1.bf16.msra.mxu0 %v4714
  %4735 = vmatprep.subr.bf16.mxu0 0
  %4736 = vmatpush2.bf16.msra.mxu0 0
  %4737 = vmatprep.subr.bf16.mxu0 0
  %4738 = vmatpush2.bf16.msra.mxu0 0
  %4739 = vmatprep.subr.bf16.mxu0 0
  %4740 = vmatpush2.bf16.msra.mxu0 0
  %4741 = vmatprep.subr.bf16.mxu0 0
  %4742 = vmatpush2.bf16.msra.mxu0 0
  %4743 = vmatprep.subr.bf16.mxu0 0
  %4744 = vmatpush2.bf16.msra.mxu0 0
  %4745 = vmatprep.subr.bf16.mxu0 0
  %4746 = vmatpush2.bf16.msra.mxu0 0
  %4747 = vmatprep.subr.bf16.mxu0 0
  %4748 = vmatpush2.bf16.msra.mxu0 0
  %4749 = vmatprep.subr.bf16.mxu0 0
  %4750 = vmatpush2.bf16.msra.mxu0 0
  %4751 = vmatprep.mubr.bf16.mxu0 0
  %4752 = vmatmul.mubr.bf16.gmra.mxu0 %v4717
  %v4753 = vpop.f32.mrf.mxu0
  %v4754 = vadd.f32 0.0, %v4753
  %v4755 = vpop.f32.mrf.mxu0
  %v4756 = vpop.f32.mrf.mxu0
  %v4757 = vadd.f32 0.0, %v4756
  %v4758 = vpop.f32.mrf.mxu0
  %4759 = vdwg.mxu0
  %v4760 = vadd.f32 %v4470, %v4754
  %v4761 = vadd.f32 %v4471, %v4757
  %s4762 = scalar_lea.vmem %s0, 256
  %v4763 = vld [vmem:[%s4762] sm:$0xff]
  %v4764 = vld [vmem:[%s4762 + $0x8] sm:$0xff]
  %v4767 = vunpack.c.l.b16 %v4763
  %v4768 = vunpack.c.h.b16 %v4763
  %v4769 = vunpack.c.l.b16 %v4764
  %v4770 = vunpack.c.h.b16 %v4764
  %v4771 = vpack.c.b16 %v4769, %v4767
  %v4772 = vpack.c.b16 %v4770, %v4768
  %v4775 = vsel %vm130, %v4772, 0
  %4777 = vmatprep.subr.bf16.mxu0 0
  %4778 = vmatpush1.bf16.msra.mxu0 %v117
  %4779 = vmatprep.subr.bf16.mxu0 0
  %4780 = vmatpush1.bf16.msra.mxu0 %v116
  %4781 = vmatprep.subr.bf16.mxu0 0
  %4782 = vmatpush1.bf16.msra.mxu0 %v115
  %4783 = vmatprep.subr.bf16.mxu0 0
  %4784 = vmatpush1.bf16.msra.mxu0 %v114
  %4785 = vmatprep.subr.bf16.mxu0 0
  %4786 = vmatpush1.bf16.msra.mxu0 %v113
  %4787 = vmatprep.subr.bf16.mxu0 0
  %4788 = vmatpush1.bf16.msra.mxu0 %v112
  %4789 = vmatprep.subr.bf16.mxu0 0
  %4790 = vmatpush1.bf16.msra.mxu0 %v111
  %4791 = vmatprep.subr.bf16.mxu0 0
  %4792 = vmatpush1.bf16.msra.mxu0 %v110
  %4793 = vmatprep.subr.bf16.mxu0 0
  %4794 = vmatpush2.bf16.msra.mxu0 0
  %4795 = vmatprep.subr.bf16.mxu0 0
  %4796 = vmatpush2.bf16.msra.mxu0 0
  %4797 = vmatprep.subr.bf16.mxu0 0
  %4798 = vmatpush2.bf16.msra.mxu0 0
  %4799 = vmatprep.subr.bf16.mxu0 0
  %4800 = vmatpush2.bf16.msra.mxu0 0
  %4801 = vmatprep.subr.bf16.mxu0 0
  %4802 = vmatpush2.bf16.msra.mxu0 0
  %4803 = vmatprep.subr.bf16.mxu0 0
  %4804 = vmatpush2.bf16.msra.mxu0 0
  %4805 = vmatprep.subr.bf16.mxu0 0
  %4806 = vmatpush2.bf16.msra.mxu0 %v119
  %4807 = vmatprep.subr.bf16.mxu0 0
  %4808 = vmatpush2.bf16.msra.mxu0 %v118
  %4809 = vmatprep.mubr.bf16.mxu0 %v4775
  %4810 = vmatmul.mubr.bf16.gmra.mxu0 %v4771
  %v4811 = vpop.f32.mrf.mxu0
  %v4812 = vadd.f32 0.0, %v4811
  %v4813 = vpop.f32.mrf.mxu0
  %v4814 = vpop.f32.mrf.mxu0
  %v4815 = vadd.f32 0.0, %v4814
  %v4816 = vpop.f32.mrf.mxu0
  %4817 = vdwg.mxu0
  %s4818 = scalar_lea.vmem %s0, 656
  %v4819 = vld [vmem:[%s4818] sm:$0xff]
  %v4820 = vld [vmem:[%s4818 + $0x8] sm:$0xff]
  %v4823 = vunpack.c.l.b16 %v4819
  %v4824 = vunpack.c.h.b16 %v4819
  %v4825 = vunpack.c.l.b16 %v4820
  %v4826 = vunpack.c.h.b16 %v4820
  %v4827 = vpack.c.b16 %v4825, %v4823
  %v4828 = vpack.c.b16 %v4826, %v4824
  %v4831 = vsel %vm130, %v4828, 0
  %4833 = vmatprep.subr.bf16.mxu0 0
  %4834 = vmatpush1.bf16.msra.mxu0 %v117
  %4835 = vmatprep.subr.bf16.mxu0 0
  %4836 = vmatpush1.bf16.msra.mxu0 %v116
  %4837 = vmatprep.subr.bf16.mxu0 0
  %4838 = vmatpush1.bf16.msra.mxu0 %v115
  %4839 = vmatprep.subr.bf16.mxu0 0
  %4840 = vmatpush1.bf16.msra.mxu0 %v114
  %4841 = vmatprep.subr.bf16.mxu0 0
  %4842 = vmatpush1.bf16.msra.mxu0 %v113
  %4843 = vmatprep.subr.bf16.mxu0 0
  %4844 = vmatpush1.bf16.msra.mxu0 %v112
  %4845 = vmatprep.subr.bf16.mxu0 0
  %4846 = vmatpush1.bf16.msra.mxu0 %v111
  %4847 = vmatprep.subr.bf16.mxu0 0
  %4848 = vmatpush1.bf16.msra.mxu0 %v110
  %4849 = vmatprep.subr.bf16.mxu0 0
  %4850 = vmatpush2.bf16.msra.mxu0 0
  %4851 = vmatprep.subr.bf16.mxu0 0
  %4852 = vmatpush2.bf16.msra.mxu0 0
  %4853 = vmatprep.subr.bf16.mxu0 0
  %4854 = vmatpush2.bf16.msra.mxu0 0
  %4855 = vmatprep.subr.bf16.mxu0 0
  %4856 = vmatpush2.bf16.msra.mxu0 0
  %4857 = vmatprep.subr.bf16.mxu0 0
  %4858 = vmatpush2.bf16.msra.mxu0 0
  %4859 = vmatprep.subr.bf16.mxu0 0
  %4860 = vmatpush2.bf16.msra.mxu0 0
  %4861 = vmatprep.subr.bf16.mxu0 0
  %4862 = vmatpush2.bf16.msra.mxu0 %v119
  %4863 = vmatprep.subr.bf16.mxu0 0
  %4864 = vmatpush2.bf16.msra.mxu0 %v118
  %4865 = vmatprep.mubr.bf16.mxu0 %v4831
  %4866 = vmatmul.mubr.bf16.gmra.mxu0 %v4827
  %v4867 = vpop.f32.mrf.mxu0
  %v4868 = vadd.f32 0.0, %v4867
  %v4869 = vpop.f32.mrf.mxu0
  %v4870 = vpop.f32.mrf.mxu0
  %v4871 = vadd.f32 0.0, %v4870
  %v4872 = vpop.f32.mrf.mxu0
  %4873 = vdwg.mxu0
  %v4874 = vmax.f32 %v4812, %v4868
  %v4875 = vmax.f32 %v4815, %v4871
  %s4876 = scalar_lea.vmem %s0, 1056
  %v4877 = vld [vmem:[%s4876] sm:$0xff]
  %v4878 = vld [vmem:[%s4876 + $0x8] sm:$0xff]
  %v4881 = vunpack.c.l.b16 %v4877
  %v4882 = vunpack.c.h.b16 %v4877
  %v4883 = vunpack.c.l.b16 %v4878
  %v4884 = vunpack.c.h.b16 %v4878
  %v4885 = vpack.c.b16 %v4883, %v4881
  %v4886 = vpack.c.b16 %v4884, %v4882
  %v4889 = vsel %vm130, %v4886, 0
  %4891 = vmatprep.subr.bf16.mxu0 0
  %4892 = vmatpush1.bf16.msra.mxu0 %v117
  %4893 = vmatprep.subr.bf16.mxu0 0
  %4894 = vmatpush1.bf16.msra.mxu0 %v116
  %4895 = vmatprep.subr.bf16.mxu0 0
  %4896 = vmatpush1.bf16.msra.mxu0 %v115
  %4897 = vmatprep.subr.bf16.mxu0 0
  %4898 = vmatpush1.bf16.msra.mxu0 %v114
  %4899 = vmatprep.subr.bf16.mxu0 0
  %4900 = vmatpush1.bf16.msra.mxu0 %v113
  %4901 = vmatprep.subr.bf16.mxu0 0
  %4902 = vmatpush1.bf16.msra.mxu0 %v112
  %4903 = vmatprep.subr.bf16.mxu0 0
  %4904 = vmatpush1.bf16.msra.mxu0 %v111
  %4905 = vmatprep.subr.bf16.mxu0 0
  %4906 = vmatpush1.bf16.msra.mxu0 %v110
  %4907 = vmatprep.subr.bf16.mxu0 0
  %4908 = vmatpush2.bf16.msra.mxu0 0
  %4909 = vmatprep.subr.bf16.mxu0 0
  %4910 = vmatpush2.bf16.msra.mxu0 0
  %4911 = vmatprep.subr.bf16.mxu0 0
  %4912 = vmatpush2.bf16.msra.mxu0 0
  %4913 = vmatprep.subr.bf16.mxu0 0
  %4914 = vmatpush2.bf16.msra.mxu0 0
  %4915 = vmatprep.subr.bf16.mxu0 0
  %4916 = vmatpush2.bf16.msra.mxu0 0
  %4917 = vmatprep.subr.bf16.mxu0 0
  %4918 = vmatpush2.bf16.msra.mxu0 0
  %4919 = vmatprep.subr.bf16.mxu0 0
  %4920 = vmatpush2.bf16.msra.mxu0 %v119
  %4921 = vmatprep.subr.bf16.mxu0 0
  %4922 = vmatpush2.bf16.msra.mxu0 %v118
  %4923 = vmatprep.mubr.bf16.mxu0 %v4889
  %4924 = vmatmul.mubr.bf16.gmra.mxu0 %v4885
  %v4925 = vpop.f32.mrf.mxu0
  %v4926 = vadd.f32 0.0, %v4925
  %v4927 = vpop.f32.mrf.mxu0
  %v4928 = vpop.f32.mrf.mxu0
  %v4929 = vadd.f32 0.0, %v4928
  %v4930 = vpop.f32.mrf.mxu0
  %4931 = vdwg.mxu0
  %v4932 = vmax.f32 %v4874, %v4926
  %v4933 = vmax.f32 %v4875, %v4929
  %s4934 = scalar_lea.vmem %s0, 1456
  %v4935 = vld [vmem:[%s4934] sm:$0xff]
  %v4936 = vld [vmem:[%s4934 + $0x8] sm:$0xff]
  %v4939 = vunpack.c.l.b16 %v4935
  %v4940 = vunpack.c.h.b16 %v4935
  %v4941 = vunpack.c.l.b16 %v4936
  %v4942 = vunpack.c.h.b16 %v4936
  %v4943 = vpack.c.b16 %v4941, %v4939
  %v4944 = vpack.c.b16 %v4942, %v4940
  %v4947 = vsel %vm130, %v4944, 0
  %4949 = vmatprep.subr.bf16.mxu0 0
  %4950 = vmatpush1.bf16.msra.mxu0 %v117
  %4951 = vmatprep.subr.bf16.mxu0 0
  %4952 = vmatpush1.bf16.msra.mxu0 %v116
  %4953 = vmatprep.subr.bf16.mxu0 0
  %4954 = vmatpush1.bf16.msra.mxu0 %v115
  %4955 = vmatprep.subr.bf16.mxu0 0
  %4956 = vmatpush1.bf16.msra.mxu0 %v114
  %4957 = vmatprep.subr.bf16.mxu0 0
  %4958 = vmatpush1.bf16.msra.mxu0 %v113
  %4959 = vmatprep.subr.bf16.mxu0 0
  %4960 = vmatpush1.bf16.msra.mxu0 %v112
  %4961 = vmatprep.subr.bf16.mxu0 0
  %4962 = vmatpush1.bf16.msra.mxu0 %v111
  %4963 = vmatprep.subr.bf16.mxu0 0
  %4964 = vmatpush1.bf16.msra.mxu0 %v110
  %4965 = vmatprep.subr.bf16.mxu0 0
  %4966 = vmatpush2.bf16.msra.mxu0 0
  %4967 = vmatprep.subr.bf16.mxu0 0
  %4968 = vmatpush2.bf16.msra.mxu0 0
  %4969 = vmatprep.subr.bf16.mxu0 0
  %4970 = vmatpush2.bf16.msra.mxu0 0
  %4971 = vmatprep.subr.bf16.mxu0 0
  %4972 = vmatpush2.bf16.msra.mxu0 0
  %4973 = vmatprep.subr.bf16.mxu0 0
  %4974 = vmatpush2.bf16.msra.mxu0 0
  %4975 = vmatprep.subr.bf16.mxu0 0
  %4976 = vmatpush2.bf16.msra.mxu0 0
  %4977 = vmatprep.subr.bf16.mxu0 0
  %4978 = vmatpush2.bf16.msra.mxu0 %v119
  %4979 = vmatprep.subr.bf16.mxu0 0
  %4980 = vmatpush2.bf16.msra.mxu0 %v118
  %4981 = vmatprep.mubr.bf16.mxu0 %v4947
  %4982 = vmatmul.mubr.bf16.gmra.mxu0 %v4943
  %v4983 = vpop.f32.mrf.mxu0
  %v4984 = vadd.f32 0.0, %v4983
  %v4985 = vpop.f32.mrf.mxu0
  %v4986 = vpop.f32.mrf.mxu0
  %v4987 = vadd.f32 0.0, %v4986
  %v4988 = vpop.f32.mrf.mxu0
  %4989 = vdwg.mxu0
  %v4990 = vmax.f32 %v4932, %v4984
  %v4991 = vmax.f32 %v4933, %v4987
  %v4992 = vadd.f32 %v4990, %v354
  %v4993 = vadd.f32 %v4991, %v354
  %v4994 = vmax.f32 %v4992, 0.0
  %v4995 = vmax.f32 %v4993, 0.0
  %v4996 = vpack.c.bf16 %v4995, %v4994
  %s4997 = scalar_lea.vmem %s3, 128
  %v4998 = vld [vmem:[%s4997] sm:$0xf]
  %v4999 = vld [vmem:[%s4997 + $0x4] sm:$0xf]
  %v5002 = vunpack.c.l.b16 %v4998
  %v5003 = vunpack.c.l.b16 %v4999
  %v5004 = vpack.c.b16 %v5003, %v5002
  %v5007 = vsel %vm607, %v4996, 0
  %5009 = vmatprep.subr.bf16.mxu0 0
  %5010 = vmatpush1.bf16.msra.mxu0 0
  %5011 = vmatprep.subr.bf16.mxu0 0
  %5012 = vmatpush1.bf16.msra.mxu0 0
  %5013 = vmatprep.subr.bf16.mxu0 0
  %5014 = vmatpush1.bf16.msra.mxu0 0
  %5015 = vmatprep.subr.bf16.mxu0 0
  %5016 = vmatpush1.bf16.msra.mxu0 0
  %5017 = vmatprep.subr.bf16.mxu0 0
  %5018 = vmatpush1.bf16.msra.mxu0 0
  %5019 = vmatprep.subr.bf16.mxu0 0
  %5020 = vmatpush1.bf16.msra.mxu0 0
  %5021 = vmatprep.subr.bf16.mxu0 0
  %5022 = vmatpush1.bf16.msra.mxu0 0
  %5023 = vmatprep.subr.bf16.mxu0 0
  %5024 = vmatpush1.bf16.msra.mxu0 %v5004
  %5025 = vmatprep.subr.bf16.mxu0 0
  %5026 = vmatpush2.bf16.msra.mxu0 0
  %5027 = vmatprep.subr.bf16.mxu0 0
  %5028 = vmatpush2.bf16.msra.mxu0 0
  %5029 = vmatprep.subr.bf16.mxu0 0
  %5030 = vmatpush2.bf16.msra.mxu0 0
  %5031 = vmatprep.subr.bf16.mxu0 0
  %5032 = vmatpush2.bf16.msra.mxu0 0
  %5033 = vmatprep.subr.bf16.mxu0 0
  %5034 = vmatpush2.bf16.msra.mxu0 0
  %5035 = vmatprep.subr.bf16.mxu0 0
  %5036 = vmatpush2.bf16.msra.mxu0 0
  %5037 = vmatprep.subr.bf16.mxu0 0
  %5038 = vmatpush2.bf16.msra.mxu0 0
  %5039 = vmatprep.subr.bf16.mxu0 0
  %5040 = vmatpush2.bf16.msra.mxu0 0
  %5041 = vmatprep.mubr.bf16.mxu0 0
  %5042 = vmatmul.mubr.bf16.gmra.mxu0 %v5007
  %v5043 = vpop.f32.mrf.mxu0
  %v5044 = vadd.f32 0.0, %v5043
  %v5045 = vpop.f32.mrf.mxu0
  %v5046 = vpop.f32.mrf.mxu0
  %v5047 = vadd.f32 0.0, %v5046
  %v5048 = vpop.f32.mrf.mxu0
  %5049 = vdwg.mxu0
  %v5050 = vadd.f32 %v4760, %v5044
  %v5051 = vadd.f32 %v4761, %v5047
  %s5052 = scalar_lea.vmem %s0, 272
  %v5053 = vld [vmem:[%s5052] sm:$0xff]
  %v5054 = vld [vmem:[%s5052 + $0x8] sm:$0xff]
  %v5057 = vunpack.c.l.b16 %v5053
  %v5058 = vunpack.c.h.b16 %v5053
  %v5059 = vunpack.c.l.b16 %v5054
  %v5060 = vunpack.c.h.b16 %v5054
  %v5061 = vpack.c.b16 %v5059, %v5057
  %v5062 = vpack.c.b16 %v5060, %v5058
  %v5065 = vsel %vm130, %v5062, 0
  %5067 = vmatprep.subr.bf16.mxu0 0
  %5068 = vmatpush1.bf16.msra.mxu0 %v117
  %5069 = vmatprep.subr.bf16.mxu0 0
  %5070 = vmatpush1.bf16.msra.mxu0 %v116
  %5071 = vmatprep.subr.bf16.mxu0 0
  %5072 = vmatpush1.bf16.msra.mxu0 %v115
  %5073 = vmatprep.subr.bf16.mxu0 0
  %5074 = vmatpush1.bf16.msra.mxu0 %v114
  %5075 = vmatprep.subr.bf16.mxu0 0
  %5076 = vmatpush1.bf16.msra.mxu0 %v113
  %5077 = vmatprep.subr.bf16.mxu0 0
  %5078 = vmatpush1.bf16.msra.mxu0 %v112
  %5079 = vmatprep.subr.bf16.mxu0 0
  %5080 = vmatpush1.bf16.msra.mxu0 %v111
  %5081 = vmatprep.subr.bf16.mxu0 0
  %5082 = vmatpush1.bf16.msra.mxu0 %v110
  %5083 = vmatprep.subr.bf16.mxu0 0
  %5084 = vmatpush2.bf16.msra.mxu0 0
  %5085 = vmatprep.subr.bf16.mxu0 0
  %5086 = vmatpush2.bf16.msra.mxu0 0
  %5087 = vmatprep.subr.bf16.mxu0 0
  %5088 = vmatpush2.bf16.msra.mxu0 0
  %5089 = vmatprep.subr.bf16.mxu0 0
  %5090 = vmatpush2.bf16.msra.mxu0 0
  %5091 = vmatprep.subr.bf16.mxu0 0
  %5092 = vmatpush2.bf16.msra.mxu0 0
  %5093 = vmatprep.subr.bf16.mxu0 0
  %5094 = vmatpush2.bf16.msra.mxu0 0
  %5095 = vmatprep.subr.bf16.mxu0 0
  %5096 = vmatpush2.bf16.msra.mxu0 %v119
  %5097 = vmatprep.subr.bf16.mxu0 0
  %5098 = vmatpush2.bf16.msra.mxu0 %v118
  %5099 = vmatprep.mubr.bf16.mxu0 %v5065
  %5100 = vmatmul.mubr.bf16.gmra.mxu0 %v5061
  %v5101 = vpop.f32.mrf.mxu0
  %v5102 = vadd.f32 0.0, %v5101
  %v5103 = vpop.f32.mrf.mxu0
  %v5104 = vpop.f32.mrf.mxu0
  %v5105 = vadd.f32 0.0, %v5104
  %v5106 = vpop.f32.mrf.mxu0
  %5107 = vdwg.mxu0
  %s5108 = scalar_lea.vmem %s0, 672
  %v5109 = vld [vmem:[%s5108] sm:$0xff]
  %v5110 = vld [vmem:[%s5108 + $0x8] sm:$0xff]
  %v5113 = vunpack.c.l.b16 %v5109
  %v5114 = vunpack.c.h.b16 %v5109
  %v5115 = vunpack.c.l.b16 %v5110
  %v5116 = vunpack.c.h.b16 %v5110
  %v5117 = vpack.c.b16 %v5115, %v5113
  %v5118 = vpack.c.b16 %v5116, %v5114
  %v5121 = vsel %vm130, %v5118, 0
  %5123 = vmatprep.subr.bf16.mxu0 0
  %5124 = vmatpush1.bf16.msra.mxu0 %v117
  %5125 = vmatprep.subr.bf16.mxu0 0
  %5126 = vmatpush1.bf16.msra.mxu0 %v116
  %5127 = vmatprep.subr.bf16.mxu0 0
  %5128 = vmatpush1.bf16.msra.mxu0 %v115
  %5129 = vmatprep.subr.bf16.mxu0 0
  %5130 = vmatpush1.bf16.msra.mxu0 %v114
  %5131 = vmatprep.subr.bf16.mxu0 0
  %5132 = vmatpush1.bf16.msra.mxu0 %v113
  %5133 = vmatprep.subr.bf16.mxu0 0
  %5134 = vmatpush1.bf16.msra.mxu0 %v112
  %5135 = vmatprep.subr.bf16.mxu0 0
  %5136 = vmatpush1.bf16.msra.mxu0 %v111
  %5137 = vmatprep.subr.bf16.mxu0 0
  %5138 = vmatpush1.bf16.msra.mxu0 %v110
  %5139 = vmatprep.subr.bf16.mxu0 0
  %5140 = vmatpush2.bf16.msra.mxu0 0
  %5141 = vmatprep.subr.bf16.mxu0 0
  %5142 = vmatpush2.bf16.msra.mxu0 0
  %5143 = vmatprep.subr.bf16.mxu0 0
  %5144 = vmatpush2.bf16.msra.mxu0 0
  %5145 = vmatprep.subr.bf16.mxu0 0
  %5146 = vmatpush2.bf16.msra.mxu0 0
  %5147 = vmatprep.subr.bf16.mxu0 0
  %5148 = vmatpush2.bf16.msra.mxu0 0
  %5149 = vmatprep.subr.bf16.mxu0 0
  %5150 = vmatpush2.bf16.msra.mxu0 0
  %5151 = vmatprep.subr.bf16.mxu0 0
  %5152 = vmatpush2.bf16.msra.mxu0 %v119
  %5153 = vmatprep.subr.bf16.mxu0 0
  %5154 = vmatpush2.bf16.msra.mxu0 %v118
  %5155 = vmatprep.mubr.bf16.mxu0 %v5121
  %5156 = vmatmul.mubr.bf16.gmra.mxu0 %v5117
  %v5157 = vpop.f32.mrf.mxu0
  %v5158 = vadd.f32 0.0, %v5157
  %v5159 = vpop.f32.mrf.mxu0
  %v5160 = vpop.f32.mrf.mxu0
  %v5161 = vadd.f32 0.0, %v5160
  %v5162 = vpop.f32.mrf.mxu0
  %5163 = vdwg.mxu0
  %v5164 = vmax.f32 %v5102, %v5158
  %v5165 = vmax.f32 %v5105, %v5161
  %s5166 = scalar_lea.vmem %s0, 1072
  %v5167 = vld [vmem:[%s5166] sm:$0xff]
  %v5168 = vld [vmem:[%s5166 + $0x8] sm:$0xff]
  %v5171 = vunpack.c.l.b16 %v5167
  %v5172 = vunpack.c.h.b16 %v5167
  %v5173 = vunpack.c.l.b16 %v5168
  %v5174 = vunpack.c.h.b16 %v5168
  %v5175 = vpack.c.b16 %v5173, %v5171
  %v5176 = vpack.c.b16 %v5174, %v5172
  %v5179 = vsel %vm130, %v5176, 0
  %5181 = vmatprep.subr.bf16.mxu0 0
  %5182 = vmatpush1.bf16.msra.mxu0 %v117
  %5183 = vmatprep.subr.bf16.mxu0 0
  %5184 = vmatpush1.bf16.msra.mxu0 %v116
  %5185 = vmatprep.subr.bf16.mxu0 0
  %5186 = vmatpush1.bf16.msra.mxu0 %v115
  %5187 = vmatprep.subr.bf16.mxu0 0
  %5188 = vmatpush1.bf16.msra.mxu0 %v114
  %5189 = vmatprep.subr.bf16.mxu0 0
  %5190 = vmatpush1.bf16.msra.mxu0 %v113
  %5191 = vmatprep.subr.bf16.mxu0 0
  %5192 = vmatpush1.bf16.msra.mxu0 %v112
  %5193 = vmatprep.subr.bf16.mxu0 0
  %5194 = vmatpush1.bf16.msra.mxu0 %v111
  %5195 = vmatprep.subr.bf16.mxu0 0
  %5196 = vmatpush1.bf16.msra.mxu0 %v110
  %5197 = vmatprep.subr.bf16.mxu0 0
  %5198 = vmatpush2.bf16.msra.mxu0 0
  %5199 = vmatprep.subr.bf16.mxu0 0
  %5200 = vmatpush2.bf16.msra.mxu0 0
  %5201 = vmatprep.subr.bf16.mxu0 0
  %5202 = vmatpush2.bf16.msra.mxu0 0
  %5203 = vmatprep.subr.bf16.mxu0 0
  %5204 = vmatpush2.bf16.msra.mxu0 0
  %5205 = vmatprep.subr.bf16.mxu0 0
  %5206 = vmatpush2.bf16.msra.mxu0 0
  %5207 = vmatprep.subr.bf16.mxu0 0
  %5208 = vmatpush2.bf16.msra.mxu0 0
  %5209 = vmatprep.subr.bf16.mxu0 0
  %5210 = vmatpush2.bf16.msra.mxu0 %v119
  %5211 = vmatprep.subr.bf16.mxu0 0
  %5212 = vmatpush2.bf16.msra.mxu0 %v118
  %5213 = vmatprep.mubr.bf16.mxu0 %v5179
  %5214 = vmatmul.mubr.bf16.gmra.mxu0 %v5175
  %v5215 = vpop.f32.mrf.mxu0
  %v5216 = vadd.f32 0.0, %v5215
  %v5217 = vpop.f32.mrf.mxu0
  %v5218 = vpop.f32.mrf.mxu0
  %v5219 = vadd.f32 0.0, %v5218
  %v5220 = vpop.f32.mrf.mxu0
  %5221 = vdwg.mxu0
  %v5222 = vmax.f32 %v5164, %v5216
  %v5223 = vmax.f32 %v5165, %v5219
  %s5224 = scalar_lea.vmem %s0, 1472
  %v5225 = vld [vmem:[%s5224] sm:$0xff]
  %v5226 = vld [vmem:[%s5224 + $0x8] sm:$0xff]
  %v5229 = vunpack.c.l.b16 %v5225
  %v5230 = vunpack.c.h.b16 %v5225
  %v5231 = vunpack.c.l.b16 %v5226
  %v5232 = vunpack.c.h.b16 %v5226
  %v5233 = vpack.c.b16 %v5231, %v5229
  %v5234 = vpack.c.b16 %v5232, %v5230
  %v5237 = vsel %vm130, %v5234, 0
  %5239 = vmatprep.subr.bf16.mxu0 0
  %5240 = vmatpush1.bf16.msra.mxu0 %v117
  %5241 = vmatprep.subr.bf16.mxu0 0
  %5242 = vmatpush1.bf16.msra.mxu0 %v116
  %5243 = vmatprep.subr.bf16.mxu0 0
  %5244 = vmatpush1.bf16.msra.mxu0 %v115
  %5245 = vmatprep.subr.bf16.mxu0 0
  %5246 = vmatpush1.bf16.msra.mxu0 %v114
  %5247 = vmatprep.subr.bf16.mxu0 0
  %5248 = vmatpush1.bf16.msra.mxu0 %v113
  %5249 = vmatprep.subr.bf16.mxu0 0
  %5250 = vmatpush1.bf16.msra.mxu0 %v112
  %5251 = vmatprep.subr.bf16.mxu0 0
  %5252 = vmatpush1.bf16.msra.mxu0 %v111
  %5253 = vmatprep.subr.bf16.mxu0 0
  %5254 = vmatpush1.bf16.msra.mxu0 %v110
  %5255 = vmatprep.subr.bf16.mxu0 0
  %5256 = vmatpush2.bf16.msra.mxu0 0
  %5257 = vmatprep.subr.bf16.mxu0 0
  %5258 = vmatpush2.bf16.msra.mxu0 0
  %5259 = vmatprep.subr.bf16.mxu0 0
  %5260 = vmatpush2.bf16.msra.mxu0 0
  %5261 = vmatprep.subr.bf16.mxu0 0
  %5262 = vmatpush2.bf16.msra.mxu0 0
  %5263 = vmatprep.subr.bf16.mxu0 0
  %5264 = vmatpush2.bf16.msra.mxu0 0
  %5265 = vmatprep.subr.bf16.mxu0 0
  %5266 = vmatpush2.bf16.msra.mxu0 0
  %5267 = vmatprep.subr.bf16.mxu0 0
  %5268 = vmatpush2.bf16.msra.mxu0 %v119
  %5269 = vmatprep.subr.bf16.mxu0 0
  %5270 = vmatpush2.bf16.msra.mxu0 %v118
  %5271 = vmatprep.mubr.bf16.mxu0 %v5237
  %5272 = vmatmul.mubr.bf16.gmra.mxu0 %v5233
  %v5273 = vpop.f32.mrf.mxu0
  %v5274 = vadd.f32 0.0, %v5273
  %v5275 = vpop.f32.mrf.mxu0
  %v5276 = vpop.f32.mrf.mxu0
  %v5277 = vadd.f32 0.0, %v5276
  %v5278 = vpop.f32.mrf.mxu0
  %5279 = vdwg.mxu0
  %v5280 = vmax.f32 %v5222, %v5274
  %v5281 = vmax.f32 %v5223, %v5277
  %v5282 = vadd.f32 %v5280, %v354
  %v5283 = vadd.f32 %v5281, %v354
  %v5284 = vmax.f32 %v5282, 0.0
  %v5285 = vmax.f32 %v5283, 0.0
  %v5286 = vpack.c.bf16 %v5285, %v5284
  %s5287 = scalar_lea.vmem %s3, 136
  %v5288 = vld [vmem:[%s5287] sm:$0xf]
  %v5289 = vld [vmem:[%s5287 + $0x4] sm:$0xf]
  %v5292 = vunpack.c.l.b16 %v5288
  %v5293 = vunpack.c.l.b16 %v5289
  %v5294 = vpack.c.b16 %v5293, %v5292
  %v5297 = vsel %vm607, %v5286, 0
  %5299 = vmatprep.subr.bf16.mxu0 0
  %5300 = vmatpush1.bf16.msra.mxu0 0
  %5301 = vmatprep.subr.bf16.mxu0 0
  %5302 = vmatpush1.bf16.msra.mxu0 0
  %5303 = vmatprep.subr.bf16.mxu0 0
  %5304 = vmatpush1.bf16.msra.mxu0 0
  %5305 = vmatprep.subr.bf16.mxu0 0
  %5306 = vmatpush1.bf16.msra.mxu0 0
  %5307 = vmatprep.subr.bf16.mxu0 0
  %5308 = vmatpush1.bf16.msra.mxu0 0
  %5309 = vmatprep.subr.bf16.mxu0 0
  %5310 = vmatpush1.bf16.msra.mxu0 0
  %5311 = vmatprep.subr.bf16.mxu0 0
  %5312 = vmatpush1.bf16.msra.mxu0 0
  %5313 = vmatprep.subr.bf16.mxu0 0
  %5314 = vmatpush1.bf16.msra.mxu0 %v5294
  %5315 = vmatprep.subr.bf16.mxu0 0
  %5316 = vmatpush2.bf16.msra.mxu0 0
  %5317 = vmatprep.subr.bf16.mxu0 0
  %5318 = vmatpush2.bf16.msra.mxu0 0
  %5319 = vmatprep.subr.bf16.mxu0 0
  %5320 = vmatpush2.bf16.msra.mxu0 0
  %5321 = vmatprep.subr.bf16.mxu0 0
  %5322 = vmatpush2.bf16.msra.mxu0 0
  %5323 = vmatprep.subr.bf16.mxu0 0
  %5324 = vmatpush2.bf16.msra.mxu0 0
  %5325 = vmatprep.subr.bf16.mxu0 0
  %5326 = vmatpush2.bf16.msra.mxu0 0
  %5327 = vmatprep.subr.bf16.mxu0 0
  %5328 = vmatpush2.bf16.msra.mxu0 0
  %5329 = vmatprep.subr.bf16.mxu0 0
  %5330 = vmatpush2.bf16.msra.mxu0 0
  %5331 = vmatprep.mubr.bf16.mxu0 0
  %5332 = vmatmul.mubr.bf16.gmra.mxu0 %v5297
  %v5333 = vpop.f32.mrf.mxu0
  %v5334 = vadd.f32 0.0, %v5333
  %v5335 = vpop.f32.mrf.mxu0
  %v5336 = vpop.f32.mrf.mxu0
  %v5337 = vadd.f32 0.0, %v5336
  %v5338 = vpop.f32.mrf.mxu0
  %5339 = vdwg.mxu0
  %v5340 = vadd.f32 %v5050, %v5334
  %v5341 = vadd.f32 %v5051, %v5337
  %s5342 = scalar_lea.vmem %s0, 288
  %v5343 = vld [vmem:[%s5342] sm:$0xff]
  %v5344 = vld [vmem:[%s5342 + $0x8] sm:$0xff]
  %v5347 = vunpack.c.l.b16 %v5343
  %v5348 = vunpack.c.h.b16 %v5343
  %v5349 = vunpack.c.l.b16 %v5344
  %v5350 = vunpack.c.h.b16 %v5344
  %v5351 = vpack.c.b16 %v5349, %v5347
  %v5352 = vpack.c.b16 %v5350, %v5348
  %v5355 = vsel %vm130, %v5352, 0
  %5357 = vmatprep.subr.bf16.mxu0 0
  %5358 = vmatpush1.bf16.msra.mxu0 %v117
  %5359 = vmatprep.subr.bf16.mxu0 0
  %5360 = vmatpush1.bf16.msra.mxu0 %v116
  %5361 = vmatprep.subr.bf16.mxu0 0
  %5362 = vmatpush1.bf16.msra.mxu0 %v115
  %5363 = vmatprep.subr.bf16.mxu0 0
  %5364 = vmatpush1.bf16.msra.mxu0 %v114
  %5365 = vmatprep.subr.bf16.mxu0 0
  %5366 = vmatpush1.bf16.msra.mxu0 %v113
  %5367 = vmatprep.subr.bf16.mxu0 0
  %5368 = vmatpush1.bf16.msra.mxu0 %v112
  %5369 = vmatprep.subr.bf16.mxu0 0
  %5370 = vmatpush1.bf16.msra.mxu0 %v111
  %5371 = vmatprep.subr.bf16.mxu0 0
  %5372 = vmatpush1.bf16.msra.mxu0 %v110
  %5373 = vmatprep.subr.bf16.mxu0 0
  %5374 = vmatpush2.bf16.msra.mxu0 0
  %5375 = vmatprep.subr.bf16.mxu0 0
  %5376 = vmatpush2.bf16.msra.mxu0 0
  %5377 = vmatprep.subr.bf16.mxu0 0
  %5378 = vmatpush2.bf16.msra.mxu0 0
  %5379 = vmatprep.subr.bf16.mxu0 0
  %5380 = vmatpush2.bf16.msra.mxu0 0
  %5381 = vmatprep.subr.bf16.mxu0 0
  %5382 = vmatpush2.bf16.msra.mxu0 0
  %5383 = vmatprep.subr.bf16.mxu0 0
  %5384 = vmatpush2.bf16.msra.mxu0 0
  %5385 = vmatprep.subr.bf16.mxu0 0
  %5386 = vmatpush2.bf16.msra.mxu0 %v119
  %5387 = vmatprep.subr.bf16.mxu0 0
  %5388 = vmatpush2.bf16.msra.mxu0 %v118
  %5389 = vmatprep.mubr.bf16.mxu0 %v5355
  %5390 = vmatmul.mubr.bf16.gmra.mxu0 %v5351
  %v5391 = vpop.f32.mrf.mxu0
  %v5392 = vadd.f32 0.0, %v5391
  %v5393 = vpop.f32.mrf.mxu0
  %v5394 = vpop.f32.mrf.mxu0
  %v5395 = vadd.f32 0.0, %v5394
  %v5396 = vpop.f32.mrf.mxu0
  %5397 = vdwg.mxu0
  %s5398 = scalar_lea.vmem %s0, 688
  %v5399 = vld [vmem:[%s5398] sm:$0xff]
  %v5400 = vld [vmem:[%s5398 + $0x8] sm:$0xff]
  %v5403 = vunpack.c.l.b16 %v5399
  %v5404 = vunpack.c.h.b16 %v5399
  %v5405 = vunpack.c.l.b16 %v5400
  %v5406 = vunpack.c.h.b16 %v5400
  %v5407 = vpack.c.b16 %v5405, %v5403
  %v5408 = vpack.c.b16 %v5406, %v5404
  %v5411 = vsel %vm130, %v5408, 0
  %5413 = vmatprep.subr.bf16.mxu0 0
  %5414 = vmatpush1.bf16.msra.mxu0 %v117
  %5415 = vmatprep.subr.bf16.mxu0 0
  %5416 = vmatpush1.bf16.msra.mxu0 %v116
  %5417 = vmatprep.subr.bf16.mxu0 0
  %5418 = vmatpush1.bf16.msra.mxu0 %v115
  %5419 = vmatprep.subr.bf16.mxu0 0
  %5420 = vmatpush1.bf16.msra.mxu0 %v114
  %5421 = vmatprep.subr.bf16.mxu0 0
  %5422 = vmatpush1.bf16.msra.mxu0 %v113
  %5423 = vmatprep.subr.bf16.mxu0 0
  %5424 = vmatpush1.bf16.msra.mxu0 %v112
  %5425 = vmatprep.subr.bf16.mxu0 0
  %5426 = vmatpush1.bf16.msra.mxu0 %v111
  %5427 = vmatprep.subr.bf16.mxu0 0
  %5428 = vmatpush1.bf16.msra.mxu0 %v110
  %5429 = vmatprep.subr.bf16.mxu0 0
  %5430 = vmatpush2.bf16.msra.mxu0 0
  %5431 = vmatprep.subr.bf16.mxu0 0
  %5432 = vmatpush2.bf16.msra.mxu0 0
  %5433 = vmatprep.subr.bf16.mxu0 0
  %5434 = vmatpush2.bf16.msra.mxu0 0
  %5435 = vmatprep.subr.bf16.mxu0 0
  %5436 = vmatpush2.bf16.msra.mxu0 0
  %5437 = vmatprep.subr.bf16.mxu0 0
  %5438 = vmatpush2.bf16.msra.mxu0 0
  %5439 = vmatprep.subr.bf16.mxu0 0
  %5440 = vmatpush2.bf16.msra.mxu0 0
  %5441 = vmatprep.subr.bf16.mxu0 0
  %5442 = vmatpush2.bf16.msra.mxu0 %v119
  %5443 = vmatprep.subr.bf16.mxu0 0
  %5444 = vmatpush2.bf16.msra.mxu0 %v118
  %5445 = vmatprep.mubr.bf16.mxu0 %v5411
  %5446 = vmatmul.mubr.bf16.gmra.mxu0 %v5407
  %v5447 = vpop.f32.mrf.mxu0
  %v5448 = vadd.f32 0.0, %v5447
  %v5449 = vpop.f32.mrf.mxu0
  %v5450 = vpop.f32.mrf.mxu0
  %v5451 = vadd.f32 0.0, %v5450
  %v5452 = vpop.f32.mrf.mxu0
  %5453 = vdwg.mxu0
  %v5454 = vmax.f32 %v5392, %v5448
  %v5455 = vmax.f32 %v5395, %v5451
  %s5456 = scalar_lea.vmem %s0, 1088
  %v5457 = vld [vmem:[%s5456] sm:$0xff]
  %v5458 = vld [vmem:[%s5456 + $0x8] sm:$0xff]
  %v5461 = vunpack.c.l.b16 %v5457
  %v5462 = vunpack.c.h.b16 %v5457
  %v5463 = vunpack.c.l.b16 %v5458
  %v5464 = vunpack.c.h.b16 %v5458
  %v5465 = vpack.c.b16 %v5463, %v5461
  %v5466 = vpack.c.b16 %v5464, %v5462
  %v5469 = vsel %vm130, %v5466, 0
  %5471 = vmatprep.subr.bf16.mxu0 0
  %5472 = vmatpush1.bf16.msra.mxu0 %v117
  %5473 = vmatprep.subr.bf16.mxu0 0
  %5474 = vmatpush1.bf16.msra.mxu0 %v116
  %5475 = vmatprep.subr.bf16.mxu0 0
  %5476 = vmatpush1.bf16.msra.mxu0 %v115
  %5477 = vmatprep.subr.bf16.mxu0 0
  %5478 = vmatpush1.bf16.msra.mxu0 %v114
  %5479 = vmatprep.subr.bf16.mxu0 0
  %5480 = vmatpush1.bf16.msra.mxu0 %v113
  %5481 = vmatprep.subr.bf16.mxu0 0
  %5482 = vmatpush1.bf16.msra.mxu0 %v112
  %5483 = vmatprep.subr.bf16.mxu0 0
  %5484 = vmatpush1.bf16.msra.mxu0 %v111
  %5485 = vmatprep.subr.bf16.mxu0 0
  %5486 = vmatpush1.bf16.msra.mxu0 %v110
  %5487 = vmatprep.subr.bf16.mxu0 0
  %5488 = vmatpush2.bf16.msra.mxu0 0
  %5489 = vmatprep.subr.bf16.mxu0 0
  %5490 = vmatpush2.bf16.msra.mxu0 0
  %5491 = vmatprep.subr.bf16.mxu0 0
  %5492 = vmatpush2.bf16.msra.mxu0 0
  %5493 = vmatprep.subr.bf16.mxu0 0
  %5494 = vmatpush2.bf16.msra.mxu0 0
  %5495 = vmatprep.subr.bf16.mxu0 0
  %5496 = vmatpush2.bf16.msra.mxu0 0
  %5497 = vmatprep.subr.bf16.mxu0 0
  %5498 = vmatpush2.bf16.msra.mxu0 0
  %5499 = vmatprep.subr.bf16.mxu0 0
  %5500 = vmatpush2.bf16.msra.mxu0 %v119
  %5501 = vmatprep.subr.bf16.mxu0 0
  %5502 = vmatpush2.bf16.msra.mxu0 %v118
  %5503 = vmatprep.mubr.bf16.mxu0 %v5469
  %5504 = vmatmul.mubr.bf16.gmra.mxu0 %v5465
  %v5505 = vpop.f32.mrf.mxu0
  %v5506 = vadd.f32 0.0, %v5505
  %v5507 = vpop.f32.mrf.mxu0
  %v5508 = vpop.f32.mrf.mxu0
  %v5509 = vadd.f32 0.0, %v5508
  %v5510 = vpop.f32.mrf.mxu0
  %5511 = vdwg.mxu0
  %v5512 = vmax.f32 %v5454, %v5506
  %v5513 = vmax.f32 %v5455, %v5509
  %s5514 = scalar_lea.vmem %s0, 1488
  %v5515 = vld [vmem:[%s5514] sm:$0xff]
  %v5516 = vld [vmem:[%s5514 + $0x8] sm:$0xff]
  %v5519 = vunpack.c.l.b16 %v5515
  %v5520 = vunpack.c.h.b16 %v5515
  %v5521 = vunpack.c.l.b16 %v5516
  %v5522 = vunpack.c.h.b16 %v5516
  %v5523 = vpack.c.b16 %v5521, %v5519
  %v5524 = vpack.c.b16 %v5522, %v5520
  %v5527 = vsel %vm130, %v5524, 0
  %5529 = vmatprep.subr.bf16.mxu0 0
  %5530 = vmatpush1.bf16.msra.mxu0 %v117
  %5531 = vmatprep.subr.bf16.mxu0 0
  %5532 = vmatpush1.bf16.msra.mxu0 %v116
  %5533 = vmatprep.subr.bf16.mxu0 0
  %5534 = vmatpush1.bf16.msra.mxu0 %v115
  %5535 = vmatprep.subr.bf16.mxu0 0
  %5536 = vmatpush1.bf16.msra.mxu0 %v114
  %5537 = vmatprep.subr.bf16.mxu0 0
  %5538 = vmatpush1.bf16.msra.mxu0 %v113
  %5539 = vmatprep.subr.bf16.mxu0 0
  %5540 = vmatpush1.bf16.msra.mxu0 %v112
  %5541 = vmatprep.subr.bf16.mxu0 0
  %5542 = vmatpush1.bf16.msra.mxu0 %v111
  %5543 = vmatprep.subr.bf16.mxu0 0
  %5544 = vmatpush1.bf16.msra.mxu0 %v110
  %5545 = vmatprep.subr.bf16.mxu0 0
  %5546 = vmatpush2.bf16.msra.mxu0 0
  %5547 = vmatprep.subr.bf16.mxu0 0
  %5548 = vmatpush2.bf16.msra.mxu0 0
  %5549 = vmatprep.subr.bf16.mxu0 0
  %5550 = vmatpush2.bf16.msra.mxu0 0
  %5551 = vmatprep.subr.bf16.mxu0 0
  %5552 = vmatpush2.bf16.msra.mxu0 0
  %5553 = vmatprep.subr.bf16.mxu0 0
  %5554 = vmatpush2.bf16.msra.mxu0 0
  %5555 = vmatprep.subr.bf16.mxu0 0
  %5556 = vmatpush2.bf16.msra.mxu0 0
  %5557 = vmatprep.subr.bf16.mxu0 0
  %5558 = vmatpush2.bf16.msra.mxu0 %v119
  %5559 = vmatprep.subr.bf16.mxu0 0
  %5560 = vmatpush2.bf16.msra.mxu0 %v118
  %5561 = vmatprep.mubr.bf16.mxu0 %v5527
  %5562 = vmatmul.mubr.bf16.gmra.mxu0 %v5523
  %v5563 = vpop.f32.mrf.mxu0
  %v5564 = vadd.f32 0.0, %v5563
  %v5565 = vpop.f32.mrf.mxu0
  %v5566 = vpop.f32.mrf.mxu0
  %v5567 = vadd.f32 0.0, %v5566
  %v5568 = vpop.f32.mrf.mxu0
  %5569 = vdwg.mxu0
  %v5570 = vmax.f32 %v5512, %v5564
  %v5571 = vmax.f32 %v5513, %v5567
  %v5572 = vadd.f32 %v5570, %v354
  %v5573 = vadd.f32 %v5571, %v354
  %v5574 = vmax.f32 %v5572, 0.0
  %v5575 = vmax.f32 %v5573, 0.0
  %v5576 = vpack.c.bf16 %v5575, %v5574
  %s5577 = scalar_lea.vmem %s3, 144
  %v5578 = vld [vmem:[%s5577] sm:$0xf]
  %v5579 = vld [vmem:[%s5577 + $0x4] sm:$0xf]
  %v5582 = vunpack.c.l.b16 %v5578
  %v5583 = vunpack.c.l.b16 %v5579
  %v5584 = vpack.c.b16 %v5583, %v5582
  %v5587 = vsel %vm607, %v5576, 0
  %5589 = vmatprep.subr.bf16.mxu0 0
  %5590 = vmatpush1.bf16.msra.mxu0 0
  %5591 = vmatprep.subr.bf16.mxu0 0
  %5592 = vmatpush1.bf16.msra.mxu0 0
  %5593 = vmatprep.subr.bf16.mxu0 0
  %5594 = vmatpush1.bf16.msra.mxu0 0
  %5595 = vmatprep.subr.bf16.mxu0 0
  %5596 = vmatpush1.bf16.msra.mxu0 0
  %5597 = vmatprep.subr.bf16.mxu0 0
  %5598 = vmatpush1.bf16.msra.mxu0 0
  %5599 = vmatprep.subr.bf16.mxu0 0
  %5600 = vmatpush1.bf16.msra.mxu0 0
  %5601 = vmatprep.subr.bf16.mxu0 0
  %5602 = vmatpush1.bf16.msra.mxu0 0
  %5603 = vmatprep.subr.bf16.mxu0 0
  %5604 = vmatpush1.bf16.msra.mxu0 %v5584
  %5605 = vmatprep.subr.bf16.mxu0 0
  %5606 = vmatpush2.bf16.msra.mxu0 0
  %5607 = vmatprep.subr.bf16.mxu0 0
  %5608 = vmatpush2.bf16.msra.mxu0 0
  %5609 = vmatprep.subr.bf16.mxu0 0
  %5610 = vmatpush2.bf16.msra.mxu0 0
  %5611 = vmatprep.subr.bf16.mxu0 0
  %5612 = vmatpush2.bf16.msra.mxu0 0
  %5613 = vmatprep.subr.bf16.mxu0 0
  %5614 = vmatpush2.bf16.msra.mxu0 0
  %5615 = vmatprep.subr.bf16.mxu0 0
  %5616 = vmatpush2.bf16.msra.mxu0 0
  %5617 = vmatprep.subr.bf16.mxu0 0
  %5618 = vmatpush2.bf16.msra.mxu0 0
  %5619 = vmatprep.subr.bf16.mxu0 0
  %5620 = vmatpush2.bf16.msra.mxu0 0
  %5621 = vmatprep.mubr.bf16.mxu0 0
  %5622 = vmatmul.mubr.bf16.gmra.mxu0 %v5587
  %v5623 = vpop.f32.mrf.mxu0
  %v5624 = vadd.f32 0.0, %v5623
  %v5625 = vpop.f32.mrf.mxu0
  %v5626 = vpop.f32.mrf.mxu0
  %v5627 = vadd.f32 0.0, %v5626
  %v5628 = vpop.f32.mrf.mxu0
  %5629 = vdwg.mxu0
  %v5630 = vadd.f32 %v5340, %v5624
  %v5631 = vadd.f32 %v5341, %v5627
  %s5632 = scalar_lea.vmem %s0, 304
  %v5633 = vld [vmem:[%s5632] sm:$0xff]
  %v5634 = vld [vmem:[%s5632 + $0x8] sm:$0xff]
  %v5637 = vunpack.c.l.b16 %v5633
  %v5638 = vunpack.c.h.b16 %v5633
  %v5639 = vunpack.c.l.b16 %v5634
  %v5640 = vunpack.c.h.b16 %v5634
  %v5641 = vpack.c.b16 %v5639, %v5637
  %v5642 = vpack.c.b16 %v5640, %v5638
  %v5645 = vsel %vm130, %v5642, 0
  %5647 = vmatprep.subr.bf16.mxu0 0
  %5648 = vmatpush1.bf16.msra.mxu0 %v117
  %5649 = vmatprep.subr.bf16.mxu0 0
  %5650 = vmatpush1.bf16.msra.mxu0 %v116
  %5651 = vmatprep.subr.bf16.mxu0 0
  %5652 = vmatpush1.bf16.msra.mxu0 %v115
  %5653 = vmatprep.subr.bf16.mxu0 0
  %5654 = vmatpush1.bf16.msra.mxu0 %v114
  %5655 = vmatprep.subr.bf16.mxu0 0
  %5656 = vmatpush1.bf16.msra.mxu0 %v113
  %5657 = vmatprep.subr.bf16.mxu0 0
  %5658 = vmatpush1.bf16.msra.mxu0 %v112
  %5659 = vmatprep.subr.bf16.mxu0 0
  %5660 = vmatpush1.bf16.msra.mxu0 %v111
  %5661 = vmatprep.subr.bf16.mxu0 0
  %5662 = vmatpush1.bf16.msra.mxu0 %v110
  %5663 = vmatprep.subr.bf16.mxu0 0
  %5664 = vmatpush2.bf16.msra.mxu0 0
  %5665 = vmatprep.subr.bf16.mxu0 0
  %5666 = vmatpush2.bf16.msra.mxu0 0
  %5667 = vmatprep.subr.bf16.mxu0 0
  %5668 = vmatpush2.bf16.msra.mxu0 0
  %5669 = vmatprep.subr.bf16.mxu0 0
  %5670 = vmatpush2.bf16.msra.mxu0 0
  %5671 = vmatprep.subr.bf16.mxu0 0
  %5672 = vmatpush2.bf16.msra.mxu0 0
  %5673 = vmatprep.subr.bf16.mxu0 0
  %5674 = vmatpush2.bf16.msra.mxu0 0
  %5675 = vmatprep.subr.bf16.mxu0 0
  %5676 = vmatpush2.bf16.msra.mxu0 %v119
  %5677 = vmatprep.subr.bf16.mxu0 0
  %5678 = vmatpush2.bf16.msra.mxu0 %v118
  %5679 = vmatprep.mubr.bf16.mxu0 %v5645
  %5680 = vmatmul.mubr.bf16.gmra.mxu0 %v5641
  %v5681 = vpop.f32.mrf.mxu0
  %v5682 = vadd.f32 0.0, %v5681
  %v5683 = vpop.f32.mrf.mxu0
  %v5684 = vpop.f32.mrf.mxu0
  %v5685 = vadd.f32 0.0, %v5684
  %v5686 = vpop.f32.mrf.mxu0
  %5687 = vdwg.mxu0
  %s5688 = scalar_lea.vmem %s0, 704
  %v5689 = vld [vmem:[%s5688] sm:$0xff]
  %v5690 = vld [vmem:[%s5688 + $0x8] sm:$0xff]
  %v5693 = vunpack.c.l.b16 %v5689
  %v5694 = vunpack.c.h.b16 %v5689
  %v5695 = vunpack.c.l.b16 %v5690
  %v5696 = vunpack.c.h.b16 %v5690
  %v5697 = vpack.c.b16 %v5695, %v5693
  %v5698 = vpack.c.b16 %v5696, %v5694
  %v5701 = vsel %vm130, %v5698, 0
  %5703 = vmatprep.subr.bf16.mxu0 0
  %5704 = vmatpush1.bf16.msra.mxu0 %v117
  %5705 = vmatprep.subr.bf16.mxu0 0
  %5706 = vmatpush1.bf16.msra.mxu0 %v116
  %5707 = vmatprep.subr.bf16.mxu0 0
  %5708 = vmatpush1.bf16.msra.mxu0 %v115
  %5709 = vmatprep.subr.bf16.mxu0 0
  %5710 = vmatpush1.bf16.msra.mxu0 %v114
  %5711 = vmatprep.subr.bf16.mxu0 0
  %5712 = vmatpush1.bf16.msra.mxu0 %v113
  %5713 = vmatprep.subr.bf16.mxu0 0
  %5714 = vmatpush1.bf16.msra.mxu0 %v112
  %5715 = vmatprep.subr.bf16.mxu0 0
  %5716 = vmatpush1.bf16.msra.mxu0 %v111
  %5717 = vmatprep.subr.bf16.mxu0 0
  %5718 = vmatpush1.bf16.msra.mxu0 %v110
  %5719 = vmatprep.subr.bf16.mxu0 0
  %5720 = vmatpush2.bf16.msra.mxu0 0
  %5721 = vmatprep.subr.bf16.mxu0 0
  %5722 = vmatpush2.bf16.msra.mxu0 0
  %5723 = vmatprep.subr.bf16.mxu0 0
  %5724 = vmatpush2.bf16.msra.mxu0 0
  %5725 = vmatprep.subr.bf16.mxu0 0
  %5726 = vmatpush2.bf16.msra.mxu0 0
  %5727 = vmatprep.subr.bf16.mxu0 0
  %5728 = vmatpush2.bf16.msra.mxu0 0
  %5729 = vmatprep.subr.bf16.mxu0 0
  %5730 = vmatpush2.bf16.msra.mxu0 0
  %5731 = vmatprep.subr.bf16.mxu0 0
  %5732 = vmatpush2.bf16.msra.mxu0 %v119
  %5733 = vmatprep.subr.bf16.mxu0 0
  %5734 = vmatpush2.bf16.msra.mxu0 %v118
  %5735 = vmatprep.mubr.bf16.mxu0 %v5701
  %5736 = vmatmul.mubr.bf16.gmra.mxu0 %v5697
  %v5737 = vpop.f32.mrf.mxu0
  %v5738 = vadd.f32 0.0, %v5737
  %v5739 = vpop.f32.mrf.mxu0
  %v5740 = vpop.f32.mrf.mxu0
  %v5741 = vadd.f32 0.0, %v5740
  %v5742 = vpop.f32.mrf.mxu0
  %5743 = vdwg.mxu0
  %v5744 = vmax.f32 %v5682, %v5738
  %v5745 = vmax.f32 %v5685, %v5741
  %s5746 = scalar_lea.vmem %s0, 1104
  %v5747 = vld [vmem:[%s5746] sm:$0xff]
  %v5748 = vld [vmem:[%s5746 + $0x8] sm:$0xff]
  %v5751 = vunpack.c.l.b16 %v5747
  %v5752 = vunpack.c.h.b16 %v5747
  %v5753 = vunpack.c.l.b16 %v5748
  %v5754 = vunpack.c.h.b16 %v5748
  %v5755 = vpack.c.b16 %v5753, %v5751
  %v5756 = vpack.c.b16 %v5754, %v5752
  %v5759 = vsel %vm130, %v5756, 0
  %5761 = vmatprep.subr.bf16.mxu0 0
  %5762 = vmatpush1.bf16.msra.mxu0 %v117
  %5763 = vmatprep.subr.bf16.mxu0 0
  %5764 = vmatpush1.bf16.msra.mxu0 %v116
  %5765 = vmatprep.subr.bf16.mxu0 0
  %5766 = vmatpush1.bf16.msra.mxu0 %v115
  %5767 = vmatprep.subr.bf16.mxu0 0
  %5768 = vmatpush1.bf16.msra.mxu0 %v114
  %5769 = vmatprep.subr.bf16.mxu0 0
  %5770 = vmatpush1.bf16.msra.mxu0 %v113
  %5771 = vmatprep.subr.bf16.mxu0 0
  %5772 = vmatpush1.bf16.msra.mxu0 %v112
  %5773 = vmatprep.subr.bf16.mxu0 0
  %5774 = vmatpush1.bf16.msra.mxu0 %v111
  %5775 = vmatprep.subr.bf16.mxu0 0
  %5776 = vmatpush1.bf16.msra.mxu0 %v110
  %5777 = vmatprep.subr.bf16.mxu0 0
  %5778 = vmatpush2.bf16.msra.mxu0 0
  %5779 = vmatprep.subr.bf16.mxu0 0
  %5780 = vmatpush2.bf16.msra.mxu0 0
  %5781 = vmatprep.subr.bf16.mxu0 0
  %5782 = vmatpush2.bf16.msra.mxu0 0
  %5783 = vmatprep.subr.bf16.mxu0 0
  %5784 = vmatpush2.bf16.msra.mxu0 0
  %5785 = vmatprep.subr.bf16.mxu0 0
  %5786 = vmatpush2.bf16.msra.mxu0 0
  %5787 = vmatprep.subr.bf16.mxu0 0
  %5788 = vmatpush2.bf16.msra.mxu0 0
  %5789 = vmatprep.subr.bf16.mxu0 0
  %5790 = vmatpush2.bf16.msra.mxu0 %v119
  %5791 = vmatprep.subr.bf16.mxu0 0
  %5792 = vmatpush2.bf16.msra.mxu0 %v118
  %5793 = vmatprep.mubr.bf16.mxu0 %v5759
  %5794 = vmatmul.mubr.bf16.gmra.mxu0 %v5755
  %v5795 = vpop.f32.mrf.mxu0
  %v5796 = vadd.f32 0.0, %v5795
  %v5797 = vpop.f32.mrf.mxu0
  %v5798 = vpop.f32.mrf.mxu0
  %v5799 = vadd.f32 0.0, %v5798
  %v5800 = vpop.f32.mrf.mxu0
  %5801 = vdwg.mxu0
  %v5802 = vmax.f32 %v5744, %v5796
  %v5803 = vmax.f32 %v5745, %v5799
  %s5804 = scalar_lea.vmem %s0, 1504
  %v5805 = vld [vmem:[%s5804] sm:$0xff]
  %v5806 = vld [vmem:[%s5804 + $0x8] sm:$0xff]
  %v5809 = vunpack.c.l.b16 %v5805
  %v5810 = vunpack.c.h.b16 %v5805
  %v5811 = vunpack.c.l.b16 %v5806
  %v5812 = vunpack.c.h.b16 %v5806
  %v5813 = vpack.c.b16 %v5811, %v5809
  %v5814 = vpack.c.b16 %v5812, %v5810
  %v5817 = vsel %vm130, %v5814, 0
  %5819 = vmatprep.subr.bf16.mxu0 0
  %5820 = vmatpush1.bf16.msra.mxu0 %v117
  %5821 = vmatprep.subr.bf16.mxu0 0
  %5822 = vmatpush1.bf16.msra.mxu0 %v116
  %5823 = vmatprep.subr.bf16.mxu0 0
  %5824 = vmatpush1.bf16.msra.mxu0 %v115
  %5825 = vmatprep.subr.bf16.mxu0 0
  %5826 = vmatpush1.bf16.msra.mxu0 %v114
  %5827 = vmatprep.subr.bf16.mxu0 0
  %5828 = vmatpush1.bf16.msra.mxu0 %v113
  %5829 = vmatprep.subr.bf16.mxu0 0
  %5830 = vmatpush1.bf16.msra.mxu0 %v112
  %5831 = vmatprep.subr.bf16.mxu0 0
  %5832 = vmatpush1.bf16.msra.mxu0 %v111
  %5833 = vmatprep.subr.bf16.mxu0 0
  %5834 = vmatpush1.bf16.msra.mxu0 %v110
  %5835 = vmatprep.subr.bf16.mxu0 0
  %5836 = vmatpush2.bf16.msra.mxu0 0
  %5837 = vmatprep.subr.bf16.mxu0 0
  %5838 = vmatpush2.bf16.msra.mxu0 0
  %5839 = vmatprep.subr.bf16.mxu0 0
  %5840 = vmatpush2.bf16.msra.mxu0 0
  %5841 = vmatprep.subr.bf16.mxu0 0
  %5842 = vmatpush2.bf16.msra.mxu0 0
  %5843 = vmatprep.subr.bf16.mxu0 0
  %5844 = vmatpush2.bf16.msra.mxu0 0
  %5845 = vmatprep.subr.bf16.mxu0 0
  %5846 = vmatpush2.bf16.msra.mxu0 0
  %5847 = vmatprep.subr.bf16.mxu0 0
  %5848 = vmatpush2.bf16.msra.mxu0 %v119
  %5849 = vmatprep.subr.bf16.mxu0 0
  %5850 = vmatpush2.bf16.msra.mxu0 %v118
  %5851 = vmatprep.mubr.bf16.mxu0 %v5817
  %5852 = vmatmul.mubr.bf16.gmra.mxu0 %v5813
  %v5853 = vpop.f32.mrf.mxu0
  %v5854 = vadd.f32 0.0, %v5853
  %v5855 = vpop.f32.mrf.mxu0
  %v5856 = vpop.f32.mrf.mxu0
  %v5857 = vadd.f32 0.0, %v5856
  %v5858 = vpop.f32.mrf.mxu0
  %5859 = vdwg.mxu0
  %v5860 = vmax.f32 %v5802, %v5854
  %v5861 = vmax.f32 %v5803, %v5857
  %v5862 = vadd.f32 %v5860, %v354
  %v5863 = vadd.f32 %v5861, %v354
  %v5864 = vmax.f32 %v5862, 0.0
  %v5865 = vmax.f32 %v5863, 0.0
  %v5866 = vpack.c.bf16 %v5865, %v5864
  %s5867 = scalar_lea.vmem %s3, 152
  %v5868 = vld [vmem:[%s5867] sm:$0xf]
  %v5869 = vld [vmem:[%s5867 + $0x4] sm:$0xf]
  %v5872 = vunpack.c.l.b16 %v5868
  %v5873 = vunpack.c.l.b16 %v5869
  %v5874 = vpack.c.b16 %v5873, %v5872
  %v5877 = vsel %vm607, %v5866, 0
  %5879 = vmatprep.subr.bf16.mxu0 0
  %5880 = vmatpush1.bf16.msra.mxu0 0
  %5881 = vmatprep.subr.bf16.mxu0 0
  %5882 = vmatpush1.bf16.msra.mxu0 0
  %5883 = vmatprep.subr.bf16.mxu0 0
  %5884 = vmatpush1.bf16.msra.mxu0 0
  %5885 = vmatprep.subr.bf16.mxu0 0
  %5886 = vmatpush1.bf16.msra.mxu0 0
  %5887 = vmatprep.subr.bf16.mxu0 0
  %5888 = vmatpush1.bf16.msra.mxu0 0
  %5889 = vmatprep.subr.bf16.mxu0 0
  %5890 = vmatpush1.bf16.msra.mxu0 0
  %5891 = vmatprep.subr.bf16.mxu0 0
  %5892 = vmatpush1.bf16.msra.mxu0 0
  %5893 = vmatprep.subr.bf16.mxu0 0
  %5894 = vmatpush1.bf16.msra.mxu0 %v5874
  %5895 = vmatprep.subr.bf16.mxu0 0
  %5896 = vmatpush2.bf16.msra.mxu0 0
  %5897 = vmatprep.subr.bf16.mxu0 0
  %5898 = vmatpush2.bf16.msra.mxu0 0
  %5899 = vmatprep.subr.bf16.mxu0 0
  %5900 = vmatpush2.bf16.msra.mxu0 0
  %5901 = vmatprep.subr.bf16.mxu0 0
  %5902 = vmatpush2.bf16.msra.mxu0 0
  %5903 = vmatprep.subr.bf16.mxu0 0
  %5904 = vmatpush2.bf16.msra.mxu0 0
  %5905 = vmatprep.subr.bf16.mxu0 0
  %5906 = vmatpush2.bf16.msra.mxu0 0
  %5907 = vmatprep.subr.bf16.mxu0 0
  %5908 = vmatpush2.bf16.msra.mxu0 0
  %5909 = vmatprep.subr.bf16.mxu0 0
  %5910 = vmatpush2.bf16.msra.mxu0 0
  %5911 = vmatprep.mubr.bf16.mxu0 0
  %5912 = vmatmul.mubr.bf16.gmra.mxu0 %v5877
  %v5913 = vpop.f32.mrf.mxu0
  %v5914 = vadd.f32 0.0, %v5913
  %v5915 = vpop.f32.mrf.mxu0
  %v5916 = vpop.f32.mrf.mxu0
  %v5917 = vadd.f32 0.0, %v5916
  %v5918 = vpop.f32.mrf.mxu0
  %5919 = vdwg.mxu0
  %v5920 = vadd.f32 %v5630, %v5914
  %v5921 = vadd.f32 %v5631, %v5917
  %s5922 = scalar_lea.vmem %s0, 320
  %v5923 = vld [vmem:[%s5922] sm:$0xff]
  %v5924 = vld [vmem:[%s5922 + $0x8] sm:$0xff]
  %v5927 = vunpack.c.l.b16 %v5923
  %v5928 = vunpack.c.h.b16 %v5923
  %v5929 = vunpack.c.l.b16 %v5924
  %v5930 = vunpack.c.h.b16 %v5924
  %v5931 = vpack.c.b16 %v5929, %v5927
  %v5932 = vpack.c.b16 %v5930, %v5928
  %v5935 = vsel %vm130, %v5932, 0
  %5937 = vmatprep.subr.bf16.mxu0 0
  %5938 = vmatpush1.bf16.msra.mxu0 %v117
  %5939 = vmatprep.subr.bf16.mxu0 0
  %5940 = vmatpush1.bf16.msra.mxu0 %v116
  %5941 = vmatprep.subr.bf16.mxu0 0
  %5942 = vmatpush1.bf16.msra.mxu0 %v115
  %5943 = vmatprep.subr.bf16.mxu0 0
  %5944 = vmatpush1.bf16.msra.mxu0 %v114
  %5945 = vmatprep.subr.bf16.mxu0 0
  %5946 = vmatpush1.bf16.msra.mxu0 %v113
  %5947 = vmatprep.subr.bf16.mxu0 0
  %5948 = vmatpush1.bf16.msra.mxu0 %v112
  %5949 = vmatprep.subr.bf16.mxu0 0
  %5950 = vmatpush1.bf16.msra.mxu0 %v111
  %5951 = vmatprep.subr.bf16.mxu0 0
  %5952 = vmatpush1.bf16.msra.mxu0 %v110
  %5953 = vmatprep.subr.bf16.mxu0 0
  %5954 = vmatpush2.bf16.msra.mxu0 0
  %5955 = vmatprep.subr.bf16.mxu0 0
  %5956 = vmatpush2.bf16.msra.mxu0 0
  %5957 = vmatprep.subr.bf16.mxu0 0
  %5958 = vmatpush2.bf16.msra.mxu0 0
  %5959 = vmatprep.subr.bf16.mxu0 0
  %5960 = vmatpush2.bf16.msra.mxu0 0
  %5961 = vmatprep.subr.bf16.mxu0 0
  %5962 = vmatpush2.bf16.msra.mxu0 0
  %5963 = vmatprep.subr.bf16.mxu0 0
  %5964 = vmatpush2.bf16.msra.mxu0 0
  %5965 = vmatprep.subr.bf16.mxu0 0
  %5966 = vmatpush2.bf16.msra.mxu0 %v119
  %5967 = vmatprep.subr.bf16.mxu0 0
  %5968 = vmatpush2.bf16.msra.mxu0 %v118
  %5969 = vmatprep.mubr.bf16.mxu0 %v5935
  %5970 = vmatmul.mubr.bf16.gmra.mxu0 %v5931
  %v5971 = vpop.f32.mrf.mxu0
  %v5972 = vadd.f32 0.0, %v5971
  %v5973 = vpop.f32.mrf.mxu0
  %v5974 = vpop.f32.mrf.mxu0
  %v5975 = vadd.f32 0.0, %v5974
  %v5976 = vpop.f32.mrf.mxu0
  %5977 = vdwg.mxu0
  %s5978 = scalar_lea.vmem %s0, 720
  %v5979 = vld [vmem:[%s5978] sm:$0xff]
  %v5980 = vld [vmem:[%s5978 + $0x8] sm:$0xff]
  %v5983 = vunpack.c.l.b16 %v5979
  %v5984 = vunpack.c.h.b16 %v5979
  %v5985 = vunpack.c.l.b16 %v5980
  %v5986 = vunpack.c.h.b16 %v5980
  %v5987 = vpack.c.b16 %v5985, %v5983
  %v5988 = vpack.c.b16 %v5986, %v5984
  %v5991 = vsel %vm130, %v5988, 0
  %5993 = vmatprep.subr.bf16.mxu0 0
  %5994 = vmatpush1.bf16.msra.mxu0 %v117
  %5995 = vmatprep.subr.bf16.mxu0 0
  %5996 = vmatpush1.bf16.msra.mxu0 %v116
  %5997 = vmatprep.subr.bf16.mxu0 0
  %5998 = vmatpush1.bf16.msra.mxu0 %v115
  %5999 = vmatprep.subr.bf16.mxu0 0
  %6000 = vmatpush1.bf16.msra.mxu0 %v114
  %6001 = vmatprep.subr.bf16.mxu0 0
  %6002 = vmatpush1.bf16.msra.mxu0 %v113
  %6003 = vmatprep.subr.bf16.mxu0 0
  %6004 = vmatpush1.bf16.msra.mxu0 %v112
  %6005 = vmatprep.subr.bf16.mxu0 0
  %6006 = vmatpush1.bf16.msra.mxu0 %v111
  %6007 = vmatprep.subr.bf16.mxu0 0
  %6008 = vmatpush1.bf16.msra.mxu0 %v110
  %6009 = vmatprep.subr.bf16.mxu0 0
  %6010 = vmatpush2.bf16.msra.mxu0 0
  %6011 = vmatprep.subr.bf16.mxu0 0
  %6012 = vmatpush2.bf16.msra.mxu0 0
  %6013 = vmatprep.subr.bf16.mxu0 0
  %6014 = vmatpush2.bf16.msra.mxu0 0
  %6015 = vmatprep.subr.bf16.mxu0 0
  %6016 = vmatpush2.bf16.msra.mxu0 0
  %6017 = vmatprep.subr.bf16.mxu0 0
  %6018 = vmatpush2.bf16.msra.mxu0 0
  %6019 = vmatprep.subr.bf16.mxu0 0
  %6020 = vmatpush2.bf16.msra.mxu0 0
  %6021 = vmatprep.subr.bf16.mxu0 0
  %6022 = vmatpush2.bf16.msra.mxu0 %v119
  %6023 = vmatprep.subr.bf16.mxu0 0
  %6024 = vmatpush2.bf16.msra.mxu0 %v118
  %6025 = vmatprep.mubr.bf16.mxu0 %v5991
  %6026 = vmatmul.mubr.bf16.gmra.mxu0 %v5987
  %v6027 = vpop.f32.mrf.mxu0
  %v6028 = vadd.f32 0.0, %v6027
  %v6029 = vpop.f32.mrf.mxu0
  %v6030 = vpop.f32.mrf.mxu0
  %v6031 = vadd.f32 0.0, %v6030
  %v6032 = vpop.f32.mrf.mxu0
  %6033 = vdwg.mxu0
  %v6034 = vmax.f32 %v5972, %v6028
  %v6035 = vmax.f32 %v5975, %v6031
  %s6036 = scalar_lea.vmem %s0, 1120
  %v6037 = vld [vmem:[%s6036] sm:$0xff]
  %v6038 = vld [vmem:[%s6036 + $0x8] sm:$0xff]
  %v6041 = vunpack.c.l.b16 %v6037
  %v6042 = vunpack.c.h.b16 %v6037
  %v6043 = vunpack.c.l.b16 %v6038
  %v6044 = vunpack.c.h.b16 %v6038
  %v6045 = vpack.c.b16 %v6043, %v6041
  %v6046 = vpack.c.b16 %v6044, %v6042
  %v6049 = vsel %vm130, %v6046, 0
  %6051 = vmatprep.subr.bf16.mxu0 0
  %6052 = vmatpush1.bf16.msra.mxu0 %v117
  %6053 = vmatprep.subr.bf16.mxu0 0
  %6054 = vmatpush1.bf16.msra.mxu0 %v116
  %6055 = vmatprep.subr.bf16.mxu0 0
  %6056 = vmatpush1.bf16.msra.mxu0 %v115
  %6057 = vmatprep.subr.bf16.mxu0 0
  %6058 = vmatpush1.bf16.msra.mxu0 %v114
  %6059 = vmatprep.subr.bf16.mxu0 0
  %6060 = vmatpush1.bf16.msra.mxu0 %v113
  %6061 = vmatprep.subr.bf16.mxu0 0
  %6062 = vmatpush1.bf16.msra.mxu0 %v112
  %6063 = vmatprep.subr.bf16.mxu0 0
  %6064 = vmatpush1.bf16.msra.mxu0 %v111
  %6065 = vmatprep.subr.bf16.mxu0 0
  %6066 = vmatpush1.bf16.msra.mxu0 %v110
  %6067 = vmatprep.subr.bf16.mxu0 0
  %6068 = vmatpush2.bf16.msra.mxu0 0
  %6069 = vmatprep.subr.bf16.mxu0 0
  %6070 = vmatpush2.bf16.msra.mxu0 0
  %6071 = vmatprep.subr.bf16.mxu0 0
  %6072 = vmatpush2.bf16.msra.mxu0 0
  %6073 = vmatprep.subr.bf16.mxu0 0
  %6074 = vmatpush2.bf16.msra.mxu0 0
  %6075 = vmatprep.subr.bf16.mxu0 0
  %6076 = vmatpush2.bf16.msra.mxu0 0
  %6077 = vmatprep.subr.bf16.mxu0 0
  %6078 = vmatpush2.bf16.msra.mxu0 0
  %6079 = vmatprep.subr.bf16.mxu0 0
  %6080 = vmatpush2.bf16.msra.mxu0 %v119
  %6081 = vmatprep.subr.bf16.mxu0 0
  %6082 = vmatpush2.bf16.msra.mxu0 %v118
  %6083 = vmatprep.mubr.bf16.mxu0 %v6049
  %6084 = vmatmul.mubr.bf16.gmra.mxu0 %v6045
  %v6085 = vpop.f32.mrf.mxu0
  %v6086 = vadd.f32 0.0, %v6085
  %v6087 = vpop.f32.mrf.mxu0
  %v6088 = vpop.f32.mrf.mxu0
  %v6089 = vadd.f32 0.0, %v6088
  %v6090 = vpop.f32.mrf.mxu0
  %6091 = vdwg.mxu0
  %v6092 = vmax.f32 %v6034, %v6086
  %v6093 = vmax.f32 %v6035, %v6089
  %s6094 = scalar_lea.vmem %s0, 1520
  %v6095 = vld [vmem:[%s6094] sm:$0xff]
  %v6096 = vld [vmem:[%s6094 + $0x8] sm:$0xff]
  %v6099 = vunpack.c.l.b16 %v6095
  %v6100 = vunpack.c.h.b16 %v6095
  %v6101 = vunpack.c.l.b16 %v6096
  %v6102 = vunpack.c.h.b16 %v6096
  %v6103 = vpack.c.b16 %v6101, %v6099
  %v6104 = vpack.c.b16 %v6102, %v6100
  %v6107 = vsel %vm130, %v6104, 0
  %6109 = vmatprep.subr.bf16.mxu0 0
  %6110 = vmatpush1.bf16.msra.mxu0 %v117
  %6111 = vmatprep.subr.bf16.mxu0 0
  %6112 = vmatpush1.bf16.msra.mxu0 %v116
  %6113 = vmatprep.subr.bf16.mxu0 0
  %6114 = vmatpush1.bf16.msra.mxu0 %v115
  %6115 = vmatprep.subr.bf16.mxu0 0
  %6116 = vmatpush1.bf16.msra.mxu0 %v114
  %6117 = vmatprep.subr.bf16.mxu0 0
  %6118 = vmatpush1.bf16.msra.mxu0 %v113
  %6119 = vmatprep.subr.bf16.mxu0 0
  %6120 = vmatpush1.bf16.msra.mxu0 %v112
  %6121 = vmatprep.subr.bf16.mxu0 0
  %6122 = vmatpush1.bf16.msra.mxu0 %v111
  %6123 = vmatprep.subr.bf16.mxu0 0
  %6124 = vmatpush1.bf16.msra.mxu0 %v110
  %6125 = vmatprep.subr.bf16.mxu0 0
  %6126 = vmatpush2.bf16.msra.mxu0 0
  %6127 = vmatprep.subr.bf16.mxu0 0
  %6128 = vmatpush2.bf16.msra.mxu0 0
  %6129 = vmatprep.subr.bf16.mxu0 0
  %6130 = vmatpush2.bf16.msra.mxu0 0
  %6131 = vmatprep.subr.bf16.mxu0 0
  %6132 = vmatpush2.bf16.msra.mxu0 0
  %6133 = vmatprep.subr.bf16.mxu0 0
  %6134 = vmatpush2.bf16.msra.mxu0 0
  %6135 = vmatprep.subr.bf16.mxu0 0
  %6136 = vmatpush2.bf16.msra.mxu0 0
  %6137 = vmatprep.subr.bf16.mxu0 0
  %6138 = vmatpush2.bf16.msra.mxu0 %v119
  %6139 = vmatprep.subr.bf16.mxu0 0
  %6140 = vmatpush2.bf16.msra.mxu0 %v118
  %6141 = vmatprep.mubr.bf16.mxu0 %v6107
  %6142 = vmatmul.mubr.bf16.gmra.mxu0 %v6103
  %v6143 = vpop.f32.mrf.mxu0
  %v6144 = vadd.f32 0.0, %v6143
  %v6145 = vpop.f32.mrf.mxu0
  %v6146 = vpop.f32.mrf.mxu0
  %v6147 = vadd.f32 0.0, %v6146
  %v6148 = vpop.f32.mrf.mxu0
  %6149 = vdwg.mxu0
  %v6150 = vmax.f32 %v6092, %v6144
  %v6151 = vmax.f32 %v6093, %v6147
  %v6152 = vadd.f32 %v6150, %v354
  %v6153 = vadd.f32 %v6151, %v354
  %v6154 = vmax.f32 %v6152, 0.0
  %v6155 = vmax.f32 %v6153, 0.0
  %v6156 = vpack.c.bf16 %v6155, %v6154
  %s6157 = scalar_lea.vmem %s3, 160
  %v6158 = vld [vmem:[%s6157] sm:$0xf]
  %v6159 = vld [vmem:[%s6157 + $0x4] sm:$0xf]
  %v6162 = vunpack.c.l.b16 %v6158
  %v6163 = vunpack.c.l.b16 %v6159
  %v6164 = vpack.c.b16 %v6163, %v6162
  %v6167 = vsel %vm607, %v6156, 0
  %6169 = vmatprep.subr.bf16.mxu0 0
  %6170 = vmatpush1.bf16.msra.mxu0 0
  %6171 = vmatprep.subr.bf16.mxu0 0
  %6172 = vmatpush1.bf16.msra.mxu0 0
  %6173 = vmatprep.subr.bf16.mxu0 0
  %6174 = vmatpush1.bf16.msra.mxu0 0
  %6175 = vmatprep.subr.bf16.mxu0 0
  %6176 = vmatpush1.bf16.msra.mxu0 0
  %6177 = vmatprep.subr.bf16.mxu0 0
  %6178 = vmatpush1.bf16.msra.mxu0 0
  %6179 = vmatprep.subr.bf16.mxu0 0
  %6180 = vmatpush1.bf16.msra.mxu0 0
  %6181 = vmatprep.subr.bf16.mxu0 0
  %6182 = vmatpush1.bf16.msra.mxu0 0
  %6183 = vmatprep.subr.bf16.mxu0 0
  %6184 = vmatpush1.bf16.msra.mxu0 %v6164
  %6185 = vmatprep.subr.bf16.mxu0 0
  %6186 = vmatpush2.bf16.msra.mxu0 0
  %6187 = vmatprep.subr.bf16.mxu0 0
  %6188 = vmatpush2.bf16.msra.mxu0 0
  %6189 = vmatprep.subr.bf16.mxu0 0
  %6190 = vmatpush2.bf16.msra.mxu0 0
  %6191 = vmatprep.subr.bf16.mxu0 0
  %6192 = vmatpush2.bf16.msra.mxu0 0
  %6193 = vmatprep.subr.bf16.mxu0 0
  %6194 = vmatpush2.bf16.msra.mxu0 0
  %6195 = vmatprep.subr.bf16.mxu0 0
  %6196 = vmatpush2.bf16.msra.mxu0 0
  %6197 = vmatprep.subr.bf16.mxu0 0
  %6198 = vmatpush2.bf16.msra.mxu0 0
  %6199 = vmatprep.subr.bf16.mxu0 0
  %6200 = vmatpush2.bf16.msra.mxu0 0
  %6201 = vmatprep.mubr.bf16.mxu0 0
  %6202 = vmatmul.mubr.bf16.gmra.mxu0 %v6167
  %v6203 = vpop.f32.mrf.mxu0
  %v6204 = vadd.f32 0.0, %v6203
  %v6205 = vpop.f32.mrf.mxu0
  %v6206 = vpop.f32.mrf.mxu0
  %v6207 = vadd.f32 0.0, %v6206
  %v6208 = vpop.f32.mrf.mxu0
  %6209 = vdwg.mxu0
  %v6210 = vadd.f32 %v5920, %v6204
  %v6211 = vadd.f32 %v5921, %v6207
  %s6212 = scalar_lea.vmem %s0, 336
  %v6213 = vld [vmem:[%s6212] sm:$0xff]
  %v6214 = vld [vmem:[%s6212 + $0x8] sm:$0xff]
  %v6217 = vunpack.c.l.b16 %v6213
  %v6218 = vunpack.c.h.b16 %v6213
  %v6219 = vunpack.c.l.b16 %v6214
  %v6220 = vunpack.c.h.b16 %v6214
  %v6221 = vpack.c.b16 %v6219, %v6217
  %v6222 = vpack.c.b16 %v6220, %v6218
  %v6225 = vsel %vm130, %v6222, 0
  %6227 = vmatprep.subr.bf16.mxu0 0
  %6228 = vmatpush1.bf16.msra.mxu0 %v117
  %6229 = vmatprep.subr.bf16.mxu0 0
  %6230 = vmatpush1.bf16.msra.mxu0 %v116
  %6231 = vmatprep.subr.bf16.mxu0 0
  %6232 = vmatpush1.bf16.msra.mxu0 %v115
  %6233 = vmatprep.subr.bf16.mxu0 0
  %6234 = vmatpush1.bf16.msra.mxu0 %v114
  %6235 = vmatprep.subr.bf16.mxu0 0
  %6236 = vmatpush1.bf16.msra.mxu0 %v113
  %6237 = vmatprep.subr.bf16.mxu0 0
  %6238 = vmatpush1.bf16.msra.mxu0 %v112
  %6239 = vmatprep.subr.bf16.mxu0 0
  %6240 = vmatpush1.bf16.msra.mxu0 %v111
  %6241 = vmatprep.subr.bf16.mxu0 0
  %6242 = vmatpush1.bf16.msra.mxu0 %v110
  %6243 = vmatprep.subr.bf16.mxu0 0
  %6244 = vmatpush2.bf16.msra.mxu0 0
  %6245 = vmatprep.subr.bf16.mxu0 0
  %6246 = vmatpush2.bf16.msra.mxu0 0
  %6247 = vmatprep.subr.bf16.mxu0 0
  %6248 = vmatpush2.bf16.msra.mxu0 0
  %6249 = vmatprep.subr.bf16.mxu0 0
  %6250 = vmatpush2.bf16.msra.mxu0 0
  %6251 = vmatprep.subr.bf16.mxu0 0
  %6252 = vmatpush2.bf16.msra.mxu0 0
  %6253 = vmatprep.subr.bf16.mxu0 0
  %6254 = vmatpush2.bf16.msra.mxu0 0
  %6255 = vmatprep.subr.bf16.mxu0 0
  %6256 = vmatpush2.bf16.msra.mxu0 %v119
  %6257 = vmatprep.subr.bf16.mxu0 0
  %6258 = vmatpush2.bf16.msra.mxu0 %v118
  %6259 = vmatprep.mubr.bf16.mxu0 %v6225
  %6260 = vmatmul.mubr.bf16.gmra.mxu0 %v6221
  %v6261 = vpop.f32.mrf.mxu0
  %v6262 = vadd.f32 0.0, %v6261
  %v6263 = vpop.f32.mrf.mxu0
  %v6264 = vpop.f32.mrf.mxu0
  %v6265 = vadd.f32 0.0, %v6264
  %v6266 = vpop.f32.mrf.mxu0
  %6267 = vdwg.mxu0
  %s6268 = scalar_lea.vmem %s0, 736
  %v6269 = vld [vmem:[%s6268] sm:$0xff]
  %v6270 = vld [vmem:[%s6268 + $0x8] sm:$0xff]
  %v6273 = vunpack.c.l.b16 %v6269
  %v6274 = vunpack.c.h.b16 %v6269
  %v6275 = vunpack.c.l.b16 %v6270
  %v6276 = vunpack.c.h.b16 %v6270
  %v6277 = vpack.c.b16 %v6275, %v6273
  %v6278 = vpack.c.b16 %v6276, %v6274
  %v6281 = vsel %vm130, %v6278, 0
  %6283 = vmatprep.subr.bf16.mxu0 0
  %6284 = vmatpush1.bf16.msra.mxu0 %v117
  %6285 = vmatprep.subr.bf16.mxu0 0
  %6286 = vmatpush1.bf16.msra.mxu0 %v116
  %6287 = vmatprep.subr.bf16.mxu0 0
  %6288 = vmatpush1.bf16.msra.mxu0 %v115
  %6289 = vmatprep.subr.bf16.mxu0 0
  %6290 = vmatpush1.bf16.msra.mxu0 %v114
  %6291 = vmatprep.subr.bf16.mxu0 0
  %6292 = vmatpush1.bf16.msra.mxu0 %v113
  %6293 = vmatprep.subr.bf16.mxu0 0
  %6294 = vmatpush1.bf16.msra.mxu0 %v112
  %6295 = vmatprep.subr.bf16.mxu0 0
  %6296 = vmatpush1.bf16.msra.mxu0 %v111
  %6297 = vmatprep.subr.bf16.mxu0 0
  %6298 = vmatpush1.bf16.msra.mxu0 %v110
  %6299 = vmatprep.subr.bf16.mxu0 0
  %6300 = vmatpush2.bf16.msra.mxu0 0
  %6301 = vmatprep.subr.bf16.mxu0 0
  %6302 = vmatpush2.bf16.msra.mxu0 0
  %6303 = vmatprep.subr.bf16.mxu0 0
  %6304 = vmatpush2.bf16.msra.mxu0 0
  %6305 = vmatprep.subr.bf16.mxu0 0
  %6306 = vmatpush2.bf16.msra.mxu0 0
  %6307 = vmatprep.subr.bf16.mxu0 0
  %6308 = vmatpush2.bf16.msra.mxu0 0
  %6309 = vmatprep.subr.bf16.mxu0 0
  %6310 = vmatpush2.bf16.msra.mxu0 0
  %6311 = vmatprep.subr.bf16.mxu0 0
  %6312 = vmatpush2.bf16.msra.mxu0 %v119
  %6313 = vmatprep.subr.bf16.mxu0 0
  %6314 = vmatpush2.bf16.msra.mxu0 %v118
  %6315 = vmatprep.mubr.bf16.mxu0 %v6281
  %6316 = vmatmul.mubr.bf16.gmra.mxu0 %v6277
  %v6317 = vpop.f32.mrf.mxu0
  %v6318 = vadd.f32 0.0, %v6317
  %v6319 = vpop.f32.mrf.mxu0
  %v6320 = vpop.f32.mrf.mxu0
  %v6321 = vadd.f32 0.0, %v6320
  %v6322 = vpop.f32.mrf.mxu0
  %6323 = vdwg.mxu0
  %v6324 = vmax.f32 %v6262, %v6318
  %v6325 = vmax.f32 %v6265, %v6321
  %s6326 = scalar_lea.vmem %s0, 1136
  %v6327 = vld [vmem:[%s6326] sm:$0xff]
  %v6328 = vld [vmem:[%s6326 + $0x8] sm:$0xff]
  %v6331 = vunpack.c.l.b16 %v6327
  %v6332 = vunpack.c.h.b16 %v6327
  %v6333 = vunpack.c.l.b16 %v6328
  %v6334 = vunpack.c.h.b16 %v6328
  %v6335 = vpack.c.b16 %v6333, %v6331
  %v6336 = vpack.c.b16 %v6334, %v6332
  %v6339 = vsel %vm130, %v6336, 0
  %6341 = vmatprep.subr.bf16.mxu0 0
  %6342 = vmatpush1.bf16.msra.mxu0 %v117
  %6343 = vmatprep.subr.bf16.mxu0 0
  %6344 = vmatpush1.bf16.msra.mxu0 %v116
  %6345 = vmatprep.subr.bf16.mxu0 0
  %6346 = vmatpush1.bf16.msra.mxu0 %v115
  %6347 = vmatprep.subr.bf16.mxu0 0
  %6348 = vmatpush1.bf16.msra.mxu0 %v114
  %6349 = vmatprep.subr.bf16.mxu0 0
  %6350 = vmatpush1.bf16.msra.mxu0 %v113
  %6351 = vmatprep.subr.bf16.mxu0 0
  %6352 = vmatpush1.bf16.msra.mxu0 %v112
  %6353 = vmatprep.subr.bf16.mxu0 0
  %6354 = vmatpush1.bf16.msra.mxu0 %v111
  %6355 = vmatprep.subr.bf16.mxu0 0
  %6356 = vmatpush1.bf16.msra.mxu0 %v110
  %6357 = vmatprep.subr.bf16.mxu0 0
  %6358 = vmatpush2.bf16.msra.mxu0 0
  %6359 = vmatprep.subr.bf16.mxu0 0
  %6360 = vmatpush2.bf16.msra.mxu0 0
  %6361 = vmatprep.subr.bf16.mxu0 0
  %6362 = vmatpush2.bf16.msra.mxu0 0
  %6363 = vmatprep.subr.bf16.mxu0 0
  %6364 = vmatpush2.bf16.msra.mxu0 0
  %6365 = vmatprep.subr.bf16.mxu0 0
  %6366 = vmatpush2.bf16.msra.mxu0 0
  %6367 = vmatprep.subr.bf16.mxu0 0
  %6368 = vmatpush2.bf16.msra.mxu0 0
  %6369 = vmatprep.subr.bf16.mxu0 0
  %6370 = vmatpush2.bf16.msra.mxu0 %v119
  %6371 = vmatprep.subr.bf16.mxu0 0
  %6372 = vmatpush2.bf16.msra.mxu0 %v118
  %6373 = vmatprep.mubr.bf16.mxu0 %v6339
  %6374 = vmatmul.mubr.bf16.gmra.mxu0 %v6335
  %v6375 = vpop.f32.mrf.mxu0
  %v6376 = vadd.f32 0.0, %v6375
  %v6377 = vpop.f32.mrf.mxu0
  %v6378 = vpop.f32.mrf.mxu0
  %v6379 = vadd.f32 0.0, %v6378
  %v6380 = vpop.f32.mrf.mxu0
  %6381 = vdwg.mxu0
  %v6382 = vmax.f32 %v6324, %v6376
  %v6383 = vmax.f32 %v6325, %v6379
  %s6384 = scalar_lea.vmem %s0, 1536
  %v6385 = vld [vmem:[%s6384] sm:$0xff]
  %v6386 = vld [vmem:[%s6384 + $0x8] sm:$0xff]
  %v6389 = vunpack.c.l.b16 %v6385
  %v6390 = vunpack.c.h.b16 %v6385
  %v6391 = vunpack.c.l.b16 %v6386
  %v6392 = vunpack.c.h.b16 %v6386
  %v6393 = vpack.c.b16 %v6391, %v6389
  %v6394 = vpack.c.b16 %v6392, %v6390
  %v6397 = vsel %vm130, %v6394, 0
  %6399 = vmatprep.subr.bf16.mxu0 0
  %6400 = vmatpush1.bf16.msra.mxu0 %v117
  %6401 = vmatprep.subr.bf16.mxu0 0
  %6402 = vmatpush1.bf16.msra.mxu0 %v116
  %6403 = vmatprep.subr.bf16.mxu0 0
  %6404 = vmatpush1.bf16.msra.mxu0 %v115
  %6405 = vmatprep.subr.bf16.mxu0 0
  %6406 = vmatpush1.bf16.msra.mxu0 %v114
  %6407 = vmatprep.subr.bf16.mxu0 0
  %6408 = vmatpush1.bf16.msra.mxu0 %v113
  %6409 = vmatprep.subr.bf16.mxu0 0
  %6410 = vmatpush1.bf16.msra.mxu0 %v112
  %6411 = vmatprep.subr.bf16.mxu0 0
  %6412 = vmatpush1.bf16.msra.mxu0 %v111
  %6413 = vmatprep.subr.bf16.mxu0 0
  %6414 = vmatpush1.bf16.msra.mxu0 %v110
  %6415 = vmatprep.subr.bf16.mxu0 0
  %6416 = vmatpush2.bf16.msra.mxu0 0
  %6417 = vmatprep.subr.bf16.mxu0 0
  %6418 = vmatpush2.bf16.msra.mxu0 0
  %6419 = vmatprep.subr.bf16.mxu0 0
  %6420 = vmatpush2.bf16.msra.mxu0 0
  %6421 = vmatprep.subr.bf16.mxu0 0
  %6422 = vmatpush2.bf16.msra.mxu0 0
  %6423 = vmatprep.subr.bf16.mxu0 0
  %6424 = vmatpush2.bf16.msra.mxu0 0
  %6425 = vmatprep.subr.bf16.mxu0 0
  %6426 = vmatpush2.bf16.msra.mxu0 0
  %6427 = vmatprep.subr.bf16.mxu0 0
  %6428 = vmatpush2.bf16.msra.mxu0 %v119
  %6429 = vmatprep.subr.bf16.mxu0 0
  %6430 = vmatpush2.bf16.msra.mxu0 %v118
  %6431 = vmatprep.mubr.bf16.mxu0 %v6397
  %6432 = vmatmul.mubr.bf16.gmra.mxu0 %v6393
  %v6433 = vpop.f32.mrf.mxu0
  %v6434 = vadd.f32 0.0, %v6433
  %v6435 = vpop.f32.mrf.mxu0
  %v6436 = vpop.f32.mrf.mxu0
  %v6437 = vadd.f32 0.0, %v6436
  %v6438 = vpop.f32.mrf.mxu0
  %6439 = vdwg.mxu0
  %v6440 = vmax.f32 %v6382, %v6434
  %v6441 = vmax.f32 %v6383, %v6437
  %v6442 = vadd.f32 %v6440, %v354
  %v6443 = vadd.f32 %v6441, %v354
  %v6444 = vmax.f32 %v6442, 0.0
  %v6445 = vmax.f32 %v6443, 0.0
  %v6446 = vpack.c.bf16 %v6445, %v6444
  %s6447 = scalar_lea.vmem %s3, 168
  %v6448 = vld [vmem:[%s6447] sm:$0xf]
  %v6449 = vld [vmem:[%s6447 + $0x4] sm:$0xf]
  %v6452 = vunpack.c.l.b16 %v6448
  %v6453 = vunpack.c.l.b16 %v6449
  %v6454 = vpack.c.b16 %v6453, %v6452
  %v6457 = vsel %vm607, %v6446, 0
  %6459 = vmatprep.subr.bf16.mxu0 0
  %6460 = vmatpush1.bf16.msra.mxu0 0
  %6461 = vmatprep.subr.bf16.mxu0 0
  %6462 = vmatpush1.bf16.msra.mxu0 0
  %6463 = vmatprep.subr.bf16.mxu0 0
  %6464 = vmatpush1.bf16.msra.mxu0 0
  %6465 = vmatprep.subr.bf16.mxu0 0
  %6466 = vmatpush1.bf16.msra.mxu0 0
  %6467 = vmatprep.subr.bf16.mxu0 0
  %6468 = vmatpush1.bf16.msra.mxu0 0
  %6469 = vmatprep.subr.bf16.mxu0 0
  %6470 = vmatpush1.bf16.msra.mxu0 0
  %6471 = vmatprep.subr.bf16.mxu0 0
  %6472 = vmatpush1.bf16.msra.mxu0 0
  %6473 = vmatprep.subr.bf16.mxu0 0
  %6474 = vmatpush1.bf16.msra.mxu0 %v6454
  %6475 = vmatprep.subr.bf16.mxu0 0
  %6476 = vmatpush2.bf16.msra.mxu0 0
  %6477 = vmatprep.subr.bf16.mxu0 0
  %6478 = vmatpush2.bf16.msra.mxu0 0
  %6479 = vmatprep.subr.bf16.mxu0 0
  %6480 = vmatpush2.bf16.msra.mxu0 0
  %6481 = vmatprep.subr.bf16.mxu0 0
  %6482 = vmatpush2.bf16.msra.mxu0 0
  %6483 = vmatprep.subr.bf16.mxu0 0
  %6484 = vmatpush2.bf16.msra.mxu0 0
  %6485 = vmatprep.subr.bf16.mxu0 0
  %6486 = vmatpush2.bf16.msra.mxu0 0
  %6487 = vmatprep.subr.bf16.mxu0 0
  %6488 = vmatpush2.bf16.msra.mxu0 0
  %6489 = vmatprep.subr.bf16.mxu0 0
  %6490 = vmatpush2.bf16.msra.mxu0 0
  %6491 = vmatprep.mubr.bf16.mxu0 0
  %6492 = vmatmul.mubr.bf16.gmra.mxu0 %v6457
  %v6493 = vpop.f32.mrf.mxu0
  %v6494 = vadd.f32 0.0, %v6493
  %v6495 = vpop.f32.mrf.mxu0
  %v6496 = vpop.f32.mrf.mxu0
  %v6497 = vadd.f32 0.0, %v6496
  %v6498 = vpop.f32.mrf.mxu0
  %6499 = vdwg.mxu0
  %v6500 = vadd.f32 %v6210, %v6494
  %v6501 = vadd.f32 %v6211, %v6497
  %s6502 = scalar_lea.vmem %s0, 352
  %v6503 = vld [vmem:[%s6502] sm:$0xff]
  %v6504 = vld [vmem:[%s6502 + $0x8] sm:$0xff]
  %v6507 = vunpack.c.l.b16 %v6503
  %v6508 = vunpack.c.h.b16 %v6503
  %v6509 = vunpack.c.l.b16 %v6504
  %v6510 = vunpack.c.h.b16 %v6504
  %v6511 = vpack.c.b16 %v6509, %v6507
  %v6512 = vpack.c.b16 %v6510, %v6508
  %v6515 = vsel %vm130, %v6512, 0
  %6517 = vmatprep.subr.bf16.mxu0 0
  %6518 = vmatpush1.bf16.msra.mxu0 %v117
  %6519 = vmatprep.subr.bf16.mxu0 0
  %6520 = vmatpush1.bf16.msra.mxu0 %v116
  %6521 = vmatprep.subr.bf16.mxu0 0
  %6522 = vmatpush1.bf16.msra.mxu0 %v115
  %6523 = vmatprep.subr.bf16.mxu0 0
  %6524 = vmatpush1.bf16.msra.mxu0 %v114
  %6525 = vmatprep.subr.bf16.mxu0 0
  %6526 = vmatpush1.bf16.msra.mxu0 %v113
  %6527 = vmatprep.subr.bf16.mxu0 0
  %6528 = vmatpush1.bf16.msra.mxu0 %v112
  %6529 = vmatprep.subr.bf16.mxu0 0
  %6530 = vmatpush1.bf16.msra.mxu0 %v111
  %6531 = vmatprep.subr.bf16.mxu0 0
  %6532 = vmatpush1.bf16.msra.mxu0 %v110
  %6533 = vmatprep.subr.bf16.mxu0 0
  %6534 = vmatpush2.bf16.msra.mxu0 0
  %6535 = vmatprep.subr.bf16.mxu0 0
  %6536 = vmatpush2.bf16.msra.mxu0 0
  %6537 = vmatprep.subr.bf16.mxu0 0
  %6538 = vmatpush2.bf16.msra.mxu0 0
  %6539 = vmatprep.subr.bf16.mxu0 0
  %6540 = vmatpush2.bf16.msra.mxu0 0
  %6541 = vmatprep.subr.bf16.mxu0 0
  %6542 = vmatpush2.bf16.msra.mxu0 0
  %6543 = vmatprep.subr.bf16.mxu0 0
  %6544 = vmatpush2.bf16.msra.mxu0 0
  %6545 = vmatprep.subr.bf16.mxu0 0
  %6546 = vmatpush2.bf16.msra.mxu0 %v119
  %6547 = vmatprep.subr.bf16.mxu0 0
  %6548 = vmatpush2.bf16.msra.mxu0 %v118
  %6549 = vmatprep.mubr.bf16.mxu0 %v6515
  %6550 = vmatmul.mubr.bf16.gmra.mxu0 %v6511
  %v6551 = vpop.f32.mrf.mxu0
  %v6552 = vadd.f32 0.0, %v6551
  %v6553 = vpop.f32.mrf.mxu0
  %v6554 = vpop.f32.mrf.mxu0
  %v6555 = vadd.f32 0.0, %v6554
  %v6556 = vpop.f32.mrf.mxu0
  %6557 = vdwg.mxu0
  %s6558 = scalar_lea.vmem %s0, 752
  %v6559 = vld [vmem:[%s6558] sm:$0xff]
  %v6560 = vld [vmem:[%s6558 + $0x8] sm:$0xff]
  %v6563 = vunpack.c.l.b16 %v6559
  %v6564 = vunpack.c.h.b16 %v6559
  %v6565 = vunpack.c.l.b16 %v6560
  %v6566 = vunpack.c.h.b16 %v6560
  %v6567 = vpack.c.b16 %v6565, %v6563
  %v6568 = vpack.c.b16 %v6566, %v6564
  %v6571 = vsel %vm130, %v6568, 0
  %6573 = vmatprep.subr.bf16.mxu0 0
  %6574 = vmatpush1.bf16.msra.mxu0 %v117
  %6575 = vmatprep.subr.bf16.mxu0 0
  %6576 = vmatpush1.bf16.msra.mxu0 %v116
  %6577 = vmatprep.subr.bf16.mxu0 0
  %6578 = vmatpush1.bf16.msra.mxu0 %v115
  %6579 = vmatprep.subr.bf16.mxu0 0
  %6580 = vmatpush1.bf16.msra.mxu0 %v114
  %6581 = vmatprep.subr.bf16.mxu0 0
  %6582 = vmatpush1.bf16.msra.mxu0 %v113
  %6583 = vmatprep.subr.bf16.mxu0 0
  %6584 = vmatpush1.bf16.msra.mxu0 %v112
  %6585 = vmatprep.subr.bf16.mxu0 0
  %6586 = vmatpush1.bf16.msra.mxu0 %v111
  %6587 = vmatprep.subr.bf16.mxu0 0
  %6588 = vmatpush1.bf16.msra.mxu0 %v110
  %6589 = vmatprep.subr.bf16.mxu0 0
  %6590 = vmatpush2.bf16.msra.mxu0 0
  %6591 = vmatprep.subr.bf16.mxu0 0
  %6592 = vmatpush2.bf16.msra.mxu0 0
  %6593 = vmatprep.subr.bf16.mxu0 0
  %6594 = vmatpush2.bf16.msra.mxu0 0
  %6595 = vmatprep.subr.bf16.mxu0 0
  %6596 = vmatpush2.bf16.msra.mxu0 0
  %6597 = vmatprep.subr.bf16.mxu0 0
  %6598 = vmatpush2.bf16.msra.mxu0 0
  %6599 = vmatprep.subr.bf16.mxu0 0
  %6600 = vmatpush2.bf16.msra.mxu0 0
  %6601 = vmatprep.subr.bf16.mxu0 0
  %6602 = vmatpush2.bf16.msra.mxu0 %v119
  %6603 = vmatprep.subr.bf16.mxu0 0
  %6604 = vmatpush2.bf16.msra.mxu0 %v118
  %6605 = vmatprep.mubr.bf16.mxu0 %v6571
  %6606 = vmatmul.mubr.bf16.gmra.mxu0 %v6567
  %v6607 = vpop.f32.mrf.mxu0
  %v6608 = vadd.f32 0.0, %v6607
  %v6609 = vpop.f32.mrf.mxu0
  %v6610 = vpop.f32.mrf.mxu0
  %v6611 = vadd.f32 0.0, %v6610
  %v6612 = vpop.f32.mrf.mxu0
  %6613 = vdwg.mxu0
  %v6614 = vmax.f32 %v6552, %v6608
  %v6615 = vmax.f32 %v6555, %v6611
  %s6616 = scalar_lea.vmem %s0, 1152
  %v6617 = vld [vmem:[%s6616] sm:$0xff]
  %v6618 = vld [vmem:[%s6616 + $0x8] sm:$0xff]
  %v6621 = vunpack.c.l.b16 %v6617
  %v6622 = vunpack.c.h.b16 %v6617
  %v6623 = vunpack.c.l.b16 %v6618
  %v6624 = vunpack.c.h.b16 %v6618
  %v6625 = vpack.c.b16 %v6623, %v6621
  %v6626 = vpack.c.b16 %v6624, %v6622
  %v6629 = vsel %vm130, %v6626, 0
  %6631 = vmatprep.subr.bf16.mxu0 0
  %6632 = vmatpush1.bf16.msra.mxu0 %v117
  %6633 = vmatprep.subr.bf16.mxu0 0
  %6634 = vmatpush1.bf16.msra.mxu0 %v116
  %6635 = vmatprep.subr.bf16.mxu0 0
  %6636 = vmatpush1.bf16.msra.mxu0 %v115
  %6637 = vmatprep.subr.bf16.mxu0 0
  %6638 = vmatpush1.bf16.msra.mxu0 %v114
  %6639 = vmatprep.subr.bf16.mxu0 0
  %6640 = vmatpush1.bf16.msra.mxu0 %v113
  %6641 = vmatprep.subr.bf16.mxu0 0
  %6642 = vmatpush1.bf16.msra.mxu0 %v112
  %6643 = vmatprep.subr.bf16.mxu0 0
  %6644 = vmatpush1.bf16.msra.mxu0 %v111
  %6645 = vmatprep.subr.bf16.mxu0 0
  %6646 = vmatpush1.bf16.msra.mxu0 %v110
  %6647 = vmatprep.subr.bf16.mxu0 0
  %6648 = vmatpush2.bf16.msra.mxu0 0
  %6649 = vmatprep.subr.bf16.mxu0 0
  %6650 = vmatpush2.bf16.msra.mxu0 0
  %6651 = vmatprep.subr.bf16.mxu0 0
  %6652 = vmatpush2.bf16.msra.mxu0 0
  %6653 = vmatprep.subr.bf16.mxu0 0
  %6654 = vmatpush2.bf16.msra.mxu0 0
  %6655 = vmatprep.subr.bf16.mxu0 0
  %6656 = vmatpush2.bf16.msra.mxu0 0
  %6657 = vmatprep.subr.bf16.mxu0 0
  %6658 = vmatpush2.bf16.msra.mxu0 0
  %6659 = vmatprep.subr.bf16.mxu0 0
  %6660 = vmatpush2.bf16.msra.mxu0 %v119
  %6661 = vmatprep.subr.bf16.mxu0 0
  %6662 = vmatpush2.bf16.msra.mxu0 %v118
  %6663 = vmatprep.mubr.bf16.mxu0 %v6629
  %6664 = vmatmul.mubr.bf16.gmra.mxu0 %v6625
  %v6665 = vpop.f32.mrf.mxu0
  %v6666 = vadd.f32 0.0, %v6665
  %v6667 = vpop.f32.mrf.mxu0
  %v6668 = vpop.f32.mrf.mxu0
  %v6669 = vadd.f32 0.0, %v6668
  %v6670 = vpop.f32.mrf.mxu0
  %6671 = vdwg.mxu0
  %v6672 = vmax.f32 %v6614, %v6666
  %v6673 = vmax.f32 %v6615, %v6669
  %s6674 = scalar_lea.vmem %s0, 1552
  %v6675 = vld [vmem:[%s6674] sm:$0xff]
  %v6676 = vld [vmem:[%s6674 + $0x8] sm:$0xff]
  %v6679 = vunpack.c.l.b16 %v6675
  %v6680 = vunpack.c.h.b16 %v6675
  %v6681 = vunpack.c.l.b16 %v6676
  %v6682 = vunpack.c.h.b16 %v6676
  %v6683 = vpack.c.b16 %v6681, %v6679
  %v6684 = vpack.c.b16 %v6682, %v6680
  %v6687 = vsel %vm130, %v6684, 0
  %6689 = vmatprep.subr.bf16.mxu0 0
  %6690 = vmatpush1.bf16.msra.mxu0 %v117
  %6691 = vmatprep.subr.bf16.mxu0 0
  %6692 = vmatpush1.bf16.msra.mxu0 %v116
  %6693 = vmatprep.subr.bf16.mxu0 0
  %6694 = vmatpush1.bf16.msra.mxu0 %v115
  %6695 = vmatprep.subr.bf16.mxu0 0
  %6696 = vmatpush1.bf16.msra.mxu0 %v114
  %6697 = vmatprep.subr.bf16.mxu0 0
  %6698 = vmatpush1.bf16.msra.mxu0 %v113
  %6699 = vmatprep.subr.bf16.mxu0 0
  %6700 = vmatpush1.bf16.msra.mxu0 %v112
  %6701 = vmatprep.subr.bf16.mxu0 0
  %6702 = vmatpush1.bf16.msra.mxu0 %v111
  %6703 = vmatprep.subr.bf16.mxu0 0
  %6704 = vmatpush1.bf16.msra.mxu0 %v110
  %6705 = vmatprep.subr.bf16.mxu0 0
  %6706 = vmatpush2.bf16.msra.mxu0 0
  %6707 = vmatprep.subr.bf16.mxu0 0
  %6708 = vmatpush2.bf16.msra.mxu0 0
  %6709 = vmatprep.subr.bf16.mxu0 0
  %6710 = vmatpush2.bf16.msra.mxu0 0
  %6711 = vmatprep.subr.bf16.mxu0 0
  %6712 = vmatpush2.bf16.msra.mxu0 0
  %6713 = vmatprep.subr.bf16.mxu0 0
  %6714 = vmatpush2.bf16.msra.mxu0 0
  %6715 = vmatprep.subr.bf16.mxu0 0
  %6716 = vmatpush2.bf16.msra.mxu0 0
  %6717 = vmatprep.subr.bf16.mxu0 0
  %6718 = vmatpush2.bf16.msra.mxu0 %v119
  %6719 = vmatprep.subr.bf16.mxu0 0
  %6720 = vmatpush2.bf16.msra.mxu0 %v118
  %6721 = vmatprep.mubr.bf16.mxu0 %v6687
  %6722 = vmatmul.mubr.bf16.gmra.mxu0 %v6683
  %v6723 = vpop.f32.mrf.mxu0
  %v6724 = vadd.f32 0.0, %v6723
  %v6725 = vpop.f32.mrf.mxu0
  %v6726 = vpop.f32.mrf.mxu0
  %v6727 = vadd.f32 0.0, %v6726
  %v6728 = vpop.f32.mrf.mxu0
  %6729 = vdwg.mxu0
  %v6730 = vmax.f32 %v6672, %v6724
  %v6731 = vmax.f32 %v6673, %v6727
  %v6732 = vadd.f32 %v6730, %v354
  %v6733 = vadd.f32 %v6731, %v354
  %v6734 = vmax.f32 %v6732, 0.0
  %v6735 = vmax.f32 %v6733, 0.0
  %v6736 = vpack.c.bf16 %v6735, %v6734
  %s6737 = scalar_lea.vmem %s3, 176
  %v6738 = vld [vmem:[%s6737] sm:$0xf]
  %v6739 = vld [vmem:[%s6737 + $0x4] sm:$0xf]
  %v6742 = vunpack.c.l.b16 %v6738
  %v6743 = vunpack.c.l.b16 %v6739
  %v6744 = vpack.c.b16 %v6743, %v6742
  %v6747 = vsel %vm607, %v6736, 0
  %6749 = vmatprep.subr.bf16.mxu0 0
  %6750 = vmatpush1.bf16.msra.mxu0 0
  %6751 = vmatprep.subr.bf16.mxu0 0
  %6752 = vmatpush1.bf16.msra.mxu0 0
  %6753 = vmatprep.subr.bf16.mxu0 0
  %6754 = vmatpush1.bf16.msra.mxu0 0
  %6755 = vmatprep.subr.bf16.mxu0 0
  %6756 = vmatpush1.bf16.msra.mxu0 0
  %6757 = vmatprep.subr.bf16.mxu0 0
  %6758 = vmatpush1.bf16.msra.mxu0 0
  %6759 = vmatprep.subr.bf16.mxu0 0
  %6760 = vmatpush1.bf16.msra.mxu0 0
  %6761 = vmatprep.subr.bf16.mxu0 0
  %6762 = vmatpush1.bf16.msra.mxu0 0
  %6763 = vmatprep.subr.bf16.mxu0 0
  %6764 = vmatpush1.bf16.msra.mxu0 %v6744
  %6765 = vmatprep.subr.bf16.mxu0 0
  %6766 = vmatpush2.bf16.msra.mxu0 0
  %6767 = vmatprep.subr.bf16.mxu0 0
  %6768 = vmatpush2.bf16.msra.mxu0 0
  %6769 = vmatprep.subr.bf16.mxu0 0
  %6770 = vmatpush2.bf16.msra.mxu0 0
  %6771 = vmatprep.subr.bf16.mxu0 0
  %6772 = vmatpush2.bf16.msra.mxu0 0
  %6773 = vmatprep.subr.bf16.mxu0 0
  %6774 = vmatpush2.bf16.msra.mxu0 0
  %6775 = vmatprep.subr.bf16.mxu0 0
  %6776 = vmatpush2.bf16.msra.mxu0 0
  %6777 = vmatprep.subr.bf16.mxu0 0
  %6778 = vmatpush2.bf16.msra.mxu0 0
  %6779 = vmatprep.subr.bf16.mxu0 0
  %6780 = vmatpush2.bf16.msra.mxu0 0
  %6781 = vmatprep.mubr.bf16.mxu0 0
  %6782 = vmatmul.mubr.bf16.gmra.mxu0 %v6747
  %v6783 = vpop.f32.mrf.mxu0
  %v6784 = vadd.f32 0.0, %v6783
  %v6785 = vpop.f32.mrf.mxu0
  %v6786 = vpop.f32.mrf.mxu0
  %v6787 = vadd.f32 0.0, %v6786
  %v6788 = vpop.f32.mrf.mxu0
  %6789 = vdwg.mxu0
  %v6790 = vadd.f32 %v6500, %v6784
  %v6791 = vadd.f32 %v6501, %v6787
  %s6792 = scalar_lea.vmem %s0, 368
  %v6793 = vld [vmem:[%s6792] sm:$0xff]
  %v6794 = vld [vmem:[%s6792 + $0x8] sm:$0xff]
  %v6797 = vunpack.c.l.b16 %v6793
  %v6798 = vunpack.c.h.b16 %v6793
  %v6799 = vunpack.c.l.b16 %v6794
  %v6800 = vunpack.c.h.b16 %v6794
  %v6801 = vpack.c.b16 %v6799, %v6797
  %v6802 = vpack.c.b16 %v6800, %v6798
  %v6805 = vsel %vm130, %v6802, 0
  %6807 = vmatprep.subr.bf16.mxu0 0
  %6808 = vmatpush1.bf16.msra.mxu0 %v117
  %6809 = vmatprep.subr.bf16.mxu0 0
  %6810 = vmatpush1.bf16.msra.mxu0 %v116
  %6811 = vmatprep.subr.bf16.mxu0 0
  %6812 = vmatpush1.bf16.msra.mxu0 %v115
  %6813 = vmatprep.subr.bf16.mxu0 0
  %6814 = vmatpush1.bf16.msra.mxu0 %v114
  %6815 = vmatprep.subr.bf16.mxu0 0
  %6816 = vmatpush1.bf16.msra.mxu0 %v113
  %6817 = vmatprep.subr.bf16.mxu0 0
  %6818 = vmatpush1.bf16.msra.mxu0 %v112
  %6819 = vmatprep.subr.bf16.mxu0 0
  %6820 = vmatpush1.bf16.msra.mxu0 %v111
  %6821 = vmatprep.subr.bf16.mxu0 0
  %6822 = vmatpush1.bf16.msra.mxu0 %v110
  %6823 = vmatprep.subr.bf16.mxu0 0
  %6824 = vmatpush2.bf16.msra.mxu0 0
  %6825 = vmatprep.subr.bf16.mxu0 0
  %6826 = vmatpush2.bf16.msra.mxu0 0
  %6827 = vmatprep.subr.bf16.mxu0 0
  %6828 = vmatpush2.bf16.msra.mxu0 0
  %6829 = vmatprep.subr.bf16.mxu0 0
  %6830 = vmatpush2.bf16.msra.mxu0 0
  %6831 = vmatprep.subr.bf16.mxu0 0
  %6832 = vmatpush2.bf16.msra.mxu0 0
  %6833 = vmatprep.subr.bf16.mxu0 0
  %6834 = vmatpush2.bf16.msra.mxu0 0
  %6835 = vmatprep.subr.bf16.mxu0 0
  %6836 = vmatpush2.bf16.msra.mxu0 %v119
  %6837 = vmatprep.subr.bf16.mxu0 0
  %6838 = vmatpush2.bf16.msra.mxu0 %v118
  %6839 = vmatprep.mubr.bf16.mxu0 %v6805
  %6840 = vmatmul.mubr.bf16.gmra.mxu0 %v6801
  %v6841 = vpop.f32.mrf.mxu0
  %v6842 = vadd.f32 0.0, %v6841
  %v6843 = vpop.f32.mrf.mxu0
  %v6844 = vpop.f32.mrf.mxu0
  %v6845 = vadd.f32 0.0, %v6844
  %v6846 = vpop.f32.mrf.mxu0
  %6847 = vdwg.mxu0
  %s6848 = scalar_lea.vmem %s0, 768
  %v6849 = vld [vmem:[%s6848] sm:$0xff]
  %v6850 = vld [vmem:[%s6848 + $0x8] sm:$0xff]
  %v6853 = vunpack.c.l.b16 %v6849
  %v6854 = vunpack.c.h.b16 %v6849
  %v6855 = vunpack.c.l.b16 %v6850
  %v6856 = vunpack.c.h.b16 %v6850
  %v6857 = vpack.c.b16 %v6855, %v6853
  %v6858 = vpack.c.b16 %v6856, %v6854
  %v6861 = vsel %vm130, %v6858, 0
  %6863 = vmatprep.subr.bf16.mxu0 0
  %6864 = vmatpush1.bf16.msra.mxu0 %v117
  %6865 = vmatprep.subr.bf16.mxu0 0
  %6866 = vmatpush1.bf16.msra.mxu0 %v116
  %6867 = vmatprep.subr.bf16.mxu0 0
  %6868 = vmatpush1.bf16.msra.mxu0 %v115
  %6869 = vmatprep.subr.bf16.mxu0 0
  %6870 = vmatpush1.bf16.msra.mxu0 %v114
  %6871 = vmatprep.subr.bf16.mxu0 0
  %6872 = vmatpush1.bf16.msra.mxu0 %v113
  %6873 = vmatprep.subr.bf16.mxu0 0
  %6874 = vmatpush1.bf16.msra.mxu0 %v112
  %6875 = vmatprep.subr.bf16.mxu0 0
  %6876 = vmatpush1.bf16.msra.mxu0 %v111
  %6877 = vmatprep.subr.bf16.mxu0 0
  %6878 = vmatpush1.bf16.msra.mxu0 %v110
  %6879 = vmatprep.subr.bf16.mxu0 0
  %6880 = vmatpush2.bf16.msra.mxu0 0
  %6881 = vmatprep.subr.bf16.mxu0 0
  %6882 = vmatpush2.bf16.msra.mxu0 0
  %6883 = vmatprep.subr.bf16.mxu0 0
  %6884 = vmatpush2.bf16.msra.mxu0 0
  %6885 = vmatprep.subr.bf16.mxu0 0
  %6886 = vmatpush2.bf16.msra.mxu0 0
  %6887 = vmatprep.subr.bf16.mxu0 0
  %6888 = vmatpush2.bf16.msra.mxu0 0
  %6889 = vmatprep.subr.bf16.mxu0 0
  %6890 = vmatpush2.bf16.msra.mxu0 0
  %6891 = vmatprep.subr.bf16.mxu0 0
  %6892 = vmatpush2.bf16.msra.mxu0 %v119
  %6893 = vmatprep.subr.bf16.mxu0 0
  %6894 = vmatpush2.bf16.msra.mxu0 %v118
  %6895 = vmatprep.mubr.bf16.mxu0 %v6861
  %6896 = vmatmul.mubr.bf16.gmra.mxu0 %v6857
  %v6897 = vpop.f32.mrf.mxu0
  %v6898 = vadd.f32 0.0, %v6897
  %v6899 = vpop.f32.mrf.mxu0
  %v6900 = vpop.f32.mrf.mxu0
  %v6901 = vadd.f32 0.0, %v6900
  %v6902 = vpop.f32.mrf.mxu0
  %6903 = vdwg.mxu0
  %v6904 = vmax.f32 %v6842, %v6898
  %v6905 = vmax.f32 %v6845, %v6901
  %s6906 = scalar_lea.vmem %s0, 1168
  %v6907 = vld [vmem:[%s6906] sm:$0xff]
  %v6908 = vld [vmem:[%s6906 + $0x8] sm:$0xff]
  %v6911 = vunpack.c.l.b16 %v6907
  %v6912 = vunpack.c.h.b16 %v6907
  %v6913 = vunpack.c.l.b16 %v6908
  %v6914 = vunpack.c.h.b16 %v6908
  %v6915 = vpack.c.b16 %v6913, %v6911
  %v6916 = vpack.c.b16 %v6914, %v6912
  %v6919 = vsel %vm130, %v6916, 0
  %6921 = vmatprep.subr.bf16.mxu0 0
  %6922 = vmatpush1.bf16.msra.mxu0 %v117
  %6923 = vmatprep.subr.bf16.mxu0 0
  %6924 = vmatpush1.bf16.msra.mxu0 %v116
  %6925 = vmatprep.subr.bf16.mxu0 0
  %6926 = vmatpush1.bf16.msra.mxu0 %v115
  %6927 = vmatprep.subr.bf16.mxu0 0
  %6928 = vmatpush1.bf16.msra.mxu0 %v114
  %6929 = vmatprep.subr.bf16.mxu0 0
  %6930 = vmatpush1.bf16.msra.mxu0 %v113
  %6931 = vmatprep.subr.bf16.mxu0 0
  %6932 = vmatpush1.bf16.msra.mxu0 %v112
  %6933 = vmatprep.subr.bf16.mxu0 0
  %6934 = vmatpush1.bf16.msra.mxu0 %v111
  %6935 = vmatprep.subr.bf16.mxu0 0
  %6936 = vmatpush1.bf16.msra.mxu0 %v110
  %6937 = vmatprep.subr.bf16.mxu0 0
  %6938 = vmatpush2.bf16.msra.mxu0 0
  %6939 = vmatprep.subr.bf16.mxu0 0
  %6940 = vmatpush2.bf16.msra.mxu0 0
  %6941 = vmatprep.subr.bf16.mxu0 0
  %6942 = vmatpush2.bf16.msra.mxu0 0
  %6943 = vmatprep.subr.bf16.mxu0 0
  %6944 = vmatpush2.bf16.msra.mxu0 0
  %6945 = vmatprep.subr.bf16.mxu0 0
  %6946 = vmatpush2.bf16.msra.mxu0 0
  %6947 = vmatprep.subr.bf16.mxu0 0
  %6948 = vmatpush2.bf16.msra.mxu0 0
  %6949 = vmatprep.subr.bf16.mxu0 0
  %6950 = vmatpush2.bf16.msra.mxu0 %v119
  %6951 = vmatprep.subr.bf16.mxu0 0
  %6952 = vmatpush2.bf16.msra.mxu0 %v118
  %6953 = vmatprep.mubr.bf16.mxu0 %v6919
  %6954 = vmatmul.mubr.bf16.gmra.mxu0 %v6915
  %v6955 = vpop.f32.mrf.mxu0
  %v6956 = vadd.f32 0.0, %v6955
  %v6957 = vpop.f32.mrf.mxu0
  %v6958 = vpop.f32.mrf.mxu0
  %v6959 = vadd.f32 0.0, %v6958
  %v6960 = vpop.f32.mrf.mxu0
  %6961 = vdwg.mxu0
  %v6962 = vmax.f32 %v6904, %v6956
  %v6963 = vmax.f32 %v6905, %v6959
  %s6964 = scalar_lea.vmem %s0, 1568
  %v6965 = vld [vmem:[%s6964] sm:$0xff]
  %v6966 = vld [vmem:[%s6964 + $0x8] sm:$0xff]
  %v6969 = vunpack.c.l.b16 %v6965
  %v6970 = vunpack.c.h.b16 %v6965
  %v6971 = vunpack.c.l.b16 %v6966
  %v6972 = vunpack.c.h.b16 %v6966
  %v6973 = vpack.c.b16 %v6971, %v6969
  %v6974 = vpack.c.b16 %v6972, %v6970
  %v6977 = vsel %vm130, %v6974, 0
  %6979 = vmatprep.subr.bf16.mxu0 0
  %6980 = vmatpush1.bf16.msra.mxu0 %v117
  %6981 = vmatprep.subr.bf16.mxu0 0
  %6982 = vmatpush1.bf16.msra.mxu0 %v116
  %6983 = vmatprep.subr.bf16.mxu0 0
  %6984 = vmatpush1.bf16.msra.mxu0 %v115
  %6985 = vmatprep.subr.bf16.mxu0 0
  %6986 = vmatpush1.bf16.msra.mxu0 %v114
  %6987 = vmatprep.subr.bf16.mxu0 0
  %6988 = vmatpush1.bf16.msra.mxu0 %v113
  %6989 = vmatprep.subr.bf16.mxu0 0
  %6990 = vmatpush1.bf16.msra.mxu0 %v112
  %6991 = vmatprep.subr.bf16.mxu0 0
  %6992 = vmatpush1.bf16.msra.mxu0 %v111
  %6993 = vmatprep.subr.bf16.mxu0 0
  %6994 = vmatpush1.bf16.msra.mxu0 %v110
  %6995 = vmatprep.subr.bf16.mxu0 0
  %6996 = vmatpush2.bf16.msra.mxu0 0
  %6997 = vmatprep.subr.bf16.mxu0 0
  %6998 = vmatpush2.bf16.msra.mxu0 0
  %6999 = vmatprep.subr.bf16.mxu0 0
  %7000 = vmatpush2.bf16.msra.mxu0 0
  %7001 = vmatprep.subr.bf16.mxu0 0
  %7002 = vmatpush2.bf16.msra.mxu0 0
  %7003 = vmatprep.subr.bf16.mxu0 0
  %7004 = vmatpush2.bf16.msra.mxu0 0
  %7005 = vmatprep.subr.bf16.mxu0 0
  %7006 = vmatpush2.bf16.msra.mxu0 0
  %7007 = vmatprep.subr.bf16.mxu0 0
  %7008 = vmatpush2.bf16.msra.mxu0 %v119
  %7009 = vmatprep.subr.bf16.mxu0 0
  %7010 = vmatpush2.bf16.msra.mxu0 %v118
  %7011 = vmatprep.mubr.bf16.mxu0 %v6977
  %7012 = vmatmul.mubr.bf16.gmra.mxu0 %v6973
  %v7013 = vpop.f32.mrf.mxu0
  %v7014 = vadd.f32 0.0, %v7013
  %v7015 = vpop.f32.mrf.mxu0
  %v7016 = vpop.f32.mrf.mxu0
  %v7017 = vadd.f32 0.0, %v7016
  %v7018 = vpop.f32.mrf.mxu0
  %7019 = vdwg.mxu0
  %v7020 = vmax.f32 %v6962, %v7014
  %v7021 = vmax.f32 %v6963, %v7017
  %v7022 = vadd.f32 %v7020, %v354
  %v7023 = vadd.f32 %v7021, %v354
  %v7024 = vmax.f32 %v7022, 0.0
  %v7025 = vmax.f32 %v7023, 0.0
  %v7026 = vpack.c.bf16 %v7025, %v7024
  %s7027 = scalar_lea.vmem %s3, 184
  %v7028 = vld [vmem:[%s7027] sm:$0xf]
  %v7029 = vld [vmem:[%s7027 + $0x4] sm:$0xf]
  %v7032 = vunpack.c.l.b16 %v7028
  %v7033 = vunpack.c.l.b16 %v7029
  %v7034 = vpack.c.b16 %v7033, %v7032
  %v7037 = vsel %vm607, %v7026, 0
  %7039 = vmatprep.subr.bf16.mxu0 0
  %7040 = vmatpush1.bf16.msra.mxu0 0
  %7041 = vmatprep.subr.bf16.mxu0 0
  %7042 = vmatpush1.bf16.msra.mxu0 0
  %7043 = vmatprep.subr.bf16.mxu0 0
  %7044 = vmatpush1.bf16.msra.mxu0 0
  %7045 = vmatprep.subr.bf16.mxu0 0
  %7046 = vmatpush1.bf16.msra.mxu0 0
  %7047 = vmatprep.subr.bf16.mxu0 0
  %7048 = vmatpush1.bf16.msra.mxu0 0
  %7049 = vmatprep.subr.bf16.mxu0 0
  %7050 = vmatpush1.bf16.msra.mxu0 0
  %7051 = vmatprep.subr.bf16.mxu0 0
  %7052 = vmatpush1.bf16.msra.mxu0 0
  %7053 = vmatprep.subr.bf16.mxu0 0
  %7054 = vmatpush1.bf16.msra.mxu0 %v7034
  %7055 = vmatprep.subr.bf16.mxu0 0
  %7056 = vmatpush2.bf16.msra.mxu0 0
  %7057 = vmatprep.subr.bf16.mxu0 0
  %7058 = vmatpush2.bf16.msra.mxu0 0
  %7059 = vmatprep.subr.bf16.mxu0 0
  %7060 = vmatpush2.bf16.msra.mxu0 0
  %7061 = vmatprep.subr.bf16.mxu0 0
  %7062 = vmatpush2.bf16.msra.mxu0 0
  %7063 = vmatprep.subr.bf16.mxu0 0
  %7064 = vmatpush2.bf16.msra.mxu0 0
  %7065 = vmatprep.subr.bf16.mxu0 0
  %7066 = vmatpush2.bf16.msra.mxu0 0
  %7067 = vmatprep.subr.bf16.mxu0 0
  %7068 = vmatpush2.bf16.msra.mxu0 0
  %7069 = vmatprep.subr.bf16.mxu0 0
  %7070 = vmatpush2.bf16.msra.mxu0 0
  %7071 = vmatprep.mubr.bf16.mxu0 0
  %7072 = vmatmul.mubr.bf16.gmra.mxu0 %v7037
  %v7073 = vpop.f32.mrf.mxu0
  %v7074 = vadd.f32 0.0, %v7073
  %v7075 = vpop.f32.mrf.mxu0
  %v7076 = vpop.f32.mrf.mxu0
  %v7077 = vadd.f32 0.0, %v7076
  %v7078 = vpop.f32.mrf.mxu0
  %7079 = vdwg.mxu0
  %v7080 = vadd.f32 %v6790, %v7074
  %v7081 = vadd.f32 %v6791, %v7077
  %s7082 = scalar_lea.vmem %s0, 384
  %v7083 = vld [vmem:[%s7082] sm:$0xff]
  %v7084 = vld [vmem:[%s7082 + $0x8] sm:$0xff]
  %v7087 = vunpack.c.l.b16 %v7083
  %v7088 = vunpack.c.h.b16 %v7083
  %v7089 = vunpack.c.l.b16 %v7084
  %v7090 = vunpack.c.h.b16 %v7084
  %v7091 = vpack.c.b16 %v7089, %v7087
  %v7092 = vpack.c.b16 %v7090, %v7088
  %v7095 = vsel %vm130, %v7092, 0
  %7097 = vmatprep.subr.bf16.mxu0 0
  %7098 = vmatpush1.bf16.msra.mxu0 %v117
  %7099 = vmatprep.subr.bf16.mxu0 0
  %7100 = vmatpush1.bf16.msra.mxu0 %v116
  %7101 = vmatprep.subr.bf16.mxu0 0
  %7102 = vmatpush1.bf16.msra.mxu0 %v115
  %7103 = vmatprep.subr.bf16.mxu0 0
  %7104 = vmatpush1.bf16.msra.mxu0 %v114
  %7105 = vmatprep.subr.bf16.mxu0 0
  %7106 = vmatpush1.bf16.msra.mxu0 %v113
  %7107 = vmatprep.subr.bf16.mxu0 0
  %7108 = vmatpush1.bf16.msra.mxu0 %v112
  %7109 = vmatprep.subr.bf16.mxu0 0
  %7110 = vmatpush1.bf16.msra.mxu0 %v111
  %7111 = vmatprep.subr.bf16.mxu0 0
  %7112 = vmatpush1.bf16.msra.mxu0 %v110
  %7113 = vmatprep.subr.bf16.mxu0 0
  %7114 = vmatpush2.bf16.msra.mxu0 0
  %7115 = vmatprep.subr.bf16.mxu0 0
  %7116 = vmatpush2.bf16.msra.mxu0 0
  %7117 = vmatprep.subr.bf16.mxu0 0
  %7118 = vmatpush2.bf16.msra.mxu0 0
  %7119 = vmatprep.subr.bf16.mxu0 0
  %7120 = vmatpush2.bf16.msra.mxu0 0
  %7121 = vmatprep.subr.bf16.mxu0 0
  %7122 = vmatpush2.bf16.msra.mxu0 0
  %7123 = vmatprep.subr.bf16.mxu0 0
  %7124 = vmatpush2.bf16.msra.mxu0 0
  %7125 = vmatprep.subr.bf16.mxu0 0
  %7126 = vmatpush2.bf16.msra.mxu0 %v119
  %7127 = vmatprep.subr.bf16.mxu0 0
  %7128 = vmatpush2.bf16.msra.mxu0 %v118
  %7129 = vmatprep.mubr.bf16.mxu0 %v7095
  %7130 = vmatmul.mubr.bf16.gmra.mxu0 %v7091
  %v7131 = vpop.f32.mrf.mxu0
  %v7132 = vadd.f32 0.0, %v7131
  %v7133 = vpop.f32.mrf.mxu0
  %v7134 = vpop.f32.mrf.mxu0
  %v7135 = vadd.f32 0.0, %v7134
  %v7136 = vpop.f32.mrf.mxu0
  %7137 = vdwg.mxu0
  %s7138 = scalar_lea.vmem %s0, 784
  %v7139 = vld [vmem:[%s7138] sm:$0xff]
  %v7140 = vld [vmem:[%s7138 + $0x8] sm:$0xff]
  %v7143 = vunpack.c.l.b16 %v7139
  %v7144 = vunpack.c.h.b16 %v7139
  %v7145 = vunpack.c.l.b16 %v7140
  %v7146 = vunpack.c.h.b16 %v7140
  %v7147 = vpack.c.b16 %v7145, %v7143
  %v7148 = vpack.c.b16 %v7146, %v7144
  %v7151 = vsel %vm130, %v7148, 0
  %7153 = vmatprep.subr.bf16.mxu0 0
  %7154 = vmatpush1.bf16.msra.mxu0 %v117
  %7155 = vmatprep.subr.bf16.mxu0 0
  %7156 = vmatpush1.bf16.msra.mxu0 %v116
  %7157 = vmatprep.subr.bf16.mxu0 0
  %7158 = vmatpush1.bf16.msra.mxu0 %v115
  %7159 = vmatprep.subr.bf16.mxu0 0
  %7160 = vmatpush1.bf16.msra.mxu0 %v114
  %7161 = vmatprep.subr.bf16.mxu0 0
  %7162 = vmatpush1.bf16.msra.mxu0 %v113
  %7163 = vmatprep.subr.bf16.mxu0 0
  %7164 = vmatpush1.bf16.msra.mxu0 %v112
  %7165 = vmatprep.subr.bf16.mxu0 0
  %7166 = vmatpush1.bf16.msra.mxu0 %v111
  %7167 = vmatprep.subr.bf16.mxu0 0
  %7168 = vmatpush1.bf16.msra.mxu0 %v110
  %7169 = vmatprep.subr.bf16.mxu0 0
  %7170 = vmatpush2.bf16.msra.mxu0 0
  %7171 = vmatprep.subr.bf16.mxu0 0
  %7172 = vmatpush2.bf16.msra.mxu0 0
  %7173 = vmatprep.subr.bf16.mxu0 0
  %7174 = vmatpush2.bf16.msra.mxu0 0
  %7175 = vmatprep.subr.bf16.mxu0 0
  %7176 = vmatpush2.bf16.msra.mxu0 0
  %7177 = vmatprep.subr.bf16.mxu0 0
  %7178 = vmatpush2.bf16.msra.mxu0 0
  %7179 = vmatprep.subr.bf16.mxu0 0
  %7180 = vmatpush2.bf16.msra.mxu0 0
  %7181 = vmatprep.subr.bf16.mxu0 0
  %7182 = vmatpush2.bf16.msra.mxu0 %v119
  %7183 = vmatprep.subr.bf16.mxu0 0
  %7184 = vmatpush2.bf16.msra.mxu0 %v118
  %7185 = vmatprep.mubr.bf16.mxu0 %v7151
  %7186 = vmatmul.mubr.bf16.gmra.mxu0 %v7147
  %v7187 = vpop.f32.mrf.mxu0
  %v7188 = vadd.f32 0.0, %v7187
  %v7189 = vpop.f32.mrf.mxu0
  %v7190 = vpop.f32.mrf.mxu0
  %v7191 = vadd.f32 0.0, %v7190
  %v7192 = vpop.f32.mrf.mxu0
  %7193 = vdwg.mxu0
  %v7194 = vmax.f32 %v7132, %v7188
  %v7195 = vmax.f32 %v7135, %v7191
  %s7196 = scalar_lea.vmem %s0, 1184
  %v7197 = vld [vmem:[%s7196] sm:$0xff]
  %v7198 = vld [vmem:[%s7196 + $0x8] sm:$0xff]
  %v7201 = vunpack.c.l.b16 %v7197
  %v7202 = vunpack.c.h.b16 %v7197
  %v7203 = vunpack.c.l.b16 %v7198
  %v7204 = vunpack.c.h.b16 %v7198
  %v7205 = vpack.c.b16 %v7203, %v7201
  %v7206 = vpack.c.b16 %v7204, %v7202
  %v7209 = vsel %vm130, %v7206, 0
  %7211 = vmatprep.subr.bf16.mxu0 0
  %7212 = vmatpush1.bf16.msra.mxu0 %v117
  %7213 = vmatprep.subr.bf16.mxu0 0
  %7214 = vmatpush1.bf16.msra.mxu0 %v116
  %7215 = vmatprep.subr.bf16.mxu0 0
  %7216 = vmatpush1.bf16.msra.mxu0 %v115
  %7217 = vmatprep.subr.bf16.mxu0 0
  %7218 = vmatpush1.bf16.msra.mxu0 %v114
  %7219 = vmatprep.subr.bf16.mxu0 0
  %7220 = vmatpush1.bf16.msra.mxu0 %v113
  %7221 = vmatprep.subr.bf16.mxu0 0
  %7222 = vmatpush1.bf16.msra.mxu0 %v112
  %7223 = vmatprep.subr.bf16.mxu0 0
  %7224 = vmatpush1.bf16.msra.mxu0 %v111
  %7225 = vmatprep.subr.bf16.mxu0 0
  %7226 = vmatpush1.bf16.msra.mxu0 %v110
  %7227 = vmatprep.subr.bf16.mxu0 0
  %7228 = vmatpush2.bf16.msra.mxu0 0
  %7229 = vmatprep.subr.bf16.mxu0 0
  %7230 = vmatpush2.bf16.msra.mxu0 0
  %7231 = vmatprep.subr.bf16.mxu0 0
  %7232 = vmatpush2.bf16.msra.mxu0 0
  %7233 = vmatprep.subr.bf16.mxu0 0
  %7234 = vmatpush2.bf16.msra.mxu0 0
  %7235 = vmatprep.subr.bf16.mxu0 0
  %7236 = vmatpush2.bf16.msra.mxu0 0
  %7237 = vmatprep.subr.bf16.mxu0 0
  %7238 = vmatpush2.bf16.msra.mxu0 0
  %7239 = vmatprep.subr.bf16.mxu0 0
  %7240 = vmatpush2.bf16.msra.mxu0 %v119
  %7241 = vmatprep.subr.bf16.mxu0 0
  %7242 = vmatpush2.bf16.msra.mxu0 %v118
  %7243 = vmatprep.mubr.bf16.mxu0 %v7209
  %7244 = vmatmul.mubr.bf16.gmra.mxu0 %v7205
  %v7245 = vpop.f32.mrf.mxu0
  %v7246 = vadd.f32 0.0, %v7245
  %v7247 = vpop.f32.mrf.mxu0
  %v7248 = vpop.f32.mrf.mxu0
  %v7249 = vadd.f32 0.0, %v7248
  %v7250 = vpop.f32.mrf.mxu0
  %7251 = vdwg.mxu0
  %v7252 = vmax.f32 %v7194, %v7246
  %v7253 = vmax.f32 %v7195, %v7249
  %s7254 = scalar_lea.vmem %s0, 1584
  %v7255 = vld [vmem:[%s7254] sm:$0xff]
  %v7256 = vld [vmem:[%s7254 + $0x8] sm:$0xff]
  %v7259 = vunpack.c.l.b16 %v7255
  %v7260 = vunpack.c.h.b16 %v7255
  %v7261 = vunpack.c.l.b16 %v7256
  %v7262 = vunpack.c.h.b16 %v7256
  %v7263 = vpack.c.b16 %v7261, %v7259
  %v7264 = vpack.c.b16 %v7262, %v7260
  %v7267 = vsel %vm130, %v7264, 0
  %7269 = vmatprep.subr.bf16.mxu0 0
  %7270 = vmatpush1.bf16.msra.mxu0 %v117
  %7271 = vmatprep.subr.bf16.mxu0 0
  %7272 = vmatpush1.bf16.msra.mxu0 %v116
  %7273 = vmatprep.subr.bf16.mxu0 0
  %7274 = vmatpush1.bf16.msra.mxu0 %v115
  %7275 = vmatprep.subr.bf16.mxu0 0
  %7276 = vmatpush1.bf16.msra.mxu0 %v114
  %7277 = vmatprep.subr.bf16.mxu0 0
  %7278 = vmatpush1.bf16.msra.mxu0 %v113
  %7279 = vmatprep.subr.bf16.mxu0 0
  %7280 = vmatpush1.bf16.msra.mxu0 %v112
  %7281 = vmatprep.subr.bf16.mxu0 0
  %7282 = vmatpush1.bf16.msra.mxu0 %v111
  %7283 = vmatprep.subr.bf16.mxu0 0
  %7284 = vmatpush1.bf16.msra.mxu0 %v110
  %7285 = vmatprep.subr.bf16.mxu0 0
  %7286 = vmatpush2.bf16.msra.mxu0 0
  %7287 = vmatprep.subr.bf16.mxu0 0
  %7288 = vmatpush2.bf16.msra.mxu0 0
  %7289 = vmatprep.subr.bf16.mxu0 0
  %7290 = vmatpush2.bf16.msra.mxu0 0
  %7291 = vmatprep.subr.bf16.mxu0 0
  %7292 = vmatpush2.bf16.msra.mxu0 0
  %7293 = vmatprep.subr.bf16.mxu0 0
  %7294 = vmatpush2.bf16.msra.mxu0 0
  %7295 = vmatprep.subr.bf16.mxu0 0
  %7296 = vmatpush2.bf16.msra.mxu0 0
  %7297 = vmatprep.subr.bf16.mxu0 0
  %7298 = vmatpush2.bf16.msra.mxu0 %v119
  %7299 = vmatprep.subr.bf16.mxu0 0
  %7300 = vmatpush2.bf16.msra.mxu0 %v118
  %7301 = vmatprep.mubr.bf16.mxu0 %v7267
  %7302 = vmatmul.mubr.bf16.gmra.mxu0 %v7263
  %v7303 = vpop.f32.mrf.mxu0
  %v7304 = vadd.f32 0.0, %v7303
  %v7305 = vpop.f32.mrf.mxu0
  %v7306 = vpop.f32.mrf.mxu0
  %v7307 = vadd.f32 0.0, %v7306
  %v7308 = vpop.f32.mrf.mxu0
  %7309 = vdwg.mxu0
  %v7310 = vmax.f32 %v7252, %v7304
  %v7311 = vmax.f32 %v7253, %v7307
  %v7312 = vadd.f32 %v7310, %v354
  %v7313 = vadd.f32 %v7311, %v354
  %v7314 = vmax.f32 %v7312, 0.0
  %v7315 = vmax.f32 %v7313, 0.0
  %v7316 = vpack.c.bf16 %v7315, %v7314
  %s7317 = scalar_lea.vmem %s3, 192
  %v7318 = vld [vmem:[%s7317] sm:$0xf]
  %v7319 = vld [vmem:[%s7317 + $0x4] sm:$0xf]
  %v7322 = vunpack.c.l.b16 %v7318
  %v7323 = vunpack.c.l.b16 %v7319
  %v7324 = vpack.c.b16 %v7323, %v7322
  %v7327 = vsel %vm607, %v7316, 0
  %7329 = vmatprep.subr.bf16.mxu0 0
  %7330 = vmatpush1.bf16.msra.mxu0 0
  %7331 = vmatprep.subr.bf16.mxu0 0
  %7332 = vmatpush1.bf16.msra.mxu0 0
  %7333 = vmatprep.subr.bf16.mxu0 0
  %7334 = vmatpush1.bf16.msra.mxu0 0
  %7335 = vmatprep.subr.bf16.mxu0 0
  %7336 = vmatpush1.bf16.msra.mxu0 0
  %7337 = vmatprep.subr.bf16.mxu0 0
  %7338 = vmatpush1.bf16.msra.mxu0 0
  %7339 = vmatprep.subr.bf16.mxu0 0
  %7340 = vmatpush1.bf16.msra.mxu0 0
  %7341 = vmatprep.subr.bf16.mxu0 0
  %7342 = vmatpush1.bf16.msra.mxu0 0
  %7343 = vmatprep.subr.bf16.mxu0 0
  %7344 = vmatpush1.bf16.msra.mxu0 %v7324
  %7345 = vmatprep.subr.bf16.mxu0 0
  %7346 = vmatpush2.bf16.msra.mxu0 0
  %7347 = vmatprep.subr.bf16.mxu0 0
  %7348 = vmatpush2.bf16.msra.mxu0 0
  %7349 = vmatprep.subr.bf16.mxu0 0
  %7350 = vmatpush2.bf16.msra.mxu0 0
  %7351 = vmatprep.subr.bf16.mxu0 0
  %7352 = vmatpush2.bf16.msra.mxu0 0
  %7353 = vmatprep.subr.bf16.mxu0 0
  %7354 = vmatpush2.bf16.msra.mxu0 0
  %7355 = vmatprep.subr.bf16.mxu0 0
  %7356 = vmatpush2.bf16.msra.mxu0 0
  %7357 = vmatprep.subr.bf16.mxu0 0
  %7358 = vmatpush2.bf16.msra.mxu0 0
  %7359 = vmatprep.subr.bf16.mxu0 0
  %7360 = vmatpush2.bf16.msra.mxu0 0
  %7361 = vmatprep.mubr.bf16.mxu0 0
  %7362 = vmatmul.mubr.bf16.gmra.mxu0 %v7327
  %v7363 = vpop.f32.mrf.mxu0
  %v7364 = vadd.f32 0.0, %v7363
  %v7365 = vpop.f32.mrf.mxu0
  %v7366 = vpop.f32.mrf.mxu0
  %v7367 = vadd.f32 0.0, %v7366
  %v7368 = vpop.f32.mrf.mxu0
  %7369 = vdwg.mxu0
  %v7370 = vadd.f32 %v7080, %v7364
  %v7371 = vadd.f32 %v7081, %v7367
  %v7372 = vld [vmem:[%s4] sm:$0x1]
  %v7374 = vlaneseq
  %v7375 = vshrl.u32 %v7374, 7
  %v7376 = vsub.s32 0, %v7375
  %v7377 = vrot.slane %v7372, %v7376
  %v7379 = vadd.f32 %v7370, %v7377
  %v7380 = vadd.f32 %v7371, %v7377
  %v7381 = vmax.f32 %v7379, 0.0
  %v7382 = vmax.f32 %v7380, 0.0
  %v7383 = vpack.c.bf16 %v7382, %v7381
  %v7384 = vld [vmem:[%s5] sm:$0xf]
  %v7385 = vld [vmem:[%s5 + $0x4] sm:$0xf]
  %v7386 = vld [vmem:[%s5 + $0x8] sm:$0xf]
  %v7387 = vld [vmem:[%s5 + $0xc] sm:$0xf]
  %v7388 = vld [vmem:[%s5 + $0x10] sm:$0xf]
  %v7389 = vld [vmem:[%s5 + $0x14] sm:$0xf]
  %v7390 = vld [vmem:[%s5 + $0x18] sm:$0xf]
  %v7391 = vld [vmem:[%s5 + $0x1c] sm:$0xf]
  %v7392 = vld [vmem:[%s5 + $0x20] sm:$0xf]
  %v7393 = vld [vmem:[%s5 + $0x24] sm:$0xf]
  %v7394 = vld [vmem:[%s5 + $0x28] sm:$0xf]
  %v7395 = vld [vmem:[%s5 + $0x2c] sm:$0xf]
  %v7396 = vld [vmem:[%s5 + $0x30] sm:$0xf]
  %v7397 = vld [vmem:[%s5 + $0x34] sm:$0xf]
  %v7398 = vld [vmem:[%s5 + $0x38] sm:$0xf]
  %v7399 = vld [vmem:[%s5 + $0x3c] sm:$0xf]
  %v7400 = vld [vmem:[%s6] sm:$0x1]
  %v7402 = vlaneseq
  %v7403 = vshrl.u32 %v7402, 7
  %v7404 = vsub.s32 0, %v7403
  %v7405 = vrot.slane %v7400, %v7404
  %v7423 = vunpack.c.l.b16 %v7384
  %v7424 = vunpack.c.l.b16 %v7385
  %v7425 = vunpack.c.l.b16 %v7386
  %v7426 = vunpack.c.l.b16 %v7387
  %v7427 = vunpack.c.l.b16 %v7388
  %v7428 = vunpack.c.l.b16 %v7389
  %v7429 = vunpack.c.l.b16 %v7390
  %v7430 = vunpack.c.l.b16 %v7391
  %v7431 = vunpack.c.l.b16 %v7392
  %v7432 = vunpack.c.l.b16 %v7393
  %v7433 = vunpack.c.l.b16 %v7394
  %v7434 = vunpack.c.l.b16 %v7395
  %v7435 = vunpack.c.l.b16 %v7396
  %v7436 = vunpack.c.l.b16 %v7397
  %v7437 = vunpack.c.l.b16 %v7398
  %v7438 = vunpack.c.l.b16 %v7399
  %v7439 = vpack.c.b16 %v7424, %v7423
  %v7440 = vpack.c.b16 %v7426, %v7425
  %v7441 = vpack.c.b16 %v7428, %v7427
  %v7442 = vpack.c.b16 %v7430, %v7429
  %v7443 = vpack.c.b16 %v7432, %v7431
  %v7444 = vpack.c.b16 %v7434, %v7433
  %v7445 = vpack.c.b16 %v7436, %v7435
  %v7446 = vpack.c.b16 %v7438, %v7437
  %7455 = vmatprep.subr.bf16.mxu0 0
  %7456 = vmatpush1.bf16.msra.mxu0 %v7446
  %7457 = vmatprep.subr.bf16.mxu0 0
  %7458 = vmatpush1.bf16.msra.mxu0 %v7445
  %7459 = vmatprep.subr.bf16.mxu0 0
  %7460 = vmatpush1.bf16.msra.mxu0 %v7444
  %7461 = vmatprep.subr.bf16.mxu0 0
  %7462 = vmatpush1.bf16.msra.mxu0 %v7443
  %7463 = vmatprep.subr.bf16.mxu0 0
  %7464 = vmatpush1.bf16.msra.mxu0 %v7442
  %7465 = vmatprep.subr.bf16.mxu0 0
  %7466 = vmatpush1.bf16.msra.mxu0 %v7441
  %7467 = vmatprep.subr.bf16.mxu0 0
  %7468 = vmatpush1.bf16.msra.mxu0 %v7440
  %7469 = vmatprep.subr.bf16.mxu0 0
  %7470 = vmatpush1.bf16.msra.mxu0 %v7439
  %7471 = vmatprep.subr.bf16.mxu0 0
  %7472 = vmatpush2.bf16.msra.mxu0 0
  %7473 = vmatprep.subr.bf16.mxu0 0
  %7474 = vmatpush2.bf16.msra.mxu0 0
  %7475 = vmatprep.subr.bf16.mxu0 0
  %7476 = vmatpush2.bf16.msra.mxu0 0
  %7477 = vmatprep.subr.bf16.mxu0 0
  %7478 = vmatpush2.bf16.msra.mxu0 0
  %7479 = vmatprep.subr.bf16.mxu0 0
  %7480 = vmatpush2.bf16.msra.mxu0 0
  %7481 = vmatprep.subr.bf16.mxu0 0
  %7482 = vmatpush2.bf16.msra.mxu0 0
  %7483 = vmatprep.subr.bf16.mxu0 0
  %7484 = vmatpush2.bf16.msra.mxu0 0
  %7485 = vmatprep.subr.bf16.mxu0 0
  %7486 = vmatpush2.bf16.msra.mxu0 0
  %7487 = vmatprep.mubr.bf16.mxu0 0
  %7488 = vmatmul.mubr.bf16.gmra.mxu0 %v7383
  %v7489 = vpop.f32.mrf.mxu0
  %v7490 = vadd.f32 %v7405, %v7489
  %v7491 = vpop.f32.mrf.mxu0
  %v7492 = vpop.f32.mrf.mxu0
  %v7493 = vadd.f32 %v7405, %v7492
  %v7494 = vpop.f32.mrf.mxu0
  %7495 = vdwg.mxu0
  %v7496 = vmax.f32 %v7490, 0.0
  %v7497 = vmax.f32 %v7493, 0.0
  %v7498 = vpack.c.bf16 %v7497, %v7496
  %v7499 = vld [vmem:[%s7] sm:$0xf]
  %v7500 = vld [vmem:[%s7 + $0x4] sm:$0xf]
  %v7501 = vld [vmem:[%s7 + $0x8] sm:$0xf]
  %v7502 = vld [vmem:[%s7 + $0xc] sm:$0xf]
  %v7503 = vld [vmem:[%s7 + $0x10] sm:$0xf]
  %v7504 = vld [vmem:[%s7 + $0x14] sm:$0xf]
  %v7505 = vld [vmem:[%s7 + $0x18] sm:$0xf]
  %v7506 = vld [vmem:[%s7 + $0x1c] sm:$0xf]
  %v7507 = vld [vmem:[%s7 + $0x20] sm:$0xf]
  %v7508 = vld [vmem:[%s7 + $0x24] sm:$0xf]
  %v7509 = vld [vmem:[%s7 + $0x28] sm:$0xf]
  %v7510 = vld [vmem:[%s7 + $0x2c] sm:$0xf]
  %v7511 = vld [vmem:[%s7 + $0x30] sm:$0xf]
  %v7512 = vld [vmem:[%s7 + $0x34] sm:$0xf]
  %v7513 = vld [vmem:[%s7 + $0x38] sm:$0xf]
  %v7514 = vld [vmem:[%s7 + $0x3c] sm:$0xf]
  %v7515 = vld [vmem:[%s8] sm:$0x1]
  %v7517 = vlaneseq
  %v7518 = vshrl.u32 %v7517, 7
  %v7519 = vsub.s32 0, %v7518
  %v7520 = vrot.slane %v7515, %v7519
  %v7538 = vunpack.c.l.b16 %v7499
  %v7539 = vunpack.c.l.b16 %v7500
  %v7540 = vunpack.c.l.b16 %v7501
  %v7541 = vunpack.c.l.b16 %v7502
  %v7542 = vunpack.c.l.b16 %v7503
  %v7543 = vunpack.c.l.b16 %v7504
  %v7544 = vunpack.c.l.b16 %v7505
  %v7545 = vunpack.c.l.b16 %v7506
  %v7546 = vunpack.c.l.b16 %v7507
  %v7547 = vunpack.c.l.b16 %v7508
  %v7548 = vunpack.c.l.b16 %v7509
  %v7549 = vunpack.c.l.b16 %v7510
  %v7550 = vunpack.c.l.b16 %v7511
  %v7551 = vunpack.c.l.b16 %v7512
  %v7552 = vunpack.c.l.b16 %v7513
  %v7553 = vunpack.c.l.b16 %v7514
  %v7554 = vpack.c.b16 %v7539, %v7538
  %v7555 = vpack.c.b16 %v7541, %v7540
  %v7556 = vpack.c.b16 %v7543, %v7542
  %v7557 = vpack.c.b16 %v7545, %v7544
  %v7558 = vpack.c.b16 %v7547, %v7546
  %v7559 = vpack.c.b16 %v7549, %v7548
  %v7560 = vpack.c.b16 %v7551, %v7550
  %v7561 = vpack.c.b16 %v7553, %v7552
  %7570 = vmatprep.subr.bf16.mxu0 0
  %7571 = vmatpush1.bf16.msra.mxu0 %v7561
  %7572 = vmatprep.subr.bf16.mxu0 0
  %7573 = vmatpush1.bf16.msra.mxu0 %v7560
  %7574 = vmatprep.subr.bf16.mxu0 0
  %7575 = vmatpush1.bf16.msra.mxu0 %v7559
  %7576 = vmatprep.subr.bf16.mxu0 0
  %7577 = vmatpush1.bf16.msra.mxu0 %v7558
  %7578 = vmatprep.subr.bf16.mxu0 0
  %7579 = vmatpush1.bf16.msra.mxu0 %v7557
  %7580 = vmatprep.subr.bf16.mxu0 0
  %7581 = vmatpush1.bf16.msra.mxu0 %v7556
  %7582 = vmatprep.subr.bf16.mxu0 0
  %7583 = vmatpush1.bf16.msra.mxu0 %v7555
  %7584 = vmatprep.subr.bf16.mxu0 0
  %7585 = vmatpush1.bf16.msra.mxu0 %v7554
  %7586 = vmatprep.subr.bf16.mxu0 0
  %7587 = vmatpush2.bf16.msra.mxu0 0
  %7588 = vmatprep.subr.bf16.mxu0 0
  %7589 = vmatpush2.bf16.msra.mxu0 0
  %7590 = vmatprep.subr.bf16.mxu0 0
  %7591 = vmatpush2.bf16.msra.mxu0 0
  %7592 = vmatprep.subr.bf16.mxu0 0
  %7593 = vmatpush2.bf16.msra.mxu0 0
  %7594 = vmatprep.subr.bf16.mxu0 0
  %7595 = vmatpush2.bf16.msra.mxu0 0
  %7596 = vmatprep.subr.bf16.mxu0 0
  %7597 = vmatpush2.bf16.msra.mxu0 0
  %7598 = vmatprep.subr.bf16.mxu0 0
  %7599 = vmatpush2.bf16.msra.mxu0 0
  %7600 = vmatprep.subr.bf16.mxu0 0
  %7601 = vmatpush2.bf16.msra.mxu0 0
  %7602 = vmatprep.mubr.bf16.mxu0 0
  %7603 = vmatmul.mubr.bf16.gmra.mxu0 %v7498
  %v7604 = vpop.f32.mrf.mxu0
  %v7605 = vadd.f32 %v7520, %v7604
  %v7606 = vpop.f32.mrf.mxu0
  %v7607 = vpop.f32.mrf.mxu0
  %v7608 = vadd.f32 %v7520, %v7607
  %v7609 = vpop.f32.mrf.mxu0
  %7610 = vdwg.mxu0
  %v7611 = vmax.f32 %v7605, 0.0
  %v7612 = vmax.f32 %v7608, 0.0
  %v7613 = vpack.c.bf16 %v7612, %v7611
  %v7614 = vld [vmem:[%s9] sm:$0xf]
  %v7615 = vld [vmem:[%s9 + $0x4] sm:$0xf]
  %v7616 = vld [vmem:[%s9 + $0x8] sm:$0xf]
  %v7617 = vld [vmem:[%s9 + $0xc] sm:$0xf]
  %v7618 = vld [vmem:[%s9 + $0x10] sm:$0xf]
  %v7619 = vld [vmem:[%s9 + $0x14] sm:$0xf]
  %v7620 = vld [vmem:[%s9 + $0x18] sm:$0xf]
  %v7621 = vld [vmem:[%s9 + $0x1c] sm:$0xf]
  %v7622 = vld [vmem:[%s9 + $0x20] sm:$0xf]
  %v7623 = vld [vmem:[%s9 + $0x24] sm:$0xf]
  %v7624 = vld [vmem:[%s9 + $0x28] sm:$0xf]
  %v7625 = vld [vmem:[%s9 + $0x2c] sm:$0xf]
  %v7626 = vld [vmem:[%s9 + $0x30] sm:$0xf]
  %v7627 = vld [vmem:[%s9 + $0x34] sm:$0xf]
  %v7628 = vld [vmem:[%s9 + $0x38] sm:$0xf]
  %v7629 = vld [vmem:[%s9 + $0x3c] sm:$0xf]
  %v7630 = vld [vmem:[%s10] sm:$0x1]
  %v7632 = vlaneseq
  %v7633 = vshrl.u32 %v7632, 7
  %v7634 = vsub.s32 0, %v7633
  %v7635 = vrot.slane %v7630, %v7634
  %v7653 = vunpack.c.l.b16 %v7614
  %v7654 = vunpack.c.l.b16 %v7615
  %v7655 = vunpack.c.l.b16 %v7616
  %v7656 = vunpack.c.l.b16 %v7617
  %v7657 = vunpack.c.l.b16 %v7618
  %v7658 = vunpack.c.l.b16 %v7619
  %v7659 = vunpack.c.l.b16 %v7620
  %v7660 = vunpack.c.l.b16 %v7621
  %v7661 = vunpack.c.l.b16 %v7622
  %v7662 = vunpack.c.l.b16 %v7623
  %v7663 = vunpack.c.l.b16 %v7624
  %v7664 = vunpack.c.l.b16 %v7625
  %v7665 = vunpack.c.l.b16 %v7626
  %v7666 = vunpack.c.l.b16 %v7627
  %v7667 = vunpack.c.l.b16 %v7628
  %v7668 = vunpack.c.l.b16 %v7629
  %v7669 = vpack.c.b16 %v7654, %v7653
  %v7670 = vpack.c.b16 %v7656, %v7655
  %v7671 = vpack.c.b16 %v7658, %v7657
  %v7672 = vpack.c.b16 %v7660, %v7659
  %v7673 = vpack.c.b16 %v7662, %v7661
  %v7674 = vpack.c.b16 %v7664, %v7663
  %v7675 = vpack.c.b16 %v7666, %v7665
  %v7676 = vpack.c.b16 %v7668, %v7667
  %7685 = vmatprep.subr.bf16.mxu0 0
  %7686 = vmatpush1.bf16.msra.mxu0 %v7676
  %7687 = vmatprep.subr.bf16.mxu0 0
  %7688 = vmatpush1.bf16.msra.mxu0 %v7675
  %7689 = vmatprep.subr.bf16.mxu0 0
  %7690 = vmatpush1.bf16.msra.mxu0 %v7674
  %7691 = vmatprep.subr.bf16.mxu0 0
  %7692 = vmatpush1.bf16.msra.mxu0 %v7673
  %7693 = vmatprep.subr.bf16.mxu0 0
  %7694 = vmatpush1.bf16.msra.mxu0 %v7672
  %7695 = vmatprep.subr.bf16.mxu0 0
  %7696 = vmatpush1.bf16.msra.mxu0 %v7671
  %7697 = vmatprep.subr.bf16.mxu0 0
  %7698 = vmatpush1.bf16.msra.mxu0 %v7670
  %7699 = vmatprep.subr.bf16.mxu0 0
  %7700 = vmatpush1.bf16.msra.mxu0 %v7669
  %7701 = vmatprep.subr.bf16.mxu0 0
  %7702 = vmatpush2.bf16.msra.mxu0 0
  %7703 = vmatprep.subr.bf16.mxu0 0
  %7704 = vmatpush2.bf16.msra.mxu0 0
  %7705 = vmatprep.subr.bf16.mxu0 0
  %7706 = vmatpush2.bf16.msra.mxu0 0
  %7707 = vmatprep.subr.bf16.mxu0 0
  %7708 = vmatpush2.bf16.msra.mxu0 0
  %7709 = vmatprep.subr.bf16.mxu0 0
  %7710 = vmatpush2.bf16.msra.mxu0 0
  %7711 = vmatprep.subr.bf16.mxu0 0
  %7712 = vmatpush2.bf16.msra.mxu0 0
  %7713 = vmatprep.subr.bf16.mxu0 0
  %7714 = vmatpush2.bf16.msra.mxu0 0
  %7715 = vmatprep.subr.bf16.mxu0 0
  %7716 = vmatpush2.bf16.msra.mxu0 0
  %7717 = vmatprep.mubr.bf16.mxu0 0
  %7718 = vmatmul.mubr.bf16.gmra.mxu0 %v7613
  %v7719 = vpop.f32.mrf.mxu0
  %v7720 = vadd.f32 %v7635, %v7719
  %v7721 = vpop.f32.mrf.mxu0
  %v7722 = vpop.f32.mrf.mxu0
  %v7723 = vadd.f32 %v7635, %v7722
  %v7724 = vpop.f32.mrf.mxu0
  %7725 = vdwg.mxu0
  %vm7726 = vcmask 64512
  %7727 = vst.msk [vmem:[%s11] sm:$0xff] %vm7726, %v7720
  %7728 = vst.msk [vmem:[%s11 + $0x8] sm:$0xff] %vm7726, %v7723
  // Predicated region
  $region46: #{lenet5_forward.3} parent=0 // pred_check
    _
  $region47: #{lenet5_forward.3} parent=0 // pred_check_branch
    %7730 = sbr.rel (0) target = $region49
  $region48: #{lenet5_forward.3} parent=0 // pred_region
    _
  $region49: #{lenet5_forward.3} parent=0 // pred_fallthru
    _
  // Predicated region
  $region50: #{lenet5_forward.3} parent=0 // pred_check
    _
  $region51: #{lenet5_forward.3} parent=0 // pred_check_branch
    %7732 = sbr.rel (0) target = $region53
  $region52: #{lenet5_forward.3} parent=0 // pred_region
    _
  $region53: #{lenet5_forward.3} parent=0 // pred_fallthru
    _

</llo_original>
